<compile_context>
chip_gen: v5e
topology: v5e:2x2
jax: 0.10.0
libtpu: 0.0.40
codegen_flags: <defaults>
</compile_context>

<pallas_src>
import jax
import jax.numpy as jnp
from jax import lax
from jax.experimental import pallas as pl
from jax.experimental.pallas import tpu as pltpu


# Geometry constants (fixed by the module: fc1 = Linear(16*7*7, 64) => 1x28x28 input).
F1 = 32                 # conv1 evaluation frame (valid 28x28 at offset (2,2))
P1 = F1 // 2            # 16 = pooled frame = conv2's zero-padded input size
HW2 = 14                # conv2 spatial size
P2 = HW2 // 2           # 7
C1, C2 = 8, 16          # conv channel counts
K1 = 3 * 3 * 1 + 1      # conv1 im2col K: 9 taps + bias/validity column
K2 = 3 * 3 * C1         # conv2 im2col K: 72
FC_IN = C2 * P2 * P2    # 784
FC_H, N_CLS = 64, 10


# ----------------------------------------------------------------------------
# Fused kernel: conv1+pool -> conv2+pool -> fc1+fc2, all VMEM-resident.
# ----------------------------------------------------------------------------
def fused_cnn_kernel(p1_ref, w1_ref, w2_ref, b2_ref,
                     fw1_ref, fb1_ref, fw2_ref, fb2_ref, o_ref):
    bt = o_ref.shape[0]

    # --- conv1 (bias folded into the last im2col column) + ReLU -------------
    h1 = jnp.dot(p1_ref[...], w1_ref[...],
                 preferred_element_type=jnp.float32)          # (bt*1024, 8)
    h1 = jnp.maximum(h1, 0.0)

    # --- 2x2 maxpool; borders are exact zeros == conv2's SAME padding -------
    h1 = h1.reshape(bt * P1, 2, P1, 2, C1)
    xpad = jnp.max(h1, axis=(1, 3)).reshape(bt, P1, P1, C1)   # (bt,16,16,8)

    # --- conv2 as a single im2col matmul (9 taps on the lane axis, K=72) ----
    taps = [xpad[:, dy:dy + HW2, dx:dx + HW2, :]
            for dy in range(3) for dx in range(3)]
    patches2 = jnp.concatenate(taps, axis=-1).reshape(bt * HW2 * HW2, K2)
    h2 = jnp.dot(patches2, w2_ref[...],
                 preferred_element_type=jnp.float32)          # (bt*196, 16)
    h2 = jnp.maximum(h2 + b2_ref[...], 0.0)

    # --- 2x2 maxpool -> (bt, 7, 7, 16) ---------------------------------------
    h2 = h2.reshape(bt * P2, 2, P2, 2, C2)
    pool2 = jnp.max(h2, axis=(1, 3)).reshape(bt, P2, P2, C2)

    # --- flatten in (H, W, C) order on the lane axis -------------------------
    # (fc1 weights were pre-permuted in the wrapper to accept this order)
    flat = jnp.concatenate(
        [pool2[:, hp, wp, :] for hp in range(P2) for wp in range(P2)],
        axis=-1)                                              # (bt, 784)

    # --- fc1 + ReLU + fc2 -----------------------------------------------------
    h3 = jnp.dot(flat, fw1_ref[...], preferred_element_type=jnp.float32)
    h3 = jnp.maximum(h3 + fb1_ref[...], 0.0)
    out = jnp.dot(h3, fw2_ref[...], preferred_element_type=jnp.float32)
    o_ref[...] = (out + fb2_ref[...]).astype(o_ref.dtype)


def _batch_tile(n):
    for bt in (64, 32, 16, 8):
        if n % bt == 0:
            return bt
    return n  # small / odd batches: single block (block dim == full dim is legal)


# ----------------------------------------------------------------------------
# Wrapper: layout plumbing (im2col for conv1, weight repacking) + pallas_call.
# ----------------------------------------------------------------------------
def digit_classifier_forward(x_nchw, params):
    w1, b1, w2, b2, fw1, fb1, fw2, fb2 = params
    N = x_nchw.shape[0]
    x = jnp.transpose(x_nchw, (0, 2, 3, 1)).astype(jnp.float32)   # (N,28,28,1)

    # conv1 im2col on the 32x32 frame (one cheap fused XLA gather, ~40 B/px).
    canvas = jnp.zeros((N, F1 + 2, F1 + 2, 1), jnp.float32)
    canvas = canvas.at[:, 3:3 + 28, 3:3 + 28, :].set(x)
    taps = [canvas[:, dy:dy + F1, dx:dx + F1, :]
            for dy in range(3) for dx in range(3)]
    valid = jnp.zeros((N, F1, F1, 1), jnp.float32)
    valid = valid.at[:, 2:2 + 28, 2:2 + 28, :].set(1.0)
    patches1 = jnp.concatenate(
        [jnp.concatenate(taps, axis=-1) * valid, valid], axis=-1)  # (N,32,32,10)
    patches1 = patches1.reshape(N * F1 * F1, K1)

    # Weights in matmul layout.
    w1_aug = jnp.concatenate([w1.reshape(9, C1), b1.reshape(1, C1)], axis=0)  # (10,8)
    w2_mat = w2.reshape(K2, C2)                                               # (72,16)
    # fc1 rows: torch (C,H,W) flatten order -> the kernel's (H,W,C) order.
    fw1_hwc = fw1.reshape(C2, P2, P2, FC_H).transpose(1, 2, 0, 3).reshape(FC_IN, FC_H)

    bt = _batch_tile(N)
    return pl.pallas_call(
        fused_cnn_kernel,
        out_shape=jax.ShapeDtypeStruct((N, N_CLS), jnp.float32),
        grid=(N // bt,),
        in_specs=[
            pl.BlockSpec((bt * F1 * F1, K1), lambda i: (i, 0)),
            pl.BlockSpec((K1, C1), lambda i: (0, 0)),
            pl.BlockSpec((K2, C2), lambda i: (0, 0)),
            pl.BlockSpec((1, C2), lambda i: (0, 0)),
            pl.BlockSpec((FC_IN, FC_H), lambda i: (0, 0)),
            pl.BlockSpec((1, FC_H), lambda i: (0, 0)),
            pl.BlockSpec((FC_H, N_CLS), lambda i: (0, 0)),
            pl.BlockSpec((1, N_CLS), lambda i: (0, 0)),
        ],
        out_specs=pl.BlockSpec((bt, N_CLS), lambda i: (i, 0)),
        compiler_params=pltpu.CompilerParams(
            dimension_semantics=("parallel",)),
    )(patches1, w1_aug, w2_mat, b2.reshape(1, C2),
      fw1_hwc, fb1.reshape(1, FC_H), fw2, fb2.reshape(1, N_CLS))


# ----------------------------------------------------------------------------
# Deterministic synthetic parameters (PyTorch-default-style uniform init)
# ----------------------------------------------------------------------------
def init_params(key):
    ks = jax.random.split(key, 8)

    def u(k, shape, fan_in):
        bound = 1.0 / jnp.sqrt(jnp.float32(fan_in))
        return jax.random.uniform(k, shape, jnp.float32, -bound, bound)

    w1 = u(ks[0], (3, 3, 1, C1), 1 * 9)            # conv1 (HWIO)
    b1 = u(ks[1], (C1,), 1 * 9)
    w2 = u(ks[2], (3, 3, C1, C2), C1 * 9)          # conv2 (HWIO)
    b2 = u(ks[3], (C2,), C1 * 9)
    fw1 = u(ks[4], (FC_IN, FC_H), FC_IN)           # fc1, rows in torch (C,H,W) order
    fb1 = u(ks[5], (FC_H,), FC_IN)
    fw2 = u(ks[6], (FC_H, N_CLS), FC_H)            # fc2
    fb2 = u(ks[7], (N_CLS,), FC_H)
    return (w1, b1, w2, b2, fw1, fb1, fw2, fb2)


# Pure-JAX reference (mirrors the PyTorch forward in NCHW) for validation.
def reference_forward(x_nchw, params):
    w1, b1, w2, b2, fw1, fb1, fw2, fb2 = params
    dn = ("NCHW", "HWIO", "NCHW")

    def pool(z):
        return lax.reduce_window(z, -jnp.inf, lax.max,
                                 (1, 1, 2, 2), (1, 1, 2, 2), "VALID")

    y = lax.conv_general_dilated(x_nchw, w1, (1, 1), "SAME",
                                 dimension_numbers=dn)
    y = pool(jnp.maximum(y + b1.reshape(1, -1, 1, 1), 0.0))
    y = lax.conv_general_dilated(y, w2, (1, 1), "SAME",
                                 dimension_numbers=dn)
    y = pool(jnp.maximum(y + b2.reshape(1, -1, 1, 1), 0.0))
    y = y.reshape(y.shape[0], -1)                  # (C,H,W) flatten, like torch
    y = jnp.maximum(y @ fw1 + fb1, 0.0)
    return y @ fw2 + fb2


if __name__ == "__main__":
    key = jax.random.PRNGKey(0)
    pkey, xkey = jax.random.split(key)
    params = init_params(pkey)

    # fc1 = Linear(16*7*7, 64) pins the input to 1x28x28; batch = 2, NCHW.
    x = jax.random.normal(xkey, (2, 1, 28, 28), jnp.float32)

    fwd = jax.jit(digit_classifier_forward)
    out = jax.block_until_ready(fwd(x, params))
    ref = reference_forward(x, params)

    assert out.shape == (2, N_CLS), out.shape
    err = jnp.max(jnp.abs(out - ref))
    assert jnp.allclose(out, ref, rtol=1e-4, atol=1e-4), f"max abs err {err}"
    print("KERNEL_OK")
</pallas_src>

<mosaic_0001>
module attributes {stable_mosaic.version = 11 : i64} {
  func.func @fused_cnn_kernel(%arg0: i32, %arg1: memref<2048x10xf32, #tpu.memory_space<vmem>>, %arg2: memref<10x8xf32, #tpu.memory_space<vmem>>, %arg3: memref<72x16xf32, #tpu.memory_space<vmem>>, %arg4: memref<1x16xf32, #tpu.memory_space<vmem>>, %arg5: memref<784x64xf32, #tpu.memory_space<vmem>>, %arg6: memref<1x64xf32, #tpu.memory_space<vmem>>, %arg7: memref<64x10xf32, #tpu.memory_space<vmem>>, %arg8: memref<1x10xf32, #tpu.memory_space<vmem>>, %arg9: memref<2x10xf32, #tpu.memory_space<vmem>>) attributes {dimension_semantics = [#tpu.dimension_semantics<parallel>], iteration_bounds = array<i64: 1>, scalar_prefetch = 0 : i64, scratch_operands = 0 : i64, tpu.core_type = #tpu.core_type<tc>, window_params = [{transform_indices = @transform_0, window_bounds = array<i64: 2048, 10>}, {pipeline_mode = #tpu.pipeline_mode<synchronous>, transform_indices = @transform_1, window_bounds = array<i64: 10, 8>}, {pipeline_mode = #tpu.pipeline_mode<synchronous>, transform_indices = @transform_2, window_bounds = array<i64: 72, 16>}, {pipeline_mode = #tpu.pipeline_mode<synchronous>, transform_indices = @transform_3, window_bounds = array<i64: 1, 16>}, {pipeline_mode = #tpu.pipeline_mode<synchronous>, transform_indices = @transform_4, window_bounds = array<i64: 784, 64>}, {pipeline_mode = #tpu.pipeline_mode<synchronous>, transform_indices = @transform_5, window_bounds = array<i64: 1, 64>}, {pipeline_mode = #tpu.pipeline_mode<synchronous>, transform_indices = @transform_6, window_bounds = array<i64: 64, 10>}, {pipeline_mode = #tpu.pipeline_mode<synchronous>, transform_indices = @transform_7, window_bounds = array<i64: 1, 10>}, {transform_indices = @transform_8, window_bounds = array<i64: 2, 10>}]} {
    %c0 = arith.constant 0 : index
    %c0_0 = arith.constant 0 : index
    %0 = vector.load %arg1[%c0, %c0_0] : memref<2048x10xf32, #tpu.memory_space<vmem>>, vector<2048x10xf32>
    %c0_1 = arith.constant 0 : index
    %c0_2 = arith.constant 0 : index
    %1 = vector.load %arg2[%c0_1, %c0_2] : memref<10x8xf32, #tpu.memory_space<vmem>>, vector<10x8xf32>
    %cst = arith.constant dense<0.000000e+00> : vector<2048x8xf32>
    %2 = tpu.matmul %0, %1, %cst {dimension_numbers = #tpu.dot_dimension_numbers<[1], [0], [0], [1], [0, 0, 1, 1], [], []>} : vector<2048x10xf32>, vector<10x8xf32>, vector<2048x8xf32> -> vector<2048x8xf32>
    %cst_3 = arith.constant 0.000000e+00 : f32
    %3 = vector.broadcast %cst_3 : f32 to vector<2048x8xf32>
    %4 = arith.maximumf %2, %3 : vector<2048x8xf32>
    %5 = vector.shape_cast %4 : vector<2048x8xf32> to vector<32x2x16x2x8xf32>
    %cst_4 = arith.constant dense<0xFF800000> : vector<32x16x8xf32>
    %6 = vector.multi_reduction <maximumf>, %5, %cst_4 [1, 3] : vector<32x2x16x2x8xf32> to vector<32x16x8xf32>
    %7 = vector.shape_cast %6 : vector<32x16x8xf32> to vector<2x16x16x8xf32>
    %8 = vector.extract_strided_slice %7 {offsets = [0, 0, 0, 0], sizes = [2, 14, 14, 8], strides = [1, 1, 1, 1]} : vector<2x16x16x8xf32> to vector<2x14x14x8xf32>
    %9 = vector.extract_strided_slice %7 {offsets = [0, 0, 1, 0], sizes = [2, 14, 14, 8], strides = [1, 1, 1, 1]} : vector<2x16x16x8xf32> to vector<2x14x14x8xf32>
    %10 = vector.extract_strided_slice %7 {offsets = [0, 0, 2, 0], sizes = [2, 14, 14, 8], strides = [1, 1, 1, 1]} : vector<2x16x16x8xf32> to vector<2x14x14x8xf32>
    %11 = vector.extract_strided_slice %7 {offsets = [0, 1, 0, 0], sizes = [2, 14, 14, 8], strides = [1, 1, 1, 1]} : vector<2x16x16x8xf32> to vector<2x14x14x8xf32>
    %12 = vector.extract_strided_slice %7 {offsets = [0, 1, 1, 0], sizes = [2, 14, 14, 8], strides = [1, 1, 1, 1]} : vector<2x16x16x8xf32> to vector<2x14x14x8xf32>
    %13 = vector.extract_strided_slice %7 {offsets = [0, 1, 2, 0], sizes = [2, 14, 14, 8], strides = [1, 1, 1, 1]} : vector<2x16x16x8xf32> to vector<2x14x14x8xf32>
    %14 = vector.extract_strided_slice %7 {offsets = [0, 2, 0, 0], sizes = [2, 14, 14, 8], strides = [1, 1, 1, 1]} : vector<2x16x16x8xf32> to vector<2x14x14x8xf32>
    %15 = vector.extract_strided_slice %7 {offsets = [0, 2, 1, 0], sizes = [2, 14, 14, 8], strides = [1, 1, 1, 1]} : vector<2x16x16x8xf32> to vector<2x14x14x8xf32>
    %16 = vector.extract_strided_slice %7 {offsets = [0, 2, 2, 0], sizes = [2, 14, 14, 8], strides = [1, 1, 1, 1]} : vector<2x16x16x8xf32> to vector<2x14x14x8xf32>
    %17 = tpu.concatenate %8, %9, %10, %11, %12, %13, %14, %15, %16 in 3 : vector<2x14x14x8xf32>, vector<2x14x14x8xf32>, vector<2x14x14x8xf32>, vector<2x14x14x8xf32>, vector<2x14x14x8xf32>, vector<2x14x14x8xf32>, vector<2x14x14x8xf32>, vector<2x14x14x8xf32>, vector<2x14x14x8xf32> -> vector<2x14x14x72xf32>
    %18 = vector.shape_cast %17 : vector<2x14x14x72xf32> to vector<392x72xf32>
    %c0_5 = arith.constant 0 : index
    %c0_6 = arith.constant 0 : index
    %19 = vector.load %arg3[%c0_5, %c0_6] : memref<72x16xf32, #tpu.memory_space<vmem>>, vector<72x16xf32>
    %cst_7 = arith.constant dense<0.000000e+00> : vector<392x16xf32>
    %20 = tpu.matmul %18, %19, %cst_7 {dimension_numbers = #tpu.dot_dimension_numbers<[1], [0], [0], [1], [0, 0, 1, 1], [], []>} : vector<392x72xf32>, vector<72x16xf32>, vector<392x16xf32> -> vector<392x16xf32>
    %c0_8 = arith.constant 0 : index
    %c0_9 = arith.constant 0 : index
    %21 = vector.load %arg4[%c0_8, %c0_9] : memref<1x16xf32, #tpu.memory_space<vmem>>, vector<1x16xf32>
    %22 = vector.broadcast %21 : vector<1x16xf32> to vector<392x16xf32>
    %23 = arith.addf %20, %22 : vector<392x16xf32>
    %cst_10 = arith.constant 0.000000e+00 : f32
    %24 = vector.broadcast %cst_10 : f32 to vector<392x16xf32>
    %25 = arith.maximumf %23, %24 : vector<392x16xf32>
    %26 = vector.shape_cast %25 : vector<392x16xf32> to vector<14x2x7x2x16xf32>
    %cst_11 = arith.constant dense<0xFF800000> : vector<14x7x16xf32>
    %27 = vector.multi_reduction <maximumf>, %26, %cst_11 [1, 3] : vector<14x2x7x2x16xf32> to vector<14x7x16xf32>
    %28 = vector.shape_cast %27 : vector<14x7x16xf32> to vector<2x7x7x16xf32>
    %29 = vector.extract_strided_slice %28 {offsets = [0, 0, 0, 0], sizes = [2, 1, 1, 16], strides = [1, 1, 1, 1]} : vector<2x7x7x16xf32> to vector<2x1x1x16xf32>
    %30 = vector.shape_cast %29 : vector<2x1x1x16xf32> to vector<2x16xf32>
    %31 = vector.extract_strided_slice %28 {offsets = [0, 0, 1, 0], sizes = [2, 1, 1, 16], strides = [1, 1, 1, 1]} : vector<2x7x7x16xf32> to vector<2x1x1x16xf32>
    %32 = vector.shape_cast %31 : vector<2x1x1x16xf32> to vector<2x16xf32>
    %33 = vector.extract_strided_slice %28 {offsets = [0, 0, 2, 0], sizes = [2, 1, 1, 16], strides = [1, 1, 1, 1]} : vector<2x7x7x16xf32> to vector<2x1x1x16xf32>
    %34 = vector.shape_cast %33 : vector<2x1x1x16xf32> to vector<2x16xf32>
    %35 = vector.extract_strided_slice %28 {offsets = [0, 0, 3, 0], sizes = [2, 1, 1, 16], strides = [1, 1, 1, 1]} : vector<2x7x7x16xf32> to vector<2x1x1x16xf32>
    %36 = vector.shape_cast %35 : vector<2x1x1x16xf32> to vector<2x16xf32>
    %37 = vector.extract_strided_slice %28 {offsets = [0, 0, 4, 0], sizes = [2, 1, 1, 16], strides = [1, 1, 1, 1]} : vector<2x7x7x16xf32> to vector<2x1x1x16xf32>
    %38 = vector.shape_cast %37 : vector<2x1x1x16xf32> to vector<2x16xf32>
    %39 = vector.extract_strided_slice %28 {offsets = [0, 0, 5, 0], sizes = [2, 1, 1, 16], strides = [1, 1, 1, 1]} : vector<2x7x7x16xf32> to vector<2x1x1x16xf32>
    %40 = vector.shape_cast %39 : vector<2x1x1x16xf32> to vector<2x16xf32>
    %41 = vector.extract_strided_slice %28 {offsets = [0, 0, 6, 0], sizes = [2, 1, 1, 16], strides = [1, 1, 1, 1]} : vector<2x7x7x16xf32> to vector<2x1x1x16xf32>
    %42 = vector.shape_cast %41 : vector<2x1x1x16xf32> to vector<2x16xf32>
    %43 = vector.extract_strided_slice %28 {offsets = [0, 1, 0, 0], sizes = [2, 1, 1, 16], strides = [1, 1, 1, 1]} : vector<2x7x7x16xf32> to vector<2x1x1x16xf32>
    %44 = vector.shape_cast %43 : vector<2x1x1x16xf32> to vector<2x16xf32>
    %45 = vector.extract_strided_slice %28 {offsets = [0, 1, 1, 0], sizes = [2, 1, 1, 16], strides = [1, 1, 1, 1]} : vector<2x7x7x16xf32> to vector<2x1x1x16xf32>
    %46 = vector.shape_cast %45 : vector<2x1x1x16xf32> to vector<2x16xf32>
    %47 = vector.extract_strided_slice %28 {offsets = [0, 1, 2, 0], sizes = [2, 1, 1, 16], strides = [1, 1, 1, 1]} : vector<2x7x7x16xf32> to vector<2x1x1x16xf32>
    %48 = vector.shape_cast %47 : vector<2x1x1x16xf32> to vector<2x16xf32>
    %49 = vector.extract_strided_slice %28 {offsets = [0, 1, 3, 0], sizes = [2, 1, 1, 16], strides = [1, 1, 1, 1]} : vector<2x7x7x16xf32> to vector<2x1x1x16xf32>
    %50 = vector.shape_cast %49 : vector<2x1x1x16xf32> to vector<2x16xf32>
    %51 = vector.extract_strided_slice %28 {offsets = [0, 1, 4, 0], sizes = [2, 1, 1, 16], strides = [1, 1, 1, 1]} : vector<2x7x7x16xf32> to vector<2x1x1x16xf32>
    %52 = vector.shape_cast %51 : vector<2x1x1x16xf32> to vector<2x16xf32>
    %53 = vector.extract_strided_slice %28 {offsets = [0, 1, 5, 0], sizes = [2, 1, 1, 16], strides = [1, 1, 1, 1]} : vector<2x7x7x16xf32> to vector<2x1x1x16xf32>
    %54 = vector.shape_cast %53 : vector<2x1x1x16xf32> to vector<2x16xf32>
    %55 = vector.extract_strided_slice %28 {offsets = [0, 1, 6, 0], sizes = [2, 1, 1, 16], strides = [1, 1, 1, 1]} : vector<2x7x7x16xf32> to vector<2x1x1x16xf32>
    %56 = vector.shape_cast %55 : vector<2x1x1x16xf32> to vector<2x16xf32>
    %57 = vector.extract_strided_slice %28 {offsets = [0, 2, 0, 0], sizes = [2, 1, 1, 16], strides = [1, 1, 1, 1]} : vector<2x7x7x16xf32> to vector<2x1x1x16xf32>
    %58 = vector.shape_cast %57 : vector<2x1x1x16xf32> to vector<2x16xf32>
    %59 = vector.extract_strided_slice %28 {offsets = [0, 2, 1, 0], sizes = [2, 1, 1, 16], strides = [1, 1, 1, 1]} : vector<2x7x7x16xf32> to vector<2x1x1x16xf32>
    %60 = vector.shape_cast %59 : vector<2x1x1x16xf32> to vector<2x16xf32>
    %61 = vector.extract_strided_slice %28 {offsets = [0, 2, 2, 0], sizes = [2, 1, 1, 16], strides = [1, 1, 1, 1]} : vector<2x7x7x16xf32> to vector<2x1x1x16xf32>
    %62 = vector.shape_cast %61 : vector<2x1x1x16xf32> to vector<2x16xf32>
    %63 = vector.extract_strided_slice %28 {offsets = [0, 2, 3, 0], sizes = [2, 1, 1, 16], strides = [1, 1, 1, 1]} : vector<2x7x7x16xf32> to vector<2x1x1x16xf32>
    %64 = vector.shape_cast %63 : vector<2x1x1x16xf32> to vector<2x16xf32>
    %65 = vector.extract_strided_slice %28 {offsets = [0, 2, 4, 0], sizes = [2, 1, 1, 16], strides = [1, 1, 1, 1]} : vector<2x7x7x16xf32> to vector<2x1x1x16xf32>
    %66 = vector.shape_cast %65 : vector<2x1x1x16xf32> to vector<2x16xf32>
    %67 = vector.extract_strided_slice %28 {offsets = [0, 2, 5, 0], sizes = [2, 1, 1, 16], strides = [1, 1, 1, 1]} : vector<2x7x7x16xf32> to vector<2x1x1x16xf32>
    %68 = vector.shape_cast %67 : vector<2x1x1x16xf32> to vector<2x16xf32>
    %69 = vector.extract_strided_slice %28 {offsets = [0, 2, 6, 0], sizes = [2, 1, 1, 16], strides = [1, 1, 1, 1]} : vector<2x7x7x16xf32> to vector<2x1x1x16xf32>
    %70 = vector.shape_cast %69 : vector<2x1x1x16xf32> to vector<2x16xf32>
    %71 = vector.extract_strided_slice %28 {offsets = [0, 3, 0, 0], sizes = [2, 1, 1, 16], strides = [1, 1, 1, 1]} : vector<2x7x7x16xf32> to vector<2x1x1x16xf32>
    %72 = vector.shape_cast %71 : vector<2x1x1x16xf32> to vector<2x16xf32>
    %73 = vector.extract_strided_slice %28 {offsets = [0, 3, 1, 0], sizes = [2, 1, 1, 16], strides = [1, 1, 1, 1]} : vector<2x7x7x16xf32> to vector<2x1x1x16xf32>
    %74 = vector.shape_cast %73 : vector<2x1x1x16xf32> to vector<2x16xf32>
    %75 = vector.extract_strided_slice %28 {offsets = [0, 3, 2, 0], sizes = [2, 1, 1, 16], strides = [1, 1, 1, 1]} : vector<2x7x7x16xf32> to vector<2x1x1x16xf32>
    %76 = vector.shape_cast %75 : vector<2x1x1x16xf32> to vector<2x16xf32>
    %77 = vector.extract_strided_slice %28 {offsets = [0, 3, 3, 0], sizes = [2, 1, 1, 16], strides = [1, 1, 1, 1]} : vector<2x7x7x16xf32> to vector<2x1x1x16xf32>
    %78 = vector.shape_cast %77 : vector<2x1x1x16xf32> to vector<2x16xf32>
    %79 = vector.extract_strided_slice %28 {offsets = [0, 3, 4, 0], sizes = [2, 1, 1, 16], strides = [1, 1, 1, 1]} : vector<2x7x7x16xf32> to vector<2x1x1x16xf32>
    %80 = vector.shape_cast %79 : vector<2x1x1x16xf32> to vector<2x16xf32>
    %81 = vector.extract_strided_slice %28 {offsets = [0, 3, 5, 0], sizes = [2, 1, 1, 16], strides = [1, 1, 1, 1]} : vector<2x7x7x16xf32> to vector<2x1x1x16xf32>
    %82 = vector.shape_cast %81 : vector<2x1x1x16xf32> to vector<2x16xf32>
    %83 = vector.extract_strided_slice %28 {offsets = [0, 3, 6, 0], sizes = [2, 1, 1, 16], strides = [1, 1, 1, 1]} : vector<2x7x7x16xf32> to vector<2x1x1x16xf32>
    %84 = vector.shape_cast %83 : vector<2x1x1x16xf32> to vector<2x16xf32>
    %85 = vector.extract_strided_slice %28 {offsets = [0, 4, 0, 0], sizes = [2, 1, 1, 16], strides = [1, 1, 1, 1]} : vector<2x7x7x16xf32> to vector<2x1x1x16xf32>
    %86 = vector.shape_cast %85 : vector<2x1x1x16xf32> to vector<2x16xf32>
    %87 = vector.extract_strided_slice %28 {offsets = [0, 4, 1, 0], sizes = [2, 1, 1, 16], strides = [1, 1, 1, 1]} : vector<2x7x7x16xf32> to vector<2x1x1x16xf32>
    %88 = vector.shape_cast %87 : vector<2x1x1x16xf32> to vector<2x16xf32>
    %89 = vector.extract_strided_slice %28 {offsets = [0, 4, 2, 0], sizes = [2, 1, 1, 16], strides = [1, 1, 1, 1]} : vector<2x7x7x16xf32> to vector<2x1x1x16xf32>
    %90 = vector.shape_cast %89 : vector<2x1x1x16xf32> to vector<2x16xf32>
    %91 = vector.extract_strided_slice %28 {offsets = [0, 4, 3, 0], sizes = [2, 1, 1, 16], strides = [1, 1, 1, 1]} : vector<2x7x7x16xf32> to vector<2x1x1x16xf32>
    %92 = vector.shape_cast %91 : vector<2x1x1x16xf32> to vector<2x16xf32>
    %93 = vector.extract_strided_slice %28 {offsets = [0, 4, 4, 0], sizes = [2, 1, 1, 16], strides = [1, 1, 1, 1]} : vector<2x7x7x16xf32> to vector<2x1x1x16xf32>
    %94 = vector.shape_cast %93 : vector<2x1x1x16xf32> to vector<2x16xf32>
    %95 = vector.extract_strided_slice %28 {offsets = [0, 4, 5, 0], sizes = [2, 1, 1, 16], strides = [1, 1, 1, 1]} : vector<2x7x7x16xf32> to vector<2x1x1x16xf32>
    %96 = vector.shape_cast %95 : vector<2x1x1x16xf32> to vector<2x16xf32>
    %97 = vector.extract_strided_slice %28 {offsets = [0, 4, 6, 0], sizes = [2, 1, 1, 16], strides = [1, 1, 1, 1]} : vector<2x7x7x16xf32> to vector<2x1x1x16xf32>
    %98 = vector.shape_cast %97 : vector<2x1x1x16xf32> to vector<2x16xf32>
    %99 = vector.extract_strided_slice %28 {offsets = [0, 5, 0, 0], sizes = [2, 1, 1, 16], strides = [1, 1, 1, 1]} : vector<2x7x7x16xf32> to vector<2x1x1x16xf32>
    %100 = vector.shape_cast %99 : vector<2x1x1x16xf32> to vector<2x16xf32>
    %101 = vector.extract_strided_slice %28 {offsets = [0, 5, 1, 0], sizes = [2, 1, 1, 16], strides = [1, 1, 1, 1]} : vector<2x7x7x16xf32> to vector<2x1x1x16xf32>
    %102 = vector.shape_cast %101 : vector<2x1x1x16xf32> to vector<2x16xf32>
    %103 = vector.extract_strided_slice %28 {offsets = [0, 5, 2, 0], sizes = [2, 1, 1, 16], strides = [1, 1, 1, 1]} : vector<2x7x7x16xf32> to vector<2x1x1x16xf32>
    %104 = vector.shape_cast %103 : vector<2x1x1x16xf32> to vector<2x16xf32>
    %105 = vector.extract_strided_slice %28 {offsets = [0, 5, 3, 0], sizes = [2, 1, 1, 16], strides = [1, 1, 1, 1]} : vector<2x7x7x16xf32> to vector<2x1x1x16xf32>
    %106 = vector.shape_cast %105 : vector<2x1x1x16xf32> to vector<2x16xf32>
    %107 = vector.extract_strided_slice %28 {offsets = [0, 5, 4, 0], sizes = [2, 1, 1, 16], strides = [1, 1, 1, 1]} : vector<2x7x7x16xf32> to vector<2x1x1x16xf32>
    %108 = vector.shape_cast %107 : vector<2x1x1x16xf32> to vector<2x16xf32>
    %109 = vector.extract_strided_slice %28 {offsets = [0, 5, 5, 0], sizes = [2, 1, 1, 16], strides = [1, 1, 1, 1]} : vector<2x7x7x16xf32> to vector<2x1x1x16xf32>
    %110 = vector.shape_cast %109 : vector<2x1x1x16xf32> to vector<2x16xf32>
    %111 = vector.extract_strided_slice %28 {offsets = [0, 5, 6, 0], sizes = [2, 1, 1, 16], strides = [1, 1, 1, 1]} : vector<2x7x7x16xf32> to vector<2x1x1x16xf32>
    %112 = vector.shape_cast %111 : vector<2x1x1x16xf32> to vector<2x16xf32>
    %113 = vector.extract_strided_slice %28 {offsets = [0, 6, 0, 0], sizes = [2, 1, 1, 16], strides = [1, 1, 1, 1]} : vector<2x7x7x16xf32> to vector<2x1x1x16xf32>
    %114 = vector.shape_cast %113 : vector<2x1x1x16xf32> to vector<2x16xf32>
    %115 = vector.extract_strided_slice %28 {offsets = [0, 6, 1, 0], sizes = [2, 1, 1, 16], strides = [1, 1, 1, 1]} : vector<2x7x7x16xf32> to vector<2x1x1x16xf32>
    %116 = vector.shape_cast %115 : vector<2x1x1x16xf32> to vector<2x16xf32>
    %117 = vector.extract_strided_slice %28 {offsets = [0, 6, 2, 0], sizes = [2, 1, 1, 16], strides = [1, 1, 1, 1]} : vector<2x7x7x16xf32> to vector<2x1x1x16xf32>
    %118 = vector.shape_cast %117 : vector<2x1x1x16xf32> to vector<2x16xf32>
    %119 = vector.extract_strided_slice %28 {offsets = [0, 6, 3, 0], sizes = [2, 1, 1, 16], strides = [1, 1, 1, 1]} : vector<2x7x7x16xf32> to vector<2x1x1x16xf32>
    %120 = vector.shape_cast %119 : vector<2x1x1x16xf32> to vector<2x16xf32>
    %121 = vector.extract_strided_slice %28 {offsets = [0, 6, 4, 0], sizes = [2, 1, 1, 16], strides = [1, 1, 1, 1]} : vector<2x7x7x16xf32> to vector<2x1x1x16xf32>
    %122 = vector.shape_cast %121 : vector<2x1x1x16xf32> to vector<2x16xf32>
    %123 = vector.extract_strided_slice %28 {offsets = [0, 6, 5, 0], sizes = [2, 1, 1, 16], strides = [1, 1, 1, 1]} : vector<2x7x7x16xf32> to vector<2x1x1x16xf32>
    %124 = vector.shape_cast %123 : vector<2x1x1x16xf32> to vector<2x16xf32>
    %125 = vector.extract_strided_slice %28 {offsets = [0, 6, 6, 0], sizes = [2, 1, 1, 16], strides = [1, 1, 1, 1]} : vector<2x7x7x16xf32> to vector<2x1x1x16xf32>
    %126 = vector.shape_cast %125 : vector<2x1x1x16xf32> to vector<2x16xf32>
    %127 = tpu.concatenate %30, %32, %34, %36, %38, %40, %42, %44, %46, %48, %50, %52, %54, %56, %58, %60 in 1 : vector<2x16xf32>, vector<2x16xf32>, vector<2x16xf32>, vector<2x16xf32>, vector<2x16xf32>, vector<2x16xf32>, vector<2x16xf32>, vector<2x16xf32>, vector<2x16xf32>, vector<2x16xf32>, vector<2x16xf32>, vector<2x16xf32>, vector<2x16xf32>, vector<2x16xf32>, vector<2x16xf32>, vector<2x16xf32> -> vector<2x256xf32>
    %128 = tpu.concatenate %62, %64, %66, %68, %70, %72, %74, %76, %78, %80, %82, %84, %86, %88, %90, %92 in 1 : vector<2x16xf32>, vector<2x16xf32>, vector<2x16xf32>, vector<2x16xf32>, vector<2x16xf32>, vector<2x16xf32>, vector<2x16xf32>, vector<2x16xf32>, vector<2x16xf32>, vector<2x16xf32>, vector<2x16xf32>, vector<2x16xf32>, vector<2x16xf32>, vector<2x16xf32>, vector<2x16xf32>, vector<2x16xf32> -> vector<2x256xf32>
    %129 = tpu.concatenate %94, %96, %98, %100, %102, %104, %106, %108, %110, %112, %114, %116, %118, %120, %122, %124 in 1 : vector<2x16xf32>, vector<2x16xf32>, vector<2x16xf32>, vector<2x16xf32>, vector<2x16xf32>, vector<2x16xf32>, vector<2x16xf32>, vector<2x16xf32>, vector<2x16xf32>, vector<2x16xf32>, vector<2x16xf32>, vector<2x16xf32>, vector<2x16xf32>, vector<2x16xf32>, vector<2x16xf32>, vector<2x16xf32> -> vector<2x256xf32>
    %130 = tpu.concatenate %127, %128, %129, %126 in 1 : vector<2x256xf32>, vector<2x256xf32>, vector<2x256xf32>, vector<2x16xf32> -> vector<2x784xf32>
    %c0_12 = arith.constant 0 : index
    %c0_13 = arith.constant 0 : index
    %131 = vector.load %arg5[%c0_12, %c0_13] : memref<784x64xf32, #tpu.memory_space<vmem>>, vector<784x64xf32>
    %cst_14 = arith.constant dense<0.000000e+00> : vector<2x64xf32>
    %132 = tpu.matmul %130, %131, %cst_14 {dimension_numbers = #tpu.dot_dimension_numbers<[1], [0], [0], [1], [0, 0, 1, 1], [], []>} : vector<2x784xf32>, vector<784x64xf32>, vector<2x64xf32> -> vector<2x64xf32>
    %c0_15 = arith.constant 0 : index
    %c0_16 = arith.constant 0 : index
    %133 = vector.load %arg6[%c0_15, %c0_16] : memref<1x64xf32, #tpu.memory_space<vmem>>, vector<1x64xf32>
    %134 = vector.broadcast %133 : vector<1x64xf32> to vector<2x64xf32>
    %135 = arith.addf %132, %134 : vector<2x64xf32>
    %cst_17 = arith.constant 0.000000e+00 : f32
    %136 = vector.broadcast %cst_17 : f32 to vector<2x64xf32>
    %137 = arith.maximumf %135, %136 : vector<2x64xf32>
    %c0_18 = arith.constant 0 : index
    %c0_19 = arith.constant 0 : index
    %138 = vector.load %arg7[%c0_18, %c0_19] : memref<64x10xf32, #tpu.memory_space<vmem>>, vector<64x10xf32>
    %cst_20 = arith.constant dense<0.000000e+00> : vector<2x10xf32>
    %139 = tpu.matmul %137, %138, %cst_20 {dimension_numbers = #tpu.dot_dimension_numbers<[1], [0], [0], [1], [0, 0, 1, 1], [], []>} : vector<2x64xf32>, vector<64x10xf32>, vector<2x10xf32> -> vector<2x10xf32>
    %c0_21 = arith.constant 0 : index
    %c0_22 = arith.constant 0 : index
    %140 = vector.load %arg8[%c0_21, %c0_22] : memref<1x10xf32, #tpu.memory_space<vmem>>, vector<1x10xf32>
    %141 = vector.broadcast %140 : vector<1x10xf32> to vector<2x10xf32>
    %142 = arith.addf %139, %141 : vector<2x10xf32>
    %c0_23 = arith.constant 0 : index
    %c0_24 = arith.constant 0 : index
    %143 = vector.load %arg9[%c0_23, %c0_24] : memref<2x10xf32, #tpu.memory_space<vmem>>, vector<2x10xf32>
    tpu.vector_store %arg9[%c0_23, %c0_24], %142 {strides = array<i32>} : memref<2x10xf32, #tpu.memory_space<vmem>>, vector<2x10xf32>,
    return
  }
  func.func @transform_0(%arg0: i32) -> (i32, i32) {
    %c0_i32 = arith.constant 0 : i32
    %c0_i32_0 = arith.constant 0 : i32
    return %arg0, %c0_i32 : i32, i32
  }
  func.func @transform_1(%arg0: i32) -> (i32, i32) {
    %c0_i32 = arith.constant 0 : i32
    %c0_i32_0 = arith.constant 0 : i32
    %c0_i32_1 = arith.constant 0 : i32
    return %c0_i32, %c0_i32_0 : i32, i32
  }
  func.func @transform_2(%arg0: i32) -> (i32, i32) {
    %c0_i32 = arith.constant 0 : i32
    %c0_i32_0 = arith.constant 0 : i32
    %c0_i32_1 = arith.constant 0 : i32
    return %c0_i32, %c0_i32_0 : i32, i32
  }
  func.func @transform_3(%arg0: i32) -> (i32, i32) {
    %c0_i32 = arith.constant 0 : i32
    %c0_i32_0 = arith.constant 0 : i32
    %c0_i32_1 = arith.constant 0 : i32
    return %c0_i32, %c0_i32_0 : i32, i32
  }
  func.func @transform_4(%arg0: i32) -> (i32, i32) {
    %c0_i32 = arith.constant 0 : i32
    %c0_i32_0 = arith.constant 0 : i32
    %c0_i32_1 = arith.constant 0 : i32
    return %c0_i32, %c0_i32_0 : i32, i32
  }
  func.func @transform_5(%arg0: i32) -> (i32, i32) {
    %c0_i32 = arith.constant 0 : i32
    %c0_i32_0 = arith.constant 0 : i32
    %c0_i32_1 = arith.constant 0 : i32
    return %c0_i32, %c0_i32_0 : i32, i32
  }
  func.func @transform_6(%arg0: i32) -> (i32, i32) {
    %c0_i32 = arith.constant 0 : i32
    %c0_i32_0 = arith.constant 0 : i32
    %c0_i32_1 = arith.constant 0 : i32
    return %c0_i32, %c0_i32_0 : i32, i32
  }
  func.func @transform_7(%arg0: i32) -> (i32, i32) {
    %c0_i32 = arith.constant 0 : i32
    %c0_i32_0 = arith.constant 0 : i32
    %c0_i32_1 = arith.constant 0 : i32
    return %c0_i32, %c0_i32_0 : i32, i32
  }
  func.func @transform_8(%arg0: i32) -> (i32, i32) {
    %c0_i32 = arith.constant 0 : i32
    %c0_i32_0 = arith.constant 0 : i32
    return %arg0, %c0_i32 : i32, i32
  }
}

</mosaic_0001>

<llo_original>
// kernel: digit_classifier_forward.1
$region0: #{digit_classifier_forward.1}
  #allocation0 [shape = 'u32[]', space=smem, size = 0x4, offset = 0x4, fixed_abs, tag = 'smem constant byte address 0x4 - core index']
  #allocation1 [shape = 'u32[72,128]{1,0:T(1,128)}', space=vmem, size = 0x9000, scoped, tag = 'internal scratch']
  %s0 = inlined_call_operand.vmem [shape: f32[2048,10], index: 0, kind: input, shape index: {}]
  %s1 = inlined_call_operand.vmem [shape: f32[10,8], index: 1, kind: input, shape index: {}]
  %s2 = inlined_call_operand.vmem [shape: f32[72,16], index: 2, kind: input, shape index: {}]
  %s3 = inlined_call_operand.vmem [shape: f32[1,16], index: 3, kind: input, shape index: {}]
  %s4 = inlined_call_operand.vmem [shape: f32[784,64], index: 4, kind: input, shape index: {}]
  %s5 = inlined_call_operand.vmem [shape: f32[1,64], index: 5, kind: input, shape index: {}]
  %s6 = inlined_call_operand.vmem [shape: f32[64,10], index: 6, kind: input, shape index: {}]
  %s7 = inlined_call_operand.vmem [shape: f32[1,10], index: 7, kind: input, shape index: {}]
  %s8 = inlined_call_operand.hbm [shape: f32[2,10], index: 8, kind: output, shape index: {}]
  %s9 = sld [smem:[#allocation0]]
  $region42: #{digit_classifier_forward.1} parent=0
    _
  %s11 = ssub.s32 1, %s9
  %s12 = scalar_select 0, %s11, %s9
  $region1: #{digit_classifier_forward.1} parent=0
    #allocation2 [shape = 'u8[1024]{0}', space=vmem, size = 0x400, scoped, tag = 'output window, operand 0, single buffered']
    #allocation3 [shape = 's32[1]{0}', space=sflag, size = 0x4, scoped, tag = 'scoped memory for digit_classifier_forward.1']
    %13 = vsyncpa [#allocation3], 0
    // Predicated region
    $region2: #{digit_classifier_forward.1} parent=1 // pred_check
      _
    $region3: #{digit_classifier_forward.1} parent=1 // pred_check_branch
      %15 = sbr.rel (0) target = $region5
    $region4: #{digit_classifier_forward.1} parent=1 // pred_region
      _
    $region5: #{digit_classifier_forward.1} parent=1 // pred_fallthru
      _
    // Predicated region
    $region6: #{digit_classifier_forward.1} parent=1 // pred_check
      _
    $region7: #{digit_classifier_forward.1} parent=1 // pred_check_branch
      %17 = sbr.rel (0) target = $region9
    $region8: #{digit_classifier_forward.1} parent=1 // pred_region
      _
    $region9: #{digit_classifier_forward.1} parent=1 // pred_fallthru
      _
    // Predicated region
    $region10: #{digit_classifier_forward.1} parent=1 // pred_check
      _
    $region11: #{digit_classifier_forward.1} parent=1 // pred_check_branch
      %19 = sbr.rel (0) target = $region13
    $region12: #{digit_classifier_forward.1} parent=1 // pred_region
      _
    $region13: #{digit_classifier_forward.1} parent=1 // pred_fallthru
      _
    // Predicated region
    $region14: #{digit_classifier_forward.1} parent=1 // pred_check
      _
    $region15: #{digit_classifier_forward.1} parent=1 // pred_check_branch
      %21 = sbr.rel (0) target = $region17
    $region16: #{digit_classifier_forward.1} parent=1 // pred_region
      _
    $region17: #{digit_classifier_forward.1} parent=1 // pred_fallthru
      _
    // Predicated region
    $region18: #{digit_classifier_forward.1} parent=1 // pred_check
      _
    $region19: #{digit_classifier_forward.1} parent=1 // pred_check_branch
      %23 = sbr.rel (0) target = $region21
    $region20: #{digit_classifier_forward.1} parent=1 // pred_region
      _
    $region21: #{digit_classifier_forward.1} parent=1 // pred_fallthru
      _
    // Predicated region
    $region22: #{digit_classifier_forward.1} parent=1 // pred_check
      _
    $region23: #{digit_classifier_forward.1} parent=1 // pred_check_branch
      %25 = sbr.rel (0) target = $region25
    $region24: #{digit_classifier_forward.1} parent=1 // pred_region
      _
    $region25: #{digit_classifier_forward.1} parent=1 // pred_fallthru
      _
    // Predicated region
    $region26: #{digit_classifier_forward.1} parent=1 // pred_check
      _
    $region27: #{digit_classifier_forward.1} parent=1 // pred_check_branch
      %27 = sbr.rel (0) target = $region29
    $region28: #{digit_classifier_forward.1} parent=1 // pred_region
      _
    $region29: #{digit_classifier_forward.1} parent=1 // pred_fallthru
      _
    // Predicated region
    $region30: #{digit_classifier_forward.1} parent=1 // pred_check
      _
    $region31: #{digit_classifier_forward.1} parent=1 // pred_check_branch
      %29 = sbr.rel (0) target = $region33
    $region32: #{digit_classifier_forward.1} parent=1 // pred_region
      _
    $region33: #{digit_classifier_forward.1} parent=1 // pred_fallthru
      _
    %v30 = vld [vmem:[%s0] sm:$0xff]
    %v31 = vld [vmem:[%s0 + $0x8] sm:$0xff]
    %v32 = vld [vmem:[%s0 + $0x10] sm:$0xff]
    %v33 = vld [vmem:[%s0 + $0x18] sm:$0xff]
    %v34 = vld [vmem:[%s0 + $0x20] sm:$0xff]
    %v35 = vld [vmem:[%s0 + $0x28] sm:$0xff]
    %v36 = vld [vmem:[%s0 + $0x30] sm:$0xff]
    %v37 = vld [vmem:[%s0 + $0x38] sm:$0xff]
    %v38 = vld [vmem:[%s0 + $0x40] sm:$0xff]
    %v39 = vld [vmem:[%s0 + $0x48] sm:$0xff]
    %v40 = vld [vmem:[%s0 + $0x50] sm:$0xff]
    %v41 = vld [vmem:[%s0 + $0x58] sm:$0xff]
    %v42 = vld [vmem:[%s0 + $0x60] sm:$0xff]
    %v43 = vld [vmem:[%s0 + $0x68] sm:$0xff]
    %v44 = vld [vmem:[%s0 + $0x70] sm:$0xff]
    %v45 = vld [vmem:[%s0 + $0x78] sm:$0xff]
    %v46 = vld [vmem:[%s0 + $0x80] sm:$0xff]
    %v47 = vld [vmem:[%s0 + $0x88] sm:$0xff]
    %v48 = vld [vmem:[%s0 + $0x90] sm:$0xff]
    %v49 = vld [vmem:[%s0 + $0x98] sm:$0xff]
    %v50 = vld [vmem:[%s0 + $0xa0] sm:$0xff]
    %v51 = vld [vmem:[%s0 + $0xa8] sm:$0xff]
    %v52 = vld [vmem:[%s0 + $0xb0] sm:$0xff]
    %v53 = vld [vmem:[%s0 + $0xb8] sm:$0xff]
    %v54 = vld [vmem:[%s0 + $0xc0] sm:$0xff]
    %v55 = vld [vmem:[%s0 + $0xc8] sm:$0xff]
    %v56 = vld [vmem:[%s0 + $0xd0] sm:$0xff]
    %v57 = vld [vmem:[%s0 + $0xd8] sm:$0xff]
    %v58 = vld [vmem:[%s0 + $0xe0] sm:$0xff]
    %v59 = vld [vmem:[%s0 + $0xe8] sm:$0xff]
    %v60 = vld [vmem:[%s0 + $0xf0] sm:$0xff]
    %v61 = vld [vmem:[%s0 + $0xf8] sm:$0xff]
    %v62 = vld [vmem:[%s0 + $0x100] sm:$0xff]
    %v63 = vld [vmem:[%s0 + $0x108] sm:$0xff]
    %v64 = vld [vmem:[%s0 + $0x110] sm:$0xff]
    %v65 = vld [vmem:[%s0 + $0x118] sm:$0xff]
    %v66 = vld [vmem:[%s0 + $0x120] sm:$0xff]
    %v67 = vld [vmem:[%s0 + $0x128] sm:$0xff]
    %v68 = vld [vmem:[%s0 + $0x130] sm:$0xff]
    %v69 = vld [vmem:[%s0 + $0x138] sm:$0xff]
    %v70 = vld [vmem:[%s0 + $0x140] sm:$0xff]
    %v71 = vld [vmem:[%s0 + $0x148] sm:$0xff]
    %v72 = vld [vmem:[%s0 + $0x150] sm:$0xff]
    %v73 = vld [vmem:[%s0 + $0x158] sm:$0xff]
    %v74 = vld [vmem:[%s0 + $0x160] sm:$0xff]
    %v75 = vld [vmem:[%s0 + $0x168] sm:$0xff]
    %v76 = vld [vmem:[%s0 + $0x170] sm:$0xff]
    %v77 = vld [vmem:[%s0 + $0x178] sm:$0xff]
    %v78 = vld [vmem:[%s0 + $0x180] sm:$0xff]
    %v79 = vld [vmem:[%s0 + $0x188] sm:$0xff]
    %v80 = vld [vmem:[%s0 + $0x190] sm:$0xff]
    %v81 = vld [vmem:[%s0 + $0x198] sm:$0xff]
    %v82 = vld [vmem:[%s0 + $0x1a0] sm:$0xff]
    %v83 = vld [vmem:[%s0 + $0x1a8] sm:$0xff]
    %v84 = vld [vmem:[%s0 + $0x1b0] sm:$0xff]
    %v85 = vld [vmem:[%s0 + $0x1b8] sm:$0xff]
    %v86 = vld [vmem:[%s0 + $0x1c0] sm:$0xff]
    %v87 = vld [vmem:[%s0 + $0x1c8] sm:$0xff]
    %v88 = vld [vmem:[%s0 + $0x1d0] sm:$0xff]
    %v89 = vld [vmem:[%s0 + $0x1d8] sm:$0xff]
    %v90 = vld [vmem:[%s0 + $0x1e0] sm:$0xff]
    %v91 = vld [vmem:[%s0 + $0x1e8] sm:$0xff]
    %v92 = vld [vmem:[%s0 + $0x1f0] sm:$0xff]
    %v93 = vld [vmem:[%s0 + $0x1f8] sm:$0xff]
    %v94 = vld [vmem:[%s0 + $0x200] sm:$0xff]
    %v95 = vld [vmem:[%s0 + $0x208] sm:$0xff]
    %v96 = vld [vmem:[%s0 + $0x210] sm:$0xff]
    %v97 = vld [vmem:[%s0 + $0x218] sm:$0xff]
    %v98 = vld [vmem:[%s0 + $0x220] sm:$0xff]
    %v99 = vld [vmem:[%s0 + $0x228] sm:$0xff]
    %v100 = vld [vmem:[%s0 + $0x230] sm:$0xff]
    %v101 = vld [vmem:[%s0 + $0x238] sm:$0xff]
    %v102 = vld [vmem:[%s0 + $0x240] sm:$0xff]
    %v103 = vld [vmem:[%s0 + $0x248] sm:$0xff]
    %v104 = vld [vmem:[%s0 + $0x250] sm:$0xff]
    %v105 = vld [vmem:[%s0 + $0x258] sm:$0xff]
    %v106 = vld [vmem:[%s0 + $0x260] sm:$0xff]
    %v107 = vld [vmem:[%s0 + $0x268] sm:$0xff]
    %v108 = vld [vmem:[%s0 + $0x270] sm:$0xff]
    %v109 = vld [vmem:[%s0 + $0x278] sm:$0xff]
    %v110 = vld [vmem:[%s0 + $0x280] sm:$0xff]
    %v111 = vld [vmem:[%s0 + $0x288] sm:$0xff]
    %v112 = vld [vmem:[%s0 + $0x290] sm:$0xff]
    %v113 = vld [vmem:[%s0 + $0x298] sm:$0xff]
    %v114 = vld [vmem:[%s0 + $0x2a0] sm:$0xff]
    %v115 = vld [vmem:[%s0 + $0x2a8] sm:$0xff]
    %v116 = vld [vmem:[%s0 + $0x2b0] sm:$0xff]
    %v117 = vld [vmem:[%s0 + $0x2b8] sm:$0xff]
    %v118 = vld [vmem:[%s0 + $0x2c0] sm:$0xff]
    %v119 = vld [vmem:[%s0 + $0x2c8] sm:$0xff]
    %v120 = vld [vmem:[%s0 + $0x2d0] sm:$0xff]
    %v121 = vld [vmem:[%s0 + $0x2d8] sm:$0xff]
    %v122 = vld [vmem:[%s0 + $0x2e0] sm:$0xff]
    %v123 = vld [vmem:[%s0 + $0x2e8] sm:$0xff]
    %v124 = vld [vmem:[%s0 + $0x2f0] sm:$0xff]
    %v125 = vld [vmem:[%s0 + $0x2f8] sm:$0xff]
    %v126 = vld [vmem:[%s0 + $0x300] sm:$0xff]
    %v127 = vld [vmem:[%s0 + $0x308] sm:$0xff]
    %v128 = vld [vmem:[%s0 + $0x310] sm:$0xff]
    %v129 = vld [vmem:[%s0 + $0x318] sm:$0xff]
    %v130 = vld [vmem:[%s0 + $0x320] sm:$0xff]
    %v131 = vld [vmem:[%s0 + $0x328] sm:$0xff]
    %v132 = vld [vmem:[%s0 + $0x330] sm:$0xff]
    %v133 = vld [vmem:[%s0 + $0x338] sm:$0xff]
    %v134 = vld [vmem:[%s0 + $0x340] sm:$0xff]
    %v135 = vld [vmem:[%s0 + $0x348] sm:$0xff]
    %v136 = vld [vmem:[%s0 + $0x350] sm:$0xff]
    %v137 = vld [vmem:[%s0 + $0x358] sm:$0xff]
    %v138 = vld [vmem:[%s0 + $0x360] sm:$0xff]
    %v139 = vld [vmem:[%s0 + $0x368] sm:$0xff]
    %v140 = vld [vmem:[%s0 + $0x370] sm:$0xff]
    %v141 = vld [vmem:[%s0 + $0x378] sm:$0xff]
    %v142 = vld [vmem:[%s0 + $0x380] sm:$0xff]
    %v143 = vld [vmem:[%s0 + $0x388] sm:$0xff]
    %v144 = vld [vmem:[%s0 + $0x390] sm:$0xff]
    %v145 = vld [vmem:[%s0 + $0x398] sm:$0xff]
    %v146 = vld [vmem:[%s0 + $0x3a0] sm:$0xff]
    %v147 = vld [vmem:[%s0 + $0x3a8] sm:$0xff]
    %v148 = vld [vmem:[%s0 + $0x3b0] sm:$0xff]
    %v149 = vld [vmem:[%s0 + $0x3b8] sm:$0xff]
    %v150 = vld [vmem:[%s0 + $0x3c0] sm:$0xff]
    %v151 = vld [vmem:[%s0 + $0x3c8] sm:$0xff]
    %v152 = vld [vmem:[%s0 + $0x3d0] sm:$0xff]
    %v153 = vld [vmem:[%s0 + $0x3d8] sm:$0xff]
    %v154 = vld [vmem:[%s0 + $0x3e0] sm:$0xff]
    %v155 = vld [vmem:[%s0 + $0x3e8] sm:$0xff]
    %v156 = vld [vmem:[%s0 + $0x3f0] sm:$0xff]
    %v157 = vld [vmem:[%s0 + $0x3f8] sm:$0xff]
    %v158 = vld [vmem:[%s0 + $0x400] sm:$0xff]
    %v159 = vld [vmem:[%s0 + $0x408] sm:$0xff]
    %v160 = vld [vmem:[%s0 + $0x410] sm:$0xff]
    %v161 = vld [vmem:[%s0 + $0x418] sm:$0xff]
    %v162 = vld [vmem:[%s0 + $0x420] sm:$0xff]
    %v163 = vld [vmem:[%s0 + $0x428] sm:$0xff]
    %v164 = vld [vmem:[%s0 + $0x430] sm:$0xff]
    %v165 = vld [vmem:[%s0 + $0x438] sm:$0xff]
    %v166 = vld [vmem:[%s0 + $0x440] sm:$0xff]
    %v167 = vld [vmem:[%s0 + $0x448] sm:$0xff]
    %v168 = vld [vmem:[%s0 + $0x450] sm:$0xff]
    %v169 = vld [vmem:[%s0 + $0x458] sm:$0xff]
    %v170 = vld [vmem:[%s0 + $0x460] sm:$0xff]
    %v171 = vld [vmem:[%s0 + $0x468] sm:$0xff]
    %v172 = vld [vmem:[%s0 + $0x470] sm:$0xff]
    %v173 = vld [vmem:[%s0 + $0x478] sm:$0xff]
    %v174 = vld [vmem:[%s0 + $0x480] sm:$0xff]
    %v175 = vld [vmem:[%s0 + $0x488] sm:$0xff]
    %v176 = vld [vmem:[%s0 + $0x490] sm:$0xff]
    %v177 = vld [vmem:[%s0 + $0x498] sm:$0xff]
    %v178 = vld [vmem:[%s0 + $0x4a0] sm:$0xff]
    %v179 = vld [vmem:[%s0 + $0x4a8] sm:$0xff]
    %v180 = vld [vmem:[%s0 + $0x4b0] sm:$0xff]
    %v181 = vld [vmem:[%s0 + $0x4b8] sm:$0xff]
    %v182 = vld [vmem:[%s0 + $0x4c0] sm:$0xff]
    %v183 = vld [vmem:[%s0 + $0x4c8] sm:$0xff]
    %v184 = vld [vmem:[%s0 + $0x4d0] sm:$0xff]
    %v185 = vld [vmem:[%s0 + $0x4d8] sm:$0xff]
    %v186 = vld [vmem:[%s0 + $0x4e0] sm:$0xff]
    %v187 = vld [vmem:[%s0 + $0x4e8] sm:$0xff]
    %v188 = vld [vmem:[%s0 + $0x4f0] sm:$0xff]
    %v189 = vld [vmem:[%s0 + $0x4f8] sm:$0xff]
    %v190 = vld [vmem:[%s0 + $0x500] sm:$0xff]
    %v191 = vld [vmem:[%s0 + $0x508] sm:$0xff]
    %v192 = vld [vmem:[%s0 + $0x510] sm:$0xff]
    %v193 = vld [vmem:[%s0 + $0x518] sm:$0xff]
    %v194 = vld [vmem:[%s0 + $0x520] sm:$0xff]
    %v195 = vld [vmem:[%s0 + $0x528] sm:$0xff]
    %v196 = vld [vmem:[%s0 + $0x530] sm:$0xff]
    %v197 = vld [vmem:[%s0 + $0x538] sm:$0xff]
    %v198 = vld [vmem:[%s0 + $0x540] sm:$0xff]
    %v199 = vld [vmem:[%s0 + $0x548] sm:$0xff]
    %v200 = vld [vmem:[%s0 + $0x550] sm:$0xff]
    %v201 = vld [vmem:[%s0 + $0x558] sm:$0xff]
    %v202 = vld [vmem:[%s0 + $0x560] sm:$0xff]
    %v203 = vld [vmem:[%s0 + $0x568] sm:$0xff]
    %v204 = vld [vmem:[%s0 + $0x570] sm:$0xff]
    %v205 = vld [vmem:[%s0 + $0x578] sm:$0xff]
    %v206 = vld [vmem:[%s0 + $0x580] sm:$0xff]
    %v207 = vld [vmem:[%s0 + $0x588] sm:$0xff]
    %v208 = vld [vmem:[%s0 + $0x590] sm:$0xff]
    %v209 = vld [vmem:[%s0 + $0x598] sm:$0xff]
    %v210 = vld [vmem:[%s0 + $0x5a0] sm:$0xff]
    %v211 = vld [vmem:[%s0 + $0x5a8] sm:$0xff]
    %v212 = vld [vmem:[%s0 + $0x5b0] sm:$0xff]
    %v213 = vld [vmem:[%s0 + $0x5b8] sm:$0xff]
    %v214 = vld [vmem:[%s0 + $0x5c0] sm:$0xff]
    %v215 = vld [vmem:[%s0 + $0x5c8] sm:$0xff]
    %v216 = vld [vmem:[%s0 + $0x5d0] sm:$0xff]
    %v217 = vld [vmem:[%s0 + $0x5d8] sm:$0xff]
    %v218 = vld [vmem:[%s0 + $0x5e0] sm:$0xff]
    %v219 = vld [vmem:[%s0 + $0x5e8] sm:$0xff]
    %v220 = vld [vmem:[%s0 + $0x5f0] sm:$0xff]
    %v221 = vld [vmem:[%s0 + $0x5f8] sm:$0xff]
    %v222 = vld [vmem:[%s0 + $0x600] sm:$0xff]
    %v223 = vld [vmem:[%s0 + $0x608] sm:$0xff]
    %v224 = vld [vmem:[%s0 + $0x610] sm:$0xff]
    %v225 = vld [vmem:[%s0 + $0x618] sm:$0xff]
    %v226 = vld [vmem:[%s0 + $0x620] sm:$0xff]
    %v227 = vld [vmem:[%s0 + $0x628] sm:$0xff]
    %v228 = vld [vmem:[%s0 + $0x630] sm:$0xff]
    %v229 = vld [vmem:[%s0 + $0x638] sm:$0xff]
    %v230 = vld [vmem:[%s0 + $0x640] sm:$0xff]
    %v231 = vld [vmem:[%s0 + $0x648] sm:$0xff]
    %v232 = vld [vmem:[%s0 + $0x650] sm:$0xff]
    %v233 = vld [vmem:[%s0 + $0x658] sm:$0xff]
    %v234 = vld [vmem:[%s0 + $0x660] sm:$0xff]
    %v235 = vld [vmem:[%s0 + $0x668] sm:$0xff]
    %v236 = vld [vmem:[%s0 + $0x670] sm:$0xff]
    %v237 = vld [vmem:[%s0 + $0x678] sm:$0xff]
    %v238 = vld [vmem:[%s0 + $0x680] sm:$0xff]
    %v239 = vld [vmem:[%s0 + $0x688] sm:$0xff]
    %v240 = vld [vmem:[%s0 + $0x690] sm:$0xff]
    %v241 = vld [vmem:[%s0 + $0x698] sm:$0xff]
    %v242 = vld [vmem:[%s0 + $0x6a0] sm:$0xff]
    %v243 = vld [vmem:[%s0 + $0x6a8] sm:$0xff]
    %v244 = vld [vmem:[%s0 + $0x6b0] sm:$0xff]
    %v245 = vld [vmem:[%s0 + $0x6b8] sm:$0xff]
    %v246 = vld [vmem:[%s0 + $0x6c0] sm:$0xff]
    %v247 = vld [vmem:[%s0 + $0x6c8] sm:$0xff]
    %v248 = vld [vmem:[%s0 + $0x6d0] sm:$0xff]
    %v249 = vld [vmem:[%s0 + $0x6d8] sm:$0xff]
    %v250 = vld [vmem:[%s0 + $0x6e0] sm:$0xff]
    %v251 = vld [vmem:[%s0 + $0x6e8] sm:$0xff]
    %v252 = vld [vmem:[%s0 + $0x6f0] sm:$0xff]
    %v253 = vld [vmem:[%s0 + $0x6f8] sm:$0xff]
    %v254 = vld [vmem:[%s0 + $0x700] sm:$0xff]
    %v255 = vld [vmem:[%s0 + $0x708] sm:$0xff]
    %v256 = vld [vmem:[%s0 + $0x710] sm:$0xff]
    %v257 = vld [vmem:[%s0 + $0x718] sm:$0xff]
    %v258 = vld [vmem:[%s0 + $0x720] sm:$0xff]
    %v259 = vld [vmem:[%s0 + $0x728] sm:$0xff]
    %v260 = vld [vmem:[%s0 + $0x730] sm:$0xff]
    %v261 = vld [vmem:[%s0 + $0x738] sm:$0xff]
    %v262 = vld [vmem:[%s0 + $0x740] sm:$0xff]
    %v263 = vld [vmem:[%s0 + $0x748] sm:$0xff]
    %v264 = vld [vmem:[%s0 + $0x750] sm:$0xff]
    %v265 = vld [vmem:[%s0 + $0x758] sm:$0xff]
    %v266 = vld [vmem:[%s0 + $0x760] sm:$0xff]
    %v267 = vld [vmem:[%s0 + $0x768] sm:$0xff]
    %v268 = vld [vmem:[%s0 + $0x770] sm:$0xff]
    %v269 = vld [vmem:[%s0 + $0x778] sm:$0xff]
    %v270 = vld [vmem:[%s0 + $0x780] sm:$0xff]
    %v271 = vld [vmem:[%s0 + $0x788] sm:$0xff]
    %v272 = vld [vmem:[%s0 + $0x790] sm:$0xff]
    %v273 = vld [vmem:[%s0 + $0x798] sm:$0xff]
    %v274 = vld [vmem:[%s0 + $0x7a0] sm:$0xff]
    %v275 = vld [vmem:[%s0 + $0x7a8] sm:$0xff]
    %v276 = vld [vmem:[%s0 + $0x7b0] sm:$0xff]
    %v277 = vld [vmem:[%s0 + $0x7b8] sm:$0xff]
    %v278 = vld [vmem:[%s0 + $0x7c0] sm:$0xff]
    %v279 = vld [vmem:[%s0 + $0x7c8] sm:$0xff]
    %v280 = vld [vmem:[%s0 + $0x7d0] sm:$0xff]
    %v281 = vld [vmem:[%s0 + $0x7d8] sm:$0xff]
    %v282 = vld [vmem:[%s0 + $0x7e0] sm:$0xff]
    %v283 = vld [vmem:[%s0 + $0x7e8] sm:$0xff]
    %v284 = vld [vmem:[%s0 + $0x7f0] sm:$0xff]
    %v285 = vld [vmem:[%s0 + $0x7f8] sm:$0xff]
    %v286 = vld [vmem:[%s1] sm:$0xff]
    %v287 = vld [vmem:[%s1 + $0x8] sm:$0x3]
    %vm288 = vcmask 80896
    %v290 = vsel %vm288, %v30, 0
    %v293 = vsel %vm288, %v31, 0
    %v296 = vsel %vm288, %v32, 0
    %v299 = vsel %vm288, %v33, 0
    %v302 = vsel %vm288, %v34, 0
    %v305 = vsel %vm288, %v35, 0
    %v308 = vsel %vm288, %v36, 0
    %v311 = vsel %vm288, %v37, 0
    %v314 = vsel %vm288, %v38, 0
    %v317 = vsel %vm288, %v39, 0
    %v320 = vsel %vm288, %v40, 0
    %v323 = vsel %vm288, %v41, 0
    %v326 = vsel %vm288, %v42, 0
    %v329 = vsel %vm288, %v43, 0
    %v332 = vsel %vm288, %v44, 0
    %v335 = vsel %vm288, %v45, 0
    %v338 = vsel %vm288, %v46, 0
    %v341 = vsel %vm288, %v47, 0
    %v344 = vsel %vm288, %v48, 0
    %v347 = vsel %vm288, %v49, 0
    %v350 = vsel %vm288, %v50, 0
    %v353 = vsel %vm288, %v51, 0
    %v356 = vsel %vm288, %v52, 0
    %v359 = vsel %vm288, %v53, 0
    %v362 = vsel %vm288, %v54, 0
    %v365 = vsel %vm288, %v55, 0
    %v368 = vsel %vm288, %v56, 0
    %v371 = vsel %vm288, %v57, 0
    %v374 = vsel %vm288, %v58, 0
    %v377 = vsel %vm288, %v59, 0
    %v380 = vsel %vm288, %v60, 0
    %v383 = vsel %vm288, %v61, 0
    %v386 = vsel %vm288, %v62, 0
    %v389 = vsel %vm288, %v63, 0
    %v392 = vsel %vm288, %v64, 0
    %v395 = vsel %vm288, %v65, 0
    %v398 = vsel %vm288, %v66, 0
    %v401 = vsel %vm288, %v67, 0
    %v404 = vsel %vm288, %v68, 0
    %v407 = vsel %vm288, %v69, 0
    %v410 = vsel %vm288, %v70, 0
    %v413 = vsel %vm288, %v71, 0
    %v416 = vsel %vm288, %v72, 0
    %v419 = vsel %vm288, %v73, 0
    %v422 = vsel %vm288, %v74, 0
    %v425 = vsel %vm288, %v75, 0
    %v428 = vsel %vm288, %v76, 0
    %v431 = vsel %vm288, %v77, 0
    %v434 = vsel %vm288, %v78, 0
    %v437 = vsel %vm288, %v79, 0
    %v440 = vsel %vm288, %v80, 0
    %v443 = vsel %vm288, %v81, 0
    %v446 = vsel %vm288, %v82, 0
    %v449 = vsel %vm288, %v83, 0
    %v452 = vsel %vm288, %v84, 0
    %v455 = vsel %vm288, %v85, 0
    %v458 = vsel %vm288, %v86, 0
    %v461 = vsel %vm288, %v87, 0
    %v464 = vsel %vm288, %v88, 0
    %v467 = vsel %vm288, %v89, 0
    %v470 = vsel %vm288, %v90, 0
    %v473 = vsel %vm288, %v91, 0
    %v476 = vsel %vm288, %v92, 0
    %v479 = vsel %vm288, %v93, 0
    %v482 = vsel %vm288, %v94, 0
    %v485 = vsel %vm288, %v95, 0
    %v488 = vsel %vm288, %v96, 0
    %v491 = vsel %vm288, %v97, 0
    %v494 = vsel %vm288, %v98, 0
    %v497 = vsel %vm288, %v99, 0
    %v500 = vsel %vm288, %v100, 0
    %v503 = vsel %vm288, %v101, 0
    %v506 = vsel %vm288, %v102, 0
    %v509 = vsel %vm288, %v103, 0
    %v512 = vsel %vm288, %v104, 0
    %v515 = vsel %vm288, %v105, 0
    %v518 = vsel %vm288, %v106, 0
    %v521 = vsel %vm288, %v107, 0
    %v524 = vsel %vm288, %v108, 0
    %v527 = vsel %vm288, %v109, 0
    %v530 = vsel %vm288, %v110, 0
    %v533 = vsel %vm288, %v111, 0
    %v536 = vsel %vm288, %v112, 0
    %v539 = vsel %vm288, %v113, 0
    %v542 = vsel %vm288, %v114, 0
    %v545 = vsel %vm288, %v115, 0
    %v548 = vsel %vm288, %v116, 0
    %v551 = vsel %vm288, %v117, 0
    %v554 = vsel %vm288, %v118, 0
    %v557 = vsel %vm288, %v119, 0
    %v560 = vsel %vm288, %v120, 0
    %v563 = vsel %vm288, %v121, 0
    %v566 = vsel %vm288, %v122, 0
    %v569 = vsel %vm288, %v123, 0
    %v572 = vsel %vm288, %v124, 0
    %v575 = vsel %vm288, %v125, 0
    %v578 = vsel %vm288, %v126, 0
    %v581 = vsel %vm288, %v127, 0
    %v584 = vsel %vm288, %v128, 0
    %v587 = vsel %vm288, %v129, 0
    %v590 = vsel %vm288, %v130, 0
    %v593 = vsel %vm288, %v131, 0
    %v596 = vsel %vm288, %v132, 0
    %v599 = vsel %vm288, %v133, 0
    %v602 = vsel %vm288, %v134, 0
    %v605 = vsel %vm288, %v135, 0
    %v608 = vsel %vm288, %v136, 0
    %v611 = vsel %vm288, %v137, 0
    %v614 = vsel %vm288, %v138, 0
    %v617 = vsel %vm288, %v139, 0
    %v620 = vsel %vm288, %v140, 0
    %v623 = vsel %vm288, %v141, 0
    %v626 = vsel %vm288, %v142, 0
    %v629 = vsel %vm288, %v143, 0
    %v632 = vsel %vm288, %v144, 0
    %v635 = vsel %vm288, %v145, 0
    %v638 = vsel %vm288, %v146, 0
    %v641 = vsel %vm288, %v147, 0
    %v644 = vsel %vm288, %v148, 0
    %v647 = vsel %vm288, %v149, 0
    %v650 = vsel %vm288, %v150, 0
    %v653 = vsel %vm288, %v151, 0
    %v656 = vsel %vm288, %v152, 0
    %v659 = vsel %vm288, %v153, 0
    %v662 = vsel %vm288, %v154, 0
    %v665 = vsel %vm288, %v155, 0
    %v668 = vsel %vm288, %v156, 0
    %v671 = vsel %vm288, %v157, 0
    %v674 = vsel %vm288, %v158, 0
    %v677 = vsel %vm288, %v159, 0
    %v680 = vsel %vm288, %v160, 0
    %v683 = vsel %vm288, %v161, 0
    %v686 = vsel %vm288, %v162, 0
    %v689 = vsel %vm288, %v163, 0
    %v692 = vsel %vm288, %v164, 0
    %v695 = vsel %vm288, %v165, 0
    %v698 = vsel %vm288, %v166, 0
    %v701 = vsel %vm288, %v167, 0
    %v704 = vsel %vm288, %v168, 0
    %v707 = vsel %vm288, %v169, 0
    %v710 = vsel %vm288, %v170, 0
    %v713 = vsel %vm288, %v171, 0
    %v716 = vsel %vm288, %v172, 0
    %v719 = vsel %vm288, %v173, 0
    %v722 = vsel %vm288, %v174, 0
    %v725 = vsel %vm288, %v175, 0
    %v728 = vsel %vm288, %v176, 0
    %v731 = vsel %vm288, %v177, 0
    %v734 = vsel %vm288, %v178, 0
    %v737 = vsel %vm288, %v179, 0
    %v740 = vsel %vm288, %v180, 0
    %v743 = vsel %vm288, %v181, 0
    %v746 = vsel %vm288, %v182, 0
    %v749 = vsel %vm288, %v183, 0
    %v752 = vsel %vm288, %v184, 0
    %v755 = vsel %vm288, %v185, 0
    %v758 = vsel %vm288, %v186, 0
    %v761 = vsel %vm288, %v187, 0
    %v764 = vsel %vm288, %v188, 0
    %v767 = vsel %vm288, %v189, 0
    %v770 = vsel %vm288, %v190, 0
    %v773 = vsel %vm288, %v191, 0
    %v776 = vsel %vm288, %v192, 0
    %v779 = vsel %vm288, %v193, 0
    %v782 = vsel %vm288, %v194, 0
    %v785 = vsel %vm288, %v195, 0
    %v788 = vsel %vm288, %v196, 0
    %v791 = vsel %vm288, %v197, 0
    %v794 = vsel %vm288, %v198, 0
    %v797 = vsel %vm288, %v199, 0
    %v800 = vsel %vm288, %v200, 0
    %v803 = vsel %vm288, %v201, 0
    %v806 = vsel %vm288, %v202, 0
    %v809 = vsel %vm288, %v203, 0
    %v812 = vsel %vm288, %v204, 0
    %v815 = vsel %vm288, %v205, 0
    %v818 = vsel %vm288, %v206, 0
    %v821 = vsel %vm288, %v207, 0
    %v824 = vsel %vm288, %v208, 0
    %v827 = vsel %vm288, %v209, 0
    %v830 = vsel %vm288, %v210, 0
    %v833 = vsel %vm288, %v211, 0
    %v836 = vsel %vm288, %v212, 0
    %v839 = vsel %vm288, %v213, 0
    %v842 = vsel %vm288, %v214, 0
    %v845 = vsel %vm288, %v215, 0
    %v848 = vsel %vm288, %v216, 0
    %v851 = vsel %vm288, %v217, 0
    %v854 = vsel %vm288, %v218, 0
    %v857 = vsel %vm288, %v219, 0
    %v860 = vsel %vm288, %v220, 0
    %v863 = vsel %vm288, %v221, 0
    %v866 = vsel %vm288, %v222, 0
    %v869 = vsel %vm288, %v223, 0
    %v872 = vsel %vm288, %v224, 0
    %v875 = vsel %vm288, %v225, 0
    %v878 = vsel %vm288, %v226, 0
    %v881 = vsel %vm288, %v227, 0
    %v884 = vsel %vm288, %v228, 0
    %v887 = vsel %vm288, %v229, 0
    %v890 = vsel %vm288, %v230, 0
    %v893 = vsel %vm288, %v231, 0
    %v896 = vsel %vm288, %v232, 0
    %v899 = vsel %vm288, %v233, 0
    %v902 = vsel %vm288, %v234, 0
    %v905 = vsel %vm288, %v235, 0
    %v908 = vsel %vm288, %v236, 0
    %v911 = vsel %vm288, %v237, 0
    %v914 = vsel %vm288, %v238, 0
    %v917 = vsel %vm288, %v239, 0
    %v920 = vsel %vm288, %v240, 0
    %v923 = vsel %vm288, %v241, 0
    %v926 = vsel %vm288, %v242, 0
    %v929 = vsel %vm288, %v243, 0
    %v932 = vsel %vm288, %v244, 0
    %v935 = vsel %vm288, %v245, 0
    %v938 = vsel %vm288, %v246, 0
    %v941 = vsel %vm288, %v247, 0
    %v944 = vsel %vm288, %v248, 0
    %v947 = vsel %vm288, %v249, 0
    %v950 = vsel %vm288, %v250, 0
    %v953 = vsel %vm288, %v251, 0
    %v956 = vsel %vm288, %v252, 0
    %v959 = vsel %vm288, %v253, 0
    %v962 = vsel %vm288, %v254, 0
    %v965 = vsel %vm288, %v255, 0
    %v968 = vsel %vm288, %v256, 0
    %v971 = vsel %vm288, %v257, 0
    %v974 = vsel %vm288, %v258, 0
    %v977 = vsel %vm288, %v259, 0
    %v980 = vsel %vm288, %v260, 0
    %v983 = vsel %vm288, %v261, 0
    %v986 = vsel %vm288, %v262, 0
    %v989 = vsel %vm288, %v263, 0
    %v992 = vsel %vm288, %v264, 0
    %v995 = vsel %vm288, %v265, 0
    %v998 = vsel %vm288, %v266, 0
    %v1001 = vsel %vm288, %v267, 0
    %v1004 = vsel %vm288, %v268, 0
    %v1007 = vsel %vm288, %v269, 0
    %v1010 = vsel %vm288, %v270, 0
    %v1013 = vsel %vm288, %v271, 0
    %v1016 = vsel %vm288, %v272, 0
    %v1019 = vsel %vm288, %v273, 0
    %v1022 = vsel %vm288, %v274, 0
    %v1025 = vsel %vm288, %v275, 0
    %v1028 = vsel %vm288, %v276, 0
    %v1031 = vsel %vm288, %v277, 0
    %v1034 = vsel %vm288, %v278, 0
    %v1037 = vsel %vm288, %v279, 0
    %v1040 = vsel %vm288, %v280, 0
    %v1043 = vsel %vm288, %v281, 0
    %v1046 = vsel %vm288, %v282, 0
    %v1049 = vsel %vm288, %v283, 0
    %v1052 = vsel %vm288, %v284, 0
    %v1055 = vsel %vm288, %v285, 0
    %vm1057 = vcmask 1041408
    %v1059 = vsel %vm1057, %v287, 0
    %1061 = vmatpush.msra.mxu0 0.0
    %1062 = vmatpush.msra.mxu0 0.0
    %1063 = vmatpush.msra.mxu0 0.0
    %1064 = vmatpush.msra.mxu0 0.0
    %1065 = vmatpush.msra.mxu0 0.0
    %1066 = vmatpush.msra.mxu0 0.0
    %1067 = vmatpush.msra.mxu0 0.0
    %1068 = vmatpush.msra.mxu0 0.0
    %1069 = vmatpush.msra.mxu0 0.0
    %1070 = vmatpush.msra.mxu0 0.0
    %1071 = vmatpush.msra.mxu0 0.0
    %1072 = vmatpush.msra.mxu0 0.0
    %1073 = vmatpush.msra.mxu0 0.0
    %1074 = vmatpush.msra.mxu0 0.0
    %1075 = vmatpush.msra.mxu0 %v1059
    %1076 = vmatpush.msra.mxu0 %v286
    %1077 = vmatmul.f32.gmra.mxu0 %v290
    %v1078 = vpop.f32.mrf.mxu0
    %v1079 = vadd.f32 0.0, %v1078
    %1080 = vmatmul.f32.gmra.mxu0 %v293
    %v1081 = vpop.f32.mrf.mxu0
    %v1082 = vadd.f32 0.0, %v1081
    %1083 = vmatmul.f32.gmra.mxu0 %v296
    %v1084 = vpop.f32.mrf.mxu0
    %v1085 = vadd.f32 0.0, %v1084
    %1086 = vmatmul.f32.gmra.mxu0 %v299
    %v1087 = vpop.f32.mrf.mxu0
    %v1088 = vadd.f32 0.0, %v1087
    %1089 = vmatmul.f32.gmra.mxu0 %v302
    %v1090 = vpop.f32.mrf.mxu0
    %v1091 = vadd.f32 0.0, %v1090
    %1092 = vmatmul.f32.gmra.mxu0 %v305
    %v1093 = vpop.f32.mrf.mxu0
    %v1094 = vadd.f32 0.0, %v1093
    %1095 = vmatmul.f32.gmra.mxu0 %v308
    %v1096 = vpop.f32.mrf.mxu0
    %v1097 = vadd.f32 0.0, %v1096
    %1098 = vmatmul.f32.gmra.mxu0 %v311
    %v1099 = vpop.f32.mrf.mxu0
    %v1100 = vadd.f32 0.0, %v1099
    %1101 = vmatmul.f32.gmra.mxu0 %v314
    %v1102 = vpop.f32.mrf.mxu0
    %v1103 = vadd.f32 0.0, %v1102
    %1104 = vmatmul.f32.gmra.mxu0 %v317
    %v1105 = vpop.f32.mrf.mxu0
    %v1106 = vadd.f32 0.0, %v1105
    %1107 = vmatmul.f32.gmra.mxu0 %v320
    %v1108 = vpop.f32.mrf.mxu0
    %v1109 = vadd.f32 0.0, %v1108
    %1110 = vmatmul.f32.gmra.mxu0 %v323
    %v1111 = vpop.f32.mrf.mxu0
    %v1112 = vadd.f32 0.0, %v1111
    %1113 = vmatmul.f32.gmra.mxu0 %v326
    %v1114 = vpop.f32.mrf.mxu0
    %v1115 = vadd.f32 0.0, %v1114
    %1116 = vmatmul.f32.gmra.mxu0 %v329
    %v1117 = vpop.f32.mrf.mxu0
    %v1118 = vadd.f32 0.0, %v1117
    %1119 = vmatmul.f32.gmra.mxu0 %v332
    %v1120 = vpop.f32.mrf.mxu0
    %v1121 = vadd.f32 0.0, %v1120
    %1122 = vmatmul.f32.gmra.mxu0 %v335
    %v1123 = vpop.f32.mrf.mxu0
    %v1124 = vadd.f32 0.0, %v1123
    %1125 = vmatmul.f32.gmra.mxu0 %v338
    %v1126 = vpop.f32.mrf.mxu0
    %v1127 = vadd.f32 0.0, %v1126
    %1128 = vmatmul.f32.gmra.mxu0 %v341
    %v1129 = vpop.f32.mrf.mxu0
    %v1130 = vadd.f32 0.0, %v1129
    %1131 = vmatmul.f32.gmra.mxu0 %v344
    %v1132 = vpop.f32.mrf.mxu0
    %v1133 = vadd.f32 0.0, %v1132
    %1134 = vmatmul.f32.gmra.mxu0 %v347
    %v1135 = vpop.f32.mrf.mxu0
    %v1136 = vadd.f32 0.0, %v1135
    %1137 = vmatmul.f32.gmra.mxu0 %v350
    %v1138 = vpop.f32.mrf.mxu0
    %v1139 = vadd.f32 0.0, %v1138
    %1140 = vmatmul.f32.gmra.mxu0 %v353
    %v1141 = vpop.f32.mrf.mxu0
    %v1142 = vadd.f32 0.0, %v1141
    %1143 = vmatmul.f32.gmra.mxu0 %v356
    %v1144 = vpop.f32.mrf.mxu0
    %v1145 = vadd.f32 0.0, %v1144
    %1146 = vmatmul.f32.gmra.mxu0 %v359
    %v1147 = vpop.f32.mrf.mxu0
    %v1148 = vadd.f32 0.0, %v1147
    %1149 = vmatmul.f32.gmra.mxu0 %v362
    %v1150 = vpop.f32.mrf.mxu0
    %v1151 = vadd.f32 0.0, %v1150
    %1152 = vmatmul.f32.gmra.mxu0 %v365
    %v1153 = vpop.f32.mrf.mxu0
    %v1154 = vadd.f32 0.0, %v1153
    %1155 = vmatmul.f32.gmra.mxu0 %v368
    %v1156 = vpop.f32.mrf.mxu0
    %v1157 = vadd.f32 0.0, %v1156
    %1158 = vmatmul.f32.gmra.mxu0 %v371
    %v1159 = vpop.f32.mrf.mxu0
    %v1160 = vadd.f32 0.0, %v1159
    %1161 = vmatmul.f32.gmra.mxu0 %v374
    %v1162 = vpop.f32.mrf.mxu0
    %v1163 = vadd.f32 0.0, %v1162
    %1164 = vmatmul.f32.gmra.mxu0 %v377
    %v1165 = vpop.f32.mrf.mxu0
    %v1166 = vadd.f32 0.0, %v1165
    %1167 = vmatmul.f32.gmra.mxu0 %v380
    %v1168 = vpop.f32.mrf.mxu0
    %v1169 = vadd.f32 0.0, %v1168
    %1170 = vmatmul.f32.gmra.mxu0 %v383
    %v1171 = vpop.f32.mrf.mxu0
    %v1172 = vadd.f32 0.0, %v1171
    %1173 = vmatmul.f32.gmra.mxu0 %v386
    %v1174 = vpop.f32.mrf.mxu0
    %v1175 = vadd.f32 0.0, %v1174
    %1176 = vmatmul.f32.gmra.mxu0 %v389
    %v1177 = vpop.f32.mrf.mxu0
    %v1178 = vadd.f32 0.0, %v1177
    %1179 = vmatmul.f32.gmra.mxu0 %v392
    %v1180 = vpop.f32.mrf.mxu0
    %v1181 = vadd.f32 0.0, %v1180
    %1182 = vmatmul.f32.gmra.mxu0 %v395
    %v1183 = vpop.f32.mrf.mxu0
    %v1184 = vadd.f32 0.0, %v1183
    %1185 = vmatmul.f32.gmra.mxu0 %v398
    %v1186 = vpop.f32.mrf.mxu0
    %v1187 = vadd.f32 0.0, %v1186
    %1188 = vmatmul.f32.gmra.mxu0 %v401
    %v1189 = vpop.f32.mrf.mxu0
    %v1190 = vadd.f32 0.0, %v1189
    %1191 = vmatmul.f32.gmra.mxu0 %v404
    %v1192 = vpop.f32.mrf.mxu0
    %v1193 = vadd.f32 0.0, %v1192
    %1194 = vmatmul.f32.gmra.mxu0 %v407
    %v1195 = vpop.f32.mrf.mxu0
    %v1196 = vadd.f32 0.0, %v1195
    %1197 = vmatmul.f32.gmra.mxu0 %v410
    %v1198 = vpop.f32.mrf.mxu0
    %v1199 = vadd.f32 0.0, %v1198
    %1200 = vmatmul.f32.gmra.mxu0 %v413
    %v1201 = vpop.f32.mrf.mxu0
    %v1202 = vadd.f32 0.0, %v1201
    %1203 = vmatmul.f32.gmra.mxu0 %v416
    %v1204 = vpop.f32.mrf.mxu0
    %v1205 = vadd.f32 0.0, %v1204
    %1206 = vmatmul.f32.gmra.mxu0 %v419
    %v1207 = vpop.f32.mrf.mxu0
    %v1208 = vadd.f32 0.0, %v1207
    %1209 = vmatmul.f32.gmra.mxu0 %v422
    %v1210 = vpop.f32.mrf.mxu0
    %v1211 = vadd.f32 0.0, %v1210
    %1212 = vmatmul.f32.gmra.mxu0 %v425
    %v1213 = vpop.f32.mrf.mxu0
    %v1214 = vadd.f32 0.0, %v1213
    %1215 = vmatmul.f32.gmra.mxu0 %v428
    %v1216 = vpop.f32.mrf.mxu0
    %v1217 = vadd.f32 0.0, %v1216
    %1218 = vmatmul.f32.gmra.mxu0 %v431
    %v1219 = vpop.f32.mrf.mxu0
    %v1220 = vadd.f32 0.0, %v1219
    %1221 = vmatmul.f32.gmra.mxu0 %v434
    %v1222 = vpop.f32.mrf.mxu0
    %v1223 = vadd.f32 0.0, %v1222
    %1224 = vmatmul.f32.gmra.mxu0 %v437
    %v1225 = vpop.f32.mrf.mxu0
    %v1226 = vadd.f32 0.0, %v1225
    %1227 = vmatmul.f32.gmra.mxu0 %v440
    %v1228 = vpop.f32.mrf.mxu0
    %v1229 = vadd.f32 0.0, %v1228
    %1230 = vmatmul.f32.gmra.mxu0 %v443
    %v1231 = vpop.f32.mrf.mxu0
    %v1232 = vadd.f32 0.0, %v1231
    %1233 = vmatmul.f32.gmra.mxu0 %v446
    %v1234 = vpop.f32.mrf.mxu0
    %v1235 = vadd.f32 0.0, %v1234
    %1236 = vmatmul.f32.gmra.mxu0 %v449
    %v1237 = vpop.f32.mrf.mxu0
    %v1238 = vadd.f32 0.0, %v1237
    %1239 = vmatmul.f32.gmra.mxu0 %v452
    %v1240 = vpop.f32.mrf.mxu0
    %v1241 = vadd.f32 0.0, %v1240
    %1242 = vmatmul.f32.gmra.mxu0 %v455
    %v1243 = vpop.f32.mrf.mxu0
    %v1244 = vadd.f32 0.0, %v1243
    %1245 = vmatmul.f32.gmra.mxu0 %v458
    %v1246 = vpop.f32.mrf.mxu0
    %v1247 = vadd.f32 0.0, %v1246
    %1248 = vmatmul.f32.gmra.mxu0 %v461
    %v1249 = vpop.f32.mrf.mxu0
    %v1250 = vadd.f32 0.0, %v1249
    %1251 = vmatmul.f32.gmra.mxu0 %v464
    %v1252 = vpop.f32.mrf.mxu0
    %v1253 = vadd.f32 0.0, %v1252
    %1254 = vmatmul.f32.gmra.mxu0 %v467
    %v1255 = vpop.f32.mrf.mxu0
    %v1256 = vadd.f32 0.0, %v1255
    %1257 = vmatmul.f32.gmra.mxu0 %v470
    %v1258 = vpop.f32.mrf.mxu0
    %v1259 = vadd.f32 0.0, %v1258
    %1260 = vmatmul.f32.gmra.mxu0 %v473
    %v1261 = vpop.f32.mrf.mxu0
    %v1262 = vadd.f32 0.0, %v1261
    %1263 = vmatmul.f32.gmra.mxu0 %v476
    %v1264 = vpop.f32.mrf.mxu0
    %v1265 = vadd.f32 0.0, %v1264
    %1266 = vmatmul.f32.gmra.mxu0 %v479
    %v1267 = vpop.f32.mrf.mxu0
    %v1268 = vadd.f32 0.0, %v1267
    %1269 = vmatmul.f32.gmra.mxu0 %v482
    %v1270 = vpop.f32.mrf.mxu0
    %v1271 = vadd.f32 0.0, %v1270
    %1272 = vmatmul.f32.gmra.mxu0 %v485
    %v1273 = vpop.f32.mrf.mxu0
    %v1274 = vadd.f32 0.0, %v1273
    %1275 = vmatmul.f32.gmra.mxu0 %v488
    %v1276 = vpop.f32.mrf.mxu0
    %v1277 = vadd.f32 0.0, %v1276
    %1278 = vmatmul.f32.gmra.mxu0 %v491
    %v1279 = vpop.f32.mrf.mxu0
    %v1280 = vadd.f32 0.0, %v1279
    %1281 = vmatmul.f32.gmra.mxu0 %v494
    %v1282 = vpop.f32.mrf.mxu0
    %v1283 = vadd.f32 0.0, %v1282
    %1284 = vmatmul.f32.gmra.mxu0 %v497
    %v1285 = vpop.f32.mrf.mxu0
    %v1286 = vadd.f32 0.0, %v1285
    %1287 = vmatmul.f32.gmra.mxu0 %v500
    %v1288 = vpop.f32.mrf.mxu0
    %v1289 = vadd.f32 0.0, %v1288
    %1290 = vmatmul.f32.gmra.mxu0 %v503
    %v1291 = vpop.f32.mrf.mxu0
    %v1292 = vadd.f32 0.0, %v1291
    %1293 = vmatmul.f32.gmra.mxu0 %v506
    %v1294 = vpop.f32.mrf.mxu0
    %v1295 = vadd.f32 0.0, %v1294
    %1296 = vmatmul.f32.gmra.mxu0 %v509
    %v1297 = vpop.f32.mrf.mxu0
    %v1298 = vadd.f32 0.0, %v1297
    %1299 = vmatmul.f32.gmra.mxu0 %v512
    %v1300 = vpop.f32.mrf.mxu0
    %v1301 = vadd.f32 0.0, %v1300
    %1302 = vmatmul.f32.gmra.mxu0 %v515
    %v1303 = vpop.f32.mrf.mxu0
    %v1304 = vadd.f32 0.0, %v1303
    %1305 = vmatmul.f32.gmra.mxu0 %v518
    %v1306 = vpop.f32.mrf.mxu0
    %v1307 = vadd.f32 0.0, %v1306
    %1308 = vmatmul.f32.gmra.mxu0 %v521
    %v1309 = vpop.f32.mrf.mxu0
    %v1310 = vadd.f32 0.0, %v1309
    %1311 = vmatmul.f32.gmra.mxu0 %v524
    %v1312 = vpop.f32.mrf.mxu0
    %v1313 = vadd.f32 0.0, %v1312
    %1314 = vmatmul.f32.gmra.mxu0 %v527
    %v1315 = vpop.f32.mrf.mxu0
    %v1316 = vadd.f32 0.0, %v1315
    %1317 = vmatmul.f32.gmra.mxu0 %v530
    %v1318 = vpop.f32.mrf.mxu0
    %v1319 = vadd.f32 0.0, %v1318
    %1320 = vmatmul.f32.gmra.mxu0 %v533
    %v1321 = vpop.f32.mrf.mxu0
    %v1322 = vadd.f32 0.0, %v1321
    %1323 = vmatmul.f32.gmra.mxu0 %v536
    %v1324 = vpop.f32.mrf.mxu0
    %v1325 = vadd.f32 0.0, %v1324
    %1326 = vmatmul.f32.gmra.mxu0 %v539
    %v1327 = vpop.f32.mrf.mxu0
    %v1328 = vadd.f32 0.0, %v1327
    %1329 = vmatmul.f32.gmra.mxu0 %v542
    %v1330 = vpop.f32.mrf.mxu0
    %v1331 = vadd.f32 0.0, %v1330
    %1332 = vmatmul.f32.gmra.mxu0 %v545
    %v1333 = vpop.f32.mrf.mxu0
    %v1334 = vadd.f32 0.0, %v1333
    %1335 = vmatmul.f32.gmra.mxu0 %v548
    %v1336 = vpop.f32.mrf.mxu0
    %v1337 = vadd.f32 0.0, %v1336
    %1338 = vmatmul.f32.gmra.mxu0 %v551
    %v1339 = vpop.f32.mrf.mxu0
    %v1340 = vadd.f32 0.0, %v1339
    %1341 = vmatmul.f32.gmra.mxu0 %v554
    %v1342 = vpop.f32.mrf.mxu0
    %v1343 = vadd.f32 0.0, %v1342
    %1344 = vmatmul.f32.gmra.mxu0 %v557
    %v1345 = vpop.f32.mrf.mxu0
    %v1346 = vadd.f32 0.0, %v1345
    %1347 = vmatmul.f32.gmra.mxu0 %v560
    %v1348 = vpop.f32.mrf.mxu0
    %v1349 = vadd.f32 0.0, %v1348
    %1350 = vmatmul.f32.gmra.mxu0 %v563
    %v1351 = vpop.f32.mrf.mxu0
    %v1352 = vadd.f32 0.0, %v1351
    %1353 = vmatmul.f32.gmra.mxu0 %v566
    %v1354 = vpop.f32.mrf.mxu0
    %v1355 = vadd.f32 0.0, %v1354
    %1356 = vmatmul.f32.gmra.mxu0 %v569
    %v1357 = vpop.f32.mrf.mxu0
    %v1358 = vadd.f32 0.0, %v1357
    %1359 = vmatmul.f32.gmra.mxu0 %v572
    %v1360 = vpop.f32.mrf.mxu0
    %v1361 = vadd.f32 0.0, %v1360
    %1362 = vmatmul.f32.gmra.mxu0 %v575
    %v1363 = vpop.f32.mrf.mxu0
    %v1364 = vadd.f32 0.0, %v1363
    %1365 = vmatmul.f32.gmra.mxu0 %v578
    %v1366 = vpop.f32.mrf.mxu0
    %v1367 = vadd.f32 0.0, %v1366
    %1368 = vmatmul.f32.gmra.mxu0 %v581
    %v1369 = vpop.f32.mrf.mxu0
    %v1370 = vadd.f32 0.0, %v1369
    %1371 = vmatmul.f32.gmra.mxu0 %v584
    %v1372 = vpop.f32.mrf.mxu0
    %v1373 = vadd.f32 0.0, %v1372
    %1374 = vmatmul.f32.gmra.mxu0 %v587
    %v1375 = vpop.f32.mrf.mxu0
    %v1376 = vadd.f32 0.0, %v1375
    %1377 = vmatmul.f32.gmra.mxu0 %v590
    %v1378 = vpop.f32.mrf.mxu0
    %v1379 = vadd.f32 0.0, %v1378
    %1380 = vmatmul.f32.gmra.mxu0 %v593
    %v1381 = vpop.f32.mrf.mxu0
    %v1382 = vadd.f32 0.0, %v1381
    %1383 = vmatmul.f32.gmra.mxu0 %v596
    %v1384 = vpop.f32.mrf.mxu0
    %v1385 = vadd.f32 0.0, %v1384
    %1386 = vmatmul.f32.gmra.mxu0 %v599
    %v1387 = vpop.f32.mrf.mxu0
    %v1388 = vadd.f32 0.0, %v1387
    %1389 = vmatmul.f32.gmra.mxu0 %v602
    %v1390 = vpop.f32.mrf.mxu0
    %v1391 = vadd.f32 0.0, %v1390
    %1392 = vmatmul.f32.gmra.mxu0 %v605
    %v1393 = vpop.f32.mrf.mxu0
    %v1394 = vadd.f32 0.0, %v1393
    %1395 = vmatmul.f32.gmra.mxu0 %v608
    %v1396 = vpop.f32.mrf.mxu0
    %v1397 = vadd.f32 0.0, %v1396
    %1398 = vmatmul.f32.gmra.mxu0 %v611
    %v1399 = vpop.f32.mrf.mxu0
    %v1400 = vadd.f32 0.0, %v1399
    %1401 = vmatmul.f32.gmra.mxu0 %v614
    %v1402 = vpop.f32.mrf.mxu0
    %v1403 = vadd.f32 0.0, %v1402
    %1404 = vmatmul.f32.gmra.mxu0 %v617
    %v1405 = vpop.f32.mrf.mxu0
    %v1406 = vadd.f32 0.0, %v1405
    %1407 = vmatmul.f32.gmra.mxu0 %v620
    %v1408 = vpop.f32.mrf.mxu0
    %v1409 = vadd.f32 0.0, %v1408
    %1410 = vmatmul.f32.gmra.mxu0 %v623
    %v1411 = vpop.f32.mrf.mxu0
    %v1412 = vadd.f32 0.0, %v1411
    %1413 = vmatmul.f32.gmra.mxu0 %v626
    %v1414 = vpop.f32.mrf.mxu0
    %v1415 = vadd.f32 0.0, %v1414
    %1416 = vmatmul.f32.gmra.mxu0 %v629
    %v1417 = vpop.f32.mrf.mxu0
    %v1418 = vadd.f32 0.0, %v1417
    %1419 = vmatmul.f32.gmra.mxu0 %v632
    %v1420 = vpop.f32.mrf.mxu0
    %v1421 = vadd.f32 0.0, %v1420
    %1422 = vmatmul.f32.gmra.mxu0 %v635
    %v1423 = vpop.f32.mrf.mxu0
    %v1424 = vadd.f32 0.0, %v1423
    %1425 = vmatmul.f32.gmra.mxu0 %v638
    %v1426 = vpop.f32.mrf.mxu0
    %v1427 = vadd.f32 0.0, %v1426
    %1428 = vmatmul.f32.gmra.mxu0 %v641
    %v1429 = vpop.f32.mrf.mxu0
    %v1430 = vadd.f32 0.0, %v1429
    %1431 = vmatmul.f32.gmra.mxu0 %v644
    %v1432 = vpop.f32.mrf.mxu0
    %v1433 = vadd.f32 0.0, %v1432
    %1434 = vmatmul.f32.gmra.mxu0 %v647
    %v1435 = vpop.f32.mrf.mxu0
    %v1436 = vadd.f32 0.0, %v1435
    %1437 = vmatmul.f32.gmra.mxu0 %v650
    %v1438 = vpop.f32.mrf.mxu0
    %v1439 = vadd.f32 0.0, %v1438
    %1440 = vmatmul.f32.gmra.mxu0 %v653
    %v1441 = vpop.f32.mrf.mxu0
    %v1442 = vadd.f32 0.0, %v1441
    %1443 = vmatmul.f32.gmra.mxu0 %v656
    %v1444 = vpop.f32.mrf.mxu0
    %v1445 = vadd.f32 0.0, %v1444
    %1446 = vmatmul.f32.gmra.mxu0 %v659
    %v1447 = vpop.f32.mrf.mxu0
    %v1448 = vadd.f32 0.0, %v1447
    %1449 = vmatmul.f32.gmra.mxu0 %v662
    %v1450 = vpop.f32.mrf.mxu0
    %v1451 = vadd.f32 0.0, %v1450
    %1452 = vmatmul.f32.gmra.mxu0 %v665
    %v1453 = vpop.f32.mrf.mxu0
    %v1454 = vadd.f32 0.0, %v1453
    %1455 = vmatmul.f32.gmra.mxu0 %v668
    %v1456 = vpop.f32.mrf.mxu0
    %v1457 = vadd.f32 0.0, %v1456
    %1458 = vmatmul.f32.gmra.mxu0 %v671
    %v1459 = vpop.f32.mrf.mxu0
    %v1460 = vadd.f32 0.0, %v1459
    %1461 = vmatmul.f32.gmra.mxu0 %v674
    %v1462 = vpop.f32.mrf.mxu0
    %v1463 = vadd.f32 0.0, %v1462
    %1464 = vmatmul.f32.gmra.mxu0 %v677
    %v1465 = vpop.f32.mrf.mxu0
    %v1466 = vadd.f32 0.0, %v1465
    %1467 = vmatmul.f32.gmra.mxu0 %v680
    %v1468 = vpop.f32.mrf.mxu0
    %v1469 = vadd.f32 0.0, %v1468
    %1470 = vmatmul.f32.gmra.mxu0 %v683
    %v1471 = vpop.f32.mrf.mxu0
    %v1472 = vadd.f32 0.0, %v1471
    %1473 = vmatmul.f32.gmra.mxu0 %v686
    %v1474 = vpop.f32.mrf.mxu0
    %v1475 = vadd.f32 0.0, %v1474
    %1476 = vmatmul.f32.gmra.mxu0 %v689
    %v1477 = vpop.f32.mrf.mxu0
    %v1478 = vadd.f32 0.0, %v1477
    %1479 = vmatmul.f32.gmra.mxu0 %v692
    %v1480 = vpop.f32.mrf.mxu0
    %v1481 = vadd.f32 0.0, %v1480
    %1482 = vmatmul.f32.gmra.mxu0 %v695
    %v1483 = vpop.f32.mrf.mxu0
    %v1484 = vadd.f32 0.0, %v1483
    %1485 = vmatmul.f32.gmra.mxu0 %v698
    %v1486 = vpop.f32.mrf.mxu0
    %v1487 = vadd.f32 0.0, %v1486
    %1488 = vmatmul.f32.gmra.mxu0 %v701
    %v1489 = vpop.f32.mrf.mxu0
    %v1490 = vadd.f32 0.0, %v1489
    %1491 = vmatmul.f32.gmra.mxu0 %v704
    %v1492 = vpop.f32.mrf.mxu0
    %v1493 = vadd.f32 0.0, %v1492
    %1494 = vmatmul.f32.gmra.mxu0 %v707
    %v1495 = vpop.f32.mrf.mxu0
    %v1496 = vadd.f32 0.0, %v1495
    %1497 = vmatmul.f32.gmra.mxu0 %v710
    %v1498 = vpop.f32.mrf.mxu0
    %v1499 = vadd.f32 0.0, %v1498
    %1500 = vmatmul.f32.gmra.mxu0 %v713
    %v1501 = vpop.f32.mrf.mxu0
    %v1502 = vadd.f32 0.0, %v1501
    %1503 = vmatmul.f32.gmra.mxu0 %v716
    %v1504 = vpop.f32.mrf.mxu0
    %v1505 = vadd.f32 0.0, %v1504
    %1506 = vmatmul.f32.gmra.mxu0 %v719
    %v1507 = vpop.f32.mrf.mxu0
    %v1508 = vadd.f32 0.0, %v1507
    %1509 = vmatmul.f32.gmra.mxu0 %v722
    %v1510 = vpop.f32.mrf.mxu0
    %v1511 = vadd.f32 0.0, %v1510
    %1512 = vmatmul.f32.gmra.mxu0 %v725
    %v1513 = vpop.f32.mrf.mxu0
    %v1514 = vadd.f32 0.0, %v1513
    %1515 = vmatmul.f32.gmra.mxu0 %v728
    %v1516 = vpop.f32.mrf.mxu0
    %v1517 = vadd.f32 0.0, %v1516
    %1518 = vmatmul.f32.gmra.mxu0 %v731
    %v1519 = vpop.f32.mrf.mxu0
    %v1520 = vadd.f32 0.0, %v1519
    %1521 = vmatmul.f32.gmra.mxu0 %v734
    %v1522 = vpop.f32.mrf.mxu0
    %v1523 = vadd.f32 0.0, %v1522
    %1524 = vmatmul.f32.gmra.mxu0 %v737
    %v1525 = vpop.f32.mrf.mxu0
    %v1526 = vadd.f32 0.0, %v1525
    %1527 = vmatmul.f32.gmra.mxu0 %v740
    %v1528 = vpop.f32.mrf.mxu0
    %v1529 = vadd.f32 0.0, %v1528
    %1530 = vmatmul.f32.gmra.mxu0 %v743
    %v1531 = vpop.f32.mrf.mxu0
    %v1532 = vadd.f32 0.0, %v1531
    %1533 = vmatmul.f32.gmra.mxu0 %v746
    %v1534 = vpop.f32.mrf.mxu0
    %v1535 = vadd.f32 0.0, %v1534
    %1536 = vmatmul.f32.gmra.mxu0 %v749
    %v1537 = vpop.f32.mrf.mxu0
    %v1538 = vadd.f32 0.0, %v1537
    %1539 = vmatmul.f32.gmra.mxu0 %v752
    %v1540 = vpop.f32.mrf.mxu0
    %v1541 = vadd.f32 0.0, %v1540
    %1542 = vmatmul.f32.gmra.mxu0 %v755
    %v1543 = vpop.f32.mrf.mxu0
    %v1544 = vadd.f32 0.0, %v1543
    %1545 = vmatmul.f32.gmra.mxu0 %v758
    %v1546 = vpop.f32.mrf.mxu0
    %v1547 = vadd.f32 0.0, %v1546
    %1548 = vmatmul.f32.gmra.mxu0 %v761
    %v1549 = vpop.f32.mrf.mxu0
    %v1550 = vadd.f32 0.0, %v1549
    %1551 = vmatmul.f32.gmra.mxu0 %v764
    %v1552 = vpop.f32.mrf.mxu0
    %v1553 = vadd.f32 0.0, %v1552
    %1554 = vmatmul.f32.gmra.mxu0 %v767
    %v1555 = vpop.f32.mrf.mxu0
    %v1556 = vadd.f32 0.0, %v1555
    %1557 = vmatmul.f32.gmra.mxu0 %v770
    %v1558 = vpop.f32.mrf.mxu0
    %v1559 = vadd.f32 0.0, %v1558
    %1560 = vmatmul.f32.gmra.mxu0 %v773
    %v1561 = vpop.f32.mrf.mxu0
    %v1562 = vadd.f32 0.0, %v1561
    %1563 = vmatmul.f32.gmra.mxu0 %v776
    %v1564 = vpop.f32.mrf.mxu0
    %v1565 = vadd.f32 0.0, %v1564
    %1566 = vmatmul.f32.gmra.mxu0 %v779
    %v1567 = vpop.f32.mrf.mxu0
    %v1568 = vadd.f32 0.0, %v1567
    %1569 = vmatmul.f32.gmra.mxu0 %v782
    %v1570 = vpop.f32.mrf.mxu0
    %v1571 = vadd.f32 0.0, %v1570
    %1572 = vmatmul.f32.gmra.mxu0 %v785
    %v1573 = vpop.f32.mrf.mxu0
    %v1574 = vadd.f32 0.0, %v1573
    %1575 = vmatmul.f32.gmra.mxu0 %v788
    %v1576 = vpop.f32.mrf.mxu0
    %v1577 = vadd.f32 0.0, %v1576
    %1578 = vmatmul.f32.gmra.mxu0 %v791
    %v1579 = vpop.f32.mrf.mxu0
    %v1580 = vadd.f32 0.0, %v1579
    %1581 = vmatmul.f32.gmra.mxu0 %v794
    %v1582 = vpop.f32.mrf.mxu0
    %v1583 = vadd.f32 0.0, %v1582
    %1584 = vmatmul.f32.gmra.mxu0 %v797
    %v1585 = vpop.f32.mrf.mxu0
    %v1586 = vadd.f32 0.0, %v1585
    %1587 = vmatmul.f32.gmra.mxu0 %v800
    %v1588 = vpop.f32.mrf.mxu0
    %v1589 = vadd.f32 0.0, %v1588
    %1590 = vmatmul.f32.gmra.mxu0 %v803
    %v1591 = vpop.f32.mrf.mxu0
    %v1592 = vadd.f32 0.0, %v1591
    %1593 = vmatmul.f32.gmra.mxu0 %v806
    %v1594 = vpop.f32.mrf.mxu0
    %v1595 = vadd.f32 0.0, %v1594
    %1596 = vmatmul.f32.gmra.mxu0 %v809
    %v1597 = vpop.f32.mrf.mxu0
    %v1598 = vadd.f32 0.0, %v1597
    %1599 = vmatmul.f32.gmra.mxu0 %v812
    %v1600 = vpop.f32.mrf.mxu0
    %v1601 = vadd.f32 0.0, %v1600
    %1602 = vmatmul.f32.gmra.mxu0 %v815
    %v1603 = vpop.f32.mrf.mxu0
    %v1604 = vadd.f32 0.0, %v1603
    %1605 = vmatmul.f32.gmra.mxu0 %v818
    %v1606 = vpop.f32.mrf.mxu0
    %v1607 = vadd.f32 0.0, %v1606
    %1608 = vmatmul.f32.gmra.mxu0 %v821
    %v1609 = vpop.f32.mrf.mxu0
    %v1610 = vadd.f32 0.0, %v1609
    %1611 = vmatmul.f32.gmra.mxu0 %v824
    %v1612 = vpop.f32.mrf.mxu0
    %v1613 = vadd.f32 0.0, %v1612
    %1614 = vmatmul.f32.gmra.mxu0 %v827
    %v1615 = vpop.f32.mrf.mxu0
    %v1616 = vadd.f32 0.0, %v1615
    %1617 = vmatmul.f32.gmra.mxu0 %v830
    %v1618 = vpop.f32.mrf.mxu0
    %v1619 = vadd.f32 0.0, %v1618
    %1620 = vmatmul.f32.gmra.mxu0 %v833
    %v1621 = vpop.f32.mrf.mxu0
    %v1622 = vadd.f32 0.0, %v1621
    %1623 = vmatmul.f32.gmra.mxu0 %v836
    %v1624 = vpop.f32.mrf.mxu0
    %v1625 = vadd.f32 0.0, %v1624
    %1626 = vmatmul.f32.gmra.mxu0 %v839
    %v1627 = vpop.f32.mrf.mxu0
    %v1628 = vadd.f32 0.0, %v1627
    %1629 = vmatmul.f32.gmra.mxu0 %v842
    %v1630 = vpop.f32.mrf.mxu0
    %v1631 = vadd.f32 0.0, %v1630
    %1632 = vmatmul.f32.gmra.mxu0 %v845
    %v1633 = vpop.f32.mrf.mxu0
    %v1634 = vadd.f32 0.0, %v1633
    %1635 = vmatmul.f32.gmra.mxu0 %v848
    %v1636 = vpop.f32.mrf.mxu0
    %v1637 = vadd.f32 0.0, %v1636
    %1638 = vmatmul.f32.gmra.mxu0 %v851
    %v1639 = vpop.f32.mrf.mxu0
    %v1640 = vadd.f32 0.0, %v1639
    %1641 = vmatmul.f32.gmra.mxu0 %v854
    %v1642 = vpop.f32.mrf.mxu0
    %v1643 = vadd.f32 0.0, %v1642
    %1644 = vmatmul.f32.gmra.mxu0 %v857
    %v1645 = vpop.f32.mrf.mxu0
    %v1646 = vadd.f32 0.0, %v1645
    %1647 = vmatmul.f32.gmra.mxu0 %v860
    %v1648 = vpop.f32.mrf.mxu0
    %v1649 = vadd.f32 0.0, %v1648
    %1650 = vmatmul.f32.gmra.mxu0 %v863
    %v1651 = vpop.f32.mrf.mxu0
    %v1652 = vadd.f32 0.0, %v1651
    %1653 = vmatmul.f32.gmra.mxu0 %v866
    %v1654 = vpop.f32.mrf.mxu0
    %v1655 = vadd.f32 0.0, %v1654
    %1656 = vmatmul.f32.gmra.mxu0 %v869
    %v1657 = vpop.f32.mrf.mxu0
    %v1658 = vadd.f32 0.0, %v1657
    %1659 = vmatmul.f32.gmra.mxu0 %v872
    %v1660 = vpop.f32.mrf.mxu0
    %v1661 = vadd.f32 0.0, %v1660
    %1662 = vmatmul.f32.gmra.mxu0 %v875
    %v1663 = vpop.f32.mrf.mxu0
    %v1664 = vadd.f32 0.0, %v1663
    %1665 = vmatmul.f32.gmra.mxu0 %v878
    %v1666 = vpop.f32.mrf.mxu0
    %v1667 = vadd.f32 0.0, %v1666
    %1668 = vmatmul.f32.gmra.mxu0 %v881
    %v1669 = vpop.f32.mrf.mxu0
    %v1670 = vadd.f32 0.0, %v1669
    %1671 = vmatmul.f32.gmra.mxu0 %v884
    %v1672 = vpop.f32.mrf.mxu0
    %v1673 = vadd.f32 0.0, %v1672
    %1674 = vmatmul.f32.gmra.mxu0 %v887
    %v1675 = vpop.f32.mrf.mxu0
    %v1676 = vadd.f32 0.0, %v1675
    %1677 = vmatmul.f32.gmra.mxu0 %v890
    %v1678 = vpop.f32.mrf.mxu0
    %v1679 = vadd.f32 0.0, %v1678
    %1680 = vmatmul.f32.gmra.mxu0 %v893
    %v1681 = vpop.f32.mrf.mxu0
    %v1682 = vadd.f32 0.0, %v1681
    %1683 = vmatmul.f32.gmra.mxu0 %v896
    %v1684 = vpop.f32.mrf.mxu0
    %v1685 = vadd.f32 0.0, %v1684
    %1686 = vmatmul.f32.gmra.mxu0 %v899
    %v1687 = vpop.f32.mrf.mxu0
    %v1688 = vadd.f32 0.0, %v1687
    %1689 = vmatmul.f32.gmra.mxu0 %v902
    %v1690 = vpop.f32.mrf.mxu0
    %v1691 = vadd.f32 0.0, %v1690
    %1692 = vmatmul.f32.gmra.mxu0 %v905
    %v1693 = vpop.f32.mrf.mxu0
    %v1694 = vadd.f32 0.0, %v1693
    %1695 = vmatmul.f32.gmra.mxu0 %v908
    %v1696 = vpop.f32.mrf.mxu0
    %v1697 = vadd.f32 0.0, %v1696
    %1698 = vmatmul.f32.gmra.mxu0 %v911
    %v1699 = vpop.f32.mrf.mxu0
    %v1700 = vadd.f32 0.0, %v1699
    %1701 = vmatmul.f32.gmra.mxu0 %v914
    %v1702 = vpop.f32.mrf.mxu0
    %v1703 = vadd.f32 0.0, %v1702
    %1704 = vmatmul.f32.gmra.mxu0 %v917
    %v1705 = vpop.f32.mrf.mxu0
    %v1706 = vadd.f32 0.0, %v1705
    %1707 = vmatmul.f32.gmra.mxu0 %v920
    %v1708 = vpop.f32.mrf.mxu0
    %v1709 = vadd.f32 0.0, %v1708
    %1710 = vmatmul.f32.gmra.mxu0 %v923
    %v1711 = vpop.f32.mrf.mxu0
    %v1712 = vadd.f32 0.0, %v1711
    %1713 = vmatmul.f32.gmra.mxu0 %v926
    %v1714 = vpop.f32.mrf.mxu0
    %v1715 = vadd.f32 0.0, %v1714
    %1716 = vmatmul.f32.gmra.mxu0 %v929
    %v1717 = vpop.f32.mrf.mxu0
    %v1718 = vadd.f32 0.0, %v1717
    %1719 = vmatmul.f32.gmra.mxu0 %v932
    %v1720 = vpop.f32.mrf.mxu0
    %v1721 = vadd.f32 0.0, %v1720
    %1722 = vmatmul.f32.gmra.mxu0 %v935
    %v1723 = vpop.f32.mrf.mxu0
    %v1724 = vadd.f32 0.0, %v1723
    %1725 = vmatmul.f32.gmra.mxu0 %v938
    %v1726 = vpop.f32.mrf.mxu0
    %v1727 = vadd.f32 0.0, %v1726
    %1728 = vmatmul.f32.gmra.mxu0 %v941
    %v1729 = vpop.f32.mrf.mxu0
    %v1730 = vadd.f32 0.0, %v1729
    %1731 = vmatmul.f32.gmra.mxu0 %v944
    %v1732 = vpop.f32.mrf.mxu0
    %v1733 = vadd.f32 0.0, %v1732
    %1734 = vmatmul.f32.gmra.mxu0 %v947
    %v1735 = vpop.f32.mrf.mxu0
    %v1736 = vadd.f32 0.0, %v1735
    %1737 = vmatmul.f32.gmra.mxu0 %v950
    %v1738 = vpop.f32.mrf.mxu0
    %v1739 = vadd.f32 0.0, %v1738
    %1740 = vmatmul.f32.gmra.mxu0 %v953
    %v1741 = vpop.f32.mrf.mxu0
    %v1742 = vadd.f32 0.0, %v1741
    %1743 = vmatmul.f32.gmra.mxu0 %v956
    %v1744 = vpop.f32.mrf.mxu0
    %v1745 = vadd.f32 0.0, %v1744
    %1746 = vmatmul.f32.gmra.mxu0 %v959
    %v1747 = vpop.f32.mrf.mxu0
    %v1748 = vadd.f32 0.0, %v1747
    %1749 = vmatmul.f32.gmra.mxu0 %v962
    %v1750 = vpop.f32.mrf.mxu0
    %v1751 = vadd.f32 0.0, %v1750
    %1752 = vmatmul.f32.gmra.mxu0 %v965
    %v1753 = vpop.f32.mrf.mxu0
    %v1754 = vadd.f32 0.0, %v1753
    %1755 = vmatmul.f32.gmra.mxu0 %v968
    %v1756 = vpop.f32.mrf.mxu0
    %v1757 = vadd.f32 0.0, %v1756
    %1758 = vmatmul.f32.gmra.mxu0 %v971
    %v1759 = vpop.f32.mrf.mxu0
    %v1760 = vadd.f32 0.0, %v1759
    %1761 = vmatmul.f32.gmra.mxu0 %v974
    %v1762 = vpop.f32.mrf.mxu0
    %v1763 = vadd.f32 0.0, %v1762
    %1764 = vmatmul.f32.gmra.mxu0 %v977
    %v1765 = vpop.f32.mrf.mxu0
    %v1766 = vadd.f32 0.0, %v1765
    %1767 = vmatmul.f32.gmra.mxu0 %v980
    %v1768 = vpop.f32.mrf.mxu0
    %v1769 = vadd.f32 0.0, %v1768
    %1770 = vmatmul.f32.gmra.mxu0 %v983
    %v1771 = vpop.f32.mrf.mxu0
    %v1772 = vadd.f32 0.0, %v1771
    %1773 = vmatmul.f32.gmra.mxu0 %v986
    %v1774 = vpop.f32.mrf.mxu0
    %v1775 = vadd.f32 0.0, %v1774
    %1776 = vmatmul.f32.gmra.mxu0 %v989
    %v1777 = vpop.f32.mrf.mxu0
    %v1778 = vadd.f32 0.0, %v1777
    %1779 = vmatmul.f32.gmra.mxu0 %v992
    %v1780 = vpop.f32.mrf.mxu0
    %v1781 = vadd.f32 0.0, %v1780
    %1782 = vmatmul.f32.gmra.mxu0 %v995
    %v1783 = vpop.f32.mrf.mxu0
    %v1784 = vadd.f32 0.0, %v1783
    %1785 = vmatmul.f32.gmra.mxu0 %v998
    %v1786 = vpop.f32.mrf.mxu0
    %v1787 = vadd.f32 0.0, %v1786
    %1788 = vmatmul.f32.gmra.mxu0 %v1001
    %v1789 = vpop.f32.mrf.mxu0
    %v1790 = vadd.f32 0.0, %v1789
    %1791 = vmatmul.f32.gmra.mxu0 %v1004
    %v1792 = vpop.f32.mrf.mxu0
    %v1793 = vadd.f32 0.0, %v1792
    %1794 = vmatmul.f32.gmra.mxu0 %v1007
    %v1795 = vpop.f32.mrf.mxu0
    %v1796 = vadd.f32 0.0, %v1795
    %1797 = vmatmul.f32.gmra.mxu0 %v1010
    %v1798 = vpop.f32.mrf.mxu0
    %v1799 = vadd.f32 0.0, %v1798
    %1800 = vmatmul.f32.gmra.mxu0 %v1013
    %v1801 = vpop.f32.mrf.mxu0
    %v1802 = vadd.f32 0.0, %v1801
    %1803 = vmatmul.f32.gmra.mxu0 %v1016
    %v1804 = vpop.f32.mrf.mxu0
    %v1805 = vadd.f32 0.0, %v1804
    %1806 = vmatmul.f32.gmra.mxu0 %v1019
    %v1807 = vpop.f32.mrf.mxu0
    %v1808 = vadd.f32 0.0, %v1807
    %1809 = vmatmul.f32.gmra.mxu0 %v1022
    %v1810 = vpop.f32.mrf.mxu0
    %v1811 = vadd.f32 0.0, %v1810
    %1812 = vmatmul.f32.gmra.mxu0 %v1025
    %v1813 = vpop.f32.mrf.mxu0
    %v1814 = vadd.f32 0.0, %v1813
    %1815 = vmatmul.f32.gmra.mxu0 %v1028
    %v1816 = vpop.f32.mrf.mxu0
    %v1817 = vadd.f32 0.0, %v1816
    %1818 = vmatmul.f32.gmra.mxu0 %v1031
    %v1819 = vpop.f32.mrf.mxu0
    %v1820 = vadd.f32 0.0, %v1819
    %1821 = vmatmul.f32.gmra.mxu0 %v1034
    %v1822 = vpop.f32.mrf.mxu0
    %v1823 = vadd.f32 0.0, %v1822
    %1824 = vmatmul.f32.gmra.mxu0 %v1037
    %v1825 = vpop.f32.mrf.mxu0
    %v1826 = vadd.f32 0.0, %v1825
    %1827 = vmatmul.f32.gmra.mxu0 %v1040
    %v1828 = vpop.f32.mrf.mxu0
    %v1829 = vadd.f32 0.0, %v1828
    %1830 = vmatmul.f32.gmra.mxu0 %v1043
    %v1831 = vpop.f32.mrf.mxu0
    %v1832 = vadd.f32 0.0, %v1831
    %1833 = vmatmul.f32.gmra.mxu0 %v1046
    %v1834 = vpop.f32.mrf.mxu0
    %v1835 = vadd.f32 0.0, %v1834
    %1836 = vmatmul.f32.gmra.mxu0 %v1049
    %v1837 = vpop.f32.mrf.mxu0
    %v1838 = vadd.f32 0.0, %v1837
    %1839 = vmatmul.f32.gmra.mxu0 %v1052
    %v1840 = vpop.f32.mrf.mxu0
    %v1841 = vadd.f32 0.0, %v1840
    %1842 = vmatmul.f32.gmra.mxu0 %v1055
    %v1843 = vpop.f32.mrf.mxu0
    %v1844 = vadd.f32 0.0, %v1843
    %1845 = vdwg.mxu0
    %v1846 = vmax.f32 %v1079, 0.0
    %v1847 = vmax.f32 %v1082, 0.0
    %v1848 = vmax.f32 %v1085, 0.0
    %v1849 = vmax.f32 %v1088, 0.0
    %v1850 = vmax.f32 %v1091, 0.0
    %v1851 = vmax.f32 %v1094, 0.0
    %v1852 = vmax.f32 %v1097, 0.0
    %v1853 = vmax.f32 %v1100, 0.0
    %v1854 = vmax.f32 %v1103, 0.0
    %v1855 = vmax.f32 %v1106, 0.0
    %v1856 = vmax.f32 %v1109, 0.0
    %v1857 = vmax.f32 %v1112, 0.0
    %v1858 = vmax.f32 %v1115, 0.0
    %v1859 = vmax.f32 %v1118, 0.0
    %v1860 = vmax.f32 %v1121, 0.0
    %v1861 = vmax.f32 %v1124, 0.0
    %v1862 = vmax.f32 %v1127, 0.0
    %v1863 = vmax.f32 %v1130, 0.0
    %v1864 = vmax.f32 %v1133, 0.0
    %v1865 = vmax.f32 %v1136, 0.0
    %v1866 = vmax.f32 %v1139, 0.0
    %v1867 = vmax.f32 %v1142, 0.0
    %v1868 = vmax.f32 %v1145, 0.0
    %v1869 = vmax.f32 %v1148, 0.0
    %v1870 = vmax.f32 %v1151, 0.0
    %v1871 = vmax.f32 %v1154, 0.0
    %v1872 = vmax.f32 %v1157, 0.0
    %v1873 = vmax.f32 %v1160, 0.0
    %v1874 = vmax.f32 %v1163, 0.0
    %v1875 = vmax.f32 %v1166, 0.0
    %v1876 = vmax.f32 %v1169, 0.0
    %v1877 = vmax.f32 %v1172, 0.0
    %v1878 = vmax.f32 %v1175, 0.0
    %v1879 = vmax.f32 %v1178, 0.0
    %v1880 = vmax.f32 %v1181, 0.0
    %v1881 = vmax.f32 %v1184, 0.0
    %v1882 = vmax.f32 %v1187, 0.0
    %v1883 = vmax.f32 %v1190, 0.0
    %v1884 = vmax.f32 %v1193, 0.0
    %v1885 = vmax.f32 %v1196, 0.0
    %v1886 = vmax.f32 %v1199, 0.0
    %v1887 = vmax.f32 %v1202, 0.0
    %v1888 = vmax.f32 %v1205, 0.0
    %v1889 = vmax.f32 %v1208, 0.0
    %v1890 = vmax.f32 %v1211, 0.0
    %v1891 = vmax.f32 %v1214, 0.0
    %v1892 = vmax.f32 %v1217, 0.0
    %v1893 = vmax.f32 %v1220, 0.0
    %v1894 = vmax.f32 %v1223, 0.0
    %v1895 = vmax.f32 %v1226, 0.0
    %v1896 = vmax.f32 %v1229, 0.0
    %v1897 = vmax.f32 %v1232, 0.0
    %v1898 = vmax.f32 %v1235, 0.0
    %v1899 = vmax.f32 %v1238, 0.0
    %v1900 = vmax.f32 %v1241, 0.0
    %v1901 = vmax.f32 %v1244, 0.0
    %v1902 = vmax.f32 %v1247, 0.0
    %v1903 = vmax.f32 %v1250, 0.0
    %v1904 = vmax.f32 %v1253, 0.0
    %v1905 = vmax.f32 %v1256, 0.0
    %v1906 = vmax.f32 %v1259, 0.0
    %v1907 = vmax.f32 %v1262, 0.0
    %v1908 = vmax.f32 %v1265, 0.0
    %v1909 = vmax.f32 %v1268, 0.0
    %v1910 = vmax.f32 %v1271, 0.0
    %v1911 = vmax.f32 %v1274, 0.0
    %v1912 = vmax.f32 %v1277, 0.0
    %v1913 = vmax.f32 %v1280, 0.0
    %v1914 = vmax.f32 %v1283, 0.0
    %v1915 = vmax.f32 %v1286, 0.0
    %v1916 = vmax.f32 %v1289, 0.0
    %v1917 = vmax.f32 %v1292, 0.0
    %v1918 = vmax.f32 %v1295, 0.0
    %v1919 = vmax.f32 %v1298, 0.0
    %v1920 = vmax.f32 %v1301, 0.0
    %v1921 = vmax.f32 %v1304, 0.0
    %v1922 = vmax.f32 %v1307, 0.0
    %v1923 = vmax.f32 %v1310, 0.0
    %v1924 = vmax.f32 %v1313, 0.0
    %v1925 = vmax.f32 %v1316, 0.0
    %v1926 = vmax.f32 %v1319, 0.0
    %v1927 = vmax.f32 %v1322, 0.0
    %v1928 = vmax.f32 %v1325, 0.0
    %v1929 = vmax.f32 %v1328, 0.0
    %v1930 = vmax.f32 %v1331, 0.0
    %v1931 = vmax.f32 %v1334, 0.0
    %v1932 = vmax.f32 %v1337, 0.0
    %v1933 = vmax.f32 %v1340, 0.0
    %v1934 = vmax.f32 %v1343, 0.0
    %v1935 = vmax.f32 %v1346, 0.0
    %v1936 = vmax.f32 %v1349, 0.0
    %v1937 = vmax.f32 %v1352, 0.0
    %v1938 = vmax.f32 %v1355, 0.0
    %v1939 = vmax.f32 %v1358, 0.0
    %v1940 = vmax.f32 %v1361, 0.0
    %v1941 = vmax.f32 %v1364, 0.0
    %v1942 = vmax.f32 %v1367, 0.0
    %v1943 = vmax.f32 %v1370, 0.0
    %v1944 = vmax.f32 %v1373, 0.0
    %v1945 = vmax.f32 %v1376, 0.0
    %v1946 = vmax.f32 %v1379, 0.0
    %v1947 = vmax.f32 %v1382, 0.0
    %v1948 = vmax.f32 %v1385, 0.0
    %v1949 = vmax.f32 %v1388, 0.0
    %v1950 = vmax.f32 %v1391, 0.0
    %v1951 = vmax.f32 %v1394, 0.0
    %v1952 = vmax.f32 %v1397, 0.0
    %v1953 = vmax.f32 %v1400, 0.0
    %v1954 = vmax.f32 %v1403, 0.0
    %v1955 = vmax.f32 %v1406, 0.0
    %v1956 = vmax.f32 %v1409, 0.0
    %v1957 = vmax.f32 %v1412, 0.0
    %v1958 = vmax.f32 %v1415, 0.0
    %v1959 = vmax.f32 %v1418, 0.0
    %v1960 = vmax.f32 %v1421, 0.0
    %v1961 = vmax.f32 %v1424, 0.0
    %v1962 = vmax.f32 %v1427, 0.0
    %v1963 = vmax.f32 %v1430, 0.0
    %v1964 = vmax.f32 %v1433, 0.0
    %v1965 = vmax.f32 %v1436, 0.0
    %v1966 = vmax.f32 %v1439, 0.0
    %v1967 = vmax.f32 %v1442, 0.0
    %v1968 = vmax.f32 %v1445, 0.0
    %v1969 = vmax.f32 %v1448, 0.0
    %v1970 = vmax.f32 %v1451, 0.0
    %v1971 = vmax.f32 %v1454, 0.0
    %v1972 = vmax.f32 %v1457, 0.0
    %v1973 = vmax.f32 %v1460, 0.0
    %v1974 = vmax.f32 %v1463, 0.0
    %v1975 = vmax.f32 %v1466, 0.0
    %v1976 = vmax.f32 %v1469, 0.0
    %v1977 = vmax.f32 %v1472, 0.0
    %v1978 = vmax.f32 %v1475, 0.0
    %v1979 = vmax.f32 %v1478, 0.0
    %v1980 = vmax.f32 %v1481, 0.0
    %v1981 = vmax.f32 %v1484, 0.0
    %v1982 = vmax.f32 %v1487, 0.0
    %v1983 = vmax.f32 %v1490, 0.0
    %v1984 = vmax.f32 %v1493, 0.0
    %v1985 = vmax.f32 %v1496, 0.0
    %v1986 = vmax.f32 %v1499, 0.0
    %v1987 = vmax.f32 %v1502, 0.0
    %v1988 = vmax.f32 %v1505, 0.0
    %v1989 = vmax.f32 %v1508, 0.0
    %v1990 = vmax.f32 %v1511, 0.0
    %v1991 = vmax.f32 %v1514, 0.0
    %v1992 = vmax.f32 %v1517, 0.0
    %v1993 = vmax.f32 %v1520, 0.0
    %v1994 = vmax.f32 %v1523, 0.0
    %v1995 = vmax.f32 %v1526, 0.0
    %v1996 = vmax.f32 %v1529, 0.0
    %v1997 = vmax.f32 %v1532, 0.0
    %v1998 = vmax.f32 %v1535, 0.0
    %v1999 = vmax.f32 %v1538, 0.0
    %v2000 = vmax.f32 %v1541, 0.0
    %v2001 = vmax.f32 %v1544, 0.0
    %v2002 = vmax.f32 %v1547, 0.0
    %v2003 = vmax.f32 %v1550, 0.0
    %v2004 = vmax.f32 %v1553, 0.0
    %v2005 = vmax.f32 %v1556, 0.0
    %v2006 = vmax.f32 %v1559, 0.0
    %v2007 = vmax.f32 %v1562, 0.0
    %v2008 = vmax.f32 %v1565, 0.0
    %v2009 = vmax.f32 %v1568, 0.0
    %v2010 = vmax.f32 %v1571, 0.0
    %v2011 = vmax.f32 %v1574, 0.0
    %v2012 = vmax.f32 %v1577, 0.0
    %v2013 = vmax.f32 %v1580, 0.0
    %v2014 = vmax.f32 %v1583, 0.0
    %v2015 = vmax.f32 %v1586, 0.0
    %v2016 = vmax.f32 %v1589, 0.0
    %v2017 = vmax.f32 %v1592, 0.0
    %v2018 = vmax.f32 %v1595, 0.0
    %v2019 = vmax.f32 %v1598, 0.0
    %v2020 = vmax.f32 %v1601, 0.0
    %v2021 = vmax.f32 %v1604, 0.0
    %v2022 = vmax.f32 %v1607, 0.0
    %v2023 = vmax.f32 %v1610, 0.0
    %v2024 = vmax.f32 %v1613, 0.0
    %v2025 = vmax.f32 %v1616, 0.0
    %v2026 = vmax.f32 %v1619, 0.0
    %v2027 = vmax.f32 %v1622, 0.0
    %v2028 = vmax.f32 %v1625, 0.0
    %v2029 = vmax.f32 %v1628, 0.0
    %v2030 = vmax.f32 %v1631, 0.0
    %v2031 = vmax.f32 %v1634, 0.0
    %v2032 = vmax.f32 %v1637, 0.0
    %v2033 = vmax.f32 %v1640, 0.0
    %v2034 = vmax.f32 %v1643, 0.0
    %v2035 = vmax.f32 %v1646, 0.0
    %v2036 = vmax.f32 %v1649, 0.0
    %v2037 = vmax.f32 %v1652, 0.0
    %v2038 = vmax.f32 %v1655, 0.0
    %v2039 = vmax.f32 %v1658, 0.0
    %v2040 = vmax.f32 %v1661, 0.0
    %v2041 = vmax.f32 %v1664, 0.0
    %v2042 = vmax.f32 %v1667, 0.0
    %v2043 = vmax.f32 %v1670, 0.0
    %v2044 = vmax.f32 %v1673, 0.0
    %v2045 = vmax.f32 %v1676, 0.0
    %v2046 = vmax.f32 %v1679, 0.0
    %v2047 = vmax.f32 %v1682, 0.0
    %v2048 = vmax.f32 %v1685, 0.0
    %v2049 = vmax.f32 %v1688, 0.0
    %v2050 = vmax.f32 %v1691, 0.0
    %v2051 = vmax.f32 %v1694, 0.0
    %v2052 = vmax.f32 %v1697, 0.0
    %v2053 = vmax.f32 %v1700, 0.0
    %v2054 = vmax.f32 %v1703, 0.0
    %v2055 = vmax.f32 %v1706, 0.0
    %v2056 = vmax.f32 %v1709, 0.0
    %v2057 = vmax.f32 %v1712, 0.0
    %v2058 = vmax.f32 %v1715, 0.0
    %v2059 = vmax.f32 %v1718, 0.0
    %v2060 = vmax.f32 %v1721, 0.0
    %v2061 = vmax.f32 %v1724, 0.0
    %v2062 = vmax.f32 %v1727, 0.0
    %v2063 = vmax.f32 %v1730, 0.0
    %v2064 = vmax.f32 %v1733, 0.0
    %v2065 = vmax.f32 %v1736, 0.0
    %v2066 = vmax.f32 %v1739, 0.0
    %v2067 = vmax.f32 %v1742, 0.0
    %v2068 = vmax.f32 %v1745, 0.0
    %v2069 = vmax.f32 %v1748, 0.0
    %v2070 = vmax.f32 %v1751, 0.0
    %v2071 = vmax.f32 %v1754, 0.0
    %v2072 = vmax.f32 %v1757, 0.0
    %v2073 = vmax.f32 %v1760, 0.0
    %v2074 = vmax.f32 %v1763, 0.0
    %v2075 = vmax.f32 %v1766, 0.0
    %v2076 = vmax.f32 %v1769, 0.0
    %v2077 = vmax.f32 %v1772, 0.0
    %v2078 = vmax.f32 %v1775, 0.0
    %v2079 = vmax.f32 %v1778, 0.0
    %v2080 = vmax.f32 %v1781, 0.0
    %v2081 = vmax.f32 %v1784, 0.0
    %v2082 = vmax.f32 %v1787, 0.0
    %v2083 = vmax.f32 %v1790, 0.0
    %v2084 = vmax.f32 %v1793, 0.0
    %v2085 = vmax.f32 %v1796, 0.0
    %v2086 = vmax.f32 %v1799, 0.0
    %v2087 = vmax.f32 %v1802, 0.0
    %v2088 = vmax.f32 %v1805, 0.0
    %v2089 = vmax.f32 %v1808, 0.0
    %v2090 = vmax.f32 %v1811, 0.0
    %v2091 = vmax.f32 %v1814, 0.0
    %v2092 = vmax.f32 %v1817, 0.0
    %v2093 = vmax.f32 %v1820, 0.0
    %v2094 = vmax.f32 %v1823, 0.0
    %v2095 = vmax.f32 %v1826, 0.0
    %v2096 = vmax.f32 %v1829, 0.0
    %v2097 = vmax.f32 %v1832, 0.0
    %v2098 = vmax.f32 %v1835, 0.0
    %v2099 = vmax.f32 %v1838, 0.0
    %v2100 = vmax.f32 %v1841, 0.0
    %v2101 = vmax.f32 %v1844, 0.0
    %v2358 = vrot.slane %v1846, 2
    %v2359 = vrot.slane %v1846, 4
    %v2360 = vrot.slane %v1846, 6
    %v2361 = vrot.slane %v1847, 2
    %v2362 = vrot.slane %v1847, 4
    %v2363 = vrot.slane %v1847, 6
    %v2364 = vrot.slane %v1848, 2
    %v2365 = vrot.slane %v1848, 4
    %v2366 = vrot.slane %v1848, 6
    %v2367 = vrot.slane %v1849, 2
    %v2368 = vrot.slane %v1849, 4
    %v2369 = vrot.slane %v1849, 6
    %v2370 = vrot.slane %v1850, 2
    %v2371 = vrot.slane %v1850, 4
    %v2372 = vrot.slane %v1850, 6
    %v2373 = vrot.slane %v1851, 2
    %v2374 = vrot.slane %v1851, 4
    %v2375 = vrot.slane %v1851, 6
    %v2376 = vrot.slane %v1852, 2
    %v2377 = vrot.slane %v1852, 4
    %v2378 = vrot.slane %v1852, 6
    %v2379 = vrot.slane %v1853, 2
    %v2380 = vrot.slane %v1853, 4
    %v2381 = vrot.slane %v1853, 6
    %v2382 = vrot.slane %v1854, 2
    %v2383 = vrot.slane %v1854, 4
    %v2384 = vrot.slane %v1854, 6
    %v2385 = vrot.slane %v1855, 2
    %v2386 = vrot.slane %v1855, 4
    %v2387 = vrot.slane %v1855, 6
    %v2388 = vrot.slane %v1856, 2
    %v2389 = vrot.slane %v1856, 4
    %v2390 = vrot.slane %v1856, 6
    %v2391 = vrot.slane %v1857, 2
    %v2392 = vrot.slane %v1857, 4
    %v2393 = vrot.slane %v1857, 6
    %v2394 = vrot.slane %v1858, 2
    %v2395 = vrot.slane %v1858, 4
    %v2396 = vrot.slane %v1858, 6
    %v2397 = vrot.slane %v1859, 2
    %v2398 = vrot.slane %v1859, 4
    %v2399 = vrot.slane %v1859, 6
    %v2400 = vrot.slane %v1860, 2
    %v2401 = vrot.slane %v1860, 4
    %v2402 = vrot.slane %v1860, 6
    %v2403 = vrot.slane %v1861, 2
    %v2404 = vrot.slane %v1861, 4
    %v2405 = vrot.slane %v1861, 6
    %v2406 = vrot.slane %v1862, 2
    %v2407 = vrot.slane %v1862, 4
    %v2408 = vrot.slane %v1862, 6
    %v2409 = vrot.slane %v1863, 2
    %v2410 = vrot.slane %v1863, 4
    %v2411 = vrot.slane %v1863, 6
    %v2412 = vrot.slane %v1864, 2
    %v2413 = vrot.slane %v1864, 4
    %v2414 = vrot.slane %v1864, 6
    %v2415 = vrot.slane %v1865, 2
    %v2416 = vrot.slane %v1865, 4
    %v2417 = vrot.slane %v1865, 6
    %v2418 = vrot.slane %v1866, 2
    %v2419 = vrot.slane %v1866, 4
    %v2420 = vrot.slane %v1866, 6
    %v2421 = vrot.slane %v1867, 2
    %v2422 = vrot.slane %v1867, 4
    %v2423 = vrot.slane %v1867, 6
    %v2424 = vrot.slane %v1868, 2
    %v2425 = vrot.slane %v1868, 4
    %v2426 = vrot.slane %v1868, 6
    %v2427 = vrot.slane %v1869, 2
    %v2428 = vrot.slane %v1869, 4
    %v2429 = vrot.slane %v1869, 6
    %v2430 = vrot.slane %v1870, 2
    %v2431 = vrot.slane %v1870, 4
    %v2432 = vrot.slane %v1870, 6
    %v2433 = vrot.slane %v1871, 2
    %v2434 = vrot.slane %v1871, 4
    %v2435 = vrot.slane %v1871, 6
    %v2436 = vrot.slane %v1872, 2
    %v2437 = vrot.slane %v1872, 4
    %v2438 = vrot.slane %v1872, 6
    %v2439 = vrot.slane %v1873, 2
    %v2440 = vrot.slane %v1873, 4
    %v2441 = vrot.slane %v1873, 6
    %v2442 = vrot.slane %v1874, 2
    %v2443 = vrot.slane %v1874, 4
    %v2444 = vrot.slane %v1874, 6
    %v2445 = vrot.slane %v1875, 2
    %v2446 = vrot.slane %v1875, 4
    %v2447 = vrot.slane %v1875, 6
    %v2448 = vrot.slane %v1876, 2
    %v2449 = vrot.slane %v1876, 4
    %v2450 = vrot.slane %v1876, 6
    %v2451 = vrot.slane %v1877, 2
    %v2452 = vrot.slane %v1877, 4
    %v2453 = vrot.slane %v1877, 6
    %v2454 = vrot.slane %v1878, 2
    %v2455 = vrot.slane %v1878, 4
    %v2456 = vrot.slane %v1878, 6
    %v2457 = vrot.slane %v1879, 2
    %v2458 = vrot.slane %v1879, 4
    %v2459 = vrot.slane %v1879, 6
    %v2460 = vrot.slane %v1880, 2
    %v2461 = vrot.slane %v1880, 4
    %v2462 = vrot.slane %v1880, 6
    %v2463 = vrot.slane %v1881, 2
    %v2464 = vrot.slane %v1881, 4
    %v2465 = vrot.slane %v1881, 6
    %v2466 = vrot.slane %v1882, 2
    %v2467 = vrot.slane %v1882, 4
    %v2468 = vrot.slane %v1882, 6
    %v2469 = vrot.slane %v1883, 2
    %v2470 = vrot.slane %v1883, 4
    %v2471 = vrot.slane %v1883, 6
    %v2472 = vrot.slane %v1884, 2
    %v2473 = vrot.slane %v1884, 4
    %v2474 = vrot.slane %v1884, 6
    %v2475 = vrot.slane %v1885, 2
    %v2476 = vrot.slane %v1885, 4
    %v2477 = vrot.slane %v1885, 6
    %v2478 = vrot.slane %v1886, 2
    %v2479 = vrot.slane %v1886, 4
    %v2480 = vrot.slane %v1886, 6
    %v2481 = vrot.slane %v1887, 2
    %v2482 = vrot.slane %v1887, 4
    %v2483 = vrot.slane %v1887, 6
    %v2484 = vrot.slane %v1888, 2
    %v2485 = vrot.slane %v1888, 4
    %v2486 = vrot.slane %v1888, 6
    %v2487 = vrot.slane %v1889, 2
    %v2488 = vrot.slane %v1889, 4
    %v2489 = vrot.slane %v1889, 6
    %v2490 = vrot.slane %v1890, 2
    %v2491 = vrot.slane %v1890, 4
    %v2492 = vrot.slane %v1890, 6
    %v2493 = vrot.slane %v1891, 2
    %v2494 = vrot.slane %v1891, 4
    %v2495 = vrot.slane %v1891, 6
    %v2496 = vrot.slane %v1892, 2
    %v2497 = vrot.slane %v1892, 4
    %v2498 = vrot.slane %v1892, 6
    %v2499 = vrot.slane %v1893, 2
    %v2500 = vrot.slane %v1893, 4
    %v2501 = vrot.slane %v1893, 6
    %v2502 = vrot.slane %v1894, 2
    %v2503 = vrot.slane %v1894, 4
    %v2504 = vrot.slane %v1894, 6
    %v2505 = vrot.slane %v1895, 2
    %v2506 = vrot.slane %v1895, 4
    %v2507 = vrot.slane %v1895, 6
    %v2508 = vrot.slane %v1896, 2
    %v2509 = vrot.slane %v1896, 4
    %v2510 = vrot.slane %v1896, 6
    %v2511 = vrot.slane %v1897, 2
    %v2512 = vrot.slane %v1897, 4
    %v2513 = vrot.slane %v1897, 6
    %v2514 = vrot.slane %v1898, 2
    %v2515 = vrot.slane %v1898, 4
    %v2516 = vrot.slane %v1898, 6
    %v2517 = vrot.slane %v1899, 2
    %v2518 = vrot.slane %v1899, 4
    %v2519 = vrot.slane %v1899, 6
    %v2520 = vrot.slane %v1900, 2
    %v2521 = vrot.slane %v1900, 4
    %v2522 = vrot.slane %v1900, 6
    %v2523 = vrot.slane %v1901, 2
    %v2524 = vrot.slane %v1901, 4
    %v2525 = vrot.slane %v1901, 6
    %v2526 = vrot.slane %v1902, 2
    %v2527 = vrot.slane %v1902, 4
    %v2528 = vrot.slane %v1902, 6
    %v2529 = vrot.slane %v1903, 2
    %v2530 = vrot.slane %v1903, 4
    %v2531 = vrot.slane %v1903, 6
    %v2532 = vrot.slane %v1904, 2
    %v2533 = vrot.slane %v1904, 4
    %v2534 = vrot.slane %v1904, 6
    %v2535 = vrot.slane %v1905, 2
    %v2536 = vrot.slane %v1905, 4
    %v2537 = vrot.slane %v1905, 6
    %v2538 = vrot.slane %v1906, 2
    %v2539 = vrot.slane %v1906, 4
    %v2540 = vrot.slane %v1906, 6
    %v2541 = vrot.slane %v1907, 2
    %v2542 = vrot.slane %v1907, 4
    %v2543 = vrot.slane %v1907, 6
    %v2544 = vrot.slane %v1908, 2
    %v2545 = vrot.slane %v1908, 4
    %v2546 = vrot.slane %v1908, 6
    %v2547 = vrot.slane %v1909, 2
    %v2548 = vrot.slane %v1909, 4
    %v2549 = vrot.slane %v1909, 6
    %v2550 = vrot.slane %v1910, 2
    %v2551 = vrot.slane %v1910, 4
    %v2552 = vrot.slane %v1910, 6
    %v2553 = vrot.slane %v1911, 2
    %v2554 = vrot.slane %v1911, 4
    %v2555 = vrot.slane %v1911, 6
    %v2556 = vrot.slane %v1912, 2
    %v2557 = vrot.slane %v1912, 4
    %v2558 = vrot.slane %v1912, 6
    %v2559 = vrot.slane %v1913, 2
    %v2560 = vrot.slane %v1913, 4
    %v2561 = vrot.slane %v1913, 6
    %v2562 = vrot.slane %v1914, 2
    %v2563 = vrot.slane %v1914, 4
    %v2564 = vrot.slane %v1914, 6
    %v2565 = vrot.slane %v1915, 2
    %v2566 = vrot.slane %v1915, 4
    %v2567 = vrot.slane %v1915, 6
    %v2568 = vrot.slane %v1916, 2
    %v2569 = vrot.slane %v1916, 4
    %v2570 = vrot.slane %v1916, 6
    %v2571 = vrot.slane %v1917, 2
    %v2572 = vrot.slane %v1917, 4
    %v2573 = vrot.slane %v1917, 6
    %v2574 = vrot.slane %v1918, 2
    %v2575 = vrot.slane %v1918, 4
    %v2576 = vrot.slane %v1918, 6
    %v2577 = vrot.slane %v1919, 2
    %v2578 = vrot.slane %v1919, 4
    %v2579 = vrot.slane %v1919, 6
    %v2580 = vrot.slane %v1920, 2
    %v2581 = vrot.slane %v1920, 4
    %v2582 = vrot.slane %v1920, 6
    %v2583 = vrot.slane %v1921, 2
    %v2584 = vrot.slane %v1921, 4
    %v2585 = vrot.slane %v1921, 6
    %v2586 = vrot.slane %v1922, 2
    %v2587 = vrot.slane %v1922, 4
    %v2588 = vrot.slane %v1922, 6
    %v2589 = vrot.slane %v1923, 2
    %v2590 = vrot.slane %v1923, 4
    %v2591 = vrot.slane %v1923, 6
    %v2592 = vrot.slane %v1924, 2
    %v2593 = vrot.slane %v1924, 4
    %v2594 = vrot.slane %v1924, 6
    %v2595 = vrot.slane %v1925, 2
    %v2596 = vrot.slane %v1925, 4
    %v2597 = vrot.slane %v1925, 6
    %v2598 = vrot.slane %v1926, 2
    %v2599 = vrot.slane %v1926, 4
    %v2600 = vrot.slane %v1926, 6
    %v2601 = vrot.slane %v1927, 2
    %v2602 = vrot.slane %v1927, 4
    %v2603 = vrot.slane %v1927, 6
    %v2604 = vrot.slane %v1928, 2
    %v2605 = vrot.slane %v1928, 4
    %v2606 = vrot.slane %v1928, 6
    %v2607 = vrot.slane %v1929, 2
    %v2608 = vrot.slane %v1929, 4
    %v2609 = vrot.slane %v1929, 6
    %v2610 = vrot.slane %v1930, 2
    %v2611 = vrot.slane %v1930, 4
    %v2612 = vrot.slane %v1930, 6
    %v2613 = vrot.slane %v1931, 2
    %v2614 = vrot.slane %v1931, 4
    %v2615 = vrot.slane %v1931, 6
    %v2616 = vrot.slane %v1932, 2
    %v2617 = vrot.slane %v1932, 4
    %v2618 = vrot.slane %v1932, 6
    %v2619 = vrot.slane %v1933, 2
    %v2620 = vrot.slane %v1933, 4
    %v2621 = vrot.slane %v1933, 6
    %v2622 = vrot.slane %v1934, 2
    %v2623 = vrot.slane %v1934, 4
    %v2624 = vrot.slane %v1934, 6
    %v2625 = vrot.slane %v1935, 2
    %v2626 = vrot.slane %v1935, 4
    %v2627 = vrot.slane %v1935, 6
    %v2628 = vrot.slane %v1936, 2
    %v2629 = vrot.slane %v1936, 4
    %v2630 = vrot.slane %v1936, 6
    %v2631 = vrot.slane %v1937, 2
    %v2632 = vrot.slane %v1937, 4
    %v2633 = vrot.slane %v1937, 6
    %v2634 = vrot.slane %v1938, 2
    %v2635 = vrot.slane %v1938, 4
    %v2636 = vrot.slane %v1938, 6
    %v2637 = vrot.slane %v1939, 2
    %v2638 = vrot.slane %v1939, 4
    %v2639 = vrot.slane %v1939, 6
    %v2640 = vrot.slane %v1940, 2
    %v2641 = vrot.slane %v1940, 4
    %v2642 = vrot.slane %v1940, 6
    %v2643 = vrot.slane %v1941, 2
    %v2644 = vrot.slane %v1941, 4
    %v2645 = vrot.slane %v1941, 6
    %v2646 = vrot.slane %v1942, 2
    %v2647 = vrot.slane %v1942, 4
    %v2648 = vrot.slane %v1942, 6
    %v2649 = vrot.slane %v1943, 2
    %v2650 = vrot.slane %v1943, 4
    %v2651 = vrot.slane %v1943, 6
    %v2652 = vrot.slane %v1944, 2
    %v2653 = vrot.slane %v1944, 4
    %v2654 = vrot.slane %v1944, 6
    %v2655 = vrot.slane %v1945, 2
    %v2656 = vrot.slane %v1945, 4
    %v2657 = vrot.slane %v1945, 6
    %v2658 = vrot.slane %v1946, 2
    %v2659 = vrot.slane %v1946, 4
    %v2660 = vrot.slane %v1946, 6
    %v2661 = vrot.slane %v1947, 2
    %v2662 = vrot.slane %v1947, 4
    %v2663 = vrot.slane %v1947, 6
    %v2664 = vrot.slane %v1948, 2
    %v2665 = vrot.slane %v1948, 4
    %v2666 = vrot.slane %v1948, 6
    %v2667 = vrot.slane %v1949, 2
    %v2668 = vrot.slane %v1949, 4
    %v2669 = vrot.slane %v1949, 6
    %v2670 = vrot.slane %v1950, 2
    %v2671 = vrot.slane %v1950, 4
    %v2672 = vrot.slane %v1950, 6
    %v2673 = vrot.slane %v1951, 2
    %v2674 = vrot.slane %v1951, 4
    %v2675 = vrot.slane %v1951, 6
    %v2676 = vrot.slane %v1952, 2
    %v2677 = vrot.slane %v1952, 4
    %v2678 = vrot.slane %v1952, 6
    %v2679 = vrot.slane %v1953, 2
    %v2680 = vrot.slane %v1953, 4
    %v2681 = vrot.slane %v1953, 6
    %v2682 = vrot.slane %v1954, 2
    %v2683 = vrot.slane %v1954, 4
    %v2684 = vrot.slane %v1954, 6
    %v2685 = vrot.slane %v1955, 2
    %v2686 = vrot.slane %v1955, 4
    %v2687 = vrot.slane %v1955, 6
    %v2688 = vrot.slane %v1956, 2
    %v2689 = vrot.slane %v1956, 4
    %v2690 = vrot.slane %v1956, 6
    %v2691 = vrot.slane %v1957, 2
    %v2692 = vrot.slane %v1957, 4
    %v2693 = vrot.slane %v1957, 6
    %v2694 = vrot.slane %v1958, 2
    %v2695 = vrot.slane %v1958, 4
    %v2696 = vrot.slane %v1958, 6
    %v2697 = vrot.slane %v1959, 2
    %v2698 = vrot.slane %v1959, 4
    %v2699 = vrot.slane %v1959, 6
    %v2700 = vrot.slane %v1960, 2
    %v2701 = vrot.slane %v1960, 4
    %v2702 = vrot.slane %v1960, 6
    %v2703 = vrot.slane %v1961, 2
    %v2704 = vrot.slane %v1961, 4
    %v2705 = vrot.slane %v1961, 6
    %v2706 = vrot.slane %v1962, 2
    %v2707 = vrot.slane %v1962, 4
    %v2708 = vrot.slane %v1962, 6
    %v2709 = vrot.slane %v1963, 2
    %v2710 = vrot.slane %v1963, 4
    %v2711 = vrot.slane %v1963, 6
    %v2712 = vrot.slane %v1964, 2
    %v2713 = vrot.slane %v1964, 4
    %v2714 = vrot.slane %v1964, 6
    %v2715 = vrot.slane %v1965, 2
    %v2716 = vrot.slane %v1965, 4
    %v2717 = vrot.slane %v1965, 6
    %v2718 = vrot.slane %v1966, 2
    %v2719 = vrot.slane %v1966, 4
    %v2720 = vrot.slane %v1966, 6
    %v2721 = vrot.slane %v1967, 2
    %v2722 = vrot.slane %v1967, 4
    %v2723 = vrot.slane %v1967, 6
    %v2724 = vrot.slane %v1968, 2
    %v2725 = vrot.slane %v1968, 4
    %v2726 = vrot.slane %v1968, 6
    %v2727 = vrot.slane %v1969, 2
    %v2728 = vrot.slane %v1969, 4
    %v2729 = vrot.slane %v1969, 6
    %v2730 = vrot.slane %v1970, 2
    %v2731 = vrot.slane %v1970, 4
    %v2732 = vrot.slane %v1970, 6
    %v2733 = vrot.slane %v1971, 2
    %v2734 = vrot.slane %v1971, 4
    %v2735 = vrot.slane %v1971, 6
    %v2736 = vrot.slane %v1972, 2
    %v2737 = vrot.slane %v1972, 4
    %v2738 = vrot.slane %v1972, 6
    %v2739 = vrot.slane %v1973, 2
    %v2740 = vrot.slane %v1973, 4
    %v2741 = vrot.slane %v1973, 6
    %v2742 = vrot.slane %v1974, 2
    %v2743 = vrot.slane %v1974, 4
    %v2744 = vrot.slane %v1974, 6
    %v2745 = vrot.slane %v1975, 2
    %v2746 = vrot.slane %v1975, 4
    %v2747 = vrot.slane %v1975, 6
    %v2748 = vrot.slane %v1976, 2
    %v2749 = vrot.slane %v1976, 4
    %v2750 = vrot.slane %v1976, 6
    %v2751 = vrot.slane %v1977, 2
    %v2752 = vrot.slane %v1977, 4
    %v2753 = vrot.slane %v1977, 6
    %v2754 = vrot.slane %v1978, 2
    %v2755 = vrot.slane %v1978, 4
    %v2756 = vrot.slane %v1978, 6
    %v2757 = vrot.slane %v1979, 2
    %v2758 = vrot.slane %v1979, 4
    %v2759 = vrot.slane %v1979, 6
    %v2760 = vrot.slane %v1980, 2
    %v2761 = vrot.slane %v1980, 4
    %v2762 = vrot.slane %v1980, 6
    %v2763 = vrot.slane %v1981, 2
    %v2764 = vrot.slane %v1981, 4
    %v2765 = vrot.slane %v1981, 6
    %v2766 = vrot.slane %v1982, 2
    %v2767 = vrot.slane %v1982, 4
    %v2768 = vrot.slane %v1982, 6
    %v2769 = vrot.slane %v1983, 2
    %v2770 = vrot.slane %v1983, 4
    %v2771 = vrot.slane %v1983, 6
    %v2772 = vrot.slane %v1984, 2
    %v2773 = vrot.slane %v1984, 4
    %v2774 = vrot.slane %v1984, 6
    %v2775 = vrot.slane %v1985, 2
    %v2776 = vrot.slane %v1985, 4
    %v2777 = vrot.slane %v1985, 6
    %v2778 = vrot.slane %v1986, 2
    %v2779 = vrot.slane %v1986, 4
    %v2780 = vrot.slane %v1986, 6
    %v2781 = vrot.slane %v1987, 2
    %v2782 = vrot.slane %v1987, 4
    %v2783 = vrot.slane %v1987, 6
    %v2784 = vrot.slane %v1988, 2
    %v2785 = vrot.slane %v1988, 4
    %v2786 = vrot.slane %v1988, 6
    %v2787 = vrot.slane %v1989, 2
    %v2788 = vrot.slane %v1989, 4
    %v2789 = vrot.slane %v1989, 6
    %v2790 = vrot.slane %v1990, 2
    %v2791 = vrot.slane %v1990, 4
    %v2792 = vrot.slane %v1990, 6
    %v2793 = vrot.slane %v1991, 2
    %v2794 = vrot.slane %v1991, 4
    %v2795 = vrot.slane %v1991, 6
    %v2796 = vrot.slane %v1992, 2
    %v2797 = vrot.slane %v1992, 4
    %v2798 = vrot.slane %v1992, 6
    %v2799 = vrot.slane %v1993, 2
    %v2800 = vrot.slane %v1993, 4
    %v2801 = vrot.slane %v1993, 6
    %v2802 = vrot.slane %v1994, 2
    %v2803 = vrot.slane %v1994, 4
    %v2804 = vrot.slane %v1994, 6
    %v2805 = vrot.slane %v1995, 2
    %v2806 = vrot.slane %v1995, 4
    %v2807 = vrot.slane %v1995, 6
    %v2808 = vrot.slane %v1996, 2
    %v2809 = vrot.slane %v1996, 4
    %v2810 = vrot.slane %v1996, 6
    %v2811 = vrot.slane %v1997, 2
    %v2812 = vrot.slane %v1997, 4
    %v2813 = vrot.slane %v1997, 6
    %v2814 = vrot.slane %v1998, 2
    %v2815 = vrot.slane %v1998, 4
    %v2816 = vrot.slane %v1998, 6
    %v2817 = vrot.slane %v1999, 2
    %v2818 = vrot.slane %v1999, 4
    %v2819 = vrot.slane %v1999, 6
    %v2820 = vrot.slane %v2000, 2
    %v2821 = vrot.slane %v2000, 4
    %v2822 = vrot.slane %v2000, 6
    %v2823 = vrot.slane %v2001, 2
    %v2824 = vrot.slane %v2001, 4
    %v2825 = vrot.slane %v2001, 6
    %v2826 = vrot.slane %v2002, 2
    %v2827 = vrot.slane %v2002, 4
    %v2828 = vrot.slane %v2002, 6
    %v2829 = vrot.slane %v2003, 2
    %v2830 = vrot.slane %v2003, 4
    %v2831 = vrot.slane %v2003, 6
    %v2832 = vrot.slane %v2004, 2
    %v2833 = vrot.slane %v2004, 4
    %v2834 = vrot.slane %v2004, 6
    %v2835 = vrot.slane %v2005, 2
    %v2836 = vrot.slane %v2005, 4
    %v2837 = vrot.slane %v2005, 6
    %v2838 = vrot.slane %v2006, 2
    %v2839 = vrot.slane %v2006, 4
    %v2840 = vrot.slane %v2006, 6
    %v2841 = vrot.slane %v2007, 2
    %v2842 = vrot.slane %v2007, 4
    %v2843 = vrot.slane %v2007, 6
    %v2844 = vrot.slane %v2008, 2
    %v2845 = vrot.slane %v2008, 4
    %v2846 = vrot.slane %v2008, 6
    %v2847 = vrot.slane %v2009, 2
    %v2848 = vrot.slane %v2009, 4
    %v2849 = vrot.slane %v2009, 6
    %v2850 = vrot.slane %v2010, 2
    %v2851 = vrot.slane %v2010, 4
    %v2852 = vrot.slane %v2010, 6
    %v2853 = vrot.slane %v2011, 2
    %v2854 = vrot.slane %v2011, 4
    %v2855 = vrot.slane %v2011, 6
    %v2856 = vrot.slane %v2012, 2
    %v2857 = vrot.slane %v2012, 4
    %v2858 = vrot.slane %v2012, 6
    %v2859 = vrot.slane %v2013, 2
    %v2860 = vrot.slane %v2013, 4
    %v2861 = vrot.slane %v2013, 6
    %v2862 = vrot.slane %v2014, 2
    %v2863 = vrot.slane %v2014, 4
    %v2864 = vrot.slane %v2014, 6
    %v2865 = vrot.slane %v2015, 2
    %v2866 = vrot.slane %v2015, 4
    %v2867 = vrot.slane %v2015, 6
    %v2868 = vrot.slane %v2016, 2
    %v2869 = vrot.slane %v2016, 4
    %v2870 = vrot.slane %v2016, 6
    %v2871 = vrot.slane %v2017, 2
    %v2872 = vrot.slane %v2017, 4
    %v2873 = vrot.slane %v2017, 6
    %v2874 = vrot.slane %v2018, 2
    %v2875 = vrot.slane %v2018, 4
    %v2876 = vrot.slane %v2018, 6
    %v2877 = vrot.slane %v2019, 2
    %v2878 = vrot.slane %v2019, 4
    %v2879 = vrot.slane %v2019, 6
    %v2880 = vrot.slane %v2020, 2
    %v2881 = vrot.slane %v2020, 4
    %v2882 = vrot.slane %v2020, 6
    %v2883 = vrot.slane %v2021, 2
    %v2884 = vrot.slane %v2021, 4
    %v2885 = vrot.slane %v2021, 6
    %v2886 = vrot.slane %v2022, 2
    %v2887 = vrot.slane %v2022, 4
    %v2888 = vrot.slane %v2022, 6
    %v2889 = vrot.slane %v2023, 2
    %v2890 = vrot.slane %v2023, 4
    %v2891 = vrot.slane %v2023, 6
    %v2892 = vrot.slane %v2024, 2
    %v2893 = vrot.slane %v2024, 4
    %v2894 = vrot.slane %v2024, 6
    %v2895 = vrot.slane %v2025, 2
    %v2896 = vrot.slane %v2025, 4
    %v2897 = vrot.slane %v2025, 6
    %v2898 = vrot.slane %v2026, 2
    %v2899 = vrot.slane %v2026, 4
    %v2900 = vrot.slane %v2026, 6
    %v2901 = vrot.slane %v2027, 2
    %v2902 = vrot.slane %v2027, 4
    %v2903 = vrot.slane %v2027, 6
    %v2904 = vrot.slane %v2028, 2
    %v2905 = vrot.slane %v2028, 4
    %v2906 = vrot.slane %v2028, 6
    %v2907 = vrot.slane %v2029, 2
    %v2908 = vrot.slane %v2029, 4
    %v2909 = vrot.slane %v2029, 6
    %v2910 = vrot.slane %v2030, 2
    %v2911 = vrot.slane %v2030, 4
    %v2912 = vrot.slane %v2030, 6
    %v2913 = vrot.slane %v2031, 2
    %v2914 = vrot.slane %v2031, 4
    %v2915 = vrot.slane %v2031, 6
    %v2916 = vrot.slane %v2032, 2
    %v2917 = vrot.slane %v2032, 4
    %v2918 = vrot.slane %v2032, 6
    %v2919 = vrot.slane %v2033, 2
    %v2920 = vrot.slane %v2033, 4
    %v2921 = vrot.slane %v2033, 6
    %v2922 = vrot.slane %v2034, 2
    %v2923 = vrot.slane %v2034, 4
    %v2924 = vrot.slane %v2034, 6
    %v2925 = vrot.slane %v2035, 2
    %v2926 = vrot.slane %v2035, 4
    %v2927 = vrot.slane %v2035, 6
    %v2928 = vrot.slane %v2036, 2
    %v2929 = vrot.slane %v2036, 4
    %v2930 = vrot.slane %v2036, 6
    %v2931 = vrot.slane %v2037, 2
    %v2932 = vrot.slane %v2037, 4
    %v2933 = vrot.slane %v2037, 6
    %v2934 = vrot.slane %v2038, 2
    %v2935 = vrot.slane %v2038, 4
    %v2936 = vrot.slane %v2038, 6
    %v2937 = vrot.slane %v2039, 2
    %v2938 = vrot.slane %v2039, 4
    %v2939 = vrot.slane %v2039, 6
    %v2940 = vrot.slane %v2040, 2
    %v2941 = vrot.slane %v2040, 4
    %v2942 = vrot.slane %v2040, 6
    %v2943 = vrot.slane %v2041, 2
    %v2944 = vrot.slane %v2041, 4
    %v2945 = vrot.slane %v2041, 6
    %v2946 = vrot.slane %v2042, 2
    %v2947 = vrot.slane %v2042, 4
    %v2948 = vrot.slane %v2042, 6
    %v2949 = vrot.slane %v2043, 2
    %v2950 = vrot.slane %v2043, 4
    %v2951 = vrot.slane %v2043, 6
    %v2952 = vrot.slane %v2044, 2
    %v2953 = vrot.slane %v2044, 4
    %v2954 = vrot.slane %v2044, 6
    %v2955 = vrot.slane %v2045, 2
    %v2956 = vrot.slane %v2045, 4
    %v2957 = vrot.slane %v2045, 6
    %v2958 = vrot.slane %v2046, 2
    %v2959 = vrot.slane %v2046, 4
    %v2960 = vrot.slane %v2046, 6
    %v2961 = vrot.slane %v2047, 2
    %v2962 = vrot.slane %v2047, 4
    %v2963 = vrot.slane %v2047, 6
    %v2964 = vrot.slane %v2048, 2
    %v2965 = vrot.slane %v2048, 4
    %v2966 = vrot.slane %v2048, 6
    %v2967 = vrot.slane %v2049, 2
    %v2968 = vrot.slane %v2049, 4
    %v2969 = vrot.slane %v2049, 6
    %v2970 = vrot.slane %v2050, 2
    %v2971 = vrot.slane %v2050, 4
    %v2972 = vrot.slane %v2050, 6
    %v2973 = vrot.slane %v2051, 2
    %v2974 = vrot.slane %v2051, 4
    %v2975 = vrot.slane %v2051, 6
    %v2976 = vrot.slane %v2052, 2
    %v2977 = vrot.slane %v2052, 4
    %v2978 = vrot.slane %v2052, 6
    %v2979 = vrot.slane %v2053, 2
    %v2980 = vrot.slane %v2053, 4
    %v2981 = vrot.slane %v2053, 6
    %v2982 = vrot.slane %v2054, 2
    %v2983 = vrot.slane %v2054, 4
    %v2984 = vrot.slane %v2054, 6
    %v2985 = vrot.slane %v2055, 2
    %v2986 = vrot.slane %v2055, 4
    %v2987 = vrot.slane %v2055, 6
    %v2988 = vrot.slane %v2056, 2
    %v2989 = vrot.slane %v2056, 4
    %v2990 = vrot.slane %v2056, 6
    %v2991 = vrot.slane %v2057, 2
    %v2992 = vrot.slane %v2057, 4
    %v2993 = vrot.slane %v2057, 6
    %v2994 = vrot.slane %v2058, 2
    %v2995 = vrot.slane %v2058, 4
    %v2996 = vrot.slane %v2058, 6
    %v2997 = vrot.slane %v2059, 2
    %v2998 = vrot.slane %v2059, 4
    %v2999 = vrot.slane %v2059, 6
    %v3000 = vrot.slane %v2060, 2
    %v3001 = vrot.slane %v2060, 4
    %v3002 = vrot.slane %v2060, 6
    %v3003 = vrot.slane %v2061, 2
    %v3004 = vrot.slane %v2061, 4
    %v3005 = vrot.slane %v2061, 6
    %v3006 = vrot.slane %v2062, 2
    %v3007 = vrot.slane %v2062, 4
    %v3008 = vrot.slane %v2062, 6
    %v3009 = vrot.slane %v2063, 2
    %v3010 = vrot.slane %v2063, 4
    %v3011 = vrot.slane %v2063, 6
    %v3012 = vrot.slane %v2064, 2
    %v3013 = vrot.slane %v2064, 4
    %v3014 = vrot.slane %v2064, 6
    %v3015 = vrot.slane %v2065, 2
    %v3016 = vrot.slane %v2065, 4
    %v3017 = vrot.slane %v2065, 6
    %v3018 = vrot.slane %v2066, 2
    %v3019 = vrot.slane %v2066, 4
    %v3020 = vrot.slane %v2066, 6
    %v3021 = vrot.slane %v2067, 2
    %v3022 = vrot.slane %v2067, 4
    %v3023 = vrot.slane %v2067, 6
    %v3024 = vrot.slane %v2068, 2
    %v3025 = vrot.slane %v2068, 4
    %v3026 = vrot.slane %v2068, 6
    %v3027 = vrot.slane %v2069, 2
    %v3028 = vrot.slane %v2069, 4
    %v3029 = vrot.slane %v2069, 6
    %v3030 = vrot.slane %v2070, 2
    %v3031 = vrot.slane %v2070, 4
    %v3032 = vrot.slane %v2070, 6
    %v3033 = vrot.slane %v2071, 2
    %v3034 = vrot.slane %v2071, 4
    %v3035 = vrot.slane %v2071, 6
    %v3036 = vrot.slane %v2072, 2
    %v3037 = vrot.slane %v2072, 4
    %v3038 = vrot.slane %v2072, 6
    %v3039 = vrot.slane %v2073, 2
    %v3040 = vrot.slane %v2073, 4
    %v3041 = vrot.slane %v2073, 6
    %v3042 = vrot.slane %v2074, 2
    %v3043 = vrot.slane %v2074, 4
    %v3044 = vrot.slane %v2074, 6
    %v3045 = vrot.slane %v2075, 2
    %v3046 = vrot.slane %v2075, 4
    %v3047 = vrot.slane %v2075, 6
    %v3048 = vrot.slane %v2076, 2
    %v3049 = vrot.slane %v2076, 4
    %v3050 = vrot.slane %v2076, 6
    %v3051 = vrot.slane %v2077, 2
    %v3052 = vrot.slane %v2077, 4
    %v3053 = vrot.slane %v2077, 6
    %v3054 = vrot.slane %v2078, 2
    %v3055 = vrot.slane %v2078, 4
    %v3056 = vrot.slane %v2078, 6
    %v3057 = vrot.slane %v2079, 2
    %v3058 = vrot.slane %v2079, 4
    %v3059 = vrot.slane %v2079, 6
    %v3060 = vrot.slane %v2080, 2
    %v3061 = vrot.slane %v2080, 4
    %v3062 = vrot.slane %v2080, 6
    %v3063 = vrot.slane %v2081, 2
    %v3064 = vrot.slane %v2081, 4
    %v3065 = vrot.slane %v2081, 6
    %v3066 = vrot.slane %v2082, 2
    %v3067 = vrot.slane %v2082, 4
    %v3068 = vrot.slane %v2082, 6
    %v3069 = vrot.slane %v2083, 2
    %v3070 = vrot.slane %v2083, 4
    %v3071 = vrot.slane %v2083, 6
    %v3072 = vrot.slane %v2084, 2
    %v3073 = vrot.slane %v2084, 4
    %v3074 = vrot.slane %v2084, 6
    %v3075 = vrot.slane %v2085, 2
    %v3076 = vrot.slane %v2085, 4
    %v3077 = vrot.slane %v2085, 6
    %v3078 = vrot.slane %v2086, 2
    %v3079 = vrot.slane %v2086, 4
    %v3080 = vrot.slane %v2086, 6
    %v3081 = vrot.slane %v2087, 2
    %v3082 = vrot.slane %v2087, 4
    %v3083 = vrot.slane %v2087, 6
    %v3084 = vrot.slane %v2088, 2
    %v3085 = vrot.slane %v2088, 4
    %v3086 = vrot.slane %v2088, 6
    %v3087 = vrot.slane %v2089, 2
    %v3088 = vrot.slane %v2089, 4
    %v3089 = vrot.slane %v2089, 6
    %v3090 = vrot.slane %v2090, 2
    %v3091 = vrot.slane %v2090, 4
    %v3092 = vrot.slane %v2090, 6
    %v3093 = vrot.slane %v2091, 2
    %v3094 = vrot.slane %v2091, 4
    %v3095 = vrot.slane %v2091, 6
    %v3096 = vrot.slane %v2092, 2
    %v3097 = vrot.slane %v2092, 4
    %v3098 = vrot.slane %v2092, 6
    %v3099 = vrot.slane %v2093, 2
    %v3100 = vrot.slane %v2093, 4
    %v3101 = vrot.slane %v2093, 6
    %v3102 = vrot.slane %v2094, 2
    %v3103 = vrot.slane %v2094, 4
    %v3104 = vrot.slane %v2094, 6
    %v3105 = vrot.slane %v2095, 2
    %v3106 = vrot.slane %v2095, 4
    %v3107 = vrot.slane %v2095, 6
    %v3108 = vrot.slane %v2096, 2
    %v3109 = vrot.slane %v2096, 4
    %v3110 = vrot.slane %v2096, 6
    %v3111 = vrot.slane %v2097, 2
    %v3112 = vrot.slane %v2097, 4
    %v3113 = vrot.slane %v2097, 6
    %v3114 = vrot.slane %v2098, 2
    %v3115 = vrot.slane %v2098, 4
    %v3116 = vrot.slane %v2098, 6
    %v3117 = vrot.slane %v2099, 2
    %v3118 = vrot.slane %v2099, 4
    %v3119 = vrot.slane %v2099, 6
    %v3120 = vrot.slane %v2100, 2
    %v3121 = vrot.slane %v2100, 4
    %v3122 = vrot.slane %v2100, 6
    %v3123 = vrot.slane %v2101, 2
    %v3124 = vrot.slane %v2101, 4
    %v3125 = vrot.slane %v2101, 6
    %vm3894 = vcmask 58368
    %v3895 = vsel %vm3894, %v1846, -inf
    %v3896 = vsel %vm3894, %v1850, -inf
    %v3897 = vmax.f32 %v3895, %v3896
    %v3898 = vrot.slane %v3897, 4
    %v3899 = vmax.f32 %v3897, %v3898
    %v3900 = vrot.slane %v3899, 2
    %v3901 = vmax.f32 %v3899, %v3900
    %v3902 = vrot.slane %v3901, 1
    %v3903 = vmax.f32 %v3901, %v3902
    %v3904 = vsel %vm3894, %v2358, -inf
    %v3905 = vsel %vm3894, %v2370, -inf
    %v3906 = vmax.f32 %v3904, %v3905
    %v3907 = vrot.slane %v3906, 4
    %v3908 = vmax.f32 %v3906, %v3907
    %v3909 = vrot.slane %v3908, 2
    %v3910 = vmax.f32 %v3908, %v3909
    %v3911 = vrot.slane %v3910, 1
    %v3912 = vmax.f32 %v3910, %v3911
    %v3913 = vsel %vm3894, %v2359, -inf
    %v3914 = vsel %vm3894, %v2371, -inf
    %v3915 = vmax.f32 %v3913, %v3914
    %v3916 = vrot.slane %v3915, 4
    %v3917 = vmax.f32 %v3915, %v3916
    %v3918 = vrot.slane %v3917, 2
    %v3919 = vmax.f32 %v3917, %v3918
    %v3920 = vrot.slane %v3919, 1
    %v3921 = vmax.f32 %v3919, %v3920
    %v3922 = vsel %vm3894, %v2360, -inf
    %v3923 = vsel %vm3894, %v2372, -inf
    %v3924 = vmax.f32 %v3922, %v3923
    %v3925 = vrot.slane %v3924, 4
    %v3926 = vmax.f32 %v3924, %v3925
    %v3927 = vrot.slane %v3926, 2
    %v3928 = vmax.f32 %v3926, %v3927
    %v3929 = vrot.slane %v3928, 1
    %v3930 = vmax.f32 %v3928, %v3929
    %v3931 = vsel %vm3894, %v1847, -inf
    %v3932 = vsel %vm3894, %v1851, -inf
    %v3933 = vmax.f32 %v3931, %v3932
    %v3934 = vrot.slane %v3933, 4
    %v3935 = vmax.f32 %v3933, %v3934
    %v3936 = vrot.slane %v3935, 2
    %v3937 = vmax.f32 %v3935, %v3936
    %v3938 = vrot.slane %v3937, 1
    %v3939 = vmax.f32 %v3937, %v3938
    %v3940 = vsel %vm3894, %v2361, -inf
    %v3941 = vsel %vm3894, %v2373, -inf
    %v3942 = vmax.f32 %v3940, %v3941
    %v3943 = vrot.slane %v3942, 4
    %v3944 = vmax.f32 %v3942, %v3943
    %v3945 = vrot.slane %v3944, 2
    %v3946 = vmax.f32 %v3944, %v3945
    %v3947 = vrot.slane %v3946, 1
    %v3948 = vmax.f32 %v3946, %v3947
    %v3949 = vsel %vm3894, %v2362, -inf
    %v3950 = vsel %vm3894, %v2374, -inf
    %v3951 = vmax.f32 %v3949, %v3950
    %v3952 = vrot.slane %v3951, 4
    %v3953 = vmax.f32 %v3951, %v3952
    %v3954 = vrot.slane %v3953, 2
    %v3955 = vmax.f32 %v3953, %v3954
    %v3956 = vrot.slane %v3955, 1
    %v3957 = vmax.f32 %v3955, %v3956
    %v3958 = vsel %vm3894, %v2363, -inf
    %v3959 = vsel %vm3894, %v2375, -inf
    %v3960 = vmax.f32 %v3958, %v3959
    %v3961 = vrot.slane %v3960, 4
    %v3962 = vmax.f32 %v3960, %v3961
    %v3963 = vrot.slane %v3962, 2
    %v3964 = vmax.f32 %v3962, %v3963
    %v3965 = vrot.slane %v3964, 1
    %v3966 = vmax.f32 %v3964, %v3965
    %v3967 = vsel %vm3894, %v1848, -inf
    %v3968 = vsel %vm3894, %v1852, -inf
    %v3969 = vmax.f32 %v3967, %v3968
    %v3970 = vrot.slane %v3969, 4
    %v3971 = vmax.f32 %v3969, %v3970
    %v3972 = vrot.slane %v3971, 2
    %v3973 = vmax.f32 %v3971, %v3972
    %v3974 = vrot.slane %v3973, 1
    %v3975 = vmax.f32 %v3973, %v3974
    %v3976 = vsel %vm3894, %v2364, -inf
    %v3977 = vsel %vm3894, %v2376, -inf
    %v3978 = vmax.f32 %v3976, %v3977
    %v3979 = vrot.slane %v3978, 4
    %v3980 = vmax.f32 %v3978, %v3979
    %v3981 = vrot.slane %v3980, 2
    %v3982 = vmax.f32 %v3980, %v3981
    %v3983 = vrot.slane %v3982, 1
    %v3984 = vmax.f32 %v3982, %v3983
    %v3985 = vsel %vm3894, %v2365, -inf
    %v3986 = vsel %vm3894, %v2377, -inf
    %v3987 = vmax.f32 %v3985, %v3986
    %v3988 = vrot.slane %v3987, 4
    %v3989 = vmax.f32 %v3987, %v3988
    %v3990 = vrot.slane %v3989, 2
    %v3991 = vmax.f32 %v3989, %v3990
    %v3992 = vrot.slane %v3991, 1
    %v3993 = vmax.f32 %v3991, %v3992
    %v3994 = vsel %vm3894, %v2366, -inf
    %v3995 = vsel %vm3894, %v2378, -inf
    %v3996 = vmax.f32 %v3994, %v3995
    %v3997 = vrot.slane %v3996, 4
    %v3998 = vmax.f32 %v3996, %v3997
    %v3999 = vrot.slane %v3998, 2
    %v4000 = vmax.f32 %v3998, %v3999
    %v4001 = vrot.slane %v4000, 1
    %v4002 = vmax.f32 %v4000, %v4001
    %v4003 = vsel %vm3894, %v1849, -inf
    %v4004 = vsel %vm3894, %v1853, -inf
    %v4005 = vmax.f32 %v4003, %v4004
    %v4006 = vrot.slane %v4005, 4
    %v4007 = vmax.f32 %v4005, %v4006
    %v4008 = vrot.slane %v4007, 2
    %v4009 = vmax.f32 %v4007, %v4008
    %v4010 = vrot.slane %v4009, 1
    %v4011 = vmax.f32 %v4009, %v4010
    %v4012 = vsel %vm3894, %v2367, -inf
    %v4013 = vsel %vm3894, %v2379, -inf
    %v4014 = vmax.f32 %v4012, %v4013
    %v4015 = vrot.slane %v4014, 4
    %v4016 = vmax.f32 %v4014, %v4015
    %v4017 = vrot.slane %v4016, 2
    %v4018 = vmax.f32 %v4016, %v4017
    %v4019 = vrot.slane %v4018, 1
    %v4020 = vmax.f32 %v4018, %v4019
    %v4021 = vsel %vm3894, %v2368, -inf
    %v4022 = vsel %vm3894, %v2380, -inf
    %v4023 = vmax.f32 %v4021, %v4022
    %v4024 = vrot.slane %v4023, 4
    %v4025 = vmax.f32 %v4023, %v4024
    %v4026 = vrot.slane %v4025, 2
    %v4027 = vmax.f32 %v4025, %v4026
    %v4028 = vrot.slane %v4027, 1
    %v4029 = vmax.f32 %v4027, %v4028
    %v4030 = vsel %vm3894, %v2369, -inf
    %v4031 = vsel %vm3894, %v2381, -inf
    %v4032 = vmax.f32 %v4030, %v4031
    %v4033 = vrot.slane %v4032, 4
    %v4034 = vmax.f32 %v4032, %v4033
    %v4035 = vrot.slane %v4034, 2
    %v4036 = vmax.f32 %v4034, %v4035
    %v4037 = vrot.slane %v4036, 1
    %v4038 = vmax.f32 %v4036, %v4037
    %v4039 = vsel %vm3894, %v1854, -inf
    %v4040 = vsel %vm3894, %v1858, -inf
    %v4041 = vmax.f32 %v4039, %v4040
    %v4042 = vrot.slane %v4041, 4
    %v4043 = vmax.f32 %v4041, %v4042
    %v4044 = vrot.slane %v4043, 2
    %v4045 = vmax.f32 %v4043, %v4044
    %v4046 = vrot.slane %v4045, 1
    %v4047 = vmax.f32 %v4045, %v4046
    %v4048 = vsel %vm3894, %v2382, -inf
    %v4049 = vsel %vm3894, %v2394, -inf
    %v4050 = vmax.f32 %v4048, %v4049
    %v4051 = vrot.slane %v4050, 4
    %v4052 = vmax.f32 %v4050, %v4051
    %v4053 = vrot.slane %v4052, 2
    %v4054 = vmax.f32 %v4052, %v4053
    %v4055 = vrot.slane %v4054, 1
    %v4056 = vmax.f32 %v4054, %v4055
    %v4057 = vsel %vm3894, %v2383, -inf
    %v4058 = vsel %vm3894, %v2395, -inf
    %v4059 = vmax.f32 %v4057, %v4058
    %v4060 = vrot.slane %v4059, 4
    %v4061 = vmax.f32 %v4059, %v4060
    %v4062 = vrot.slane %v4061, 2
    %v4063 = vmax.f32 %v4061, %v4062
    %v4064 = vrot.slane %v4063, 1
    %v4065 = vmax.f32 %v4063, %v4064
    %v4066 = vsel %vm3894, %v2384, -inf
    %v4067 = vsel %vm3894, %v2396, -inf
    %v4068 = vmax.f32 %v4066, %v4067
    %v4069 = vrot.slane %v4068, 4
    %v4070 = vmax.f32 %v4068, %v4069
    %v4071 = vrot.slane %v4070, 2
    %v4072 = vmax.f32 %v4070, %v4071
    %v4073 = vrot.slane %v4072, 1
    %v4074 = vmax.f32 %v4072, %v4073
    %v4075 = vsel %vm3894, %v1855, -inf
    %v4076 = vsel %vm3894, %v1859, -inf
    %v4077 = vmax.f32 %v4075, %v4076
    %v4078 = vrot.slane %v4077, 4
    %v4079 = vmax.f32 %v4077, %v4078
    %v4080 = vrot.slane %v4079, 2
    %v4081 = vmax.f32 %v4079, %v4080
    %v4082 = vrot.slane %v4081, 1
    %v4083 = vmax.f32 %v4081, %v4082
    %v4084 = vsel %vm3894, %v2385, -inf
    %v4085 = vsel %vm3894, %v2397, -inf
    %v4086 = vmax.f32 %v4084, %v4085
    %v4087 = vrot.slane %v4086, 4
    %v4088 = vmax.f32 %v4086, %v4087
    %v4089 = vrot.slane %v4088, 2
    %v4090 = vmax.f32 %v4088, %v4089
    %v4091 = vrot.slane %v4090, 1
    %v4092 = vmax.f32 %v4090, %v4091
    %v4093 = vsel %vm3894, %v2386, -inf
    %v4094 = vsel %vm3894, %v2398, -inf
    %v4095 = vmax.f32 %v4093, %v4094
    %v4096 = vrot.slane %v4095, 4
    %v4097 = vmax.f32 %v4095, %v4096
    %v4098 = vrot.slane %v4097, 2
    %v4099 = vmax.f32 %v4097, %v4098
    %v4100 = vrot.slane %v4099, 1
    %v4101 = vmax.f32 %v4099, %v4100
    %v4102 = vsel %vm3894, %v2387, -inf
    %v4103 = vsel %vm3894, %v2399, -inf
    %v4104 = vmax.f32 %v4102, %v4103
    %v4105 = vrot.slane %v4104, 4
    %v4106 = vmax.f32 %v4104, %v4105
    %v4107 = vrot.slane %v4106, 2
    %v4108 = vmax.f32 %v4106, %v4107
    %v4109 = vrot.slane %v4108, 1
    %v4110 = vmax.f32 %v4108, %v4109
    %v4111 = vsel %vm3894, %v1856, -inf
    %v4112 = vsel %vm3894, %v1860, -inf
    %v4113 = vmax.f32 %v4111, %v4112
    %v4114 = vrot.slane %v4113, 4
    %v4115 = vmax.f32 %v4113, %v4114
    %v4116 = vrot.slane %v4115, 2
    %v4117 = vmax.f32 %v4115, %v4116
    %v4118 = vrot.slane %v4117, 1
    %v4119 = vmax.f32 %v4117, %v4118
    %v4120 = vsel %vm3894, %v2388, -inf
    %v4121 = vsel %vm3894, %v2400, -inf
    %v4122 = vmax.f32 %v4120, %v4121
    %v4123 = vrot.slane %v4122, 4
    %v4124 = vmax.f32 %v4122, %v4123
    %v4125 = vrot.slane %v4124, 2
    %v4126 = vmax.f32 %v4124, %v4125
    %v4127 = vrot.slane %v4126, 1
    %v4128 = vmax.f32 %v4126, %v4127
    %v4129 = vsel %vm3894, %v2389, -inf
    %v4130 = vsel %vm3894, %v2401, -inf
    %v4131 = vmax.f32 %v4129, %v4130
    %v4132 = vrot.slane %v4131, 4
    %v4133 = vmax.f32 %v4131, %v4132
    %v4134 = vrot.slane %v4133, 2
    %v4135 = vmax.f32 %v4133, %v4134
    %v4136 = vrot.slane %v4135, 1
    %v4137 = vmax.f32 %v4135, %v4136
    %v4138 = vsel %vm3894, %v2390, -inf
    %v4139 = vsel %vm3894, %v2402, -inf
    %v4140 = vmax.f32 %v4138, %v4139
    %v4141 = vrot.slane %v4140, 4
    %v4142 = vmax.f32 %v4140, %v4141
    %v4143 = vrot.slane %v4142, 2
    %v4144 = vmax.f32 %v4142, %v4143
    %v4145 = vrot.slane %v4144, 1
    %v4146 = vmax.f32 %v4144, %v4145
    %v4147 = vsel %vm3894, %v1857, -inf
    %v4148 = vsel %vm3894, %v1861, -inf
    %v4149 = vmax.f32 %v4147, %v4148
    %v4150 = vrot.slane %v4149, 4
    %v4151 = vmax.f32 %v4149, %v4150
    %v4152 = vrot.slane %v4151, 2
    %v4153 = vmax.f32 %v4151, %v4152
    %v4154 = vrot.slane %v4153, 1
    %v4155 = vmax.f32 %v4153, %v4154
    %v4156 = vsel %vm3894, %v2391, -inf
    %v4157 = vsel %vm3894, %v2403, -inf
    %v4158 = vmax.f32 %v4156, %v4157
    %v4159 = vrot.slane %v4158, 4
    %v4160 = vmax.f32 %v4158, %v4159
    %v4161 = vrot.slane %v4160, 2
    %v4162 = vmax.f32 %v4160, %v4161
    %v4163 = vrot.slane %v4162, 1
    %v4164 = vmax.f32 %v4162, %v4163
    %v4165 = vsel %vm3894, %v2392, -inf
    %v4166 = vsel %vm3894, %v2404, -inf
    %v4167 = vmax.f32 %v4165, %v4166
    %v4168 = vrot.slane %v4167, 4
    %v4169 = vmax.f32 %v4167, %v4168
    %v4170 = vrot.slane %v4169, 2
    %v4171 = vmax.f32 %v4169, %v4170
    %v4172 = vrot.slane %v4171, 1
    %v4173 = vmax.f32 %v4171, %v4172
    %v4174 = vsel %vm3894, %v2393, -inf
    %v4175 = vsel %vm3894, %v2405, -inf
    %v4176 = vmax.f32 %v4174, %v4175
    %v4177 = vrot.slane %v4176, 4
    %v4178 = vmax.f32 %v4176, %v4177
    %v4179 = vrot.slane %v4178, 2
    %v4180 = vmax.f32 %v4178, %v4179
    %v4181 = vrot.slane %v4180, 1
    %v4182 = vmax.f32 %v4180, %v4181
    %v4183 = vsel %vm3894, %v1862, -inf
    %v4184 = vsel %vm3894, %v1866, -inf
    %v4185 = vmax.f32 %v4183, %v4184
    %v4186 = vrot.slane %v4185, 4
    %v4187 = vmax.f32 %v4185, %v4186
    %v4188 = vrot.slane %v4187, 2
    %v4189 = vmax.f32 %v4187, %v4188
    %v4190 = vrot.slane %v4189, 1
    %v4191 = vmax.f32 %v4189, %v4190
    %v4192 = vsel %vm3894, %v2406, -inf
    %v4193 = vsel %vm3894, %v2418, -inf
    %v4194 = vmax.f32 %v4192, %v4193
    %v4195 = vrot.slane %v4194, 4
    %v4196 = vmax.f32 %v4194, %v4195
    %v4197 = vrot.slane %v4196, 2
    %v4198 = vmax.f32 %v4196, %v4197
    %v4199 = vrot.slane %v4198, 1
    %v4200 = vmax.f32 %v4198, %v4199
    %v4201 = vsel %vm3894, %v2407, -inf
    %v4202 = vsel %vm3894, %v2419, -inf
    %v4203 = vmax.f32 %v4201, %v4202
    %v4204 = vrot.slane %v4203, 4
    %v4205 = vmax.f32 %v4203, %v4204
    %v4206 = vrot.slane %v4205, 2
    %v4207 = vmax.f32 %v4205, %v4206
    %v4208 = vrot.slane %v4207, 1
    %v4209 = vmax.f32 %v4207, %v4208
    %v4210 = vsel %vm3894, %v2408, -inf
    %v4211 = vsel %vm3894, %v2420, -inf
    %v4212 = vmax.f32 %v4210, %v4211
    %v4213 = vrot.slane %v4212, 4
    %v4214 = vmax.f32 %v4212, %v4213
    %v4215 = vrot.slane %v4214, 2
    %v4216 = vmax.f32 %v4214, %v4215
    %v4217 = vrot.slane %v4216, 1
    %v4218 = vmax.f32 %v4216, %v4217
    %v4219 = vsel %vm3894, %v1863, -inf
    %v4220 = vsel %vm3894, %v1867, -inf
    %v4221 = vmax.f32 %v4219, %v4220
    %v4222 = vrot.slane %v4221, 4
    %v4223 = vmax.f32 %v4221, %v4222
    %v4224 = vrot.slane %v4223, 2
    %v4225 = vmax.f32 %v4223, %v4224
    %v4226 = vrot.slane %v4225, 1
    %v4227 = vmax.f32 %v4225, %v4226
    %v4228 = vsel %vm3894, %v2409, -inf
    %v4229 = vsel %vm3894, %v2421, -inf
    %v4230 = vmax.f32 %v4228, %v4229
    %v4231 = vrot.slane %v4230, 4
    %v4232 = vmax.f32 %v4230, %v4231
    %v4233 = vrot.slane %v4232, 2
    %v4234 = vmax.f32 %v4232, %v4233
    %v4235 = vrot.slane %v4234, 1
    %v4236 = vmax.f32 %v4234, %v4235
    %v4237 = vsel %vm3894, %v2410, -inf
    %v4238 = vsel %vm3894, %v2422, -inf
    %v4239 = vmax.f32 %v4237, %v4238
    %v4240 = vrot.slane %v4239, 4
    %v4241 = vmax.f32 %v4239, %v4240
    %v4242 = vrot.slane %v4241, 2
    %v4243 = vmax.f32 %v4241, %v4242
    %v4244 = vrot.slane %v4243, 1
    %v4245 = vmax.f32 %v4243, %v4244
    %v4246 = vsel %vm3894, %v2411, -inf
    %v4247 = vsel %vm3894, %v2423, -inf
    %v4248 = vmax.f32 %v4246, %v4247
    %v4249 = vrot.slane %v4248, 4
    %v4250 = vmax.f32 %v4248, %v4249
    %v4251 = vrot.slane %v4250, 2
    %v4252 = vmax.f32 %v4250, %v4251
    %v4253 = vrot.slane %v4252, 1
    %v4254 = vmax.f32 %v4252, %v4253
    %v4255 = vsel %vm3894, %v1864, -inf
    %v4256 = vsel %vm3894, %v1868, -inf
    %v4257 = vmax.f32 %v4255, %v4256
    %v4258 = vrot.slane %v4257, 4
    %v4259 = vmax.f32 %v4257, %v4258
    %v4260 = vrot.slane %v4259, 2
    %v4261 = vmax.f32 %v4259, %v4260
    %v4262 = vrot.slane %v4261, 1
    %v4263 = vmax.f32 %v4261, %v4262
    %v4264 = vsel %vm3894, %v2412, -inf
    %v4265 = vsel %vm3894, %v2424, -inf
    %v4266 = vmax.f32 %v4264, %v4265
    %v4267 = vrot.slane %v4266, 4
    %v4268 = vmax.f32 %v4266, %v4267
    %v4269 = vrot.slane %v4268, 2
    %v4270 = vmax.f32 %v4268, %v4269
    %v4271 = vrot.slane %v4270, 1
    %v4272 = vmax.f32 %v4270, %v4271
    %v4273 = vsel %vm3894, %v2413, -inf
    %v4274 = vsel %vm3894, %v2425, -inf
    %v4275 = vmax.f32 %v4273, %v4274
    %v4276 = vrot.slane %v4275, 4
    %v4277 = vmax.f32 %v4275, %v4276
    %v4278 = vrot.slane %v4277, 2
    %v4279 = vmax.f32 %v4277, %v4278
    %v4280 = vrot.slane %v4279, 1
    %v4281 = vmax.f32 %v4279, %v4280
    %v4282 = vsel %vm3894, %v2414, -inf
    %v4283 = vsel %vm3894, %v2426, -inf
    %v4284 = vmax.f32 %v4282, %v4283
    %v4285 = vrot.slane %v4284, 4
    %v4286 = vmax.f32 %v4284, %v4285
    %v4287 = vrot.slane %v4286, 2
    %v4288 = vmax.f32 %v4286, %v4287
    %v4289 = vrot.slane %v4288, 1
    %v4290 = vmax.f32 %v4288, %v4289
    %v4291 = vsel %vm3894, %v1865, -inf
    %v4292 = vsel %vm3894, %v1869, -inf
    %v4293 = vmax.f32 %v4291, %v4292
    %v4294 = vrot.slane %v4293, 4
    %v4295 = vmax.f32 %v4293, %v4294
    %v4296 = vrot.slane %v4295, 2
    %v4297 = vmax.f32 %v4295, %v4296
    %v4298 = vrot.slane %v4297, 1
    %v4299 = vmax.f32 %v4297, %v4298
    %v4300 = vsel %vm3894, %v2415, -inf
    %v4301 = vsel %vm3894, %v2427, -inf
    %v4302 = vmax.f32 %v4300, %v4301
    %v4303 = vrot.slane %v4302, 4
    %v4304 = vmax.f32 %v4302, %v4303
    %v4305 = vrot.slane %v4304, 2
    %v4306 = vmax.f32 %v4304, %v4305
    %v4307 = vrot.slane %v4306, 1
    %v4308 = vmax.f32 %v4306, %v4307
    %v4309 = vsel %vm3894, %v2416, -inf
    %v4310 = vsel %vm3894, %v2428, -inf
    %v4311 = vmax.f32 %v4309, %v4310
    %v4312 = vrot.slane %v4311, 4
    %v4313 = vmax.f32 %v4311, %v4312
    %v4314 = vrot.slane %v4313, 2
    %v4315 = vmax.f32 %v4313, %v4314
    %v4316 = vrot.slane %v4315, 1
    %v4317 = vmax.f32 %v4315, %v4316
    %v4318 = vsel %vm3894, %v2417, -inf
    %v4319 = vsel %vm3894, %v2429, -inf
    %v4320 = vmax.f32 %v4318, %v4319
    %v4321 = vrot.slane %v4320, 4
    %v4322 = vmax.f32 %v4320, %v4321
    %v4323 = vrot.slane %v4322, 2
    %v4324 = vmax.f32 %v4322, %v4323
    %v4325 = vrot.slane %v4324, 1
    %v4326 = vmax.f32 %v4324, %v4325
    %v4327 = vsel %vm3894, %v1870, -inf
    %v4328 = vsel %vm3894, %v1874, -inf
    %v4329 = vmax.f32 %v4327, %v4328
    %v4330 = vrot.slane %v4329, 4
    %v4331 = vmax.f32 %v4329, %v4330
    %v4332 = vrot.slane %v4331, 2
    %v4333 = vmax.f32 %v4331, %v4332
    %v4334 = vrot.slane %v4333, 1
    %v4335 = vmax.f32 %v4333, %v4334
    %v4336 = vsel %vm3894, %v2430, -inf
    %v4337 = vsel %vm3894, %v2442, -inf
    %v4338 = vmax.f32 %v4336, %v4337
    %v4339 = vrot.slane %v4338, 4
    %v4340 = vmax.f32 %v4338, %v4339
    %v4341 = vrot.slane %v4340, 2
    %v4342 = vmax.f32 %v4340, %v4341
    %v4343 = vrot.slane %v4342, 1
    %v4344 = vmax.f32 %v4342, %v4343
    %v4345 = vsel %vm3894, %v2431, -inf
    %v4346 = vsel %vm3894, %v2443, -inf
    %v4347 = vmax.f32 %v4345, %v4346
    %v4348 = vrot.slane %v4347, 4
    %v4349 = vmax.f32 %v4347, %v4348
    %v4350 = vrot.slane %v4349, 2
    %v4351 = vmax.f32 %v4349, %v4350
    %v4352 = vrot.slane %v4351, 1
    %v4353 = vmax.f32 %v4351, %v4352
    %v4354 = vsel %vm3894, %v2432, -inf
    %v4355 = vsel %vm3894, %v2444, -inf
    %v4356 = vmax.f32 %v4354, %v4355
    %v4357 = vrot.slane %v4356, 4
    %v4358 = vmax.f32 %v4356, %v4357
    %v4359 = vrot.slane %v4358, 2
    %v4360 = vmax.f32 %v4358, %v4359
    %v4361 = vrot.slane %v4360, 1
    %v4362 = vmax.f32 %v4360, %v4361
    %v4363 = vsel %vm3894, %v1871, -inf
    %v4364 = vsel %vm3894, %v1875, -inf
    %v4365 = vmax.f32 %v4363, %v4364
    %v4366 = vrot.slane %v4365, 4
    %v4367 = vmax.f32 %v4365, %v4366
    %v4368 = vrot.slane %v4367, 2
    %v4369 = vmax.f32 %v4367, %v4368
    %v4370 = vrot.slane %v4369, 1
    %v4371 = vmax.f32 %v4369, %v4370
    %v4372 = vsel %vm3894, %v2433, -inf
    %v4373 = vsel %vm3894, %v2445, -inf
    %v4374 = vmax.f32 %v4372, %v4373
    %v4375 = vrot.slane %v4374, 4
    %v4376 = vmax.f32 %v4374, %v4375
    %v4377 = vrot.slane %v4376, 2
    %v4378 = vmax.f32 %v4376, %v4377
    %v4379 = vrot.slane %v4378, 1
    %v4380 = vmax.f32 %v4378, %v4379
    %v4381 = vsel %vm3894, %v2434, -inf
    %v4382 = vsel %vm3894, %v2446, -inf
    %v4383 = vmax.f32 %v4381, %v4382
    %v4384 = vrot.slane %v4383, 4
    %v4385 = vmax.f32 %v4383, %v4384
    %v4386 = vrot.slane %v4385, 2
    %v4387 = vmax.f32 %v4385, %v4386
    %v4388 = vrot.slane %v4387, 1
    %v4389 = vmax.f32 %v4387, %v4388
    %v4390 = vsel %vm3894, %v2435, -inf
    %v4391 = vsel %vm3894, %v2447, -inf
    %v4392 = vmax.f32 %v4390, %v4391
    %v4393 = vrot.slane %v4392, 4
    %v4394 = vmax.f32 %v4392, %v4393
    %v4395 = vrot.slane %v4394, 2
    %v4396 = vmax.f32 %v4394, %v4395
    %v4397 = vrot.slane %v4396, 1
    %v4398 = vmax.f32 %v4396, %v4397
    %v4399 = vsel %vm3894, %v1872, -inf
    %v4400 = vsel %vm3894, %v1876, -inf
    %v4401 = vmax.f32 %v4399, %v4400
    %v4402 = vrot.slane %v4401, 4
    %v4403 = vmax.f32 %v4401, %v4402
    %v4404 = vrot.slane %v4403, 2
    %v4405 = vmax.f32 %v4403, %v4404
    %v4406 = vrot.slane %v4405, 1
    %v4407 = vmax.f32 %v4405, %v4406
    %v4408 = vsel %vm3894, %v2436, -inf
    %v4409 = vsel %vm3894, %v2448, -inf
    %v4410 = vmax.f32 %v4408, %v4409
    %v4411 = vrot.slane %v4410, 4
    %v4412 = vmax.f32 %v4410, %v4411
    %v4413 = vrot.slane %v4412, 2
    %v4414 = vmax.f32 %v4412, %v4413
    %v4415 = vrot.slane %v4414, 1
    %v4416 = vmax.f32 %v4414, %v4415
    %v4417 = vsel %vm3894, %v2437, -inf
    %v4418 = vsel %vm3894, %v2449, -inf
    %v4419 = vmax.f32 %v4417, %v4418
    %v4420 = vrot.slane %v4419, 4
    %v4421 = vmax.f32 %v4419, %v4420
    %v4422 = vrot.slane %v4421, 2
    %v4423 = vmax.f32 %v4421, %v4422
    %v4424 = vrot.slane %v4423, 1
    %v4425 = vmax.f32 %v4423, %v4424
    %v4426 = vsel %vm3894, %v2438, -inf
    %v4427 = vsel %vm3894, %v2450, -inf
    %v4428 = vmax.f32 %v4426, %v4427
    %v4429 = vrot.slane %v4428, 4
    %v4430 = vmax.f32 %v4428, %v4429
    %v4431 = vrot.slane %v4430, 2
    %v4432 = vmax.f32 %v4430, %v4431
    %v4433 = vrot.slane %v4432, 1
    %v4434 = vmax.f32 %v4432, %v4433
    %v4435 = vsel %vm3894, %v1873, -inf
    %v4436 = vsel %vm3894, %v1877, -inf
    %v4437 = vmax.f32 %v4435, %v4436
    %v4438 = vrot.slane %v4437, 4
    %v4439 = vmax.f32 %v4437, %v4438
    %v4440 = vrot.slane %v4439, 2
    %v4441 = vmax.f32 %v4439, %v4440
    %v4442 = vrot.slane %v4441, 1
    %v4443 = vmax.f32 %v4441, %v4442
    %v4444 = vsel %vm3894, %v2439, -inf
    %v4445 = vsel %vm3894, %v2451, -inf
    %v4446 = vmax.f32 %v4444, %v4445
    %v4447 = vrot.slane %v4446, 4
    %v4448 = vmax.f32 %v4446, %v4447
    %v4449 = vrot.slane %v4448, 2
    %v4450 = vmax.f32 %v4448, %v4449
    %v4451 = vrot.slane %v4450, 1
    %v4452 = vmax.f32 %v4450, %v4451
    %v4453 = vsel %vm3894, %v2440, -inf
    %v4454 = vsel %vm3894, %v2452, -inf
    %v4455 = vmax.f32 %v4453, %v4454
    %v4456 = vrot.slane %v4455, 4
    %v4457 = vmax.f32 %v4455, %v4456
    %v4458 = vrot.slane %v4457, 2
    %v4459 = vmax.f32 %v4457, %v4458
    %v4460 = vrot.slane %v4459, 1
    %v4461 = vmax.f32 %v4459, %v4460
    %v4462 = vsel %vm3894, %v2441, -inf
    %v4463 = vsel %vm3894, %v2453, -inf
    %v4464 = vmax.f32 %v4462, %v4463
    %v4465 = vrot.slane %v4464, 4
    %v4466 = vmax.f32 %v4464, %v4465
    %v4467 = vrot.slane %v4466, 2
    %v4468 = vmax.f32 %v4466, %v4467
    %v4469 = vrot.slane %v4468, 1
    %v4470 = vmax.f32 %v4468, %v4469
    %v4471 = vsel %vm3894, %v1878, -inf
    %v4472 = vsel %vm3894, %v1882, -inf
    %v4473 = vmax.f32 %v4471, %v4472
    %v4474 = vrot.slane %v4473, 4
    %v4475 = vmax.f32 %v4473, %v4474
    %v4476 = vrot.slane %v4475, 2
    %v4477 = vmax.f32 %v4475, %v4476
    %v4478 = vrot.slane %v4477, 1
    %v4479 = vmax.f32 %v4477, %v4478
    %v4480 = vsel %vm3894, %v2454, -inf
    %v4481 = vsel %vm3894, %v2466, -inf
    %v4482 = vmax.f32 %v4480, %v4481
    %v4483 = vrot.slane %v4482, 4
    %v4484 = vmax.f32 %v4482, %v4483
    %v4485 = vrot.slane %v4484, 2
    %v4486 = vmax.f32 %v4484, %v4485
    %v4487 = vrot.slane %v4486, 1
    %v4488 = vmax.f32 %v4486, %v4487
    %v4489 = vsel %vm3894, %v2455, -inf
    %v4490 = vsel %vm3894, %v2467, -inf
    %v4491 = vmax.f32 %v4489, %v4490
    %v4492 = vrot.slane %v4491, 4
    %v4493 = vmax.f32 %v4491, %v4492
    %v4494 = vrot.slane %v4493, 2
    %v4495 = vmax.f32 %v4493, %v4494
    %v4496 = vrot.slane %v4495, 1
    %v4497 = vmax.f32 %v4495, %v4496
    %v4498 = vsel %vm3894, %v2456, -inf
    %v4499 = vsel %vm3894, %v2468, -inf
    %v4500 = vmax.f32 %v4498, %v4499
    %v4501 = vrot.slane %v4500, 4
    %v4502 = vmax.f32 %v4500, %v4501
    %v4503 = vrot.slane %v4502, 2
    %v4504 = vmax.f32 %v4502, %v4503
    %v4505 = vrot.slane %v4504, 1
    %v4506 = vmax.f32 %v4504, %v4505
    %v4507 = vsel %vm3894, %v1879, -inf
    %v4508 = vsel %vm3894, %v1883, -inf
    %v4509 = vmax.f32 %v4507, %v4508
    %v4510 = vrot.slane %v4509, 4
    %v4511 = vmax.f32 %v4509, %v4510
    %v4512 = vrot.slane %v4511, 2
    %v4513 = vmax.f32 %v4511, %v4512
    %v4514 = vrot.slane %v4513, 1
    %v4515 = vmax.f32 %v4513, %v4514
    %v4516 = vsel %vm3894, %v2457, -inf
    %v4517 = vsel %vm3894, %v2469, -inf
    %v4518 = vmax.f32 %v4516, %v4517
    %v4519 = vrot.slane %v4518, 4
    %v4520 = vmax.f32 %v4518, %v4519
    %v4521 = vrot.slane %v4520, 2
    %v4522 = vmax.f32 %v4520, %v4521
    %v4523 = vrot.slane %v4522, 1
    %v4524 = vmax.f32 %v4522, %v4523
    %v4525 = vsel %vm3894, %v2458, -inf
    %v4526 = vsel %vm3894, %v2470, -inf
    %v4527 = vmax.f32 %v4525, %v4526
    %v4528 = vrot.slane %v4527, 4
    %v4529 = vmax.f32 %v4527, %v4528
    %v4530 = vrot.slane %v4529, 2
    %v4531 = vmax.f32 %v4529, %v4530
    %v4532 = vrot.slane %v4531, 1
    %v4533 = vmax.f32 %v4531, %v4532
    %v4534 = vsel %vm3894, %v2459, -inf
    %v4535 = vsel %vm3894, %v2471, -inf
    %v4536 = vmax.f32 %v4534, %v4535
    %v4537 = vrot.slane %v4536, 4
    %v4538 = vmax.f32 %v4536, %v4537
    %v4539 = vrot.slane %v4538, 2
    %v4540 = vmax.f32 %v4538, %v4539
    %v4541 = vrot.slane %v4540, 1
    %v4542 = vmax.f32 %v4540, %v4541
    %v4543 = vsel %vm3894, %v1880, -inf
    %v4544 = vsel %vm3894, %v1884, -inf
    %v4545 = vmax.f32 %v4543, %v4544
    %v4546 = vrot.slane %v4545, 4
    %v4547 = vmax.f32 %v4545, %v4546
    %v4548 = vrot.slane %v4547, 2
    %v4549 = vmax.f32 %v4547, %v4548
    %v4550 = vrot.slane %v4549, 1
    %v4551 = vmax.f32 %v4549, %v4550
    %v4552 = vsel %vm3894, %v2460, -inf
    %v4553 = vsel %vm3894, %v2472, -inf
    %v4554 = vmax.f32 %v4552, %v4553
    %v4555 = vrot.slane %v4554, 4
    %v4556 = vmax.f32 %v4554, %v4555
    %v4557 = vrot.slane %v4556, 2
    %v4558 = vmax.f32 %v4556, %v4557
    %v4559 = vrot.slane %v4558, 1
    %v4560 = vmax.f32 %v4558, %v4559
    %v4561 = vsel %vm3894, %v2461, -inf
    %v4562 = vsel %vm3894, %v2473, -inf
    %v4563 = vmax.f32 %v4561, %v4562
    %v4564 = vrot.slane %v4563, 4
    %v4565 = vmax.f32 %v4563, %v4564
    %v4566 = vrot.slane %v4565, 2
    %v4567 = vmax.f32 %v4565, %v4566
    %v4568 = vrot.slane %v4567, 1
    %v4569 = vmax.f32 %v4567, %v4568
    %v4570 = vsel %vm3894, %v2462, -inf
    %v4571 = vsel %vm3894, %v2474, -inf
    %v4572 = vmax.f32 %v4570, %v4571
    %v4573 = vrot.slane %v4572, 4
    %v4574 = vmax.f32 %v4572, %v4573
    %v4575 = vrot.slane %v4574, 2
    %v4576 = vmax.f32 %v4574, %v4575
    %v4577 = vrot.slane %v4576, 1
    %v4578 = vmax.f32 %v4576, %v4577
    %v4579 = vsel %vm3894, %v1881, -inf
    %v4580 = vsel %vm3894, %v1885, -inf
    %v4581 = vmax.f32 %v4579, %v4580
    %v4582 = vrot.slane %v4581, 4
    %v4583 = vmax.f32 %v4581, %v4582
    %v4584 = vrot.slane %v4583, 2
    %v4585 = vmax.f32 %v4583, %v4584
    %v4586 = vrot.slane %v4585, 1
    %v4587 = vmax.f32 %v4585, %v4586
    %v4588 = vsel %vm3894, %v2463, -inf
    %v4589 = vsel %vm3894, %v2475, -inf
    %v4590 = vmax.f32 %v4588, %v4589
    %v4591 = vrot.slane %v4590, 4
    %v4592 = vmax.f32 %v4590, %v4591
    %v4593 = vrot.slane %v4592, 2
    %v4594 = vmax.f32 %v4592, %v4593
    %v4595 = vrot.slane %v4594, 1
    %v4596 = vmax.f32 %v4594, %v4595
    %v4597 = vsel %vm3894, %v2464, -inf
    %v4598 = vsel %vm3894, %v2476, -inf
    %v4599 = vmax.f32 %v4597, %v4598
    %v4600 = vrot.slane %v4599, 4
    %v4601 = vmax.f32 %v4599, %v4600
    %v4602 = vrot.slane %v4601, 2
    %v4603 = vmax.f32 %v4601, %v4602
    %v4604 = vrot.slane %v4603, 1
    %v4605 = vmax.f32 %v4603, %v4604
    %v4606 = vsel %vm3894, %v2465, -inf
    %v4607 = vsel %vm3894, %v2477, -inf
    %v4608 = vmax.f32 %v4606, %v4607
    %v4609 = vrot.slane %v4608, 4
    %v4610 = vmax.f32 %v4608, %v4609
    %v4611 = vrot.slane %v4610, 2
    %v4612 = vmax.f32 %v4610, %v4611
    %v4613 = vrot.slane %v4612, 1
    %v4614 = vmax.f32 %v4612, %v4613
    %v4615 = vsel %vm3894, %v1886, -inf
    %v4616 = vsel %vm3894, %v1890, -inf
    %v4617 = vmax.f32 %v4615, %v4616
    %v4618 = vrot.slane %v4617, 4
    %v4619 = vmax.f32 %v4617, %v4618
    %v4620 = vrot.slane %v4619, 2
    %v4621 = vmax.f32 %v4619, %v4620
    %v4622 = vrot.slane %v4621, 1
    %v4623 = vmax.f32 %v4621, %v4622
    %v4624 = vsel %vm3894, %v2478, -inf
    %v4625 = vsel %vm3894, %v2490, -inf
    %v4626 = vmax.f32 %v4624, %v4625
    %v4627 = vrot.slane %v4626, 4
    %v4628 = vmax.f32 %v4626, %v4627
    %v4629 = vrot.slane %v4628, 2
    %v4630 = vmax.f32 %v4628, %v4629
    %v4631 = vrot.slane %v4630, 1
    %v4632 = vmax.f32 %v4630, %v4631
    %v4633 = vsel %vm3894, %v2479, -inf
    %v4634 = vsel %vm3894, %v2491, -inf
    %v4635 = vmax.f32 %v4633, %v4634
    %v4636 = vrot.slane %v4635, 4
    %v4637 = vmax.f32 %v4635, %v4636
    %v4638 = vrot.slane %v4637, 2
    %v4639 = vmax.f32 %v4637, %v4638
    %v4640 = vrot.slane %v4639, 1
    %v4641 = vmax.f32 %v4639, %v4640
    %v4642 = vsel %vm3894, %v2480, -inf
    %v4643 = vsel %vm3894, %v2492, -inf
    %v4644 = vmax.f32 %v4642, %v4643
    %v4645 = vrot.slane %v4644, 4
    %v4646 = vmax.f32 %v4644, %v4645
    %v4647 = vrot.slane %v4646, 2
    %v4648 = vmax.f32 %v4646, %v4647
    %v4649 = vrot.slane %v4648, 1
    %v4650 = vmax.f32 %v4648, %v4649
    %v4651 = vsel %vm3894, %v1887, -inf
    %v4652 = vsel %vm3894, %v1891, -inf
    %v4653 = vmax.f32 %v4651, %v4652
    %v4654 = vrot.slane %v4653, 4
    %v4655 = vmax.f32 %v4653, %v4654
    %v4656 = vrot.slane %v4655, 2
    %v4657 = vmax.f32 %v4655, %v4656
    %v4658 = vrot.slane %v4657, 1
    %v4659 = vmax.f32 %v4657, %v4658
    %v4660 = vsel %vm3894, %v2481, -inf
    %v4661 = vsel %vm3894, %v2493, -inf
    %v4662 = vmax.f32 %v4660, %v4661
    %v4663 = vrot.slane %v4662, 4
    %v4664 = vmax.f32 %v4662, %v4663
    %v4665 = vrot.slane %v4664, 2
    %v4666 = vmax.f32 %v4664, %v4665
    %v4667 = vrot.slane %v4666, 1
    %v4668 = vmax.f32 %v4666, %v4667
    %v4669 = vsel %vm3894, %v2482, -inf
    %v4670 = vsel %vm3894, %v2494, -inf
    %v4671 = vmax.f32 %v4669, %v4670
    %v4672 = vrot.slane %v4671, 4
    %v4673 = vmax.f32 %v4671, %v4672
    %v4674 = vrot.slane %v4673, 2
    %v4675 = vmax.f32 %v4673, %v4674
    %v4676 = vrot.slane %v4675, 1
    %v4677 = vmax.f32 %v4675, %v4676
    %v4678 = vsel %vm3894, %v2483, -inf
    %v4679 = vsel %vm3894, %v2495, -inf
    %v4680 = vmax.f32 %v4678, %v4679
    %v4681 = vrot.slane %v4680, 4
    %v4682 = vmax.f32 %v4680, %v4681
    %v4683 = vrot.slane %v4682, 2
    %v4684 = vmax.f32 %v4682, %v4683
    %v4685 = vrot.slane %v4684, 1
    %v4686 = vmax.f32 %v4684, %v4685
    %v4687 = vsel %vm3894, %v1888, -inf
    %v4688 = vsel %vm3894, %v1892, -inf
    %v4689 = vmax.f32 %v4687, %v4688
    %v4690 = vrot.slane %v4689, 4
    %v4691 = vmax.f32 %v4689, %v4690
    %v4692 = vrot.slane %v4691, 2
    %v4693 = vmax.f32 %v4691, %v4692
    %v4694 = vrot.slane %v4693, 1
    %v4695 = vmax.f32 %v4693, %v4694
    %v4696 = vsel %vm3894, %v2484, -inf
    %v4697 = vsel %vm3894, %v2496, -inf
    %v4698 = vmax.f32 %v4696, %v4697
    %v4699 = vrot.slane %v4698, 4
    %v4700 = vmax.f32 %v4698, %v4699
    %v4701 = vrot.slane %v4700, 2
    %v4702 = vmax.f32 %v4700, %v4701
    %v4703 = vrot.slane %v4702, 1
    %v4704 = vmax.f32 %v4702, %v4703
    %v4705 = vsel %vm3894, %v2485, -inf
    %v4706 = vsel %vm3894, %v2497, -inf
    %v4707 = vmax.f32 %v4705, %v4706
    %v4708 = vrot.slane %v4707, 4
    %v4709 = vmax.f32 %v4707, %v4708
    %v4710 = vrot.slane %v4709, 2
    %v4711 = vmax.f32 %v4709, %v4710
    %v4712 = vrot.slane %v4711, 1
    %v4713 = vmax.f32 %v4711, %v4712
    %v4714 = vsel %vm3894, %v2486, -inf
    %v4715 = vsel %vm3894, %v2498, -inf
    %v4716 = vmax.f32 %v4714, %v4715
    %v4717 = vrot.slane %v4716, 4
    %v4718 = vmax.f32 %v4716, %v4717
    %v4719 = vrot.slane %v4718, 2
    %v4720 = vmax.f32 %v4718, %v4719
    %v4721 = vrot.slane %v4720, 1
    %v4722 = vmax.f32 %v4720, %v4721
    %v4723 = vsel %vm3894, %v1889, -inf
    %v4724 = vsel %vm3894, %v1893, -inf
    %v4725 = vmax.f32 %v4723, %v4724
    %v4726 = vrot.slane %v4725, 4
    %v4727 = vmax.f32 %v4725, %v4726
    %v4728 = vrot.slane %v4727, 2
    %v4729 = vmax.f32 %v4727, %v4728
    %v4730 = vrot.slane %v4729, 1
    %v4731 = vmax.f32 %v4729, %v4730
    %v4732 = vsel %vm3894, %v2487, -inf
    %v4733 = vsel %vm3894, %v2499, -inf
    %v4734 = vmax.f32 %v4732, %v4733
    %v4735 = vrot.slane %v4734, 4
    %v4736 = vmax.f32 %v4734, %v4735
    %v4737 = vrot.slane %v4736, 2
    %v4738 = vmax.f32 %v4736, %v4737
    %v4739 = vrot.slane %v4738, 1
    %v4740 = vmax.f32 %v4738, %v4739
    %v4741 = vsel %vm3894, %v2488, -inf
    %v4742 = vsel %vm3894, %v2500, -inf
    %v4743 = vmax.f32 %v4741, %v4742
    %v4744 = vrot.slane %v4743, 4
    %v4745 = vmax.f32 %v4743, %v4744
    %v4746 = vrot.slane %v4745, 2
    %v4747 = vmax.f32 %v4745, %v4746
    %v4748 = vrot.slane %v4747, 1
    %v4749 = vmax.f32 %v4747, %v4748
    %v4750 = vsel %vm3894, %v2489, -inf
    %v4751 = vsel %vm3894, %v2501, -inf
    %v4752 = vmax.f32 %v4750, %v4751
    %v4753 = vrot.slane %v4752, 4
    %v4754 = vmax.f32 %v4752, %v4753
    %v4755 = vrot.slane %v4754, 2
    %v4756 = vmax.f32 %v4754, %v4755
    %v4757 = vrot.slane %v4756, 1
    %v4758 = vmax.f32 %v4756, %v4757
    %v4759 = vsel %vm3894, %v1894, -inf
    %v4760 = vsel %vm3894, %v1898, -inf
    %v4761 = vmax.f32 %v4759, %v4760
    %v4762 = vrot.slane %v4761, 4
    %v4763 = vmax.f32 %v4761, %v4762
    %v4764 = vrot.slane %v4763, 2
    %v4765 = vmax.f32 %v4763, %v4764
    %v4766 = vrot.slane %v4765, 1
    %v4767 = vmax.f32 %v4765, %v4766
    %v4768 = vsel %vm3894, %v2502, -inf
    %v4769 = vsel %vm3894, %v2514, -inf
    %v4770 = vmax.f32 %v4768, %v4769
    %v4771 = vrot.slane %v4770, 4
    %v4772 = vmax.f32 %v4770, %v4771
    %v4773 = vrot.slane %v4772, 2
    %v4774 = vmax.f32 %v4772, %v4773
    %v4775 = vrot.slane %v4774, 1
    %v4776 = vmax.f32 %v4774, %v4775
    %v4777 = vsel %vm3894, %v2503, -inf
    %v4778 = vsel %vm3894, %v2515, -inf
    %v4779 = vmax.f32 %v4777, %v4778
    %v4780 = vrot.slane %v4779, 4
    %v4781 = vmax.f32 %v4779, %v4780
    %v4782 = vrot.slane %v4781, 2
    %v4783 = vmax.f32 %v4781, %v4782
    %v4784 = vrot.slane %v4783, 1
    %v4785 = vmax.f32 %v4783, %v4784
    %v4786 = vsel %vm3894, %v2504, -inf
    %v4787 = vsel %vm3894, %v2516, -inf
    %v4788 = vmax.f32 %v4786, %v4787
    %v4789 = vrot.slane %v4788, 4
    %v4790 = vmax.f32 %v4788, %v4789
    %v4791 = vrot.slane %v4790, 2
    %v4792 = vmax.f32 %v4790, %v4791
    %v4793 = vrot.slane %v4792, 1
    %v4794 = vmax.f32 %v4792, %v4793
    %v4795 = vsel %vm3894, %v1895, -inf
    %v4796 = vsel %vm3894, %v1899, -inf
    %v4797 = vmax.f32 %v4795, %v4796
    %v4798 = vrot.slane %v4797, 4
    %v4799 = vmax.f32 %v4797, %v4798
    %v4800 = vrot.slane %v4799, 2
    %v4801 = vmax.f32 %v4799, %v4800
    %v4802 = vrot.slane %v4801, 1
    %v4803 = vmax.f32 %v4801, %v4802
    %v4804 = vsel %vm3894, %v2505, -inf
    %v4805 = vsel %vm3894, %v2517, -inf
    %v4806 = vmax.f32 %v4804, %v4805
    %v4807 = vrot.slane %v4806, 4
    %v4808 = vmax.f32 %v4806, %v4807
    %v4809 = vrot.slane %v4808, 2
    %v4810 = vmax.f32 %v4808, %v4809
    %v4811 = vrot.slane %v4810, 1
    %v4812 = vmax.f32 %v4810, %v4811
    %v4813 = vsel %vm3894, %v2506, -inf
    %v4814 = vsel %vm3894, %v2518, -inf
    %v4815 = vmax.f32 %v4813, %v4814
    %v4816 = vrot.slane %v4815, 4
    %v4817 = vmax.f32 %v4815, %v4816
    %v4818 = vrot.slane %v4817, 2
    %v4819 = vmax.f32 %v4817, %v4818
    %v4820 = vrot.slane %v4819, 1
    %v4821 = vmax.f32 %v4819, %v4820
    %v4822 = vsel %vm3894, %v2507, -inf
    %v4823 = vsel %vm3894, %v2519, -inf
    %v4824 = vmax.f32 %v4822, %v4823
    %v4825 = vrot.slane %v4824, 4
    %v4826 = vmax.f32 %v4824, %v4825
    %v4827 = vrot.slane %v4826, 2
    %v4828 = vmax.f32 %v4826, %v4827
    %v4829 = vrot.slane %v4828, 1
    %v4830 = vmax.f32 %v4828, %v4829
    %v4831 = vsel %vm3894, %v1896, -inf
    %v4832 = vsel %vm3894, %v1900, -inf
    %v4833 = vmax.f32 %v4831, %v4832
    %v4834 = vrot.slane %v4833, 4
    %v4835 = vmax.f32 %v4833, %v4834
    %v4836 = vrot.slane %v4835, 2
    %v4837 = vmax.f32 %v4835, %v4836
    %v4838 = vrot.slane %v4837, 1
    %v4839 = vmax.f32 %v4837, %v4838
    %v4840 = vsel %vm3894, %v2508, -inf
    %v4841 = vsel %vm3894, %v2520, -inf
    %v4842 = vmax.f32 %v4840, %v4841
    %v4843 = vrot.slane %v4842, 4
    %v4844 = vmax.f32 %v4842, %v4843
    %v4845 = vrot.slane %v4844, 2
    %v4846 = vmax.f32 %v4844, %v4845
    %v4847 = vrot.slane %v4846, 1
    %v4848 = vmax.f32 %v4846, %v4847
    %v4849 = vsel %vm3894, %v2509, -inf
    %v4850 = vsel %vm3894, %v2521, -inf
    %v4851 = vmax.f32 %v4849, %v4850
    %v4852 = vrot.slane %v4851, 4
    %v4853 = vmax.f32 %v4851, %v4852
    %v4854 = vrot.slane %v4853, 2
    %v4855 = vmax.f32 %v4853, %v4854
    %v4856 = vrot.slane %v4855, 1
    %v4857 = vmax.f32 %v4855, %v4856
    %v4858 = vsel %vm3894, %v2510, -inf
    %v4859 = vsel %vm3894, %v2522, -inf
    %v4860 = vmax.f32 %v4858, %v4859
    %v4861 = vrot.slane %v4860, 4
    %v4862 = vmax.f32 %v4860, %v4861
    %v4863 = vrot.slane %v4862, 2
    %v4864 = vmax.f32 %v4862, %v4863
    %v4865 = vrot.slane %v4864, 1
    %v4866 = vmax.f32 %v4864, %v4865
    %v4867 = vsel %vm3894, %v1897, -inf
    %v4868 = vsel %vm3894, %v1901, -inf
    %v4869 = vmax.f32 %v4867, %v4868
    %v4870 = vrot.slane %v4869, 4
    %v4871 = vmax.f32 %v4869, %v4870
    %v4872 = vrot.slane %v4871, 2
    %v4873 = vmax.f32 %v4871, %v4872
    %v4874 = vrot.slane %v4873, 1
    %v4875 = vmax.f32 %v4873, %v4874
    %v4876 = vsel %vm3894, %v2511, -inf
    %v4877 = vsel %vm3894, %v2523, -inf
    %v4878 = vmax.f32 %v4876, %v4877
    %v4879 = vrot.slane %v4878, 4
    %v4880 = vmax.f32 %v4878, %v4879
    %v4881 = vrot.slane %v4880, 2
    %v4882 = vmax.f32 %v4880, %v4881
    %v4883 = vrot.slane %v4882, 1
    %v4884 = vmax.f32 %v4882, %v4883
    %v4885 = vsel %vm3894, %v2512, -inf
    %v4886 = vsel %vm3894, %v2524, -inf
    %v4887 = vmax.f32 %v4885, %v4886
    %v4888 = vrot.slane %v4887, 4
    %v4889 = vmax.f32 %v4887, %v4888
    %v4890 = vrot.slane %v4889, 2
    %v4891 = vmax.f32 %v4889, %v4890
    %v4892 = vrot.slane %v4891, 1
    %v4893 = vmax.f32 %v4891, %v4892
    %v4894 = vsel %vm3894, %v2513, -inf
    %v4895 = vsel %vm3894, %v2525, -inf
    %v4896 = vmax.f32 %v4894, %v4895
    %v4897 = vrot.slane %v4896, 4
    %v4898 = vmax.f32 %v4896, %v4897
    %v4899 = vrot.slane %v4898, 2
    %v4900 = vmax.f32 %v4898, %v4899
    %v4901 = vrot.slane %v4900, 1
    %v4902 = vmax.f32 %v4900, %v4901
    %v4903 = vsel %vm3894, %v1902, -inf
    %v4904 = vsel %vm3894, %v1906, -inf
    %v4905 = vmax.f32 %v4903, %v4904
    %v4906 = vrot.slane %v4905, 4
    %v4907 = vmax.f32 %v4905, %v4906
    %v4908 = vrot.slane %v4907, 2
    %v4909 = vmax.f32 %v4907, %v4908
    %v4910 = vrot.slane %v4909, 1
    %v4911 = vmax.f32 %v4909, %v4910
    %v4912 = vsel %vm3894, %v2526, -inf
    %v4913 = vsel %vm3894, %v2538, -inf
    %v4914 = vmax.f32 %v4912, %v4913
    %v4915 = vrot.slane %v4914, 4
    %v4916 = vmax.f32 %v4914, %v4915
    %v4917 = vrot.slane %v4916, 2
    %v4918 = vmax.f32 %v4916, %v4917
    %v4919 = vrot.slane %v4918, 1
    %v4920 = vmax.f32 %v4918, %v4919
    %v4921 = vsel %vm3894, %v2527, -inf
    %v4922 = vsel %vm3894, %v2539, -inf
    %v4923 = vmax.f32 %v4921, %v4922
    %v4924 = vrot.slane %v4923, 4
    %v4925 = vmax.f32 %v4923, %v4924
    %v4926 = vrot.slane %v4925, 2
    %v4927 = vmax.f32 %v4925, %v4926
    %v4928 = vrot.slane %v4927, 1
    %v4929 = vmax.f32 %v4927, %v4928
    %v4930 = vsel %vm3894, %v2528, -inf
    %v4931 = vsel %vm3894, %v2540, -inf
    %v4932 = vmax.f32 %v4930, %v4931
    %v4933 = vrot.slane %v4932, 4
    %v4934 = vmax.f32 %v4932, %v4933
    %v4935 = vrot.slane %v4934, 2
    %v4936 = vmax.f32 %v4934, %v4935
    %v4937 = vrot.slane %v4936, 1
    %v4938 = vmax.f32 %v4936, %v4937
    %v4939 = vsel %vm3894, %v1903, -inf
    %v4940 = vsel %vm3894, %v1907, -inf
    %v4941 = vmax.f32 %v4939, %v4940
    %v4942 = vrot.slane %v4941, 4
    %v4943 = vmax.f32 %v4941, %v4942
    %v4944 = vrot.slane %v4943, 2
    %v4945 = vmax.f32 %v4943, %v4944
    %v4946 = vrot.slane %v4945, 1
    %v4947 = vmax.f32 %v4945, %v4946
    %v4948 = vsel %vm3894, %v2529, -inf
    %v4949 = vsel %vm3894, %v2541, -inf
    %v4950 = vmax.f32 %v4948, %v4949
    %v4951 = vrot.slane %v4950, 4
    %v4952 = vmax.f32 %v4950, %v4951
    %v4953 = vrot.slane %v4952, 2
    %v4954 = vmax.f32 %v4952, %v4953
    %v4955 = vrot.slane %v4954, 1
    %v4956 = vmax.f32 %v4954, %v4955
    %v4957 = vsel %vm3894, %v2530, -inf
    %v4958 = vsel %vm3894, %v2542, -inf
    %v4959 = vmax.f32 %v4957, %v4958
    %v4960 = vrot.slane %v4959, 4
    %v4961 = vmax.f32 %v4959, %v4960
    %v4962 = vrot.slane %v4961, 2
    %v4963 = vmax.f32 %v4961, %v4962
    %v4964 = vrot.slane %v4963, 1
    %v4965 = vmax.f32 %v4963, %v4964
    %v4966 = vsel %vm3894, %v2531, -inf
    %v4967 = vsel %vm3894, %v2543, -inf
    %v4968 = vmax.f32 %v4966, %v4967
    %v4969 = vrot.slane %v4968, 4
    %v4970 = vmax.f32 %v4968, %v4969
    %v4971 = vrot.slane %v4970, 2
    %v4972 = vmax.f32 %v4970, %v4971
    %v4973 = vrot.slane %v4972, 1
    %v4974 = vmax.f32 %v4972, %v4973
    %v4975 = vsel %vm3894, %v1904, -inf
    %v4976 = vsel %vm3894, %v1908, -inf
    %v4977 = vmax.f32 %v4975, %v4976
    %v4978 = vrot.slane %v4977, 4
    %v4979 = vmax.f32 %v4977, %v4978
    %v4980 = vrot.slane %v4979, 2
    %v4981 = vmax.f32 %v4979, %v4980
    %v4982 = vrot.slane %v4981, 1
    %v4983 = vmax.f32 %v4981, %v4982
    %v4984 = vsel %vm3894, %v2532, -inf
    %v4985 = vsel %vm3894, %v2544, -inf
    %v4986 = vmax.f32 %v4984, %v4985
    %v4987 = vrot.slane %v4986, 4
    %v4988 = vmax.f32 %v4986, %v4987
    %v4989 = vrot.slane %v4988, 2
    %v4990 = vmax.f32 %v4988, %v4989
    %v4991 = vrot.slane %v4990, 1
    %v4992 = vmax.f32 %v4990, %v4991
    %v4993 = vsel %vm3894, %v2533, -inf
    %v4994 = vsel %vm3894, %v2545, -inf
    %v4995 = vmax.f32 %v4993, %v4994
    %v4996 = vrot.slane %v4995, 4
    %v4997 = vmax.f32 %v4995, %v4996
    %v4998 = vrot.slane %v4997, 2
    %v4999 = vmax.f32 %v4997, %v4998
    %v5000 = vrot.slane %v4999, 1
    %v5001 = vmax.f32 %v4999, %v5000
    %v5002 = vsel %vm3894, %v2534, -inf
    %v5003 = vsel %vm3894, %v2546, -inf
    %v5004 = vmax.f32 %v5002, %v5003
    %v5005 = vrot.slane %v5004, 4
    %v5006 = vmax.f32 %v5004, %v5005
    %v5007 = vrot.slane %v5006, 2
    %v5008 = vmax.f32 %v5006, %v5007
    %v5009 = vrot.slane %v5008, 1
    %v5010 = vmax.f32 %v5008, %v5009
    %v5011 = vsel %vm3894, %v1905, -inf
    %v5012 = vsel %vm3894, %v1909, -inf
    %v5013 = vmax.f32 %v5011, %v5012
    %v5014 = vrot.slane %v5013, 4
    %v5015 = vmax.f32 %v5013, %v5014
    %v5016 = vrot.slane %v5015, 2
    %v5017 = vmax.f32 %v5015, %v5016
    %v5018 = vrot.slane %v5017, 1
    %v5019 = vmax.f32 %v5017, %v5018
    %v5020 = vsel %vm3894, %v2535, -inf
    %v5021 = vsel %vm3894, %v2547, -inf
    %v5022 = vmax.f32 %v5020, %v5021
    %v5023 = vrot.slane %v5022, 4
    %v5024 = vmax.f32 %v5022, %v5023
    %v5025 = vrot.slane %v5024, 2
    %v5026 = vmax.f32 %v5024, %v5025
    %v5027 = vrot.slane %v5026, 1
    %v5028 = vmax.f32 %v5026, %v5027
    %v5029 = vsel %vm3894, %v2536, -inf
    %v5030 = vsel %vm3894, %v2548, -inf
    %v5031 = vmax.f32 %v5029, %v5030
    %v5032 = vrot.slane %v5031, 4
    %v5033 = vmax.f32 %v5031, %v5032
    %v5034 = vrot.slane %v5033, 2
    %v5035 = vmax.f32 %v5033, %v5034
    %v5036 = vrot.slane %v5035, 1
    %v5037 = vmax.f32 %v5035, %v5036
    %v5038 = vsel %vm3894, %v2537, -inf
    %v5039 = vsel %vm3894, %v2549, -inf
    %v5040 = vmax.f32 %v5038, %v5039
    %v5041 = vrot.slane %v5040, 4
    %v5042 = vmax.f32 %v5040, %v5041
    %v5043 = vrot.slane %v5042, 2
    %v5044 = vmax.f32 %v5042, %v5043
    %v5045 = vrot.slane %v5044, 1
    %v5046 = vmax.f32 %v5044, %v5045
    %v5047 = vsel %vm3894, %v1910, -inf
    %v5048 = vsel %vm3894, %v1914, -inf
    %v5049 = vmax.f32 %v5047, %v5048
    %v5050 = vrot.slane %v5049, 4
    %v5051 = vmax.f32 %v5049, %v5050
    %v5052 = vrot.slane %v5051, 2
    %v5053 = vmax.f32 %v5051, %v5052
    %v5054 = vrot.slane %v5053, 1
    %v5055 = vmax.f32 %v5053, %v5054
    %v5056 = vsel %vm3894, %v2550, -inf
    %v5057 = vsel %vm3894, %v2562, -inf
    %v5058 = vmax.f32 %v5056, %v5057
    %v5059 = vrot.slane %v5058, 4
    %v5060 = vmax.f32 %v5058, %v5059
    %v5061 = vrot.slane %v5060, 2
    %v5062 = vmax.f32 %v5060, %v5061
    %v5063 = vrot.slane %v5062, 1
    %v5064 = vmax.f32 %v5062, %v5063
    %v5065 = vsel %vm3894, %v2551, -inf
    %v5066 = vsel %vm3894, %v2563, -inf
    %v5067 = vmax.f32 %v5065, %v5066
    %v5068 = vrot.slane %v5067, 4
    %v5069 = vmax.f32 %v5067, %v5068
    %v5070 = vrot.slane %v5069, 2
    %v5071 = vmax.f32 %v5069, %v5070
    %v5072 = vrot.slane %v5071, 1
    %v5073 = vmax.f32 %v5071, %v5072
    %v5074 = vsel %vm3894, %v2552, -inf
    %v5075 = vsel %vm3894, %v2564, -inf
    %v5076 = vmax.f32 %v5074, %v5075
    %v5077 = vrot.slane %v5076, 4
    %v5078 = vmax.f32 %v5076, %v5077
    %v5079 = vrot.slane %v5078, 2
    %v5080 = vmax.f32 %v5078, %v5079
    %v5081 = vrot.slane %v5080, 1
    %v5082 = vmax.f32 %v5080, %v5081
    %v5083 = vsel %vm3894, %v1911, -inf
    %v5084 = vsel %vm3894, %v1915, -inf
    %v5085 = vmax.f32 %v5083, %v5084
    %v5086 = vrot.slane %v5085, 4
    %v5087 = vmax.f32 %v5085, %v5086
    %v5088 = vrot.slane %v5087, 2
    %v5089 = vmax.f32 %v5087, %v5088
    %v5090 = vrot.slane %v5089, 1
    %v5091 = vmax.f32 %v5089, %v5090
    %v5092 = vsel %vm3894, %v2553, -inf
    %v5093 = vsel %vm3894, %v2565, -inf
    %v5094 = vmax.f32 %v5092, %v5093
    %v5095 = vrot.slane %v5094, 4
    %v5096 = vmax.f32 %v5094, %v5095
    %v5097 = vrot.slane %v5096, 2
    %v5098 = vmax.f32 %v5096, %v5097
    %v5099 = vrot.slane %v5098, 1
    %v5100 = vmax.f32 %v5098, %v5099
    %v5101 = vsel %vm3894, %v2554, -inf
    %v5102 = vsel %vm3894, %v2566, -inf
    %v5103 = vmax.f32 %v5101, %v5102
    %v5104 = vrot.slane %v5103, 4
    %v5105 = vmax.f32 %v5103, %v5104
    %v5106 = vrot.slane %v5105, 2
    %v5107 = vmax.f32 %v5105, %v5106
    %v5108 = vrot.slane %v5107, 1
    %v5109 = vmax.f32 %v5107, %v5108
    %v5110 = vsel %vm3894, %v2555, -inf
    %v5111 = vsel %vm3894, %v2567, -inf
    %v5112 = vmax.f32 %v5110, %v5111
    %v5113 = vrot.slane %v5112, 4
    %v5114 = vmax.f32 %v5112, %v5113
    %v5115 = vrot.slane %v5114, 2
    %v5116 = vmax.f32 %v5114, %v5115
    %v5117 = vrot.slane %v5116, 1
    %v5118 = vmax.f32 %v5116, %v5117
    %v5119 = vsel %vm3894, %v1912, -inf
    %v5120 = vsel %vm3894, %v1916, -inf
    %v5121 = vmax.f32 %v5119, %v5120
    %v5122 = vrot.slane %v5121, 4
    %v5123 = vmax.f32 %v5121, %v5122
    %v5124 = vrot.slane %v5123, 2
    %v5125 = vmax.f32 %v5123, %v5124
    %v5126 = vrot.slane %v5125, 1
    %v5127 = vmax.f32 %v5125, %v5126
    %v5128 = vsel %vm3894, %v2556, -inf
    %v5129 = vsel %vm3894, %v2568, -inf
    %v5130 = vmax.f32 %v5128, %v5129
    %v5131 = vrot.slane %v5130, 4
    %v5132 = vmax.f32 %v5130, %v5131
    %v5133 = vrot.slane %v5132, 2
    %v5134 = vmax.f32 %v5132, %v5133
    %v5135 = vrot.slane %v5134, 1
    %v5136 = vmax.f32 %v5134, %v5135
    %v5137 = vsel %vm3894, %v2557, -inf
    %v5138 = vsel %vm3894, %v2569, -inf
    %v5139 = vmax.f32 %v5137, %v5138
    %v5140 = vrot.slane %v5139, 4
    %v5141 = vmax.f32 %v5139, %v5140
    %v5142 = vrot.slane %v5141, 2
    %v5143 = vmax.f32 %v5141, %v5142
    %v5144 = vrot.slane %v5143, 1
    %v5145 = vmax.f32 %v5143, %v5144
    %v5146 = vsel %vm3894, %v2558, -inf
    %v5147 = vsel %vm3894, %v2570, -inf
    %v5148 = vmax.f32 %v5146, %v5147
    %v5149 = vrot.slane %v5148, 4
    %v5150 = vmax.f32 %v5148, %v5149
    %v5151 = vrot.slane %v5150, 2
    %v5152 = vmax.f32 %v5150, %v5151
    %v5153 = vrot.slane %v5152, 1
    %v5154 = vmax.f32 %v5152, %v5153
    %v5155 = vsel %vm3894, %v1913, -inf
    %v5156 = vsel %vm3894, %v1917, -inf
    %v5157 = vmax.f32 %v5155, %v5156
    %v5158 = vrot.slane %v5157, 4
    %v5159 = vmax.f32 %v5157, %v5158
    %v5160 = vrot.slane %v5159, 2
    %v5161 = vmax.f32 %v5159, %v5160
    %v5162 = vrot.slane %v5161, 1
    %v5163 = vmax.f32 %v5161, %v5162
    %v5164 = vsel %vm3894, %v2559, -inf
    %v5165 = vsel %vm3894, %v2571, -inf
    %v5166 = vmax.f32 %v5164, %v5165
    %v5167 = vrot.slane %v5166, 4
    %v5168 = vmax.f32 %v5166, %v5167
    %v5169 = vrot.slane %v5168, 2
    %v5170 = vmax.f32 %v5168, %v5169
    %v5171 = vrot.slane %v5170, 1
    %v5172 = vmax.f32 %v5170, %v5171
    %v5173 = vsel %vm3894, %v2560, -inf
    %v5174 = vsel %vm3894, %v2572, -inf
    %v5175 = vmax.f32 %v5173, %v5174
    %v5176 = vrot.slane %v5175, 4
    %v5177 = vmax.f32 %v5175, %v5176
    %v5178 = vrot.slane %v5177, 2
    %v5179 = vmax.f32 %v5177, %v5178
    %v5180 = vrot.slane %v5179, 1
    %v5181 = vmax.f32 %v5179, %v5180
    %v5182 = vsel %vm3894, %v2561, -inf
    %v5183 = vsel %vm3894, %v2573, -inf
    %v5184 = vmax.f32 %v5182, %v5183
    %v5185 = vrot.slane %v5184, 4
    %v5186 = vmax.f32 %v5184, %v5185
    %v5187 = vrot.slane %v5186, 2
    %v5188 = vmax.f32 %v5186, %v5187
    %v5189 = vrot.slane %v5188, 1
    %v5190 = vmax.f32 %v5188, %v5189
    %v5191 = vsel %vm3894, %v1918, -inf
    %v5192 = vsel %vm3894, %v1922, -inf
    %v5193 = vmax.f32 %v5191, %v5192
    %v5194 = vrot.slane %v5193, 4
    %v5195 = vmax.f32 %v5193, %v5194
    %v5196 = vrot.slane %v5195, 2
    %v5197 = vmax.f32 %v5195, %v5196
    %v5198 = vrot.slane %v5197, 1
    %v5199 = vmax.f32 %v5197, %v5198
    %v5200 = vsel %vm3894, %v2574, -inf
    %v5201 = vsel %vm3894, %v2586, -inf
    %v5202 = vmax.f32 %v5200, %v5201
    %v5203 = vrot.slane %v5202, 4
    %v5204 = vmax.f32 %v5202, %v5203
    %v5205 = vrot.slane %v5204, 2
    %v5206 = vmax.f32 %v5204, %v5205
    %v5207 = vrot.slane %v5206, 1
    %v5208 = vmax.f32 %v5206, %v5207
    %v5209 = vsel %vm3894, %v2575, -inf
    %v5210 = vsel %vm3894, %v2587, -inf
    %v5211 = vmax.f32 %v5209, %v5210
    %v5212 = vrot.slane %v5211, 4
    %v5213 = vmax.f32 %v5211, %v5212
    %v5214 = vrot.slane %v5213, 2
    %v5215 = vmax.f32 %v5213, %v5214
    %v5216 = vrot.slane %v5215, 1
    %v5217 = vmax.f32 %v5215, %v5216
    %v5218 = vsel %vm3894, %v2576, -inf
    %v5219 = vsel %vm3894, %v2588, -inf
    %v5220 = vmax.f32 %v5218, %v5219
    %v5221 = vrot.slane %v5220, 4
    %v5222 = vmax.f32 %v5220, %v5221
    %v5223 = vrot.slane %v5222, 2
    %v5224 = vmax.f32 %v5222, %v5223
    %v5225 = vrot.slane %v5224, 1
    %v5226 = vmax.f32 %v5224, %v5225
    %v5227 = vsel %vm3894, %v1919, -inf
    %v5228 = vsel %vm3894, %v1923, -inf
    %v5229 = vmax.f32 %v5227, %v5228
    %v5230 = vrot.slane %v5229, 4
    %v5231 = vmax.f32 %v5229, %v5230
    %v5232 = vrot.slane %v5231, 2
    %v5233 = vmax.f32 %v5231, %v5232
    %v5234 = vrot.slane %v5233, 1
    %v5235 = vmax.f32 %v5233, %v5234
    %v5236 = vsel %vm3894, %v2577, -inf
    %v5237 = vsel %vm3894, %v2589, -inf
    %v5238 = vmax.f32 %v5236, %v5237
    %v5239 = vrot.slane %v5238, 4
    %v5240 = vmax.f32 %v5238, %v5239
    %v5241 = vrot.slane %v5240, 2
    %v5242 = vmax.f32 %v5240, %v5241
    %v5243 = vrot.slane %v5242, 1
    %v5244 = vmax.f32 %v5242, %v5243
    %v5245 = vsel %vm3894, %v2578, -inf
    %v5246 = vsel %vm3894, %v2590, -inf
    %v5247 = vmax.f32 %v5245, %v5246
    %v5248 = vrot.slane %v5247, 4
    %v5249 = vmax.f32 %v5247, %v5248
    %v5250 = vrot.slane %v5249, 2
    %v5251 = vmax.f32 %v5249, %v5250
    %v5252 = vrot.slane %v5251, 1
    %v5253 = vmax.f32 %v5251, %v5252
    %v5254 = vsel %vm3894, %v2579, -inf
    %v5255 = vsel %vm3894, %v2591, -inf
    %v5256 = vmax.f32 %v5254, %v5255
    %v5257 = vrot.slane %v5256, 4
    %v5258 = vmax.f32 %v5256, %v5257
    %v5259 = vrot.slane %v5258, 2
    %v5260 = vmax.f32 %v5258, %v5259
    %v5261 = vrot.slane %v5260, 1
    %v5262 = vmax.f32 %v5260, %v5261
    %v5263 = vsel %vm3894, %v1920, -inf
    %v5264 = vsel %vm3894, %v1924, -inf
    %v5265 = vmax.f32 %v5263, %v5264
    %v5266 = vrot.slane %v5265, 4
    %v5267 = vmax.f32 %v5265, %v5266
    %v5268 = vrot.slane %v5267, 2
    %v5269 = vmax.f32 %v5267, %v5268
    %v5270 = vrot.slane %v5269, 1
    %v5271 = vmax.f32 %v5269, %v5270
    %v5272 = vsel %vm3894, %v2580, -inf
    %v5273 = vsel %vm3894, %v2592, -inf
    %v5274 = vmax.f32 %v5272, %v5273
    %v5275 = vrot.slane %v5274, 4
    %v5276 = vmax.f32 %v5274, %v5275
    %v5277 = vrot.slane %v5276, 2
    %v5278 = vmax.f32 %v5276, %v5277
    %v5279 = vrot.slane %v5278, 1
    %v5280 = vmax.f32 %v5278, %v5279
    %v5281 = vsel %vm3894, %v2581, -inf
    %v5282 = vsel %vm3894, %v2593, -inf
    %v5283 = vmax.f32 %v5281, %v5282
    %v5284 = vrot.slane %v5283, 4
    %v5285 = vmax.f32 %v5283, %v5284
    %v5286 = vrot.slane %v5285, 2
    %v5287 = vmax.f32 %v5285, %v5286
    %v5288 = vrot.slane %v5287, 1
    %v5289 = vmax.f32 %v5287, %v5288
    %v5290 = vsel %vm3894, %v2582, -inf
    %v5291 = vsel %vm3894, %v2594, -inf
    %v5292 = vmax.f32 %v5290, %v5291
    %v5293 = vrot.slane %v5292, 4
    %v5294 = vmax.f32 %v5292, %v5293
    %v5295 = vrot.slane %v5294, 2
    %v5296 = vmax.f32 %v5294, %v5295
    %v5297 = vrot.slane %v5296, 1
    %v5298 = vmax.f32 %v5296, %v5297
    %v5299 = vsel %vm3894, %v1921, -inf
    %v5300 = vsel %vm3894, %v1925, -inf
    %v5301 = vmax.f32 %v5299, %v5300
    %v5302 = vrot.slane %v5301, 4
    %v5303 = vmax.f32 %v5301, %v5302
    %v5304 = vrot.slane %v5303, 2
    %v5305 = vmax.f32 %v5303, %v5304
    %v5306 = vrot.slane %v5305, 1
    %v5307 = vmax.f32 %v5305, %v5306
    %v5308 = vsel %vm3894, %v2583, -inf
    %v5309 = vsel %vm3894, %v2595, -inf
    %v5310 = vmax.f32 %v5308, %v5309
    %v5311 = vrot.slane %v5310, 4
    %v5312 = vmax.f32 %v5310, %v5311
    %v5313 = vrot.slane %v5312, 2
    %v5314 = vmax.f32 %v5312, %v5313
    %v5315 = vrot.slane %v5314, 1
    %v5316 = vmax.f32 %v5314, %v5315
    %v5317 = vsel %vm3894, %v2584, -inf
    %v5318 = vsel %vm3894, %v2596, -inf
    %v5319 = vmax.f32 %v5317, %v5318
    %v5320 = vrot.slane %v5319, 4
    %v5321 = vmax.f32 %v5319, %v5320
    %v5322 = vrot.slane %v5321, 2
    %v5323 = vmax.f32 %v5321, %v5322
    %v5324 = vrot.slane %v5323, 1
    %v5325 = vmax.f32 %v5323, %v5324
    %v5326 = vsel %vm3894, %v2585, -inf
    %v5327 = vsel %vm3894, %v2597, -inf
    %v5328 = vmax.f32 %v5326, %v5327
    %v5329 = vrot.slane %v5328, 4
    %v5330 = vmax.f32 %v5328, %v5329
    %v5331 = vrot.slane %v5330, 2
    %v5332 = vmax.f32 %v5330, %v5331
    %v5333 = vrot.slane %v5332, 1
    %v5334 = vmax.f32 %v5332, %v5333
    %v5335 = vsel %vm3894, %v1926, -inf
    %v5336 = vsel %vm3894, %v1930, -inf
    %v5337 = vmax.f32 %v5335, %v5336
    %v5338 = vrot.slane %v5337, 4
    %v5339 = vmax.f32 %v5337, %v5338
    %v5340 = vrot.slane %v5339, 2
    %v5341 = vmax.f32 %v5339, %v5340
    %v5342 = vrot.slane %v5341, 1
    %v5343 = vmax.f32 %v5341, %v5342
    %v5344 = vsel %vm3894, %v2598, -inf
    %v5345 = vsel %vm3894, %v2610, -inf
    %v5346 = vmax.f32 %v5344, %v5345
    %v5347 = vrot.slane %v5346, 4
    %v5348 = vmax.f32 %v5346, %v5347
    %v5349 = vrot.slane %v5348, 2
    %v5350 = vmax.f32 %v5348, %v5349
    %v5351 = vrot.slane %v5350, 1
    %v5352 = vmax.f32 %v5350, %v5351
    %v5353 = vsel %vm3894, %v2599, -inf
    %v5354 = vsel %vm3894, %v2611, -inf
    %v5355 = vmax.f32 %v5353, %v5354
    %v5356 = vrot.slane %v5355, 4
    %v5357 = vmax.f32 %v5355, %v5356
    %v5358 = vrot.slane %v5357, 2
    %v5359 = vmax.f32 %v5357, %v5358
    %v5360 = vrot.slane %v5359, 1
    %v5361 = vmax.f32 %v5359, %v5360
    %v5362 = vsel %vm3894, %v2600, -inf
    %v5363 = vsel %vm3894, %v2612, -inf
    %v5364 = vmax.f32 %v5362, %v5363
    %v5365 = vrot.slane %v5364, 4
    %v5366 = vmax.f32 %v5364, %v5365
    %v5367 = vrot.slane %v5366, 2
    %v5368 = vmax.f32 %v5366, %v5367
    %v5369 = vrot.slane %v5368, 1
    %v5370 = vmax.f32 %v5368, %v5369
    %v5371 = vsel %vm3894, %v1927, -inf
    %v5372 = vsel %vm3894, %v1931, -inf
    %v5373 = vmax.f32 %v5371, %v5372
    %v5374 = vrot.slane %v5373, 4
    %v5375 = vmax.f32 %v5373, %v5374
    %v5376 = vrot.slane %v5375, 2
    %v5377 = vmax.f32 %v5375, %v5376
    %v5378 = vrot.slane %v5377, 1
    %v5379 = vmax.f32 %v5377, %v5378
    %v5380 = vsel %vm3894, %v2601, -inf
    %v5381 = vsel %vm3894, %v2613, -inf
    %v5382 = vmax.f32 %v5380, %v5381
    %v5383 = vrot.slane %v5382, 4
    %v5384 = vmax.f32 %v5382, %v5383
    %v5385 = vrot.slane %v5384, 2
    %v5386 = vmax.f32 %v5384, %v5385
    %v5387 = vrot.slane %v5386, 1
    %v5388 = vmax.f32 %v5386, %v5387
    %v5389 = vsel %vm3894, %v2602, -inf
    %v5390 = vsel %vm3894, %v2614, -inf
    %v5391 = vmax.f32 %v5389, %v5390
    %v5392 = vrot.slane %v5391, 4
    %v5393 = vmax.f32 %v5391, %v5392
    %v5394 = vrot.slane %v5393, 2
    %v5395 = vmax.f32 %v5393, %v5394
    %v5396 = vrot.slane %v5395, 1
    %v5397 = vmax.f32 %v5395, %v5396
    %v5398 = vsel %vm3894, %v2603, -inf
    %v5399 = vsel %vm3894, %v2615, -inf
    %v5400 = vmax.f32 %v5398, %v5399
    %v5401 = vrot.slane %v5400, 4
    %v5402 = vmax.f32 %v5400, %v5401
    %v5403 = vrot.slane %v5402, 2
    %v5404 = vmax.f32 %v5402, %v5403
    %v5405 = vrot.slane %v5404, 1
    %v5406 = vmax.f32 %v5404, %v5405
    %v5407 = vsel %vm3894, %v1928, -inf
    %v5408 = vsel %vm3894, %v1932, -inf
    %v5409 = vmax.f32 %v5407, %v5408
    %v5410 = vrot.slane %v5409, 4
    %v5411 = vmax.f32 %v5409, %v5410
    %v5412 = vrot.slane %v5411, 2
    %v5413 = vmax.f32 %v5411, %v5412
    %v5414 = vrot.slane %v5413, 1
    %v5415 = vmax.f32 %v5413, %v5414
    %v5416 = vsel %vm3894, %v2604, -inf
    %v5417 = vsel %vm3894, %v2616, -inf
    %v5418 = vmax.f32 %v5416, %v5417
    %v5419 = vrot.slane %v5418, 4
    %v5420 = vmax.f32 %v5418, %v5419
    %v5421 = vrot.slane %v5420, 2
    %v5422 = vmax.f32 %v5420, %v5421
    %v5423 = vrot.slane %v5422, 1
    %v5424 = vmax.f32 %v5422, %v5423
    %v5425 = vsel %vm3894, %v2605, -inf
    %v5426 = vsel %vm3894, %v2617, -inf
    %v5427 = vmax.f32 %v5425, %v5426
    %v5428 = vrot.slane %v5427, 4
    %v5429 = vmax.f32 %v5427, %v5428
    %v5430 = vrot.slane %v5429, 2
    %v5431 = vmax.f32 %v5429, %v5430
    %v5432 = vrot.slane %v5431, 1
    %v5433 = vmax.f32 %v5431, %v5432
    %v5434 = vsel %vm3894, %v2606, -inf
    %v5435 = vsel %vm3894, %v2618, -inf
    %v5436 = vmax.f32 %v5434, %v5435
    %v5437 = vrot.slane %v5436, 4
    %v5438 = vmax.f32 %v5436, %v5437
    %v5439 = vrot.slane %v5438, 2
    %v5440 = vmax.f32 %v5438, %v5439
    %v5441 = vrot.slane %v5440, 1
    %v5442 = vmax.f32 %v5440, %v5441
    %v5443 = vsel %vm3894, %v1929, -inf
    %v5444 = vsel %vm3894, %v1933, -inf
    %v5445 = vmax.f32 %v5443, %v5444
    %v5446 = vrot.slane %v5445, 4
    %v5447 = vmax.f32 %v5445, %v5446
    %v5448 = vrot.slane %v5447, 2
    %v5449 = vmax.f32 %v5447, %v5448
    %v5450 = vrot.slane %v5449, 1
    %v5451 = vmax.f32 %v5449, %v5450
    %v5452 = vsel %vm3894, %v2607, -inf
    %v5453 = vsel %vm3894, %v2619, -inf
    %v5454 = vmax.f32 %v5452, %v5453
    %v5455 = vrot.slane %v5454, 4
    %v5456 = vmax.f32 %v5454, %v5455
    %v5457 = vrot.slane %v5456, 2
    %v5458 = vmax.f32 %v5456, %v5457
    %v5459 = vrot.slane %v5458, 1
    %v5460 = vmax.f32 %v5458, %v5459
    %v5461 = vsel %vm3894, %v2608, -inf
    %v5462 = vsel %vm3894, %v2620, -inf
    %v5463 = vmax.f32 %v5461, %v5462
    %v5464 = vrot.slane %v5463, 4
    %v5465 = vmax.f32 %v5463, %v5464
    %v5466 = vrot.slane %v5465, 2
    %v5467 = vmax.f32 %v5465, %v5466
    %v5468 = vrot.slane %v5467, 1
    %v5469 = vmax.f32 %v5467, %v5468
    %v5470 = vsel %vm3894, %v2609, -inf
    %v5471 = vsel %vm3894, %v2621, -inf
    %v5472 = vmax.f32 %v5470, %v5471
    %v5473 = vrot.slane %v5472, 4
    %v5474 = vmax.f32 %v5472, %v5473
    %v5475 = vrot.slane %v5474, 2
    %v5476 = vmax.f32 %v5474, %v5475
    %v5477 = vrot.slane %v5476, 1
    %v5478 = vmax.f32 %v5476, %v5477
    %v5479 = vsel %vm3894, %v1934, -inf
    %v5480 = vsel %vm3894, %v1938, -inf
    %v5481 = vmax.f32 %v5479, %v5480
    %v5482 = vrot.slane %v5481, 4
    %v5483 = vmax.f32 %v5481, %v5482
    %v5484 = vrot.slane %v5483, 2
    %v5485 = vmax.f32 %v5483, %v5484
    %v5486 = vrot.slane %v5485, 1
    %v5487 = vmax.f32 %v5485, %v5486
    %v5488 = vsel %vm3894, %v2622, -inf
    %v5489 = vsel %vm3894, %v2634, -inf
    %v5490 = vmax.f32 %v5488, %v5489
    %v5491 = vrot.slane %v5490, 4
    %v5492 = vmax.f32 %v5490, %v5491
    %v5493 = vrot.slane %v5492, 2
    %v5494 = vmax.f32 %v5492, %v5493
    %v5495 = vrot.slane %v5494, 1
    %v5496 = vmax.f32 %v5494, %v5495
    %v5497 = vsel %vm3894, %v2623, -inf
    %v5498 = vsel %vm3894, %v2635, -inf
    %v5499 = vmax.f32 %v5497, %v5498
    %v5500 = vrot.slane %v5499, 4
    %v5501 = vmax.f32 %v5499, %v5500
    %v5502 = vrot.slane %v5501, 2
    %v5503 = vmax.f32 %v5501, %v5502
    %v5504 = vrot.slane %v5503, 1
    %v5505 = vmax.f32 %v5503, %v5504
    %v5506 = vsel %vm3894, %v2624, -inf
    %v5507 = vsel %vm3894, %v2636, -inf
    %v5508 = vmax.f32 %v5506, %v5507
    %v5509 = vrot.slane %v5508, 4
    %v5510 = vmax.f32 %v5508, %v5509
    %v5511 = vrot.slane %v5510, 2
    %v5512 = vmax.f32 %v5510, %v5511
    %v5513 = vrot.slane %v5512, 1
    %v5514 = vmax.f32 %v5512, %v5513
    %v5515 = vsel %vm3894, %v1935, -inf
    %v5516 = vsel %vm3894, %v1939, -inf
    %v5517 = vmax.f32 %v5515, %v5516
    %v5518 = vrot.slane %v5517, 4
    %v5519 = vmax.f32 %v5517, %v5518
    %v5520 = vrot.slane %v5519, 2
    %v5521 = vmax.f32 %v5519, %v5520
    %v5522 = vrot.slane %v5521, 1
    %v5523 = vmax.f32 %v5521, %v5522
    %v5524 = vsel %vm3894, %v2625, -inf
    %v5525 = vsel %vm3894, %v2637, -inf
    %v5526 = vmax.f32 %v5524, %v5525
    %v5527 = vrot.slane %v5526, 4
    %v5528 = vmax.f32 %v5526, %v5527
    %v5529 = vrot.slane %v5528, 2
    %v5530 = vmax.f32 %v5528, %v5529
    %v5531 = vrot.slane %v5530, 1
    %v5532 = vmax.f32 %v5530, %v5531
    %v5533 = vsel %vm3894, %v2626, -inf
    %v5534 = vsel %vm3894, %v2638, -inf
    %v5535 = vmax.f32 %v5533, %v5534
    %v5536 = vrot.slane %v5535, 4
    %v5537 = vmax.f32 %v5535, %v5536
    %v5538 = vrot.slane %v5537, 2
    %v5539 = vmax.f32 %v5537, %v5538
    %v5540 = vrot.slane %v5539, 1
    %v5541 = vmax.f32 %v5539, %v5540
    %v5542 = vsel %vm3894, %v2627, -inf
    %v5543 = vsel %vm3894, %v2639, -inf
    %v5544 = vmax.f32 %v5542, %v5543
    %v5545 = vrot.slane %v5544, 4
    %v5546 = vmax.f32 %v5544, %v5545
    %v5547 = vrot.slane %v5546, 2
    %v5548 = vmax.f32 %v5546, %v5547
    %v5549 = vrot.slane %v5548, 1
    %v5550 = vmax.f32 %v5548, %v5549
    %v5551 = vsel %vm3894, %v1936, -inf
    %v5552 = vsel %vm3894, %v1940, -inf
    %v5553 = vmax.f32 %v5551, %v5552
    %v5554 = vrot.slane %v5553, 4
    %v5555 = vmax.f32 %v5553, %v5554
    %v5556 = vrot.slane %v5555, 2
    %v5557 = vmax.f32 %v5555, %v5556
    %v5558 = vrot.slane %v5557, 1
    %v5559 = vmax.f32 %v5557, %v5558
    %v5560 = vsel %vm3894, %v2628, -inf
    %v5561 = vsel %vm3894, %v2640, -inf
    %v5562 = vmax.f32 %v5560, %v5561
    %v5563 = vrot.slane %v5562, 4
    %v5564 = vmax.f32 %v5562, %v5563
    %v5565 = vrot.slane %v5564, 2
    %v5566 = vmax.f32 %v5564, %v5565
    %v5567 = vrot.slane %v5566, 1
    %v5568 = vmax.f32 %v5566, %v5567
    %v5569 = vsel %vm3894, %v2629, -inf
    %v5570 = vsel %vm3894, %v2641, -inf
    %v5571 = vmax.f32 %v5569, %v5570
    %v5572 = vrot.slane %v5571, 4
    %v5573 = vmax.f32 %v5571, %v5572
    %v5574 = vrot.slane %v5573, 2
    %v5575 = vmax.f32 %v5573, %v5574
    %v5576 = vrot.slane %v5575, 1
    %v5577 = vmax.f32 %v5575, %v5576
    %v5578 = vsel %vm3894, %v2630, -inf
    %v5579 = vsel %vm3894, %v2642, -inf
    %v5580 = vmax.f32 %v5578, %v5579
    %v5581 = vrot.slane %v5580, 4
    %v5582 = vmax.f32 %v5580, %v5581
    %v5583 = vrot.slane %v5582, 2
    %v5584 = vmax.f32 %v5582, %v5583
    %v5585 = vrot.slane %v5584, 1
    %v5586 = vmax.f32 %v5584, %v5585
    %v5587 = vsel %vm3894, %v1937, -inf
    %v5588 = vsel %vm3894, %v1941, -inf
    %v5589 = vmax.f32 %v5587, %v5588
    %v5590 = vrot.slane %v5589, 4
    %v5591 = vmax.f32 %v5589, %v5590
    %v5592 = vrot.slane %v5591, 2
    %v5593 = vmax.f32 %v5591, %v5592
    %v5594 = vrot.slane %v5593, 1
    %v5595 = vmax.f32 %v5593, %v5594
    %v5596 = vsel %vm3894, %v2631, -inf
    %v5597 = vsel %vm3894, %v2643, -inf
    %v5598 = vmax.f32 %v5596, %v5597
    %v5599 = vrot.slane %v5598, 4
    %v5600 = vmax.f32 %v5598, %v5599
    %v5601 = vrot.slane %v5600, 2
    %v5602 = vmax.f32 %v5600, %v5601
    %v5603 = vrot.slane %v5602, 1
    %v5604 = vmax.f32 %v5602, %v5603
    %v5605 = vsel %vm3894, %v2632, -inf
    %v5606 = vsel %vm3894, %v2644, -inf
    %v5607 = vmax.f32 %v5605, %v5606
    %v5608 = vrot.slane %v5607, 4
    %v5609 = vmax.f32 %v5607, %v5608
    %v5610 = vrot.slane %v5609, 2
    %v5611 = vmax.f32 %v5609, %v5610
    %v5612 = vrot.slane %v5611, 1
    %v5613 = vmax.f32 %v5611, %v5612
    %v5614 = vsel %vm3894, %v2633, -inf
    %v5615 = vsel %vm3894, %v2645, -inf
    %v5616 = vmax.f32 %v5614, %v5615
    %v5617 = vrot.slane %v5616, 4
    %v5618 = vmax.f32 %v5616, %v5617
    %v5619 = vrot.slane %v5618, 2
    %v5620 = vmax.f32 %v5618, %v5619
    %v5621 = vrot.slane %v5620, 1
    %v5622 = vmax.f32 %v5620, %v5621
    %v5623 = vsel %vm3894, %v1942, -inf
    %v5624 = vsel %vm3894, %v1946, -inf
    %v5625 = vmax.f32 %v5623, %v5624
    %v5626 = vrot.slane %v5625, 4
    %v5627 = vmax.f32 %v5625, %v5626
    %v5628 = vrot.slane %v5627, 2
    %v5629 = vmax.f32 %v5627, %v5628
    %v5630 = vrot.slane %v5629, 1
    %v5631 = vmax.f32 %v5629, %v5630
    %v5632 = vsel %vm3894, %v2646, -inf
    %v5633 = vsel %vm3894, %v2658, -inf
    %v5634 = vmax.f32 %v5632, %v5633
    %v5635 = vrot.slane %v5634, 4
    %v5636 = vmax.f32 %v5634, %v5635
    %v5637 = vrot.slane %v5636, 2
    %v5638 = vmax.f32 %v5636, %v5637
    %v5639 = vrot.slane %v5638, 1
    %v5640 = vmax.f32 %v5638, %v5639
    %v5641 = vsel %vm3894, %v2647, -inf
    %v5642 = vsel %vm3894, %v2659, -inf
    %v5643 = vmax.f32 %v5641, %v5642
    %v5644 = vrot.slane %v5643, 4
    %v5645 = vmax.f32 %v5643, %v5644
    %v5646 = vrot.slane %v5645, 2
    %v5647 = vmax.f32 %v5645, %v5646
    %v5648 = vrot.slane %v5647, 1
    %v5649 = vmax.f32 %v5647, %v5648
    %v5650 = vsel %vm3894, %v2648, -inf
    %v5651 = vsel %vm3894, %v2660, -inf
    %v5652 = vmax.f32 %v5650, %v5651
    %v5653 = vrot.slane %v5652, 4
    %v5654 = vmax.f32 %v5652, %v5653
    %v5655 = vrot.slane %v5654, 2
    %v5656 = vmax.f32 %v5654, %v5655
    %v5657 = vrot.slane %v5656, 1
    %v5658 = vmax.f32 %v5656, %v5657
    %v5659 = vsel %vm3894, %v1943, -inf
    %v5660 = vsel %vm3894, %v1947, -inf
    %v5661 = vmax.f32 %v5659, %v5660
    %v5662 = vrot.slane %v5661, 4
    %v5663 = vmax.f32 %v5661, %v5662
    %v5664 = vrot.slane %v5663, 2
    %v5665 = vmax.f32 %v5663, %v5664
    %v5666 = vrot.slane %v5665, 1
    %v5667 = vmax.f32 %v5665, %v5666
    %v5668 = vsel %vm3894, %v2649, -inf
    %v5669 = vsel %vm3894, %v2661, -inf
    %v5670 = vmax.f32 %v5668, %v5669
    %v5671 = vrot.slane %v5670, 4
    %v5672 = vmax.f32 %v5670, %v5671
    %v5673 = vrot.slane %v5672, 2
    %v5674 = vmax.f32 %v5672, %v5673
    %v5675 = vrot.slane %v5674, 1
    %v5676 = vmax.f32 %v5674, %v5675
    %v5677 = vsel %vm3894, %v2650, -inf
    %v5678 = vsel %vm3894, %v2662, -inf
    %v5679 = vmax.f32 %v5677, %v5678
    %v5680 = vrot.slane %v5679, 4
    %v5681 = vmax.f32 %v5679, %v5680
    %v5682 = vrot.slane %v5681, 2
    %v5683 = vmax.f32 %v5681, %v5682
    %v5684 = vrot.slane %v5683, 1
    %v5685 = vmax.f32 %v5683, %v5684
    %v5686 = vsel %vm3894, %v2651, -inf
    %v5687 = vsel %vm3894, %v2663, -inf
    %v5688 = vmax.f32 %v5686, %v5687
    %v5689 = vrot.slane %v5688, 4
    %v5690 = vmax.f32 %v5688, %v5689
    %v5691 = vrot.slane %v5690, 2
    %v5692 = vmax.f32 %v5690, %v5691
    %v5693 = vrot.slane %v5692, 1
    %v5694 = vmax.f32 %v5692, %v5693
    %v5695 = vsel %vm3894, %v1944, -inf
    %v5696 = vsel %vm3894, %v1948, -inf
    %v5697 = vmax.f32 %v5695, %v5696
    %v5698 = vrot.slane %v5697, 4
    %v5699 = vmax.f32 %v5697, %v5698
    %v5700 = vrot.slane %v5699, 2
    %v5701 = vmax.f32 %v5699, %v5700
    %v5702 = vrot.slane %v5701, 1
    %v5703 = vmax.f32 %v5701, %v5702
    %v5704 = vsel %vm3894, %v2652, -inf
    %v5705 = vsel %vm3894, %v2664, -inf
    %v5706 = vmax.f32 %v5704, %v5705
    %v5707 = vrot.slane %v5706, 4
    %v5708 = vmax.f32 %v5706, %v5707
    %v5709 = vrot.slane %v5708, 2
    %v5710 = vmax.f32 %v5708, %v5709
    %v5711 = vrot.slane %v5710, 1
    %v5712 = vmax.f32 %v5710, %v5711
    %v5713 = vsel %vm3894, %v2653, -inf
    %v5714 = vsel %vm3894, %v2665, -inf
    %v5715 = vmax.f32 %v5713, %v5714
    %v5716 = vrot.slane %v5715, 4
    %v5717 = vmax.f32 %v5715, %v5716
    %v5718 = vrot.slane %v5717, 2
    %v5719 = vmax.f32 %v5717, %v5718
    %v5720 = vrot.slane %v5719, 1
    %v5721 = vmax.f32 %v5719, %v5720
    %v5722 = vsel %vm3894, %v2654, -inf
    %v5723 = vsel %vm3894, %v2666, -inf
    %v5724 = vmax.f32 %v5722, %v5723
    %v5725 = vrot.slane %v5724, 4
    %v5726 = vmax.f32 %v5724, %v5725
    %v5727 = vrot.slane %v5726, 2
    %v5728 = vmax.f32 %v5726, %v5727
    %v5729 = vrot.slane %v5728, 1
    %v5730 = vmax.f32 %v5728, %v5729
    %v5731 = vsel %vm3894, %v1945, -inf
    %v5732 = vsel %vm3894, %v1949, -inf
    %v5733 = vmax.f32 %v5731, %v5732
    %v5734 = vrot.slane %v5733, 4
    %v5735 = vmax.f32 %v5733, %v5734
    %v5736 = vrot.slane %v5735, 2
    %v5737 = vmax.f32 %v5735, %v5736
    %v5738 = vrot.slane %v5737, 1
    %v5739 = vmax.f32 %v5737, %v5738
    %v5740 = vsel %vm3894, %v2655, -inf
    %v5741 = vsel %vm3894, %v2667, -inf
    %v5742 = vmax.f32 %v5740, %v5741
    %v5743 = vrot.slane %v5742, 4
    %v5744 = vmax.f32 %v5742, %v5743
    %v5745 = vrot.slane %v5744, 2
    %v5746 = vmax.f32 %v5744, %v5745
    %v5747 = vrot.slane %v5746, 1
    %v5748 = vmax.f32 %v5746, %v5747
    %v5749 = vsel %vm3894, %v2656, -inf
    %v5750 = vsel %vm3894, %v2668, -inf
    %v5751 = vmax.f32 %v5749, %v5750
    %v5752 = vrot.slane %v5751, 4
    %v5753 = vmax.f32 %v5751, %v5752
    %v5754 = vrot.slane %v5753, 2
    %v5755 = vmax.f32 %v5753, %v5754
    %v5756 = vrot.slane %v5755, 1
    %v5757 = vmax.f32 %v5755, %v5756
    %v5758 = vsel %vm3894, %v2657, -inf
    %v5759 = vsel %vm3894, %v2669, -inf
    %v5760 = vmax.f32 %v5758, %v5759
    %v5761 = vrot.slane %v5760, 4
    %v5762 = vmax.f32 %v5760, %v5761
    %v5763 = vrot.slane %v5762, 2
    %v5764 = vmax.f32 %v5762, %v5763
    %v5765 = vrot.slane %v5764, 1
    %v5766 = vmax.f32 %v5764, %v5765
    %v5767 = vsel %vm3894, %v1950, -inf
    %v5768 = vsel %vm3894, %v1954, -inf
    %v5769 = vmax.f32 %v5767, %v5768
    %v5770 = vrot.slane %v5769, 4
    %v5771 = vmax.f32 %v5769, %v5770
    %v5772 = vrot.slane %v5771, 2
    %v5773 = vmax.f32 %v5771, %v5772
    %v5774 = vrot.slane %v5773, 1
    %v5775 = vmax.f32 %v5773, %v5774
    %v5776 = vsel %vm3894, %v2670, -inf
    %v5777 = vsel %vm3894, %v2682, -inf
    %v5778 = vmax.f32 %v5776, %v5777
    %v5779 = vrot.slane %v5778, 4
    %v5780 = vmax.f32 %v5778, %v5779
    %v5781 = vrot.slane %v5780, 2
    %v5782 = vmax.f32 %v5780, %v5781
    %v5783 = vrot.slane %v5782, 1
    %v5784 = vmax.f32 %v5782, %v5783
    %v5785 = vsel %vm3894, %v2671, -inf
    %v5786 = vsel %vm3894, %v2683, -inf
    %v5787 = vmax.f32 %v5785, %v5786
    %v5788 = vrot.slane %v5787, 4
    %v5789 = vmax.f32 %v5787, %v5788
    %v5790 = vrot.slane %v5789, 2
    %v5791 = vmax.f32 %v5789, %v5790
    %v5792 = vrot.slane %v5791, 1
    %v5793 = vmax.f32 %v5791, %v5792
    %v5794 = vsel %vm3894, %v2672, -inf
    %v5795 = vsel %vm3894, %v2684, -inf
    %v5796 = vmax.f32 %v5794, %v5795
    %v5797 = vrot.slane %v5796, 4
    %v5798 = vmax.f32 %v5796, %v5797
    %v5799 = vrot.slane %v5798, 2
    %v5800 = vmax.f32 %v5798, %v5799
    %v5801 = vrot.slane %v5800, 1
    %v5802 = vmax.f32 %v5800, %v5801
    %v5803 = vsel %vm3894, %v1951, -inf
    %v5804 = vsel %vm3894, %v1955, -inf
    %v5805 = vmax.f32 %v5803, %v5804
    %v5806 = vrot.slane %v5805, 4
    %v5807 = vmax.f32 %v5805, %v5806
    %v5808 = vrot.slane %v5807, 2
    %v5809 = vmax.f32 %v5807, %v5808
    %v5810 = vrot.slane %v5809, 1
    %v5811 = vmax.f32 %v5809, %v5810
    %v5812 = vsel %vm3894, %v2673, -inf
    %v5813 = vsel %vm3894, %v2685, -inf
    %v5814 = vmax.f32 %v5812, %v5813
    %v5815 = vrot.slane %v5814, 4
    %v5816 = vmax.f32 %v5814, %v5815
    %v5817 = vrot.slane %v5816, 2
    %v5818 = vmax.f32 %v5816, %v5817
    %v5819 = vrot.slane %v5818, 1
    %v5820 = vmax.f32 %v5818, %v5819
    %v5821 = vsel %vm3894, %v2674, -inf
    %v5822 = vsel %vm3894, %v2686, -inf
    %v5823 = vmax.f32 %v5821, %v5822
    %v5824 = vrot.slane %v5823, 4
    %v5825 = vmax.f32 %v5823, %v5824
    %v5826 = vrot.slane %v5825, 2
    %v5827 = vmax.f32 %v5825, %v5826
    %v5828 = vrot.slane %v5827, 1
    %v5829 = vmax.f32 %v5827, %v5828
    %v5830 = vsel %vm3894, %v2675, -inf
    %v5831 = vsel %vm3894, %v2687, -inf
    %v5832 = vmax.f32 %v5830, %v5831
    %v5833 = vrot.slane %v5832, 4
    %v5834 = vmax.f32 %v5832, %v5833
    %v5835 = vrot.slane %v5834, 2
    %v5836 = vmax.f32 %v5834, %v5835
    %v5837 = vrot.slane %v5836, 1
    %v5838 = vmax.f32 %v5836, %v5837
    %v5839 = vsel %vm3894, %v1952, -inf
    %v5840 = vsel %vm3894, %v1956, -inf
    %v5841 = vmax.f32 %v5839, %v5840
    %v5842 = vrot.slane %v5841, 4
    %v5843 = vmax.f32 %v5841, %v5842
    %v5844 = vrot.slane %v5843, 2
    %v5845 = vmax.f32 %v5843, %v5844
    %v5846 = vrot.slane %v5845, 1
    %v5847 = vmax.f32 %v5845, %v5846
    %v5848 = vsel %vm3894, %v2676, -inf
    %v5849 = vsel %vm3894, %v2688, -inf
    %v5850 = vmax.f32 %v5848, %v5849
    %v5851 = vrot.slane %v5850, 4
    %v5852 = vmax.f32 %v5850, %v5851
    %v5853 = vrot.slane %v5852, 2
    %v5854 = vmax.f32 %v5852, %v5853
    %v5855 = vrot.slane %v5854, 1
    %v5856 = vmax.f32 %v5854, %v5855
    %v5857 = vsel %vm3894, %v2677, -inf
    %v5858 = vsel %vm3894, %v2689, -inf
    %v5859 = vmax.f32 %v5857, %v5858
    %v5860 = vrot.slane %v5859, 4
    %v5861 = vmax.f32 %v5859, %v5860
    %v5862 = vrot.slane %v5861, 2
    %v5863 = vmax.f32 %v5861, %v5862
    %v5864 = vrot.slane %v5863, 1
    %v5865 = vmax.f32 %v5863, %v5864
    %v5866 = vsel %vm3894, %v2678, -inf
    %v5867 = vsel %vm3894, %v2690, -inf
    %v5868 = vmax.f32 %v5866, %v5867
    %v5869 = vrot.slane %v5868, 4
    %v5870 = vmax.f32 %v5868, %v5869
    %v5871 = vrot.slane %v5870, 2
    %v5872 = vmax.f32 %v5870, %v5871
    %v5873 = vrot.slane %v5872, 1
    %v5874 = vmax.f32 %v5872, %v5873
    %v5875 = vsel %vm3894, %v1953, -inf
    %v5876 = vsel %vm3894, %v1957, -inf
    %v5877 = vmax.f32 %v5875, %v5876
    %v5878 = vrot.slane %v5877, 4
    %v5879 = vmax.f32 %v5877, %v5878
    %v5880 = vrot.slane %v5879, 2
    %v5881 = vmax.f32 %v5879, %v5880
    %v5882 = vrot.slane %v5881, 1
    %v5883 = vmax.f32 %v5881, %v5882
    %v5884 = vsel %vm3894, %v2679, -inf
    %v5885 = vsel %vm3894, %v2691, -inf
    %v5886 = vmax.f32 %v5884, %v5885
    %v5887 = vrot.slane %v5886, 4
    %v5888 = vmax.f32 %v5886, %v5887
    %v5889 = vrot.slane %v5888, 2
    %v5890 = vmax.f32 %v5888, %v5889
    %v5891 = vrot.slane %v5890, 1
    %v5892 = vmax.f32 %v5890, %v5891
    %v5893 = vsel %vm3894, %v2680, -inf
    %v5894 = vsel %vm3894, %v2692, -inf
    %v5895 = vmax.f32 %v5893, %v5894
    %v5896 = vrot.slane %v5895, 4
    %v5897 = vmax.f32 %v5895, %v5896
    %v5898 = vrot.slane %v5897, 2
    %v5899 = vmax.f32 %v5897, %v5898
    %v5900 = vrot.slane %v5899, 1
    %v5901 = vmax.f32 %v5899, %v5900
    %v5902 = vsel %vm3894, %v2681, -inf
    %v5903 = vsel %vm3894, %v2693, -inf
    %v5904 = vmax.f32 %v5902, %v5903
    %v5905 = vrot.slane %v5904, 4
    %v5906 = vmax.f32 %v5904, %v5905
    %v5907 = vrot.slane %v5906, 2
    %v5908 = vmax.f32 %v5906, %v5907
    %v5909 = vrot.slane %v5908, 1
    %v5910 = vmax.f32 %v5908, %v5909
    %v5911 = vsel %vm3894, %v1958, -inf
    %v5912 = vsel %vm3894, %v1962, -inf
    %v5913 = vmax.f32 %v5911, %v5912
    %v5914 = vrot.slane %v5913, 4
    %v5915 = vmax.f32 %v5913, %v5914
    %v5916 = vrot.slane %v5915, 2
    %v5917 = vmax.f32 %v5915, %v5916
    %v5918 = vrot.slane %v5917, 1
    %v5919 = vmax.f32 %v5917, %v5918
    %v5920 = vsel %vm3894, %v2694, -inf
    %v5921 = vsel %vm3894, %v2706, -inf
    %v5922 = vmax.f32 %v5920, %v5921
    %v5923 = vrot.slane %v5922, 4
    %v5924 = vmax.f32 %v5922, %v5923
    %v5925 = vrot.slane %v5924, 2
    %v5926 = vmax.f32 %v5924, %v5925
    %v5927 = vrot.slane %v5926, 1
    %v5928 = vmax.f32 %v5926, %v5927
    %v5929 = vsel %vm3894, %v2695, -inf
    %v5930 = vsel %vm3894, %v2707, -inf
    %v5931 = vmax.f32 %v5929, %v5930
    %v5932 = vrot.slane %v5931, 4
    %v5933 = vmax.f32 %v5931, %v5932
    %v5934 = vrot.slane %v5933, 2
    %v5935 = vmax.f32 %v5933, %v5934
    %v5936 = vrot.slane %v5935, 1
    %v5937 = vmax.f32 %v5935, %v5936
    %v5938 = vsel %vm3894, %v2696, -inf
    %v5939 = vsel %vm3894, %v2708, -inf
    %v5940 = vmax.f32 %v5938, %v5939
    %v5941 = vrot.slane %v5940, 4
    %v5942 = vmax.f32 %v5940, %v5941
    %v5943 = vrot.slane %v5942, 2
    %v5944 = vmax.f32 %v5942, %v5943
    %v5945 = vrot.slane %v5944, 1
    %v5946 = vmax.f32 %v5944, %v5945
    %v5947 = vsel %vm3894, %v1959, -inf
    %v5948 = vsel %vm3894, %v1963, -inf
    %v5949 = vmax.f32 %v5947, %v5948
    %v5950 = vrot.slane %v5949, 4
    %v5951 = vmax.f32 %v5949, %v5950
    %v5952 = vrot.slane %v5951, 2
    %v5953 = vmax.f32 %v5951, %v5952
    %v5954 = vrot.slane %v5953, 1
    %v5955 = vmax.f32 %v5953, %v5954
    %v5956 = vsel %vm3894, %v2697, -inf
    %v5957 = vsel %vm3894, %v2709, -inf
    %v5958 = vmax.f32 %v5956, %v5957
    %v5959 = vrot.slane %v5958, 4
    %v5960 = vmax.f32 %v5958, %v5959
    %v5961 = vrot.slane %v5960, 2
    %v5962 = vmax.f32 %v5960, %v5961
    %v5963 = vrot.slane %v5962, 1
    %v5964 = vmax.f32 %v5962, %v5963
    %v5965 = vsel %vm3894, %v2698, -inf
    %v5966 = vsel %vm3894, %v2710, -inf
    %v5967 = vmax.f32 %v5965, %v5966
    %v5968 = vrot.slane %v5967, 4
    %v5969 = vmax.f32 %v5967, %v5968
    %v5970 = vrot.slane %v5969, 2
    %v5971 = vmax.f32 %v5969, %v5970
    %v5972 = vrot.slane %v5971, 1
    %v5973 = vmax.f32 %v5971, %v5972
    %v5974 = vsel %vm3894, %v2699, -inf
    %v5975 = vsel %vm3894, %v2711, -inf
    %v5976 = vmax.f32 %v5974, %v5975
    %v5977 = vrot.slane %v5976, 4
    %v5978 = vmax.f32 %v5976, %v5977
    %v5979 = vrot.slane %v5978, 2
    %v5980 = vmax.f32 %v5978, %v5979
    %v5981 = vrot.slane %v5980, 1
    %v5982 = vmax.f32 %v5980, %v5981
    %v5983 = vsel %vm3894, %v1960, -inf
    %v5984 = vsel %vm3894, %v1964, -inf
    %v5985 = vmax.f32 %v5983, %v5984
    %v5986 = vrot.slane %v5985, 4
    %v5987 = vmax.f32 %v5985, %v5986
    %v5988 = vrot.slane %v5987, 2
    %v5989 = vmax.f32 %v5987, %v5988
    %v5990 = vrot.slane %v5989, 1
    %v5991 = vmax.f32 %v5989, %v5990
    %v5992 = vsel %vm3894, %v2700, -inf
    %v5993 = vsel %vm3894, %v2712, -inf
    %v5994 = vmax.f32 %v5992, %v5993
    %v5995 = vrot.slane %v5994, 4
    %v5996 = vmax.f32 %v5994, %v5995
    %v5997 = vrot.slane %v5996, 2
    %v5998 = vmax.f32 %v5996, %v5997
    %v5999 = vrot.slane %v5998, 1
    %v6000 = vmax.f32 %v5998, %v5999
    %v6001 = vsel %vm3894, %v2701, -inf
    %v6002 = vsel %vm3894, %v2713, -inf
    %v6003 = vmax.f32 %v6001, %v6002
    %v6004 = vrot.slane %v6003, 4
    %v6005 = vmax.f32 %v6003, %v6004
    %v6006 = vrot.slane %v6005, 2
    %v6007 = vmax.f32 %v6005, %v6006
    %v6008 = vrot.slane %v6007, 1
    %v6009 = vmax.f32 %v6007, %v6008
    %v6010 = vsel %vm3894, %v2702, -inf
    %v6011 = vsel %vm3894, %v2714, -inf
    %v6012 = vmax.f32 %v6010, %v6011
    %v6013 = vrot.slane %v6012, 4
    %v6014 = vmax.f32 %v6012, %v6013
    %v6015 = vrot.slane %v6014, 2
    %v6016 = vmax.f32 %v6014, %v6015
    %v6017 = vrot.slane %v6016, 1
    %v6018 = vmax.f32 %v6016, %v6017
    %v6019 = vsel %vm3894, %v1961, -inf
    %v6020 = vsel %vm3894, %v1965, -inf
    %v6021 = vmax.f32 %v6019, %v6020
    %v6022 = vrot.slane %v6021, 4
    %v6023 = vmax.f32 %v6021, %v6022
    %v6024 = vrot.slane %v6023, 2
    %v6025 = vmax.f32 %v6023, %v6024
    %v6026 = vrot.slane %v6025, 1
    %v6027 = vmax.f32 %v6025, %v6026
    %v6028 = vsel %vm3894, %v2703, -inf
    %v6029 = vsel %vm3894, %v2715, -inf
    %v6030 = vmax.f32 %v6028, %v6029
    %v6031 = vrot.slane %v6030, 4
    %v6032 = vmax.f32 %v6030, %v6031
    %v6033 = vrot.slane %v6032, 2
    %v6034 = vmax.f32 %v6032, %v6033
    %v6035 = vrot.slane %v6034, 1
    %v6036 = vmax.f32 %v6034, %v6035
    %v6037 = vsel %vm3894, %v2704, -inf
    %v6038 = vsel %vm3894, %v2716, -inf
    %v6039 = vmax.f32 %v6037, %v6038
    %v6040 = vrot.slane %v6039, 4
    %v6041 = vmax.f32 %v6039, %v6040
    %v6042 = vrot.slane %v6041, 2
    %v6043 = vmax.f32 %v6041, %v6042
    %v6044 = vrot.slane %v6043, 1
    %v6045 = vmax.f32 %v6043, %v6044
    %v6046 = vsel %vm3894, %v2705, -inf
    %v6047 = vsel %vm3894, %v2717, -inf
    %v6048 = vmax.f32 %v6046, %v6047
    %v6049 = vrot.slane %v6048, 4
    %v6050 = vmax.f32 %v6048, %v6049
    %v6051 = vrot.slane %v6050, 2
    %v6052 = vmax.f32 %v6050, %v6051
    %v6053 = vrot.slane %v6052, 1
    %v6054 = vmax.f32 %v6052, %v6053
    %v6055 = vsel %vm3894, %v1966, -inf
    %v6056 = vsel %vm3894, %v1970, -inf
    %v6057 = vmax.f32 %v6055, %v6056
    %v6058 = vrot.slane %v6057, 4
    %v6059 = vmax.f32 %v6057, %v6058
    %v6060 = vrot.slane %v6059, 2
    %v6061 = vmax.f32 %v6059, %v6060
    %v6062 = vrot.slane %v6061, 1
    %v6063 = vmax.f32 %v6061, %v6062
    %v6064 = vsel %vm3894, %v2718, -inf
    %v6065 = vsel %vm3894, %v2730, -inf
    %v6066 = vmax.f32 %v6064, %v6065
    %v6067 = vrot.slane %v6066, 4
    %v6068 = vmax.f32 %v6066, %v6067
    %v6069 = vrot.slane %v6068, 2
    %v6070 = vmax.f32 %v6068, %v6069
    %v6071 = vrot.slane %v6070, 1
    %v6072 = vmax.f32 %v6070, %v6071
    %v6073 = vsel %vm3894, %v2719, -inf
    %v6074 = vsel %vm3894, %v2731, -inf
    %v6075 = vmax.f32 %v6073, %v6074
    %v6076 = vrot.slane %v6075, 4
    %v6077 = vmax.f32 %v6075, %v6076
    %v6078 = vrot.slane %v6077, 2
    %v6079 = vmax.f32 %v6077, %v6078
    %v6080 = vrot.slane %v6079, 1
    %v6081 = vmax.f32 %v6079, %v6080
    %v6082 = vsel %vm3894, %v2720, -inf
    %v6083 = vsel %vm3894, %v2732, -inf
    %v6084 = vmax.f32 %v6082, %v6083
    %v6085 = vrot.slane %v6084, 4
    %v6086 = vmax.f32 %v6084, %v6085
    %v6087 = vrot.slane %v6086, 2
    %v6088 = vmax.f32 %v6086, %v6087
    %v6089 = vrot.slane %v6088, 1
    %v6090 = vmax.f32 %v6088, %v6089
    %v6091 = vsel %vm3894, %v1967, -inf
    %v6092 = vsel %vm3894, %v1971, -inf
    %v6093 = vmax.f32 %v6091, %v6092
    %v6094 = vrot.slane %v6093, 4
    %v6095 = vmax.f32 %v6093, %v6094
    %v6096 = vrot.slane %v6095, 2
    %v6097 = vmax.f32 %v6095, %v6096
    %v6098 = vrot.slane %v6097, 1
    %v6099 = vmax.f32 %v6097, %v6098
    %v6100 = vsel %vm3894, %v2721, -inf
    %v6101 = vsel %vm3894, %v2733, -inf
    %v6102 = vmax.f32 %v6100, %v6101
    %v6103 = vrot.slane %v6102, 4
    %v6104 = vmax.f32 %v6102, %v6103
    %v6105 = vrot.slane %v6104, 2
    %v6106 = vmax.f32 %v6104, %v6105
    %v6107 = vrot.slane %v6106, 1
    %v6108 = vmax.f32 %v6106, %v6107
    %v6109 = vsel %vm3894, %v2722, -inf
    %v6110 = vsel %vm3894, %v2734, -inf
    %v6111 = vmax.f32 %v6109, %v6110
    %v6112 = vrot.slane %v6111, 4
    %v6113 = vmax.f32 %v6111, %v6112
    %v6114 = vrot.slane %v6113, 2
    %v6115 = vmax.f32 %v6113, %v6114
    %v6116 = vrot.slane %v6115, 1
    %v6117 = vmax.f32 %v6115, %v6116
    %v6118 = vsel %vm3894, %v2723, -inf
    %v6119 = vsel %vm3894, %v2735, -inf
    %v6120 = vmax.f32 %v6118, %v6119
    %v6121 = vrot.slane %v6120, 4
    %v6122 = vmax.f32 %v6120, %v6121
    %v6123 = vrot.slane %v6122, 2
    %v6124 = vmax.f32 %v6122, %v6123
    %v6125 = vrot.slane %v6124, 1
    %v6126 = vmax.f32 %v6124, %v6125
    %v6127 = vsel %vm3894, %v1968, -inf
    %v6128 = vsel %vm3894, %v1972, -inf
    %v6129 = vmax.f32 %v6127, %v6128
    %v6130 = vrot.slane %v6129, 4
    %v6131 = vmax.f32 %v6129, %v6130
    %v6132 = vrot.slane %v6131, 2
    %v6133 = vmax.f32 %v6131, %v6132
    %v6134 = vrot.slane %v6133, 1
    %v6135 = vmax.f32 %v6133, %v6134
    %v6136 = vsel %vm3894, %v2724, -inf
    %v6137 = vsel %vm3894, %v2736, -inf
    %v6138 = vmax.f32 %v6136, %v6137
    %v6139 = vrot.slane %v6138, 4
    %v6140 = vmax.f32 %v6138, %v6139
    %v6141 = vrot.slane %v6140, 2
    %v6142 = vmax.f32 %v6140, %v6141
    %v6143 = vrot.slane %v6142, 1
    %v6144 = vmax.f32 %v6142, %v6143
    %v6145 = vsel %vm3894, %v2725, -inf
    %v6146 = vsel %vm3894, %v2737, -inf
    %v6147 = vmax.f32 %v6145, %v6146
    %v6148 = vrot.slane %v6147, 4
    %v6149 = vmax.f32 %v6147, %v6148
    %v6150 = vrot.slane %v6149, 2
    %v6151 = vmax.f32 %v6149, %v6150
    %v6152 = vrot.slane %v6151, 1
    %v6153 = vmax.f32 %v6151, %v6152
    %v6154 = vsel %vm3894, %v2726, -inf
    %v6155 = vsel %vm3894, %v2738, -inf
    %v6156 = vmax.f32 %v6154, %v6155
    %v6157 = vrot.slane %v6156, 4
    %v6158 = vmax.f32 %v6156, %v6157
    %v6159 = vrot.slane %v6158, 2
    %v6160 = vmax.f32 %v6158, %v6159
    %v6161 = vrot.slane %v6160, 1
    %v6162 = vmax.f32 %v6160, %v6161
    %v6163 = vsel %vm3894, %v1969, -inf
    %v6164 = vsel %vm3894, %v1973, -inf
    %v6165 = vmax.f32 %v6163, %v6164
    %v6166 = vrot.slane %v6165, 4
    %v6167 = vmax.f32 %v6165, %v6166
    %v6168 = vrot.slane %v6167, 2
    %v6169 = vmax.f32 %v6167, %v6168
    %v6170 = vrot.slane %v6169, 1
    %v6171 = vmax.f32 %v6169, %v6170
    %v6172 = vsel %vm3894, %v2727, -inf
    %v6173 = vsel %vm3894, %v2739, -inf
    %v6174 = vmax.f32 %v6172, %v6173
    %v6175 = vrot.slane %v6174, 4
    %v6176 = vmax.f32 %v6174, %v6175
    %v6177 = vrot.slane %v6176, 2
    %v6178 = vmax.f32 %v6176, %v6177
    %v6179 = vrot.slane %v6178, 1
    %v6180 = vmax.f32 %v6178, %v6179
    %v6181 = vsel %vm3894, %v2728, -inf
    %v6182 = vsel %vm3894, %v2740, -inf
    %v6183 = vmax.f32 %v6181, %v6182
    %v6184 = vrot.slane %v6183, 4
    %v6185 = vmax.f32 %v6183, %v6184
    %v6186 = vrot.slane %v6185, 2
    %v6187 = vmax.f32 %v6185, %v6186
    %v6188 = vrot.slane %v6187, 1
    %v6189 = vmax.f32 %v6187, %v6188
    %v6190 = vsel %vm3894, %v2729, -inf
    %v6191 = vsel %vm3894, %v2741, -inf
    %v6192 = vmax.f32 %v6190, %v6191
    %v6193 = vrot.slane %v6192, 4
    %v6194 = vmax.f32 %v6192, %v6193
    %v6195 = vrot.slane %v6194, 2
    %v6196 = vmax.f32 %v6194, %v6195
    %v6197 = vrot.slane %v6196, 1
    %v6198 = vmax.f32 %v6196, %v6197
    %v6199 = vsel %vm3894, %v1974, -inf
    %v6200 = vsel %vm3894, %v1978, -inf
    %v6201 = vmax.f32 %v6199, %v6200
    %v6202 = vrot.slane %v6201, 4
    %v6203 = vmax.f32 %v6201, %v6202
    %v6204 = vrot.slane %v6203, 2
    %v6205 = vmax.f32 %v6203, %v6204
    %v6206 = vrot.slane %v6205, 1
    %v6207 = vmax.f32 %v6205, %v6206
    %v6208 = vsel %vm3894, %v2742, -inf
    %v6209 = vsel %vm3894, %v2754, -inf
    %v6210 = vmax.f32 %v6208, %v6209
    %v6211 = vrot.slane %v6210, 4
    %v6212 = vmax.f32 %v6210, %v6211
    %v6213 = vrot.slane %v6212, 2
    %v6214 = vmax.f32 %v6212, %v6213
    %v6215 = vrot.slane %v6214, 1
    %v6216 = vmax.f32 %v6214, %v6215
    %v6217 = vsel %vm3894, %v2743, -inf
    %v6218 = vsel %vm3894, %v2755, -inf
    %v6219 = vmax.f32 %v6217, %v6218
    %v6220 = vrot.slane %v6219, 4
    %v6221 = vmax.f32 %v6219, %v6220
    %v6222 = vrot.slane %v6221, 2
    %v6223 = vmax.f32 %v6221, %v6222
    %v6224 = vrot.slane %v6223, 1
    %v6225 = vmax.f32 %v6223, %v6224
    %v6226 = vsel %vm3894, %v2744, -inf
    %v6227 = vsel %vm3894, %v2756, -inf
    %v6228 = vmax.f32 %v6226, %v6227
    %v6229 = vrot.slane %v6228, 4
    %v6230 = vmax.f32 %v6228, %v6229
    %v6231 = vrot.slane %v6230, 2
    %v6232 = vmax.f32 %v6230, %v6231
    %v6233 = vrot.slane %v6232, 1
    %v6234 = vmax.f32 %v6232, %v6233
    %v6235 = vsel %vm3894, %v1975, -inf
    %v6236 = vsel %vm3894, %v1979, -inf
    %v6237 = vmax.f32 %v6235, %v6236
    %v6238 = vrot.slane %v6237, 4
    %v6239 = vmax.f32 %v6237, %v6238
    %v6240 = vrot.slane %v6239, 2
    %v6241 = vmax.f32 %v6239, %v6240
    %v6242 = vrot.slane %v6241, 1
    %v6243 = vmax.f32 %v6241, %v6242
    %v6244 = vsel %vm3894, %v2745, -inf
    %v6245 = vsel %vm3894, %v2757, -inf
    %v6246 = vmax.f32 %v6244, %v6245
    %v6247 = vrot.slane %v6246, 4
    %v6248 = vmax.f32 %v6246, %v6247
    %v6249 = vrot.slane %v6248, 2
    %v6250 = vmax.f32 %v6248, %v6249
    %v6251 = vrot.slane %v6250, 1
    %v6252 = vmax.f32 %v6250, %v6251
    %v6253 = vsel %vm3894, %v2746, -inf
    %v6254 = vsel %vm3894, %v2758, -inf
    %v6255 = vmax.f32 %v6253, %v6254
    %v6256 = vrot.slane %v6255, 4
    %v6257 = vmax.f32 %v6255, %v6256
    %v6258 = vrot.slane %v6257, 2
    %v6259 = vmax.f32 %v6257, %v6258
    %v6260 = vrot.slane %v6259, 1
    %v6261 = vmax.f32 %v6259, %v6260
    %v6262 = vsel %vm3894, %v2747, -inf
    %v6263 = vsel %vm3894, %v2759, -inf
    %v6264 = vmax.f32 %v6262, %v6263
    %v6265 = vrot.slane %v6264, 4
    %v6266 = vmax.f32 %v6264, %v6265
    %v6267 = vrot.slane %v6266, 2
    %v6268 = vmax.f32 %v6266, %v6267
    %v6269 = vrot.slane %v6268, 1
    %v6270 = vmax.f32 %v6268, %v6269
    %v6271 = vsel %vm3894, %v1976, -inf
    %v6272 = vsel %vm3894, %v1980, -inf
    %v6273 = vmax.f32 %v6271, %v6272
    %v6274 = vrot.slane %v6273, 4
    %v6275 = vmax.f32 %v6273, %v6274
    %v6276 = vrot.slane %v6275, 2
    %v6277 = vmax.f32 %v6275, %v6276
    %v6278 = vrot.slane %v6277, 1
    %v6279 = vmax.f32 %v6277, %v6278
    %v6280 = vsel %vm3894, %v2748, -inf
    %v6281 = vsel %vm3894, %v2760, -inf
    %v6282 = vmax.f32 %v6280, %v6281
    %v6283 = vrot.slane %v6282, 4
    %v6284 = vmax.f32 %v6282, %v6283
    %v6285 = vrot.slane %v6284, 2
    %v6286 = vmax.f32 %v6284, %v6285
    %v6287 = vrot.slane %v6286, 1
    %v6288 = vmax.f32 %v6286, %v6287
    %v6289 = vsel %vm3894, %v2749, -inf
    %v6290 = vsel %vm3894, %v2761, -inf
    %v6291 = vmax.f32 %v6289, %v6290
    %v6292 = vrot.slane %v6291, 4
    %v6293 = vmax.f32 %v6291, %v6292
    %v6294 = vrot.slane %v6293, 2
    %v6295 = vmax.f32 %v6293, %v6294
    %v6296 = vrot.slane %v6295, 1
    %v6297 = vmax.f32 %v6295, %v6296
    %v6298 = vsel %vm3894, %v2750, -inf
    %v6299 = vsel %vm3894, %v2762, -inf
    %v6300 = vmax.f32 %v6298, %v6299
    %v6301 = vrot.slane %v6300, 4
    %v6302 = vmax.f32 %v6300, %v6301
    %v6303 = vrot.slane %v6302, 2
    %v6304 = vmax.f32 %v6302, %v6303
    %v6305 = vrot.slane %v6304, 1
    %v6306 = vmax.f32 %v6304, %v6305
    %v6307 = vsel %vm3894, %v1977, -inf
    %v6308 = vsel %vm3894, %v1981, -inf
    %v6309 = vmax.f32 %v6307, %v6308
    %v6310 = vrot.slane %v6309, 4
    %v6311 = vmax.f32 %v6309, %v6310
    %v6312 = vrot.slane %v6311, 2
    %v6313 = vmax.f32 %v6311, %v6312
    %v6314 = vrot.slane %v6313, 1
    %v6315 = vmax.f32 %v6313, %v6314
    %v6316 = vsel %vm3894, %v2751, -inf
    %v6317 = vsel %vm3894, %v2763, -inf
    %v6318 = vmax.f32 %v6316, %v6317
    %v6319 = vrot.slane %v6318, 4
    %v6320 = vmax.f32 %v6318, %v6319
    %v6321 = vrot.slane %v6320, 2
    %v6322 = vmax.f32 %v6320, %v6321
    %v6323 = vrot.slane %v6322, 1
    %v6324 = vmax.f32 %v6322, %v6323
    %v6325 = vsel %vm3894, %v2752, -inf
    %v6326 = vsel %vm3894, %v2764, -inf
    %v6327 = vmax.f32 %v6325, %v6326
    %v6328 = vrot.slane %v6327, 4
    %v6329 = vmax.f32 %v6327, %v6328
    %v6330 = vrot.slane %v6329, 2
    %v6331 = vmax.f32 %v6329, %v6330
    %v6332 = vrot.slane %v6331, 1
    %v6333 = vmax.f32 %v6331, %v6332
    %v6334 = vsel %vm3894, %v2753, -inf
    %v6335 = vsel %vm3894, %v2765, -inf
    %v6336 = vmax.f32 %v6334, %v6335
    %v6337 = vrot.slane %v6336, 4
    %v6338 = vmax.f32 %v6336, %v6337
    %v6339 = vrot.slane %v6338, 2
    %v6340 = vmax.f32 %v6338, %v6339
    %v6341 = vrot.slane %v6340, 1
    %v6342 = vmax.f32 %v6340, %v6341
    %v6343 = vsel %vm3894, %v1982, -inf
    %v6344 = vsel %vm3894, %v1986, -inf
    %v6345 = vmax.f32 %v6343, %v6344
    %v6346 = vrot.slane %v6345, 4
    %v6347 = vmax.f32 %v6345, %v6346
    %v6348 = vrot.slane %v6347, 2
    %v6349 = vmax.f32 %v6347, %v6348
    %v6350 = vrot.slane %v6349, 1
    %v6351 = vmax.f32 %v6349, %v6350
    %v6352 = vsel %vm3894, %v2766, -inf
    %v6353 = vsel %vm3894, %v2778, -inf
    %v6354 = vmax.f32 %v6352, %v6353
    %v6355 = vrot.slane %v6354, 4
    %v6356 = vmax.f32 %v6354, %v6355
    %v6357 = vrot.slane %v6356, 2
    %v6358 = vmax.f32 %v6356, %v6357
    %v6359 = vrot.slane %v6358, 1
    %v6360 = vmax.f32 %v6358, %v6359
    %v6361 = vsel %vm3894, %v2767, -inf
    %v6362 = vsel %vm3894, %v2779, -inf
    %v6363 = vmax.f32 %v6361, %v6362
    %v6364 = vrot.slane %v6363, 4
    %v6365 = vmax.f32 %v6363, %v6364
    %v6366 = vrot.slane %v6365, 2
    %v6367 = vmax.f32 %v6365, %v6366
    %v6368 = vrot.slane %v6367, 1
    %v6369 = vmax.f32 %v6367, %v6368
    %v6370 = vsel %vm3894, %v2768, -inf
    %v6371 = vsel %vm3894, %v2780, -inf
    %v6372 = vmax.f32 %v6370, %v6371
    %v6373 = vrot.slane %v6372, 4
    %v6374 = vmax.f32 %v6372, %v6373
    %v6375 = vrot.slane %v6374, 2
    %v6376 = vmax.f32 %v6374, %v6375
    %v6377 = vrot.slane %v6376, 1
    %v6378 = vmax.f32 %v6376, %v6377
    %v6379 = vsel %vm3894, %v1983, -inf
    %v6380 = vsel %vm3894, %v1987, -inf
    %v6381 = vmax.f32 %v6379, %v6380
    %v6382 = vrot.slane %v6381, 4
    %v6383 = vmax.f32 %v6381, %v6382
    %v6384 = vrot.slane %v6383, 2
    %v6385 = vmax.f32 %v6383, %v6384
    %v6386 = vrot.slane %v6385, 1
    %v6387 = vmax.f32 %v6385, %v6386
    %v6388 = vsel %vm3894, %v2769, -inf
    %v6389 = vsel %vm3894, %v2781, -inf
    %v6390 = vmax.f32 %v6388, %v6389
    %v6391 = vrot.slane %v6390, 4
    %v6392 = vmax.f32 %v6390, %v6391
    %v6393 = vrot.slane %v6392, 2
    %v6394 = vmax.f32 %v6392, %v6393
    %v6395 = vrot.slane %v6394, 1
    %v6396 = vmax.f32 %v6394, %v6395
    %v6397 = vsel %vm3894, %v2770, -inf
    %v6398 = vsel %vm3894, %v2782, -inf
    %v6399 = vmax.f32 %v6397, %v6398
    %v6400 = vrot.slane %v6399, 4
    %v6401 = vmax.f32 %v6399, %v6400
    %v6402 = vrot.slane %v6401, 2
    %v6403 = vmax.f32 %v6401, %v6402
    %v6404 = vrot.slane %v6403, 1
    %v6405 = vmax.f32 %v6403, %v6404
    %v6406 = vsel %vm3894, %v2771, -inf
    %v6407 = vsel %vm3894, %v2783, -inf
    %v6408 = vmax.f32 %v6406, %v6407
    %v6409 = vrot.slane %v6408, 4
    %v6410 = vmax.f32 %v6408, %v6409
    %v6411 = vrot.slane %v6410, 2
    %v6412 = vmax.f32 %v6410, %v6411
    %v6413 = vrot.slane %v6412, 1
    %v6414 = vmax.f32 %v6412, %v6413
    %v6415 = vsel %vm3894, %v1984, -inf
    %v6416 = vsel %vm3894, %v1988, -inf
    %v6417 = vmax.f32 %v6415, %v6416
    %v6418 = vrot.slane %v6417, 4
    %v6419 = vmax.f32 %v6417, %v6418
    %v6420 = vrot.slane %v6419, 2
    %v6421 = vmax.f32 %v6419, %v6420
    %v6422 = vrot.slane %v6421, 1
    %v6423 = vmax.f32 %v6421, %v6422
    %v6424 = vsel %vm3894, %v2772, -inf
    %v6425 = vsel %vm3894, %v2784, -inf
    %v6426 = vmax.f32 %v6424, %v6425
    %v6427 = vrot.slane %v6426, 4
    %v6428 = vmax.f32 %v6426, %v6427
    %v6429 = vrot.slane %v6428, 2
    %v6430 = vmax.f32 %v6428, %v6429
    %v6431 = vrot.slane %v6430, 1
    %v6432 = vmax.f32 %v6430, %v6431
    %v6433 = vsel %vm3894, %v2773, -inf
    %v6434 = vsel %vm3894, %v2785, -inf
    %v6435 = vmax.f32 %v6433, %v6434
    %v6436 = vrot.slane %v6435, 4
    %v6437 = vmax.f32 %v6435, %v6436
    %v6438 = vrot.slane %v6437, 2
    %v6439 = vmax.f32 %v6437, %v6438
    %v6440 = vrot.slane %v6439, 1
    %v6441 = vmax.f32 %v6439, %v6440
    %v6442 = vsel %vm3894, %v2774, -inf
    %v6443 = vsel %vm3894, %v2786, -inf
    %v6444 = vmax.f32 %v6442, %v6443
    %v6445 = vrot.slane %v6444, 4
    %v6446 = vmax.f32 %v6444, %v6445
    %v6447 = vrot.slane %v6446, 2
    %v6448 = vmax.f32 %v6446, %v6447
    %v6449 = vrot.slane %v6448, 1
    %v6450 = vmax.f32 %v6448, %v6449
    %v6451 = vsel %vm3894, %v1985, -inf
    %v6452 = vsel %vm3894, %v1989, -inf
    %v6453 = vmax.f32 %v6451, %v6452
    %v6454 = vrot.slane %v6453, 4
    %v6455 = vmax.f32 %v6453, %v6454
    %v6456 = vrot.slane %v6455, 2
    %v6457 = vmax.f32 %v6455, %v6456
    %v6458 = vrot.slane %v6457, 1
    %v6459 = vmax.f32 %v6457, %v6458
    %v6460 = vsel %vm3894, %v2775, -inf
    %v6461 = vsel %vm3894, %v2787, -inf
    %v6462 = vmax.f32 %v6460, %v6461
    %v6463 = vrot.slane %v6462, 4
    %v6464 = vmax.f32 %v6462, %v6463
    %v6465 = vrot.slane %v6464, 2
    %v6466 = vmax.f32 %v6464, %v6465
    %v6467 = vrot.slane %v6466, 1
    %v6468 = vmax.f32 %v6466, %v6467
    %v6469 = vsel %vm3894, %v2776, -inf
    %v6470 = vsel %vm3894, %v2788, -inf
    %v6471 = vmax.f32 %v6469, %v6470
    %v6472 = vrot.slane %v6471, 4
    %v6473 = vmax.f32 %v6471, %v6472
    %v6474 = vrot.slane %v6473, 2
    %v6475 = vmax.f32 %v6473, %v6474
    %v6476 = vrot.slane %v6475, 1
    %v6477 = vmax.f32 %v6475, %v6476
    %v6478 = vsel %vm3894, %v2777, -inf
    %v6479 = vsel %vm3894, %v2789, -inf
    %v6480 = vmax.f32 %v6478, %v6479
    %v6481 = vrot.slane %v6480, 4
    %v6482 = vmax.f32 %v6480, %v6481
    %v6483 = vrot.slane %v6482, 2
    %v6484 = vmax.f32 %v6482, %v6483
    %v6485 = vrot.slane %v6484, 1
    %v6486 = vmax.f32 %v6484, %v6485
    %v6487 = vsel %vm3894, %v1990, -inf
    %v6488 = vsel %vm3894, %v1994, -inf
    %v6489 = vmax.f32 %v6487, %v6488
    %v6490 = vrot.slane %v6489, 4
    %v6491 = vmax.f32 %v6489, %v6490
    %v6492 = vrot.slane %v6491, 2
    %v6493 = vmax.f32 %v6491, %v6492
    %v6494 = vrot.slane %v6493, 1
    %v6495 = vmax.f32 %v6493, %v6494
    %v6496 = vsel %vm3894, %v2790, -inf
    %v6497 = vsel %vm3894, %v2802, -inf
    %v6498 = vmax.f32 %v6496, %v6497
    %v6499 = vrot.slane %v6498, 4
    %v6500 = vmax.f32 %v6498, %v6499
    %v6501 = vrot.slane %v6500, 2
    %v6502 = vmax.f32 %v6500, %v6501
    %v6503 = vrot.slane %v6502, 1
    %v6504 = vmax.f32 %v6502, %v6503
    %v6505 = vsel %vm3894, %v2791, -inf
    %v6506 = vsel %vm3894, %v2803, -inf
    %v6507 = vmax.f32 %v6505, %v6506
    %v6508 = vrot.slane %v6507, 4
    %v6509 = vmax.f32 %v6507, %v6508
    %v6510 = vrot.slane %v6509, 2
    %v6511 = vmax.f32 %v6509, %v6510
    %v6512 = vrot.slane %v6511, 1
    %v6513 = vmax.f32 %v6511, %v6512
    %v6514 = vsel %vm3894, %v2792, -inf
    %v6515 = vsel %vm3894, %v2804, -inf
    %v6516 = vmax.f32 %v6514, %v6515
    %v6517 = vrot.slane %v6516, 4
    %v6518 = vmax.f32 %v6516, %v6517
    %v6519 = vrot.slane %v6518, 2
    %v6520 = vmax.f32 %v6518, %v6519
    %v6521 = vrot.slane %v6520, 1
    %v6522 = vmax.f32 %v6520, %v6521
    %v6523 = vsel %vm3894, %v1991, -inf
    %v6524 = vsel %vm3894, %v1995, -inf
    %v6525 = vmax.f32 %v6523, %v6524
    %v6526 = vrot.slane %v6525, 4
    %v6527 = vmax.f32 %v6525, %v6526
    %v6528 = vrot.slane %v6527, 2
    %v6529 = vmax.f32 %v6527, %v6528
    %v6530 = vrot.slane %v6529, 1
    %v6531 = vmax.f32 %v6529, %v6530
    %v6532 = vsel %vm3894, %v2793, -inf
    %v6533 = vsel %vm3894, %v2805, -inf
    %v6534 = vmax.f32 %v6532, %v6533
    %v6535 = vrot.slane %v6534, 4
    %v6536 = vmax.f32 %v6534, %v6535
    %v6537 = vrot.slane %v6536, 2
    %v6538 = vmax.f32 %v6536, %v6537
    %v6539 = vrot.slane %v6538, 1
    %v6540 = vmax.f32 %v6538, %v6539
    %v6541 = vsel %vm3894, %v2794, -inf
    %v6542 = vsel %vm3894, %v2806, -inf
    %v6543 = vmax.f32 %v6541, %v6542
    %v6544 = vrot.slane %v6543, 4
    %v6545 = vmax.f32 %v6543, %v6544
    %v6546 = vrot.slane %v6545, 2
    %v6547 = vmax.f32 %v6545, %v6546
    %v6548 = vrot.slane %v6547, 1
    %v6549 = vmax.f32 %v6547, %v6548
    %v6550 = vsel %vm3894, %v2795, -inf
    %v6551 = vsel %vm3894, %v2807, -inf
    %v6552 = vmax.f32 %v6550, %v6551
    %v6553 = vrot.slane %v6552, 4
    %v6554 = vmax.f32 %v6552, %v6553
    %v6555 = vrot.slane %v6554, 2
    %v6556 = vmax.f32 %v6554, %v6555
    %v6557 = vrot.slane %v6556, 1
    %v6558 = vmax.f32 %v6556, %v6557
    %v6559 = vsel %vm3894, %v1992, -inf
    %v6560 = vsel %vm3894, %v1996, -inf
    %v6561 = vmax.f32 %v6559, %v6560
    %v6562 = vrot.slane %v6561, 4
    %v6563 = vmax.f32 %v6561, %v6562
    %v6564 = vrot.slane %v6563, 2
    %v6565 = vmax.f32 %v6563, %v6564
    %v6566 = vrot.slane %v6565, 1
    %v6567 = vmax.f32 %v6565, %v6566
    %v6568 = vsel %vm3894, %v2796, -inf
    %v6569 = vsel %vm3894, %v2808, -inf
    %v6570 = vmax.f32 %v6568, %v6569
    %v6571 = vrot.slane %v6570, 4
    %v6572 = vmax.f32 %v6570, %v6571
    %v6573 = vrot.slane %v6572, 2
    %v6574 = vmax.f32 %v6572, %v6573
    %v6575 = vrot.slane %v6574, 1
    %v6576 = vmax.f32 %v6574, %v6575
    %v6577 = vsel %vm3894, %v2797, -inf
    %v6578 = vsel %vm3894, %v2809, -inf
    %v6579 = vmax.f32 %v6577, %v6578
    %v6580 = vrot.slane %v6579, 4
    %v6581 = vmax.f32 %v6579, %v6580
    %v6582 = vrot.slane %v6581, 2
    %v6583 = vmax.f32 %v6581, %v6582
    %v6584 = vrot.slane %v6583, 1
    %v6585 = vmax.f32 %v6583, %v6584
    %v6586 = vsel %vm3894, %v2798, -inf
    %v6587 = vsel %vm3894, %v2810, -inf
    %v6588 = vmax.f32 %v6586, %v6587
    %v6589 = vrot.slane %v6588, 4
    %v6590 = vmax.f32 %v6588, %v6589
    %v6591 = vrot.slane %v6590, 2
    %v6592 = vmax.f32 %v6590, %v6591
    %v6593 = vrot.slane %v6592, 1
    %v6594 = vmax.f32 %v6592, %v6593
    %v6595 = vsel %vm3894, %v1993, -inf
    %v6596 = vsel %vm3894, %v1997, -inf
    %v6597 = vmax.f32 %v6595, %v6596
    %v6598 = vrot.slane %v6597, 4
    %v6599 = vmax.f32 %v6597, %v6598
    %v6600 = vrot.slane %v6599, 2
    %v6601 = vmax.f32 %v6599, %v6600
    %v6602 = vrot.slane %v6601, 1
    %v6603 = vmax.f32 %v6601, %v6602
    %v6604 = vsel %vm3894, %v2799, -inf
    %v6605 = vsel %vm3894, %v2811, -inf
    %v6606 = vmax.f32 %v6604, %v6605
    %v6607 = vrot.slane %v6606, 4
    %v6608 = vmax.f32 %v6606, %v6607
    %v6609 = vrot.slane %v6608, 2
    %v6610 = vmax.f32 %v6608, %v6609
    %v6611 = vrot.slane %v6610, 1
    %v6612 = vmax.f32 %v6610, %v6611
    %v6613 = vsel %vm3894, %v2800, -inf
    %v6614 = vsel %vm3894, %v2812, -inf
    %v6615 = vmax.f32 %v6613, %v6614
    %v6616 = vrot.slane %v6615, 4
    %v6617 = vmax.f32 %v6615, %v6616
    %v6618 = vrot.slane %v6617, 2
    %v6619 = vmax.f32 %v6617, %v6618
    %v6620 = vrot.slane %v6619, 1
    %v6621 = vmax.f32 %v6619, %v6620
    %v6622 = vsel %vm3894, %v2801, -inf
    %v6623 = vsel %vm3894, %v2813, -inf
    %v6624 = vmax.f32 %v6622, %v6623
    %v6625 = vrot.slane %v6624, 4
    %v6626 = vmax.f32 %v6624, %v6625
    %v6627 = vrot.slane %v6626, 2
    %v6628 = vmax.f32 %v6626, %v6627
    %v6629 = vrot.slane %v6628, 1
    %v6630 = vmax.f32 %v6628, %v6629
    %v6631 = vsel %vm3894, %v1998, -inf
    %v6632 = vsel %vm3894, %v2002, -inf
    %v6633 = vmax.f32 %v6631, %v6632
    %v6634 = vrot.slane %v6633, 4
    %v6635 = vmax.f32 %v6633, %v6634
    %v6636 = vrot.slane %v6635, 2
    %v6637 = vmax.f32 %v6635, %v6636
    %v6638 = vrot.slane %v6637, 1
    %v6639 = vmax.f32 %v6637, %v6638
    %v6640 = vsel %vm3894, %v2814, -inf
    %v6641 = vsel %vm3894, %v2826, -inf
    %v6642 = vmax.f32 %v6640, %v6641
    %v6643 = vrot.slane %v6642, 4
    %v6644 = vmax.f32 %v6642, %v6643
    %v6645 = vrot.slane %v6644, 2
    %v6646 = vmax.f32 %v6644, %v6645
    %v6647 = vrot.slane %v6646, 1
    %v6648 = vmax.f32 %v6646, %v6647
    %v6649 = vsel %vm3894, %v2815, -inf
    %v6650 = vsel %vm3894, %v2827, -inf
    %v6651 = vmax.f32 %v6649, %v6650
    %v6652 = vrot.slane %v6651, 4
    %v6653 = vmax.f32 %v6651, %v6652
    %v6654 = vrot.slane %v6653, 2
    %v6655 = vmax.f32 %v6653, %v6654
    %v6656 = vrot.slane %v6655, 1
    %v6657 = vmax.f32 %v6655, %v6656
    %v6658 = vsel %vm3894, %v2816, -inf
    %v6659 = vsel %vm3894, %v2828, -inf
    %v6660 = vmax.f32 %v6658, %v6659
    %v6661 = vrot.slane %v6660, 4
    %v6662 = vmax.f32 %v6660, %v6661
    %v6663 = vrot.slane %v6662, 2
    %v6664 = vmax.f32 %v6662, %v6663
    %v6665 = vrot.slane %v6664, 1
    %v6666 = vmax.f32 %v6664, %v6665
    %v6667 = vsel %vm3894, %v1999, -inf
    %v6668 = vsel %vm3894, %v2003, -inf
    %v6669 = vmax.f32 %v6667, %v6668
    %v6670 = vrot.slane %v6669, 4
    %v6671 = vmax.f32 %v6669, %v6670
    %v6672 = vrot.slane %v6671, 2
    %v6673 = vmax.f32 %v6671, %v6672
    %v6674 = vrot.slane %v6673, 1
    %v6675 = vmax.f32 %v6673, %v6674
    %v6676 = vsel %vm3894, %v2817, -inf
    %v6677 = vsel %vm3894, %v2829, -inf
    %v6678 = vmax.f32 %v6676, %v6677
    %v6679 = vrot.slane %v6678, 4
    %v6680 = vmax.f32 %v6678, %v6679
    %v6681 = vrot.slane %v6680, 2
    %v6682 = vmax.f32 %v6680, %v6681
    %v6683 = vrot.slane %v6682, 1
    %v6684 = vmax.f32 %v6682, %v6683
    %v6685 = vsel %vm3894, %v2818, -inf
    %v6686 = vsel %vm3894, %v2830, -inf
    %v6687 = vmax.f32 %v6685, %v6686
    %v6688 = vrot.slane %v6687, 4
    %v6689 = vmax.f32 %v6687, %v6688
    %v6690 = vrot.slane %v6689, 2
    %v6691 = vmax.f32 %v6689, %v6690
    %v6692 = vrot.slane %v6691, 1
    %v6693 = vmax.f32 %v6691, %v6692
    %v6694 = vsel %vm3894, %v2819, -inf
    %v6695 = vsel %vm3894, %v2831, -inf
    %v6696 = vmax.f32 %v6694, %v6695
    %v6697 = vrot.slane %v6696, 4
    %v6698 = vmax.f32 %v6696, %v6697
    %v6699 = vrot.slane %v6698, 2
    %v6700 = vmax.f32 %v6698, %v6699
    %v6701 = vrot.slane %v6700, 1
    %v6702 = vmax.f32 %v6700, %v6701
    %v6703 = vsel %vm3894, %v2000, -inf
    %v6704 = vsel %vm3894, %v2004, -inf
    %v6705 = vmax.f32 %v6703, %v6704
    %v6706 = vrot.slane %v6705, 4
    %v6707 = vmax.f32 %v6705, %v6706
    %v6708 = vrot.slane %v6707, 2
    %v6709 = vmax.f32 %v6707, %v6708
    %v6710 = vrot.slane %v6709, 1
    %v6711 = vmax.f32 %v6709, %v6710
    %v6712 = vsel %vm3894, %v2820, -inf
    %v6713 = vsel %vm3894, %v2832, -inf
    %v6714 = vmax.f32 %v6712, %v6713
    %v6715 = vrot.slane %v6714, 4
    %v6716 = vmax.f32 %v6714, %v6715
    %v6717 = vrot.slane %v6716, 2
    %v6718 = vmax.f32 %v6716, %v6717
    %v6719 = vrot.slane %v6718, 1
    %v6720 = vmax.f32 %v6718, %v6719
    %v6721 = vsel %vm3894, %v2821, -inf
    %v6722 = vsel %vm3894, %v2833, -inf
    %v6723 = vmax.f32 %v6721, %v6722
    %v6724 = vrot.slane %v6723, 4
    %v6725 = vmax.f32 %v6723, %v6724
    %v6726 = vrot.slane %v6725, 2
    %v6727 = vmax.f32 %v6725, %v6726
    %v6728 = vrot.slane %v6727, 1
    %v6729 = vmax.f32 %v6727, %v6728
    %v6730 = vsel %vm3894, %v2822, -inf
    %v6731 = vsel %vm3894, %v2834, -inf
    %v6732 = vmax.f32 %v6730, %v6731
    %v6733 = vrot.slane %v6732, 4
    %v6734 = vmax.f32 %v6732, %v6733
    %v6735 = vrot.slane %v6734, 2
    %v6736 = vmax.f32 %v6734, %v6735
    %v6737 = vrot.slane %v6736, 1
    %v6738 = vmax.f32 %v6736, %v6737
    %v6739 = vsel %vm3894, %v2001, -inf
    %v6740 = vsel %vm3894, %v2005, -inf
    %v6741 = vmax.f32 %v6739, %v6740
    %v6742 = vrot.slane %v6741, 4
    %v6743 = vmax.f32 %v6741, %v6742
    %v6744 = vrot.slane %v6743, 2
    %v6745 = vmax.f32 %v6743, %v6744
    %v6746 = vrot.slane %v6745, 1
    %v6747 = vmax.f32 %v6745, %v6746
    %v6748 = vsel %vm3894, %v2823, -inf
    %v6749 = vsel %vm3894, %v2835, -inf
    %v6750 = vmax.f32 %v6748, %v6749
    %v6751 = vrot.slane %v6750, 4
    %v6752 = vmax.f32 %v6750, %v6751
    %v6753 = vrot.slane %v6752, 2
    %v6754 = vmax.f32 %v6752, %v6753
    %v6755 = vrot.slane %v6754, 1
    %v6756 = vmax.f32 %v6754, %v6755
    %v6757 = vsel %vm3894, %v2824, -inf
    %v6758 = vsel %vm3894, %v2836, -inf
    %v6759 = vmax.f32 %v6757, %v6758
    %v6760 = vrot.slane %v6759, 4
    %v6761 = vmax.f32 %v6759, %v6760
    %v6762 = vrot.slane %v6761, 2
    %v6763 = vmax.f32 %v6761, %v6762
    %v6764 = vrot.slane %v6763, 1
    %v6765 = vmax.f32 %v6763, %v6764
    %v6766 = vsel %vm3894, %v2825, -inf
    %v6767 = vsel %vm3894, %v2837, -inf
    %v6768 = vmax.f32 %v6766, %v6767
    %v6769 = vrot.slane %v6768, 4
    %v6770 = vmax.f32 %v6768, %v6769
    %v6771 = vrot.slane %v6770, 2
    %v6772 = vmax.f32 %v6770, %v6771
    %v6773 = vrot.slane %v6772, 1
    %v6774 = vmax.f32 %v6772, %v6773
    %v6775 = vsel %vm3894, %v2006, -inf
    %v6776 = vsel %vm3894, %v2010, -inf
    %v6777 = vmax.f32 %v6775, %v6776
    %v6778 = vrot.slane %v6777, 4
    %v6779 = vmax.f32 %v6777, %v6778
    %v6780 = vrot.slane %v6779, 2
    %v6781 = vmax.f32 %v6779, %v6780
    %v6782 = vrot.slane %v6781, 1
    %v6783 = vmax.f32 %v6781, %v6782
    %v6784 = vsel %vm3894, %v2838, -inf
    %v6785 = vsel %vm3894, %v2850, -inf
    %v6786 = vmax.f32 %v6784, %v6785
    %v6787 = vrot.slane %v6786, 4
    %v6788 = vmax.f32 %v6786, %v6787
    %v6789 = vrot.slane %v6788, 2
    %v6790 = vmax.f32 %v6788, %v6789
    %v6791 = vrot.slane %v6790, 1
    %v6792 = vmax.f32 %v6790, %v6791
    %v6793 = vsel %vm3894, %v2839, -inf
    %v6794 = vsel %vm3894, %v2851, -inf
    %v6795 = vmax.f32 %v6793, %v6794
    %v6796 = vrot.slane %v6795, 4
    %v6797 = vmax.f32 %v6795, %v6796
    %v6798 = vrot.slane %v6797, 2
    %v6799 = vmax.f32 %v6797, %v6798
    %v6800 = vrot.slane %v6799, 1
    %v6801 = vmax.f32 %v6799, %v6800
    %v6802 = vsel %vm3894, %v2840, -inf
    %v6803 = vsel %vm3894, %v2852, -inf
    %v6804 = vmax.f32 %v6802, %v6803
    %v6805 = vrot.slane %v6804, 4
    %v6806 = vmax.f32 %v6804, %v6805
    %v6807 = vrot.slane %v6806, 2
    %v6808 = vmax.f32 %v6806, %v6807
    %v6809 = vrot.slane %v6808, 1
    %v6810 = vmax.f32 %v6808, %v6809
    %v6811 = vsel %vm3894, %v2007, -inf
    %v6812 = vsel %vm3894, %v2011, -inf
    %v6813 = vmax.f32 %v6811, %v6812
    %v6814 = vrot.slane %v6813, 4
    %v6815 = vmax.f32 %v6813, %v6814
    %v6816 = vrot.slane %v6815, 2
    %v6817 = vmax.f32 %v6815, %v6816
    %v6818 = vrot.slane %v6817, 1
    %v6819 = vmax.f32 %v6817, %v6818
    %v6820 = vsel %vm3894, %v2841, -inf
    %v6821 = vsel %vm3894, %v2853, -inf
    %v6822 = vmax.f32 %v6820, %v6821
    %v6823 = vrot.slane %v6822, 4
    %v6824 = vmax.f32 %v6822, %v6823
    %v6825 = vrot.slane %v6824, 2
    %v6826 = vmax.f32 %v6824, %v6825
    %v6827 = vrot.slane %v6826, 1
    %v6828 = vmax.f32 %v6826, %v6827
    %v6829 = vsel %vm3894, %v2842, -inf
    %v6830 = vsel %vm3894, %v2854, -inf
    %v6831 = vmax.f32 %v6829, %v6830
    %v6832 = vrot.slane %v6831, 4
    %v6833 = vmax.f32 %v6831, %v6832
    %v6834 = vrot.slane %v6833, 2
    %v6835 = vmax.f32 %v6833, %v6834
    %v6836 = vrot.slane %v6835, 1
    %v6837 = vmax.f32 %v6835, %v6836
    %v6838 = vsel %vm3894, %v2843, -inf
    %v6839 = vsel %vm3894, %v2855, -inf
    %v6840 = vmax.f32 %v6838, %v6839
    %v6841 = vrot.slane %v6840, 4
    %v6842 = vmax.f32 %v6840, %v6841
    %v6843 = vrot.slane %v6842, 2
    %v6844 = vmax.f32 %v6842, %v6843
    %v6845 = vrot.slane %v6844, 1
    %v6846 = vmax.f32 %v6844, %v6845
    %v6847 = vsel %vm3894, %v2008, -inf
    %v6848 = vsel %vm3894, %v2012, -inf
    %v6849 = vmax.f32 %v6847, %v6848
    %v6850 = vrot.slane %v6849, 4
    %v6851 = vmax.f32 %v6849, %v6850
    %v6852 = vrot.slane %v6851, 2
    %v6853 = vmax.f32 %v6851, %v6852
    %v6854 = vrot.slane %v6853, 1
    %v6855 = vmax.f32 %v6853, %v6854
    %v6856 = vsel %vm3894, %v2844, -inf
    %v6857 = vsel %vm3894, %v2856, -inf
    %v6858 = vmax.f32 %v6856, %v6857
    %v6859 = vrot.slane %v6858, 4
    %v6860 = vmax.f32 %v6858, %v6859
    %v6861 = vrot.slane %v6860, 2
    %v6862 = vmax.f32 %v6860, %v6861
    %v6863 = vrot.slane %v6862, 1
    %v6864 = vmax.f32 %v6862, %v6863
    %v6865 = vsel %vm3894, %v2845, -inf
    %v6866 = vsel %vm3894, %v2857, -inf
    %v6867 = vmax.f32 %v6865, %v6866
    %v6868 = vrot.slane %v6867, 4
    %v6869 = vmax.f32 %v6867, %v6868
    %v6870 = vrot.slane %v6869, 2
    %v6871 = vmax.f32 %v6869, %v6870
    %v6872 = vrot.slane %v6871, 1
    %v6873 = vmax.f32 %v6871, %v6872
    %v6874 = vsel %vm3894, %v2846, -inf
    %v6875 = vsel %vm3894, %v2858, -inf
    %v6876 = vmax.f32 %v6874, %v6875
    %v6877 = vrot.slane %v6876, 4
    %v6878 = vmax.f32 %v6876, %v6877
    %v6879 = vrot.slane %v6878, 2
    %v6880 = vmax.f32 %v6878, %v6879
    %v6881 = vrot.slane %v6880, 1
    %v6882 = vmax.f32 %v6880, %v6881
    %v6883 = vsel %vm3894, %v2009, -inf
    %v6884 = vsel %vm3894, %v2013, -inf
    %v6885 = vmax.f32 %v6883, %v6884
    %v6886 = vrot.slane %v6885, 4
    %v6887 = vmax.f32 %v6885, %v6886
    %v6888 = vrot.slane %v6887, 2
    %v6889 = vmax.f32 %v6887, %v6888
    %v6890 = vrot.slane %v6889, 1
    %v6891 = vmax.f32 %v6889, %v6890
    %v6892 = vsel %vm3894, %v2847, -inf
    %v6893 = vsel %vm3894, %v2859, -inf
    %v6894 = vmax.f32 %v6892, %v6893
    %v6895 = vrot.slane %v6894, 4
    %v6896 = vmax.f32 %v6894, %v6895
    %v6897 = vrot.slane %v6896, 2
    %v6898 = vmax.f32 %v6896, %v6897
    %v6899 = vrot.slane %v6898, 1
    %v6900 = vmax.f32 %v6898, %v6899
    %v6901 = vsel %vm3894, %v2848, -inf
    %v6902 = vsel %vm3894, %v2860, -inf
    %v6903 = vmax.f32 %v6901, %v6902
    %v6904 = vrot.slane %v6903, 4
    %v6905 = vmax.f32 %v6903, %v6904
    %v6906 = vrot.slane %v6905, 2
    %v6907 = vmax.f32 %v6905, %v6906
    %v6908 = vrot.slane %v6907, 1
    %v6909 = vmax.f32 %v6907, %v6908
    %v6910 = vsel %vm3894, %v2849, -inf
    %v6911 = vsel %vm3894, %v2861, -inf
    %v6912 = vmax.f32 %v6910, %v6911
    %v6913 = vrot.slane %v6912, 4
    %v6914 = vmax.f32 %v6912, %v6913
    %v6915 = vrot.slane %v6914, 2
    %v6916 = vmax.f32 %v6914, %v6915
    %v6917 = vrot.slane %v6916, 1
    %v6918 = vmax.f32 %v6916, %v6917
    %v6919 = vsel %vm3894, %v2014, -inf
    %v6920 = vsel %vm3894, %v2018, -inf
    %v6921 = vmax.f32 %v6919, %v6920
    %v6922 = vrot.slane %v6921, 4
    %v6923 = vmax.f32 %v6921, %v6922
    %v6924 = vrot.slane %v6923, 2
    %v6925 = vmax.f32 %v6923, %v6924
    %v6926 = vrot.slane %v6925, 1
    %v6927 = vmax.f32 %v6925, %v6926
    %v6928 = vsel %vm3894, %v2862, -inf
    %v6929 = vsel %vm3894, %v2874, -inf
    %v6930 = vmax.f32 %v6928, %v6929
    %v6931 = vrot.slane %v6930, 4
    %v6932 = vmax.f32 %v6930, %v6931
    %v6933 = vrot.slane %v6932, 2
    %v6934 = vmax.f32 %v6932, %v6933
    %v6935 = vrot.slane %v6934, 1
    %v6936 = vmax.f32 %v6934, %v6935
    %v6937 = vsel %vm3894, %v2863, -inf
    %v6938 = vsel %vm3894, %v2875, -inf
    %v6939 = vmax.f32 %v6937, %v6938
    %v6940 = vrot.slane %v6939, 4
    %v6941 = vmax.f32 %v6939, %v6940
    %v6942 = vrot.slane %v6941, 2
    %v6943 = vmax.f32 %v6941, %v6942
    %v6944 = vrot.slane %v6943, 1
    %v6945 = vmax.f32 %v6943, %v6944
    %v6946 = vsel %vm3894, %v2864, -inf
    %v6947 = vsel %vm3894, %v2876, -inf
    %v6948 = vmax.f32 %v6946, %v6947
    %v6949 = vrot.slane %v6948, 4
    %v6950 = vmax.f32 %v6948, %v6949
    %v6951 = vrot.slane %v6950, 2
    %v6952 = vmax.f32 %v6950, %v6951
    %v6953 = vrot.slane %v6952, 1
    %v6954 = vmax.f32 %v6952, %v6953
    %v6955 = vsel %vm3894, %v2015, -inf
    %v6956 = vsel %vm3894, %v2019, -inf
    %v6957 = vmax.f32 %v6955, %v6956
    %v6958 = vrot.slane %v6957, 4
    %v6959 = vmax.f32 %v6957, %v6958
    %v6960 = vrot.slane %v6959, 2
    %v6961 = vmax.f32 %v6959, %v6960
    %v6962 = vrot.slane %v6961, 1
    %v6963 = vmax.f32 %v6961, %v6962
    %v6964 = vsel %vm3894, %v2865, -inf
    %v6965 = vsel %vm3894, %v2877, -inf
    %v6966 = vmax.f32 %v6964, %v6965
    %v6967 = vrot.slane %v6966, 4
    %v6968 = vmax.f32 %v6966, %v6967
    %v6969 = vrot.slane %v6968, 2
    %v6970 = vmax.f32 %v6968, %v6969
    %v6971 = vrot.slane %v6970, 1
    %v6972 = vmax.f32 %v6970, %v6971
    %v6973 = vsel %vm3894, %v2866, -inf
    %v6974 = vsel %vm3894, %v2878, -inf
    %v6975 = vmax.f32 %v6973, %v6974
    %v6976 = vrot.slane %v6975, 4
    %v6977 = vmax.f32 %v6975, %v6976
    %v6978 = vrot.slane %v6977, 2
    %v6979 = vmax.f32 %v6977, %v6978
    %v6980 = vrot.slane %v6979, 1
    %v6981 = vmax.f32 %v6979, %v6980
    %v6982 = vsel %vm3894, %v2867, -inf
    %v6983 = vsel %vm3894, %v2879, -inf
    %v6984 = vmax.f32 %v6982, %v6983
    %v6985 = vrot.slane %v6984, 4
    %v6986 = vmax.f32 %v6984, %v6985
    %v6987 = vrot.slane %v6986, 2
    %v6988 = vmax.f32 %v6986, %v6987
    %v6989 = vrot.slane %v6988, 1
    %v6990 = vmax.f32 %v6988, %v6989
    %v6991 = vsel %vm3894, %v2016, -inf
    %v6992 = vsel %vm3894, %v2020, -inf
    %v6993 = vmax.f32 %v6991, %v6992
    %v6994 = vrot.slane %v6993, 4
    %v6995 = vmax.f32 %v6993, %v6994
    %v6996 = vrot.slane %v6995, 2
    %v6997 = vmax.f32 %v6995, %v6996
    %v6998 = vrot.slane %v6997, 1
    %v6999 = vmax.f32 %v6997, %v6998
    %v7000 = vsel %vm3894, %v2868, -inf
    %v7001 = vsel %vm3894, %v2880, -inf
    %v7002 = vmax.f32 %v7000, %v7001
    %v7003 = vrot.slane %v7002, 4
    %v7004 = vmax.f32 %v7002, %v7003
    %v7005 = vrot.slane %v7004, 2
    %v7006 = vmax.f32 %v7004, %v7005
    %v7007 = vrot.slane %v7006, 1
    %v7008 = vmax.f32 %v7006, %v7007
    %v7009 = vsel %vm3894, %v2869, -inf
    %v7010 = vsel %vm3894, %v2881, -inf
    %v7011 = vmax.f32 %v7009, %v7010
    %v7012 = vrot.slane %v7011, 4
    %v7013 = vmax.f32 %v7011, %v7012
    %v7014 = vrot.slane %v7013, 2
    %v7015 = vmax.f32 %v7013, %v7014
    %v7016 = vrot.slane %v7015, 1
    %v7017 = vmax.f32 %v7015, %v7016
    %v7018 = vsel %vm3894, %v2870, -inf
    %v7019 = vsel %vm3894, %v2882, -inf
    %v7020 = vmax.f32 %v7018, %v7019
    %v7021 = vrot.slane %v7020, 4
    %v7022 = vmax.f32 %v7020, %v7021
    %v7023 = vrot.slane %v7022, 2
    %v7024 = vmax.f32 %v7022, %v7023
    %v7025 = vrot.slane %v7024, 1
    %v7026 = vmax.f32 %v7024, %v7025
    %v7027 = vsel %vm3894, %v2017, -inf
    %v7028 = vsel %vm3894, %v2021, -inf
    %v7029 = vmax.f32 %v7027, %v7028
    %v7030 = vrot.slane %v7029, 4
    %v7031 = vmax.f32 %v7029, %v7030
    %v7032 = vrot.slane %v7031, 2
    %v7033 = vmax.f32 %v7031, %v7032
    %v7034 = vrot.slane %v7033, 1
    %v7035 = vmax.f32 %v7033, %v7034
    %v7036 = vsel %vm3894, %v2871, -inf
    %v7037 = vsel %vm3894, %v2883, -inf
    %v7038 = vmax.f32 %v7036, %v7037
    %v7039 = vrot.slane %v7038, 4
    %v7040 = vmax.f32 %v7038, %v7039
    %v7041 = vrot.slane %v7040, 2
    %v7042 = vmax.f32 %v7040, %v7041
    %v7043 = vrot.slane %v7042, 1
    %v7044 = vmax.f32 %v7042, %v7043
    %v7045 = vsel %vm3894, %v2872, -inf
    %v7046 = vsel %vm3894, %v2884, -inf
    %v7047 = vmax.f32 %v7045, %v7046
    %v7048 = vrot.slane %v7047, 4
    %v7049 = vmax.f32 %v7047, %v7048
    %v7050 = vrot.slane %v7049, 2
    %v7051 = vmax.f32 %v7049, %v7050
    %v7052 = vrot.slane %v7051, 1
    %v7053 = vmax.f32 %v7051, %v7052
    %v7054 = vsel %vm3894, %v2873, -inf
    %v7055 = vsel %vm3894, %v2885, -inf
    %v7056 = vmax.f32 %v7054, %v7055
    %v7057 = vrot.slane %v7056, 4
    %v7058 = vmax.f32 %v7056, %v7057
    %v7059 = vrot.slane %v7058, 2
    %v7060 = vmax.f32 %v7058, %v7059
    %v7061 = vrot.slane %v7060, 1
    %v7062 = vmax.f32 %v7060, %v7061
    %v7063 = vsel %vm3894, %v2022, -inf
    %v7064 = vsel %vm3894, %v2026, -inf
    %v7065 = vmax.f32 %v7063, %v7064
    %v7066 = vrot.slane %v7065, 4
    %v7067 = vmax.f32 %v7065, %v7066
    %v7068 = vrot.slane %v7067, 2
    %v7069 = vmax.f32 %v7067, %v7068
    %v7070 = vrot.slane %v7069, 1
    %v7071 = vmax.f32 %v7069, %v7070
    %v7072 = vsel %vm3894, %v2886, -inf
    %v7073 = vsel %vm3894, %v2898, -inf
    %v7074 = vmax.f32 %v7072, %v7073
    %v7075 = vrot.slane %v7074, 4
    %v7076 = vmax.f32 %v7074, %v7075
    %v7077 = vrot.slane %v7076, 2
    %v7078 = vmax.f32 %v7076, %v7077
    %v7079 = vrot.slane %v7078, 1
    %v7080 = vmax.f32 %v7078, %v7079
    %v7081 = vsel %vm3894, %v2887, -inf
    %v7082 = vsel %vm3894, %v2899, -inf
    %v7083 = vmax.f32 %v7081, %v7082
    %v7084 = vrot.slane %v7083, 4
    %v7085 = vmax.f32 %v7083, %v7084
    %v7086 = vrot.slane %v7085, 2
    %v7087 = vmax.f32 %v7085, %v7086
    %v7088 = vrot.slane %v7087, 1
    %v7089 = vmax.f32 %v7087, %v7088
    %v7090 = vsel %vm3894, %v2888, -inf
    %v7091 = vsel %vm3894, %v2900, -inf
    %v7092 = vmax.f32 %v7090, %v7091
    %v7093 = vrot.slane %v7092, 4
    %v7094 = vmax.f32 %v7092, %v7093
    %v7095 = vrot.slane %v7094, 2
    %v7096 = vmax.f32 %v7094, %v7095
    %v7097 = vrot.slane %v7096, 1
    %v7098 = vmax.f32 %v7096, %v7097
    %v7099 = vsel %vm3894, %v2023, -inf
    %v7100 = vsel %vm3894, %v2027, -inf
    %v7101 = vmax.f32 %v7099, %v7100
    %v7102 = vrot.slane %v7101, 4
    %v7103 = vmax.f32 %v7101, %v7102
    %v7104 = vrot.slane %v7103, 2
    %v7105 = vmax.f32 %v7103, %v7104
    %v7106 = vrot.slane %v7105, 1
    %v7107 = vmax.f32 %v7105, %v7106
    %v7108 = vsel %vm3894, %v2889, -inf
    %v7109 = vsel %vm3894, %v2901, -inf
    %v7110 = vmax.f32 %v7108, %v7109
    %v7111 = vrot.slane %v7110, 4
    %v7112 = vmax.f32 %v7110, %v7111
    %v7113 = vrot.slane %v7112, 2
    %v7114 = vmax.f32 %v7112, %v7113
    %v7115 = vrot.slane %v7114, 1
    %v7116 = vmax.f32 %v7114, %v7115
    %v7117 = vsel %vm3894, %v2890, -inf
    %v7118 = vsel %vm3894, %v2902, -inf
    %v7119 = vmax.f32 %v7117, %v7118
    %v7120 = vrot.slane %v7119, 4
    %v7121 = vmax.f32 %v7119, %v7120
    %v7122 = vrot.slane %v7121, 2
    %v7123 = vmax.f32 %v7121, %v7122
    %v7124 = vrot.slane %v7123, 1
    %v7125 = vmax.f32 %v7123, %v7124
    %v7126 = vsel %vm3894, %v2891, -inf
    %v7127 = vsel %vm3894, %v2903, -inf
    %v7128 = vmax.f32 %v7126, %v7127
    %v7129 = vrot.slane %v7128, 4
    %v7130 = vmax.f32 %v7128, %v7129
    %v7131 = vrot.slane %v7130, 2
    %v7132 = vmax.f32 %v7130, %v7131
    %v7133 = vrot.slane %v7132, 1
    %v7134 = vmax.f32 %v7132, %v7133
    %v7135 = vsel %vm3894, %v2024, -inf
    %v7136 = vsel %vm3894, %v2028, -inf
    %v7137 = vmax.f32 %v7135, %v7136
    %v7138 = vrot.slane %v7137, 4
    %v7139 = vmax.f32 %v7137, %v7138
    %v7140 = vrot.slane %v7139, 2
    %v7141 = vmax.f32 %v7139, %v7140
    %v7142 = vrot.slane %v7141, 1
    %v7143 = vmax.f32 %v7141, %v7142
    %v7144 = vsel %vm3894, %v2892, -inf
    %v7145 = vsel %vm3894, %v2904, -inf
    %v7146 = vmax.f32 %v7144, %v7145
    %v7147 = vrot.slane %v7146, 4
    %v7148 = vmax.f32 %v7146, %v7147
    %v7149 = vrot.slane %v7148, 2
    %v7150 = vmax.f32 %v7148, %v7149
    %v7151 = vrot.slane %v7150, 1
    %v7152 = vmax.f32 %v7150, %v7151
    %v7153 = vsel %vm3894, %v2893, -inf
    %v7154 = vsel %vm3894, %v2905, -inf
    %v7155 = vmax.f32 %v7153, %v7154
    %v7156 = vrot.slane %v7155, 4
    %v7157 = vmax.f32 %v7155, %v7156
    %v7158 = vrot.slane %v7157, 2
    %v7159 = vmax.f32 %v7157, %v7158
    %v7160 = vrot.slane %v7159, 1
    %v7161 = vmax.f32 %v7159, %v7160
    %v7162 = vsel %vm3894, %v2894, -inf
    %v7163 = vsel %vm3894, %v2906, -inf
    %v7164 = vmax.f32 %v7162, %v7163
    %v7165 = vrot.slane %v7164, 4
    %v7166 = vmax.f32 %v7164, %v7165
    %v7167 = vrot.slane %v7166, 2
    %v7168 = vmax.f32 %v7166, %v7167
    %v7169 = vrot.slane %v7168, 1
    %v7170 = vmax.f32 %v7168, %v7169
    %v7171 = vsel %vm3894, %v2025, -inf
    %v7172 = vsel %vm3894, %v2029, -inf
    %v7173 = vmax.f32 %v7171, %v7172
    %v7174 = vrot.slane %v7173, 4
    %v7175 = vmax.f32 %v7173, %v7174
    %v7176 = vrot.slane %v7175, 2
    %v7177 = vmax.f32 %v7175, %v7176
    %v7178 = vrot.slane %v7177, 1
    %v7179 = vmax.f32 %v7177, %v7178
    %v7180 = vsel %vm3894, %v2895, -inf
    %v7181 = vsel %vm3894, %v2907, -inf
    %v7182 = vmax.f32 %v7180, %v7181
    %v7183 = vrot.slane %v7182, 4
    %v7184 = vmax.f32 %v7182, %v7183
    %v7185 = vrot.slane %v7184, 2
    %v7186 = vmax.f32 %v7184, %v7185
    %v7187 = vrot.slane %v7186, 1
    %v7188 = vmax.f32 %v7186, %v7187
    %v7189 = vsel %vm3894, %v2896, -inf
    %v7190 = vsel %vm3894, %v2908, -inf
    %v7191 = vmax.f32 %v7189, %v7190
    %v7192 = vrot.slane %v7191, 4
    %v7193 = vmax.f32 %v7191, %v7192
    %v7194 = vrot.slane %v7193, 2
    %v7195 = vmax.f32 %v7193, %v7194
    %v7196 = vrot.slane %v7195, 1
    %v7197 = vmax.f32 %v7195, %v7196
    %v7198 = vsel %vm3894, %v2897, -inf
    %v7199 = vsel %vm3894, %v2909, -inf
    %v7200 = vmax.f32 %v7198, %v7199
    %v7201 = vrot.slane %v7200, 4
    %v7202 = vmax.f32 %v7200, %v7201
    %v7203 = vrot.slane %v7202, 2
    %v7204 = vmax.f32 %v7202, %v7203
    %v7205 = vrot.slane %v7204, 1
    %v7206 = vmax.f32 %v7204, %v7205
    %v7207 = vsel %vm3894, %v2030, -inf
    %v7208 = vsel %vm3894, %v2034, -inf
    %v7209 = vmax.f32 %v7207, %v7208
    %v7210 = vrot.slane %v7209, 4
    %v7211 = vmax.f32 %v7209, %v7210
    %v7212 = vrot.slane %v7211, 2
    %v7213 = vmax.f32 %v7211, %v7212
    %v7214 = vrot.slane %v7213, 1
    %v7215 = vmax.f32 %v7213, %v7214
    %v7216 = vsel %vm3894, %v2910, -inf
    %v7217 = vsel %vm3894, %v2922, -inf
    %v7218 = vmax.f32 %v7216, %v7217
    %v7219 = vrot.slane %v7218, 4
    %v7220 = vmax.f32 %v7218, %v7219
    %v7221 = vrot.slane %v7220, 2
    %v7222 = vmax.f32 %v7220, %v7221
    %v7223 = vrot.slane %v7222, 1
    %v7224 = vmax.f32 %v7222, %v7223
    %v7225 = vsel %vm3894, %v2911, -inf
    %v7226 = vsel %vm3894, %v2923, -inf
    %v7227 = vmax.f32 %v7225, %v7226
    %v7228 = vrot.slane %v7227, 4
    %v7229 = vmax.f32 %v7227, %v7228
    %v7230 = vrot.slane %v7229, 2
    %v7231 = vmax.f32 %v7229, %v7230
    %v7232 = vrot.slane %v7231, 1
    %v7233 = vmax.f32 %v7231, %v7232
    %v7234 = vsel %vm3894, %v2912, -inf
    %v7235 = vsel %vm3894, %v2924, -inf
    %v7236 = vmax.f32 %v7234, %v7235
    %v7237 = vrot.slane %v7236, 4
    %v7238 = vmax.f32 %v7236, %v7237
    %v7239 = vrot.slane %v7238, 2
    %v7240 = vmax.f32 %v7238, %v7239
    %v7241 = vrot.slane %v7240, 1
    %v7242 = vmax.f32 %v7240, %v7241
    %v7243 = vsel %vm3894, %v2031, -inf
    %v7244 = vsel %vm3894, %v2035, -inf
    %v7245 = vmax.f32 %v7243, %v7244
    %v7246 = vrot.slane %v7245, 4
    %v7247 = vmax.f32 %v7245, %v7246
    %v7248 = vrot.slane %v7247, 2
    %v7249 = vmax.f32 %v7247, %v7248
    %v7250 = vrot.slane %v7249, 1
    %v7251 = vmax.f32 %v7249, %v7250
    %v7252 = vsel %vm3894, %v2913, -inf
    %v7253 = vsel %vm3894, %v2925, -inf
    %v7254 = vmax.f32 %v7252, %v7253
    %v7255 = vrot.slane %v7254, 4
    %v7256 = vmax.f32 %v7254, %v7255
    %v7257 = vrot.slane %v7256, 2
    %v7258 = vmax.f32 %v7256, %v7257
    %v7259 = vrot.slane %v7258, 1
    %v7260 = vmax.f32 %v7258, %v7259
    %v7261 = vsel %vm3894, %v2914, -inf
    %v7262 = vsel %vm3894, %v2926, -inf
    %v7263 = vmax.f32 %v7261, %v7262
    %v7264 = vrot.slane %v7263, 4
    %v7265 = vmax.f32 %v7263, %v7264
    %v7266 = vrot.slane %v7265, 2
    %v7267 = vmax.f32 %v7265, %v7266
    %v7268 = vrot.slane %v7267, 1
    %v7269 = vmax.f32 %v7267, %v7268
    %v7270 = vsel %vm3894, %v2915, -inf
    %v7271 = vsel %vm3894, %v2927, -inf
    %v7272 = vmax.f32 %v7270, %v7271
    %v7273 = vrot.slane %v7272, 4
    %v7274 = vmax.f32 %v7272, %v7273
    %v7275 = vrot.slane %v7274, 2
    %v7276 = vmax.f32 %v7274, %v7275
    %v7277 = vrot.slane %v7276, 1
    %v7278 = vmax.f32 %v7276, %v7277
    %v7279 = vsel %vm3894, %v2032, -inf
    %v7280 = vsel %vm3894, %v2036, -inf
    %v7281 = vmax.f32 %v7279, %v7280
    %v7282 = vrot.slane %v7281, 4
    %v7283 = vmax.f32 %v7281, %v7282
    %v7284 = vrot.slane %v7283, 2
    %v7285 = vmax.f32 %v7283, %v7284
    %v7286 = vrot.slane %v7285, 1
    %v7287 = vmax.f32 %v7285, %v7286
    %v7288 = vsel %vm3894, %v2916, -inf
    %v7289 = vsel %vm3894, %v2928, -inf
    %v7290 = vmax.f32 %v7288, %v7289
    %v7291 = vrot.slane %v7290, 4
    %v7292 = vmax.f32 %v7290, %v7291
    %v7293 = vrot.slane %v7292, 2
    %v7294 = vmax.f32 %v7292, %v7293
    %v7295 = vrot.slane %v7294, 1
    %v7296 = vmax.f32 %v7294, %v7295
    %v7297 = vsel %vm3894, %v2917, -inf
    %v7298 = vsel %vm3894, %v2929, -inf
    %v7299 = vmax.f32 %v7297, %v7298
    %v7300 = vrot.slane %v7299, 4
    %v7301 = vmax.f32 %v7299, %v7300
    %v7302 = vrot.slane %v7301, 2
    %v7303 = vmax.f32 %v7301, %v7302
    %v7304 = vrot.slane %v7303, 1
    %v7305 = vmax.f32 %v7303, %v7304
    %v7306 = vsel %vm3894, %v2918, -inf
    %v7307 = vsel %vm3894, %v2930, -inf
    %v7308 = vmax.f32 %v7306, %v7307
    %v7309 = vrot.slane %v7308, 4
    %v7310 = vmax.f32 %v7308, %v7309
    %v7311 = vrot.slane %v7310, 2
    %v7312 = vmax.f32 %v7310, %v7311
    %v7313 = vrot.slane %v7312, 1
    %v7314 = vmax.f32 %v7312, %v7313
    %v7315 = vsel %vm3894, %v2033, -inf
    %v7316 = vsel %vm3894, %v2037, -inf
    %v7317 = vmax.f32 %v7315, %v7316
    %v7318 = vrot.slane %v7317, 4
    %v7319 = vmax.f32 %v7317, %v7318
    %v7320 = vrot.slane %v7319, 2
    %v7321 = vmax.f32 %v7319, %v7320
    %v7322 = vrot.slane %v7321, 1
    %v7323 = vmax.f32 %v7321, %v7322
    %v7324 = vsel %vm3894, %v2919, -inf
    %v7325 = vsel %vm3894, %v2931, -inf
    %v7326 = vmax.f32 %v7324, %v7325
    %v7327 = vrot.slane %v7326, 4
    %v7328 = vmax.f32 %v7326, %v7327
    %v7329 = vrot.slane %v7328, 2
    %v7330 = vmax.f32 %v7328, %v7329
    %v7331 = vrot.slane %v7330, 1
    %v7332 = vmax.f32 %v7330, %v7331
    %v7333 = vsel %vm3894, %v2920, -inf
    %v7334 = vsel %vm3894, %v2932, -inf
    %v7335 = vmax.f32 %v7333, %v7334
    %v7336 = vrot.slane %v7335, 4
    %v7337 = vmax.f32 %v7335, %v7336
    %v7338 = vrot.slane %v7337, 2
    %v7339 = vmax.f32 %v7337, %v7338
    %v7340 = vrot.slane %v7339, 1
    %v7341 = vmax.f32 %v7339, %v7340
    %v7342 = vsel %vm3894, %v2921, -inf
    %v7343 = vsel %vm3894, %v2933, -inf
    %v7344 = vmax.f32 %v7342, %v7343
    %v7345 = vrot.slane %v7344, 4
    %v7346 = vmax.f32 %v7344, %v7345
    %v7347 = vrot.slane %v7346, 2
    %v7348 = vmax.f32 %v7346, %v7347
    %v7349 = vrot.slane %v7348, 1
    %v7350 = vmax.f32 %v7348, %v7349
    %v7351 = vsel %vm3894, %v2038, -inf
    %v7352 = vsel %vm3894, %v2042, -inf
    %v7353 = vmax.f32 %v7351, %v7352
    %v7354 = vrot.slane %v7353, 4
    %v7355 = vmax.f32 %v7353, %v7354
    %v7356 = vrot.slane %v7355, 2
    %v7357 = vmax.f32 %v7355, %v7356
    %v7358 = vrot.slane %v7357, 1
    %v7359 = vmax.f32 %v7357, %v7358
    %v7360 = vsel %vm3894, %v2934, -inf
    %v7361 = vsel %vm3894, %v2946, -inf
    %v7362 = vmax.f32 %v7360, %v7361
    %v7363 = vrot.slane %v7362, 4
    %v7364 = vmax.f32 %v7362, %v7363
    %v7365 = vrot.slane %v7364, 2
    %v7366 = vmax.f32 %v7364, %v7365
    %v7367 = vrot.slane %v7366, 1
    %v7368 = vmax.f32 %v7366, %v7367
    %v7369 = vsel %vm3894, %v2935, -inf
    %v7370 = vsel %vm3894, %v2947, -inf
    %v7371 = vmax.f32 %v7369, %v7370
    %v7372 = vrot.slane %v7371, 4
    %v7373 = vmax.f32 %v7371, %v7372
    %v7374 = vrot.slane %v7373, 2
    %v7375 = vmax.f32 %v7373, %v7374
    %v7376 = vrot.slane %v7375, 1
    %v7377 = vmax.f32 %v7375, %v7376
    %v7378 = vsel %vm3894, %v2936, -inf
    %v7379 = vsel %vm3894, %v2948, -inf
    %v7380 = vmax.f32 %v7378, %v7379
    %v7381 = vrot.slane %v7380, 4
    %v7382 = vmax.f32 %v7380, %v7381
    %v7383 = vrot.slane %v7382, 2
    %v7384 = vmax.f32 %v7382, %v7383
    %v7385 = vrot.slane %v7384, 1
    %v7386 = vmax.f32 %v7384, %v7385
    %v7387 = vsel %vm3894, %v2039, -inf
    %v7388 = vsel %vm3894, %v2043, -inf
    %v7389 = vmax.f32 %v7387, %v7388
    %v7390 = vrot.slane %v7389, 4
    %v7391 = vmax.f32 %v7389, %v7390
    %v7392 = vrot.slane %v7391, 2
    %v7393 = vmax.f32 %v7391, %v7392
    %v7394 = vrot.slane %v7393, 1
    %v7395 = vmax.f32 %v7393, %v7394
    %v7396 = vsel %vm3894, %v2937, -inf
    %v7397 = vsel %vm3894, %v2949, -inf
    %v7398 = vmax.f32 %v7396, %v7397
    %v7399 = vrot.slane %v7398, 4
    %v7400 = vmax.f32 %v7398, %v7399
    %v7401 = vrot.slane %v7400, 2
    %v7402 = vmax.f32 %v7400, %v7401
    %v7403 = vrot.slane %v7402, 1
    %v7404 = vmax.f32 %v7402, %v7403
    %v7405 = vsel %vm3894, %v2938, -inf
    %v7406 = vsel %vm3894, %v2950, -inf
    %v7407 = vmax.f32 %v7405, %v7406
    %v7408 = vrot.slane %v7407, 4
    %v7409 = vmax.f32 %v7407, %v7408
    %v7410 = vrot.slane %v7409, 2
    %v7411 = vmax.f32 %v7409, %v7410
    %v7412 = vrot.slane %v7411, 1
    %v7413 = vmax.f32 %v7411, %v7412
    %v7414 = vsel %vm3894, %v2939, -inf
    %v7415 = vsel %vm3894, %v2951, -inf
    %v7416 = vmax.f32 %v7414, %v7415
    %v7417 = vrot.slane %v7416, 4
    %v7418 = vmax.f32 %v7416, %v7417
    %v7419 = vrot.slane %v7418, 2
    %v7420 = vmax.f32 %v7418, %v7419
    %v7421 = vrot.slane %v7420, 1
    %v7422 = vmax.f32 %v7420, %v7421
    %v7423 = vsel %vm3894, %v2040, -inf
    %v7424 = vsel %vm3894, %v2044, -inf
    %v7425 = vmax.f32 %v7423, %v7424
    %v7426 = vrot.slane %v7425, 4
    %v7427 = vmax.f32 %v7425, %v7426
    %v7428 = vrot.slane %v7427, 2
    %v7429 = vmax.f32 %v7427, %v7428
    %v7430 = vrot.slane %v7429, 1
    %v7431 = vmax.f32 %v7429, %v7430
    %v7432 = vsel %vm3894, %v2940, -inf
    %v7433 = vsel %vm3894, %v2952, -inf
    %v7434 = vmax.f32 %v7432, %v7433
    %v7435 = vrot.slane %v7434, 4
    %v7436 = vmax.f32 %v7434, %v7435
    %v7437 = vrot.slane %v7436, 2
    %v7438 = vmax.f32 %v7436, %v7437
    %v7439 = vrot.slane %v7438, 1
    %v7440 = vmax.f32 %v7438, %v7439
    %v7441 = vsel %vm3894, %v2941, -inf
    %v7442 = vsel %vm3894, %v2953, -inf
    %v7443 = vmax.f32 %v7441, %v7442
    %v7444 = vrot.slane %v7443, 4
    %v7445 = vmax.f32 %v7443, %v7444
    %v7446 = vrot.slane %v7445, 2
    %v7447 = vmax.f32 %v7445, %v7446
    %v7448 = vrot.slane %v7447, 1
    %v7449 = vmax.f32 %v7447, %v7448
    %v7450 = vsel %vm3894, %v2942, -inf
    %v7451 = vsel %vm3894, %v2954, -inf
    %v7452 = vmax.f32 %v7450, %v7451
    %v7453 = vrot.slane %v7452, 4
    %v7454 = vmax.f32 %v7452, %v7453
    %v7455 = vrot.slane %v7454, 2
    %v7456 = vmax.f32 %v7454, %v7455
    %v7457 = vrot.slane %v7456, 1
    %v7458 = vmax.f32 %v7456, %v7457
    %v7459 = vsel %vm3894, %v2041, -inf
    %v7460 = vsel %vm3894, %v2045, -inf
    %v7461 = vmax.f32 %v7459, %v7460
    %v7462 = vrot.slane %v7461, 4
    %v7463 = vmax.f32 %v7461, %v7462
    %v7464 = vrot.slane %v7463, 2
    %v7465 = vmax.f32 %v7463, %v7464
    %v7466 = vrot.slane %v7465, 1
    %v7467 = vmax.f32 %v7465, %v7466
    %v7468 = vsel %vm3894, %v2943, -inf
    %v7469 = vsel %vm3894, %v2955, -inf
    %v7470 = vmax.f32 %v7468, %v7469
    %v7471 = vrot.slane %v7470, 4
    %v7472 = vmax.f32 %v7470, %v7471
    %v7473 = vrot.slane %v7472, 2
    %v7474 = vmax.f32 %v7472, %v7473
    %v7475 = vrot.slane %v7474, 1
    %v7476 = vmax.f32 %v7474, %v7475
    %v7477 = vsel %vm3894, %v2944, -inf
    %v7478 = vsel %vm3894, %v2956, -inf
    %v7479 = vmax.f32 %v7477, %v7478
    %v7480 = vrot.slane %v7479, 4
    %v7481 = vmax.f32 %v7479, %v7480
    %v7482 = vrot.slane %v7481, 2
    %v7483 = vmax.f32 %v7481, %v7482
    %v7484 = vrot.slane %v7483, 1
    %v7485 = vmax.f32 %v7483, %v7484
    %v7486 = vsel %vm3894, %v2945, -inf
    %v7487 = vsel %vm3894, %v2957, -inf
    %v7488 = vmax.f32 %v7486, %v7487
    %v7489 = vrot.slane %v7488, 4
    %v7490 = vmax.f32 %v7488, %v7489
    %v7491 = vrot.slane %v7490, 2
    %v7492 = vmax.f32 %v7490, %v7491
    %v7493 = vrot.slane %v7492, 1
    %v7494 = vmax.f32 %v7492, %v7493
    %v7495 = vsel %vm3894, %v2046, -inf
    %v7496 = vsel %vm3894, %v2050, -inf
    %v7497 = vmax.f32 %v7495, %v7496
    %v7498 = vrot.slane %v7497, 4
    %v7499 = vmax.f32 %v7497, %v7498
    %v7500 = vrot.slane %v7499, 2
    %v7501 = vmax.f32 %v7499, %v7500
    %v7502 = vrot.slane %v7501, 1
    %v7503 = vmax.f32 %v7501, %v7502
    %v7504 = vsel %vm3894, %v2958, -inf
    %v7505 = vsel %vm3894, %v2970, -inf
    %v7506 = vmax.f32 %v7504, %v7505
    %v7507 = vrot.slane %v7506, 4
    %v7508 = vmax.f32 %v7506, %v7507
    %v7509 = vrot.slane %v7508, 2
    %v7510 = vmax.f32 %v7508, %v7509
    %v7511 = vrot.slane %v7510, 1
    %v7512 = vmax.f32 %v7510, %v7511
    %v7513 = vsel %vm3894, %v2959, -inf
    %v7514 = vsel %vm3894, %v2971, -inf
    %v7515 = vmax.f32 %v7513, %v7514
    %v7516 = vrot.slane %v7515, 4
    %v7517 = vmax.f32 %v7515, %v7516
    %v7518 = vrot.slane %v7517, 2
    %v7519 = vmax.f32 %v7517, %v7518
    %v7520 = vrot.slane %v7519, 1
    %v7521 = vmax.f32 %v7519, %v7520
    %v7522 = vsel %vm3894, %v2960, -inf
    %v7523 = vsel %vm3894, %v2972, -inf
    %v7524 = vmax.f32 %v7522, %v7523
    %v7525 = vrot.slane %v7524, 4
    %v7526 = vmax.f32 %v7524, %v7525
    %v7527 = vrot.slane %v7526, 2
    %v7528 = vmax.f32 %v7526, %v7527
    %v7529 = vrot.slane %v7528, 1
    %v7530 = vmax.f32 %v7528, %v7529
    %v7531 = vsel %vm3894, %v2047, -inf
    %v7532 = vsel %vm3894, %v2051, -inf
    %v7533 = vmax.f32 %v7531, %v7532
    %v7534 = vrot.slane %v7533, 4
    %v7535 = vmax.f32 %v7533, %v7534
    %v7536 = vrot.slane %v7535, 2
    %v7537 = vmax.f32 %v7535, %v7536
    %v7538 = vrot.slane %v7537, 1
    %v7539 = vmax.f32 %v7537, %v7538
    %v7540 = vsel %vm3894, %v2961, -inf
    %v7541 = vsel %vm3894, %v2973, -inf
    %v7542 = vmax.f32 %v7540, %v7541
    %v7543 = vrot.slane %v7542, 4
    %v7544 = vmax.f32 %v7542, %v7543
    %v7545 = vrot.slane %v7544, 2
    %v7546 = vmax.f32 %v7544, %v7545
    %v7547 = vrot.slane %v7546, 1
    %v7548 = vmax.f32 %v7546, %v7547
    %v7549 = vsel %vm3894, %v2962, -inf
    %v7550 = vsel %vm3894, %v2974, -inf
    %v7551 = vmax.f32 %v7549, %v7550
    %v7552 = vrot.slane %v7551, 4
    %v7553 = vmax.f32 %v7551, %v7552
    %v7554 = vrot.slane %v7553, 2
    %v7555 = vmax.f32 %v7553, %v7554
    %v7556 = vrot.slane %v7555, 1
    %v7557 = vmax.f32 %v7555, %v7556
    %v7558 = vsel %vm3894, %v2963, -inf
    %v7559 = vsel %vm3894, %v2975, -inf
    %v7560 = vmax.f32 %v7558, %v7559
    %v7561 = vrot.slane %v7560, 4
    %v7562 = vmax.f32 %v7560, %v7561
    %v7563 = vrot.slane %v7562, 2
    %v7564 = vmax.f32 %v7562, %v7563
    %v7565 = vrot.slane %v7564, 1
    %v7566 = vmax.f32 %v7564, %v7565
    %v7567 = vsel %vm3894, %v2048, -inf
    %v7568 = vsel %vm3894, %v2052, -inf
    %v7569 = vmax.f32 %v7567, %v7568
    %v7570 = vrot.slane %v7569, 4
    %v7571 = vmax.f32 %v7569, %v7570
    %v7572 = vrot.slane %v7571, 2
    %v7573 = vmax.f32 %v7571, %v7572
    %v7574 = vrot.slane %v7573, 1
    %v7575 = vmax.f32 %v7573, %v7574
    %v7576 = vsel %vm3894, %v2964, -inf
    %v7577 = vsel %vm3894, %v2976, -inf
    %v7578 = vmax.f32 %v7576, %v7577
    %v7579 = vrot.slane %v7578, 4
    %v7580 = vmax.f32 %v7578, %v7579
    %v7581 = vrot.slane %v7580, 2
    %v7582 = vmax.f32 %v7580, %v7581
    %v7583 = vrot.slane %v7582, 1
    %v7584 = vmax.f32 %v7582, %v7583
    %v7585 = vsel %vm3894, %v2965, -inf
    %v7586 = vsel %vm3894, %v2977, -inf
    %v7587 = vmax.f32 %v7585, %v7586
    %v7588 = vrot.slane %v7587, 4
    %v7589 = vmax.f32 %v7587, %v7588
    %v7590 = vrot.slane %v7589, 2
    %v7591 = vmax.f32 %v7589, %v7590
    %v7592 = vrot.slane %v7591, 1
    %v7593 = vmax.f32 %v7591, %v7592
    %v7594 = vsel %vm3894, %v2966, -inf
    %v7595 = vsel %vm3894, %v2978, -inf
    %v7596 = vmax.f32 %v7594, %v7595
    %v7597 = vrot.slane %v7596, 4
    %v7598 = vmax.f32 %v7596, %v7597
    %v7599 = vrot.slane %v7598, 2
    %v7600 = vmax.f32 %v7598, %v7599
    %v7601 = vrot.slane %v7600, 1
    %v7602 = vmax.f32 %v7600, %v7601
    %v7603 = vsel %vm3894, %v2049, -inf
    %v7604 = vsel %vm3894, %v2053, -inf
    %v7605 = vmax.f32 %v7603, %v7604
    %v7606 = vrot.slane %v7605, 4
    %v7607 = vmax.f32 %v7605, %v7606
    %v7608 = vrot.slane %v7607, 2
    %v7609 = vmax.f32 %v7607, %v7608
    %v7610 = vrot.slane %v7609, 1
    %v7611 = vmax.f32 %v7609, %v7610
    %v7612 = vsel %vm3894, %v2967, -inf
    %v7613 = vsel %vm3894, %v2979, -inf
    %v7614 = vmax.f32 %v7612, %v7613
    %v7615 = vrot.slane %v7614, 4
    %v7616 = vmax.f32 %v7614, %v7615
    %v7617 = vrot.slane %v7616, 2
    %v7618 = vmax.f32 %v7616, %v7617
    %v7619 = vrot.slane %v7618, 1
    %v7620 = vmax.f32 %v7618, %v7619
    %v7621 = vsel %vm3894, %v2968, -inf
    %v7622 = vsel %vm3894, %v2980, -inf
    %v7623 = vmax.f32 %v7621, %v7622
    %v7624 = vrot.slane %v7623, 4
    %v7625 = vmax.f32 %v7623, %v7624
    %v7626 = vrot.slane %v7625, 2
    %v7627 = vmax.f32 %v7625, %v7626
    %v7628 = vrot.slane %v7627, 1
    %v7629 = vmax.f32 %v7627, %v7628
    %v7630 = vsel %vm3894, %v2969, -inf
    %v7631 = vsel %vm3894, %v2981, -inf
    %v7632 = vmax.f32 %v7630, %v7631
    %v7633 = vrot.slane %v7632, 4
    %v7634 = vmax.f32 %v7632, %v7633
    %v7635 = vrot.slane %v7634, 2
    %v7636 = vmax.f32 %v7634, %v7635
    %v7637 = vrot.slane %v7636, 1
    %v7638 = vmax.f32 %v7636, %v7637
    %v7639 = vsel %vm3894, %v2054, -inf
    %v7640 = vsel %vm3894, %v2058, -inf
    %v7641 = vmax.f32 %v7639, %v7640
    %v7642 = vrot.slane %v7641, 4
    %v7643 = vmax.f32 %v7641, %v7642
    %v7644 = vrot.slane %v7643, 2
    %v7645 = vmax.f32 %v7643, %v7644
    %v7646 = vrot.slane %v7645, 1
    %v7647 = vmax.f32 %v7645, %v7646
    %v7648 = vsel %vm3894, %v2982, -inf
    %v7649 = vsel %vm3894, %v2994, -inf
    %v7650 = vmax.f32 %v7648, %v7649
    %v7651 = vrot.slane %v7650, 4
    %v7652 = vmax.f32 %v7650, %v7651
    %v7653 = vrot.slane %v7652, 2
    %v7654 = vmax.f32 %v7652, %v7653
    %v7655 = vrot.slane %v7654, 1
    %v7656 = vmax.f32 %v7654, %v7655
    %v7657 = vsel %vm3894, %v2983, -inf
    %v7658 = vsel %vm3894, %v2995, -inf
    %v7659 = vmax.f32 %v7657, %v7658
    %v7660 = vrot.slane %v7659, 4
    %v7661 = vmax.f32 %v7659, %v7660
    %v7662 = vrot.slane %v7661, 2
    %v7663 = vmax.f32 %v7661, %v7662
    %v7664 = vrot.slane %v7663, 1
    %v7665 = vmax.f32 %v7663, %v7664
    %v7666 = vsel %vm3894, %v2984, -inf
    %v7667 = vsel %vm3894, %v2996, -inf
    %v7668 = vmax.f32 %v7666, %v7667
    %v7669 = vrot.slane %v7668, 4
    %v7670 = vmax.f32 %v7668, %v7669
    %v7671 = vrot.slane %v7670, 2
    %v7672 = vmax.f32 %v7670, %v7671
    %v7673 = vrot.slane %v7672, 1
    %v7674 = vmax.f32 %v7672, %v7673
    %v7675 = vsel %vm3894, %v2055, -inf
    %v7676 = vsel %vm3894, %v2059, -inf
    %v7677 = vmax.f32 %v7675, %v7676
    %v7678 = vrot.slane %v7677, 4
    %v7679 = vmax.f32 %v7677, %v7678
    %v7680 = vrot.slane %v7679, 2
    %v7681 = vmax.f32 %v7679, %v7680
    %v7682 = vrot.slane %v7681, 1
    %v7683 = vmax.f32 %v7681, %v7682
    %v7684 = vsel %vm3894, %v2985, -inf
    %v7685 = vsel %vm3894, %v2997, -inf
    %v7686 = vmax.f32 %v7684, %v7685
    %v7687 = vrot.slane %v7686, 4
    %v7688 = vmax.f32 %v7686, %v7687
    %v7689 = vrot.slane %v7688, 2
    %v7690 = vmax.f32 %v7688, %v7689
    %v7691 = vrot.slane %v7690, 1
    %v7692 = vmax.f32 %v7690, %v7691
    %v7693 = vsel %vm3894, %v2986, -inf
    %v7694 = vsel %vm3894, %v2998, -inf
    %v7695 = vmax.f32 %v7693, %v7694
    %v7696 = vrot.slane %v7695, 4
    %v7697 = vmax.f32 %v7695, %v7696
    %v7698 = vrot.slane %v7697, 2
    %v7699 = vmax.f32 %v7697, %v7698
    %v7700 = vrot.slane %v7699, 1
    %v7701 = vmax.f32 %v7699, %v7700
    %v7702 = vsel %vm3894, %v2987, -inf
    %v7703 = vsel %vm3894, %v2999, -inf
    %v7704 = vmax.f32 %v7702, %v7703
    %v7705 = vrot.slane %v7704, 4
    %v7706 = vmax.f32 %v7704, %v7705
    %v7707 = vrot.slane %v7706, 2
    %v7708 = vmax.f32 %v7706, %v7707
    %v7709 = vrot.slane %v7708, 1
    %v7710 = vmax.f32 %v7708, %v7709
    %v7711 = vsel %vm3894, %v2056, -inf
    %v7712 = vsel %vm3894, %v2060, -inf
    %v7713 = vmax.f32 %v7711, %v7712
    %v7714 = vrot.slane %v7713, 4
    %v7715 = vmax.f32 %v7713, %v7714
    %v7716 = vrot.slane %v7715, 2
    %v7717 = vmax.f32 %v7715, %v7716
    %v7718 = vrot.slane %v7717, 1
    %v7719 = vmax.f32 %v7717, %v7718
    %v7720 = vsel %vm3894, %v2988, -inf
    %v7721 = vsel %vm3894, %v3000, -inf
    %v7722 = vmax.f32 %v7720, %v7721
    %v7723 = vrot.slane %v7722, 4
    %v7724 = vmax.f32 %v7722, %v7723
    %v7725 = vrot.slane %v7724, 2
    %v7726 = vmax.f32 %v7724, %v7725
    %v7727 = vrot.slane %v7726, 1
    %v7728 = vmax.f32 %v7726, %v7727
    %v7729 = vsel %vm3894, %v2989, -inf
    %v7730 = vsel %vm3894, %v3001, -inf
    %v7731 = vmax.f32 %v7729, %v7730
    %v7732 = vrot.slane %v7731, 4
    %v7733 = vmax.f32 %v7731, %v7732
    %v7734 = vrot.slane %v7733, 2
    %v7735 = vmax.f32 %v7733, %v7734
    %v7736 = vrot.slane %v7735, 1
    %v7737 = vmax.f32 %v7735, %v7736
    %v7738 = vsel %vm3894, %v2990, -inf
    %v7739 = vsel %vm3894, %v3002, -inf
    %v7740 = vmax.f32 %v7738, %v7739
    %v7741 = vrot.slane %v7740, 4
    %v7742 = vmax.f32 %v7740, %v7741
    %v7743 = vrot.slane %v7742, 2
    %v7744 = vmax.f32 %v7742, %v7743
    %v7745 = vrot.slane %v7744, 1
    %v7746 = vmax.f32 %v7744, %v7745
    %v7747 = vsel %vm3894, %v2057, -inf
    %v7748 = vsel %vm3894, %v2061, -inf
    %v7749 = vmax.f32 %v7747, %v7748
    %v7750 = vrot.slane %v7749, 4
    %v7751 = vmax.f32 %v7749, %v7750
    %v7752 = vrot.slane %v7751, 2
    %v7753 = vmax.f32 %v7751, %v7752
    %v7754 = vrot.slane %v7753, 1
    %v7755 = vmax.f32 %v7753, %v7754
    %v7756 = vsel %vm3894, %v2991, -inf
    %v7757 = vsel %vm3894, %v3003, -inf
    %v7758 = vmax.f32 %v7756, %v7757
    %v7759 = vrot.slane %v7758, 4
    %v7760 = vmax.f32 %v7758, %v7759
    %v7761 = vrot.slane %v7760, 2
    %v7762 = vmax.f32 %v7760, %v7761
    %v7763 = vrot.slane %v7762, 1
    %v7764 = vmax.f32 %v7762, %v7763
    %v7765 = vsel %vm3894, %v2992, -inf
    %v7766 = vsel %vm3894, %v3004, -inf
    %v7767 = vmax.f32 %v7765, %v7766
    %v7768 = vrot.slane %v7767, 4
    %v7769 = vmax.f32 %v7767, %v7768
    %v7770 = vrot.slane %v7769, 2
    %v7771 = vmax.f32 %v7769, %v7770
    %v7772 = vrot.slane %v7771, 1
    %v7773 = vmax.f32 %v7771, %v7772
    %v7774 = vsel %vm3894, %v2993, -inf
    %v7775 = vsel %vm3894, %v3005, -inf
    %v7776 = vmax.f32 %v7774, %v7775
    %v7777 = vrot.slane %v7776, 4
    %v7778 = vmax.f32 %v7776, %v7777
    %v7779 = vrot.slane %v7778, 2
    %v7780 = vmax.f32 %v7778, %v7779
    %v7781 = vrot.slane %v7780, 1
    %v7782 = vmax.f32 %v7780, %v7781
    %v7783 = vsel %vm3894, %v2062, -inf
    %v7784 = vsel %vm3894, %v2066, -inf
    %v7785 = vmax.f32 %v7783, %v7784
    %v7786 = vrot.slane %v7785, 4
    %v7787 = vmax.f32 %v7785, %v7786
    %v7788 = vrot.slane %v7787, 2
    %v7789 = vmax.f32 %v7787, %v7788
    %v7790 = vrot.slane %v7789, 1
    %v7791 = vmax.f32 %v7789, %v7790
    %v7792 = vsel %vm3894, %v3006, -inf
    %v7793 = vsel %vm3894, %v3018, -inf
    %v7794 = vmax.f32 %v7792, %v7793
    %v7795 = vrot.slane %v7794, 4
    %v7796 = vmax.f32 %v7794, %v7795
    %v7797 = vrot.slane %v7796, 2
    %v7798 = vmax.f32 %v7796, %v7797
    %v7799 = vrot.slane %v7798, 1
    %v7800 = vmax.f32 %v7798, %v7799
    %v7801 = vsel %vm3894, %v3007, -inf
    %v7802 = vsel %vm3894, %v3019, -inf
    %v7803 = vmax.f32 %v7801, %v7802
    %v7804 = vrot.slane %v7803, 4
    %v7805 = vmax.f32 %v7803, %v7804
    %v7806 = vrot.slane %v7805, 2
    %v7807 = vmax.f32 %v7805, %v7806
    %v7808 = vrot.slane %v7807, 1
    %v7809 = vmax.f32 %v7807, %v7808
    %v7810 = vsel %vm3894, %v3008, -inf
    %v7811 = vsel %vm3894, %v3020, -inf
    %v7812 = vmax.f32 %v7810, %v7811
    %v7813 = vrot.slane %v7812, 4
    %v7814 = vmax.f32 %v7812, %v7813
    %v7815 = vrot.slane %v7814, 2
    %v7816 = vmax.f32 %v7814, %v7815
    %v7817 = vrot.slane %v7816, 1
    %v7818 = vmax.f32 %v7816, %v7817
    %v7819 = vsel %vm3894, %v2063, -inf
    %v7820 = vsel %vm3894, %v2067, -inf
    %v7821 = vmax.f32 %v7819, %v7820
    %v7822 = vrot.slane %v7821, 4
    %v7823 = vmax.f32 %v7821, %v7822
    %v7824 = vrot.slane %v7823, 2
    %v7825 = vmax.f32 %v7823, %v7824
    %v7826 = vrot.slane %v7825, 1
    %v7827 = vmax.f32 %v7825, %v7826
    %v7828 = vsel %vm3894, %v3009, -inf
    %v7829 = vsel %vm3894, %v3021, -inf
    %v7830 = vmax.f32 %v7828, %v7829
    %v7831 = vrot.slane %v7830, 4
    %v7832 = vmax.f32 %v7830, %v7831
    %v7833 = vrot.slane %v7832, 2
    %v7834 = vmax.f32 %v7832, %v7833
    %v7835 = vrot.slane %v7834, 1
    %v7836 = vmax.f32 %v7834, %v7835
    %v7837 = vsel %vm3894, %v3010, -inf
    %v7838 = vsel %vm3894, %v3022, -inf
    %v7839 = vmax.f32 %v7837, %v7838
    %v7840 = vrot.slane %v7839, 4
    %v7841 = vmax.f32 %v7839, %v7840
    %v7842 = vrot.slane %v7841, 2
    %v7843 = vmax.f32 %v7841, %v7842
    %v7844 = vrot.slane %v7843, 1
    %v7845 = vmax.f32 %v7843, %v7844
    %v7846 = vsel %vm3894, %v3011, -inf
    %v7847 = vsel %vm3894, %v3023, -inf
    %v7848 = vmax.f32 %v7846, %v7847
    %v7849 = vrot.slane %v7848, 4
    %v7850 = vmax.f32 %v7848, %v7849
    %v7851 = vrot.slane %v7850, 2
    %v7852 = vmax.f32 %v7850, %v7851
    %v7853 = vrot.slane %v7852, 1
    %v7854 = vmax.f32 %v7852, %v7853
    %v7855 = vsel %vm3894, %v2064, -inf
    %v7856 = vsel %vm3894, %v2068, -inf
    %v7857 = vmax.f32 %v7855, %v7856
    %v7858 = vrot.slane %v7857, 4
    %v7859 = vmax.f32 %v7857, %v7858
    %v7860 = vrot.slane %v7859, 2
    %v7861 = vmax.f32 %v7859, %v7860
    %v7862 = vrot.slane %v7861, 1
    %v7863 = vmax.f32 %v7861, %v7862
    %v7864 = vsel %vm3894, %v3012, -inf
    %v7865 = vsel %vm3894, %v3024, -inf
    %v7866 = vmax.f32 %v7864, %v7865
    %v7867 = vrot.slane %v7866, 4
    %v7868 = vmax.f32 %v7866, %v7867
    %v7869 = vrot.slane %v7868, 2
    %v7870 = vmax.f32 %v7868, %v7869
    %v7871 = vrot.slane %v7870, 1
    %v7872 = vmax.f32 %v7870, %v7871
    %v7873 = vsel %vm3894, %v3013, -inf
    %v7874 = vsel %vm3894, %v3025, -inf
    %v7875 = vmax.f32 %v7873, %v7874
    %v7876 = vrot.slane %v7875, 4
    %v7877 = vmax.f32 %v7875, %v7876
    %v7878 = vrot.slane %v7877, 2
    %v7879 = vmax.f32 %v7877, %v7878
    %v7880 = vrot.slane %v7879, 1
    %v7881 = vmax.f32 %v7879, %v7880
    %v7882 = vsel %vm3894, %v3014, -inf
    %v7883 = vsel %vm3894, %v3026, -inf
    %v7884 = vmax.f32 %v7882, %v7883
    %v7885 = vrot.slane %v7884, 4
    %v7886 = vmax.f32 %v7884, %v7885
    %v7887 = vrot.slane %v7886, 2
    %v7888 = vmax.f32 %v7886, %v7887
    %v7889 = vrot.slane %v7888, 1
    %v7890 = vmax.f32 %v7888, %v7889
    %v7891 = vsel %vm3894, %v2065, -inf
    %v7892 = vsel %vm3894, %v2069, -inf
    %v7893 = vmax.f32 %v7891, %v7892
    %v7894 = vrot.slane %v7893, 4
    %v7895 = vmax.f32 %v7893, %v7894
    %v7896 = vrot.slane %v7895, 2
    %v7897 = vmax.f32 %v7895, %v7896
    %v7898 = vrot.slane %v7897, 1
    %v7899 = vmax.f32 %v7897, %v7898
    %v7900 = vsel %vm3894, %v3015, -inf
    %v7901 = vsel %vm3894, %v3027, -inf
    %v7902 = vmax.f32 %v7900, %v7901
    %v7903 = vrot.slane %v7902, 4
    %v7904 = vmax.f32 %v7902, %v7903
    %v7905 = vrot.slane %v7904, 2
    %v7906 = vmax.f32 %v7904, %v7905
    %v7907 = vrot.slane %v7906, 1
    %v7908 = vmax.f32 %v7906, %v7907
    %v7909 = vsel %vm3894, %v3016, -inf
    %v7910 = vsel %vm3894, %v3028, -inf
    %v7911 = vmax.f32 %v7909, %v7910
    %v7912 = vrot.slane %v7911, 4
    %v7913 = vmax.f32 %v7911, %v7912
    %v7914 = vrot.slane %v7913, 2
    %v7915 = vmax.f32 %v7913, %v7914
    %v7916 = vrot.slane %v7915, 1
    %v7917 = vmax.f32 %v7915, %v7916
    %v7918 = vsel %vm3894, %v3017, -inf
    %v7919 = vsel %vm3894, %v3029, -inf
    %v7920 = vmax.f32 %v7918, %v7919
    %v7921 = vrot.slane %v7920, 4
    %v7922 = vmax.f32 %v7920, %v7921
    %v7923 = vrot.slane %v7922, 2
    %v7924 = vmax.f32 %v7922, %v7923
    %v7925 = vrot.slane %v7924, 1
    %v7926 = vmax.f32 %v7924, %v7925
    %v7927 = vsel %vm3894, %v2070, -inf
    %v7928 = vsel %vm3894, %v2074, -inf
    %v7929 = vmax.f32 %v7927, %v7928
    %v7930 = vrot.slane %v7929, 4
    %v7931 = vmax.f32 %v7929, %v7930
    %v7932 = vrot.slane %v7931, 2
    %v7933 = vmax.f32 %v7931, %v7932
    %v7934 = vrot.slane %v7933, 1
    %v7935 = vmax.f32 %v7933, %v7934
    %v7936 = vsel %vm3894, %v3030, -inf
    %v7937 = vsel %vm3894, %v3042, -inf
    %v7938 = vmax.f32 %v7936, %v7937
    %v7939 = vrot.slane %v7938, 4
    %v7940 = vmax.f32 %v7938, %v7939
    %v7941 = vrot.slane %v7940, 2
    %v7942 = vmax.f32 %v7940, %v7941
    %v7943 = vrot.slane %v7942, 1
    %v7944 = vmax.f32 %v7942, %v7943
    %v7945 = vsel %vm3894, %v3031, -inf
    %v7946 = vsel %vm3894, %v3043, -inf
    %v7947 = vmax.f32 %v7945, %v7946
    %v7948 = vrot.slane %v7947, 4
    %v7949 = vmax.f32 %v7947, %v7948
    %v7950 = vrot.slane %v7949, 2
    %v7951 = vmax.f32 %v7949, %v7950
    %v7952 = vrot.slane %v7951, 1
    %v7953 = vmax.f32 %v7951, %v7952
    %v7954 = vsel %vm3894, %v3032, -inf
    %v7955 = vsel %vm3894, %v3044, -inf
    %v7956 = vmax.f32 %v7954, %v7955
    %v7957 = vrot.slane %v7956, 4
    %v7958 = vmax.f32 %v7956, %v7957
    %v7959 = vrot.slane %v7958, 2
    %v7960 = vmax.f32 %v7958, %v7959
    %v7961 = vrot.slane %v7960, 1
    %v7962 = vmax.f32 %v7960, %v7961
    %v7963 = vsel %vm3894, %v2071, -inf
    %v7964 = vsel %vm3894, %v2075, -inf
    %v7965 = vmax.f32 %v7963, %v7964
    %v7966 = vrot.slane %v7965, 4
    %v7967 = vmax.f32 %v7965, %v7966
    %v7968 = vrot.slane %v7967, 2
    %v7969 = vmax.f32 %v7967, %v7968
    %v7970 = vrot.slane %v7969, 1
    %v7971 = vmax.f32 %v7969, %v7970
    %v7972 = vsel %vm3894, %v3033, -inf
    %v7973 = vsel %vm3894, %v3045, -inf
    %v7974 = vmax.f32 %v7972, %v7973
    %v7975 = vrot.slane %v7974, 4
    %v7976 = vmax.f32 %v7974, %v7975
    %v7977 = vrot.slane %v7976, 2
    %v7978 = vmax.f32 %v7976, %v7977
    %v7979 = vrot.slane %v7978, 1
    %v7980 = vmax.f32 %v7978, %v7979
    %v7981 = vsel %vm3894, %v3034, -inf
    %v7982 = vsel %vm3894, %v3046, -inf
    %v7983 = vmax.f32 %v7981, %v7982
    %v7984 = vrot.slane %v7983, 4
    %v7985 = vmax.f32 %v7983, %v7984
    %v7986 = vrot.slane %v7985, 2
    %v7987 = vmax.f32 %v7985, %v7986
    %v7988 = vrot.slane %v7987, 1
    %v7989 = vmax.f32 %v7987, %v7988
    %v7990 = vsel %vm3894, %v3035, -inf
    %v7991 = vsel %vm3894, %v3047, -inf
    %v7992 = vmax.f32 %v7990, %v7991
    %v7993 = vrot.slane %v7992, 4
    %v7994 = vmax.f32 %v7992, %v7993
    %v7995 = vrot.slane %v7994, 2
    %v7996 = vmax.f32 %v7994, %v7995
    %v7997 = vrot.slane %v7996, 1
    %v7998 = vmax.f32 %v7996, %v7997
    %v7999 = vsel %vm3894, %v2072, -inf
    %v8000 = vsel %vm3894, %v2076, -inf
    %v8001 = vmax.f32 %v7999, %v8000
    %v8002 = vrot.slane %v8001, 4
    %v8003 = vmax.f32 %v8001, %v8002
    %v8004 = vrot.slane %v8003, 2
    %v8005 = vmax.f32 %v8003, %v8004
    %v8006 = vrot.slane %v8005, 1
    %v8007 = vmax.f32 %v8005, %v8006
    %v8008 = vsel %vm3894, %v3036, -inf
    %v8009 = vsel %vm3894, %v3048, -inf
    %v8010 = vmax.f32 %v8008, %v8009
    %v8011 = vrot.slane %v8010, 4
    %v8012 = vmax.f32 %v8010, %v8011
    %v8013 = vrot.slane %v8012, 2
    %v8014 = vmax.f32 %v8012, %v8013
    %v8015 = vrot.slane %v8014, 1
    %v8016 = vmax.f32 %v8014, %v8015
    %v8017 = vsel %vm3894, %v3037, -inf
    %v8018 = vsel %vm3894, %v3049, -inf
    %v8019 = vmax.f32 %v8017, %v8018
    %v8020 = vrot.slane %v8019, 4
    %v8021 = vmax.f32 %v8019, %v8020
    %v8022 = vrot.slane %v8021, 2
    %v8023 = vmax.f32 %v8021, %v8022
    %v8024 = vrot.slane %v8023, 1
    %v8025 = vmax.f32 %v8023, %v8024
    %v8026 = vsel %vm3894, %v3038, -inf
    %v8027 = vsel %vm3894, %v3050, -inf
    %v8028 = vmax.f32 %v8026, %v8027
    %v8029 = vrot.slane %v8028, 4
    %v8030 = vmax.f32 %v8028, %v8029
    %v8031 = vrot.slane %v8030, 2
    %v8032 = vmax.f32 %v8030, %v8031
    %v8033 = vrot.slane %v8032, 1
    %v8034 = vmax.f32 %v8032, %v8033
    %v8035 = vsel %vm3894, %v2073, -inf
    %v8036 = vsel %vm3894, %v2077, -inf
    %v8037 = vmax.f32 %v8035, %v8036
    %v8038 = vrot.slane %v8037, 4
    %v8039 = vmax.f32 %v8037, %v8038
    %v8040 = vrot.slane %v8039, 2
    %v8041 = vmax.f32 %v8039, %v8040
    %v8042 = vrot.slane %v8041, 1
    %v8043 = vmax.f32 %v8041, %v8042
    %v8044 = vsel %vm3894, %v3039, -inf
    %v8045 = vsel %vm3894, %v3051, -inf
    %v8046 = vmax.f32 %v8044, %v8045
    %v8047 = vrot.slane %v8046, 4
    %v8048 = vmax.f32 %v8046, %v8047
    %v8049 = vrot.slane %v8048, 2
    %v8050 = vmax.f32 %v8048, %v8049
    %v8051 = vrot.slane %v8050, 1
    %v8052 = vmax.f32 %v8050, %v8051
    %v8053 = vsel %vm3894, %v3040, -inf
    %v8054 = vsel %vm3894, %v3052, -inf
    %v8055 = vmax.f32 %v8053, %v8054
    %v8056 = vrot.slane %v8055, 4
    %v8057 = vmax.f32 %v8055, %v8056
    %v8058 = vrot.slane %v8057, 2
    %v8059 = vmax.f32 %v8057, %v8058
    %v8060 = vrot.slane %v8059, 1
    %v8061 = vmax.f32 %v8059, %v8060
    %v8062 = vsel %vm3894, %v3041, -inf
    %v8063 = vsel %vm3894, %v3053, -inf
    %v8064 = vmax.f32 %v8062, %v8063
    %v8065 = vrot.slane %v8064, 4
    %v8066 = vmax.f32 %v8064, %v8065
    %v8067 = vrot.slane %v8066, 2
    %v8068 = vmax.f32 %v8066, %v8067
    %v8069 = vrot.slane %v8068, 1
    %v8070 = vmax.f32 %v8068, %v8069
    %v8071 = vsel %vm3894, %v2078, -inf
    %v8072 = vsel %vm3894, %v2082, -inf
    %v8073 = vmax.f32 %v8071, %v8072
    %v8074 = vrot.slane %v8073, 4
    %v8075 = vmax.f32 %v8073, %v8074
    %v8076 = vrot.slane %v8075, 2
    %v8077 = vmax.f32 %v8075, %v8076
    %v8078 = vrot.slane %v8077, 1
    %v8079 = vmax.f32 %v8077, %v8078
    %v8080 = vsel %vm3894, %v3054, -inf
    %v8081 = vsel %vm3894, %v3066, -inf
    %v8082 = vmax.f32 %v8080, %v8081
    %v8083 = vrot.slane %v8082, 4
    %v8084 = vmax.f32 %v8082, %v8083
    %v8085 = vrot.slane %v8084, 2
    %v8086 = vmax.f32 %v8084, %v8085
    %v8087 = vrot.slane %v8086, 1
    %v8088 = vmax.f32 %v8086, %v8087
    %v8089 = vsel %vm3894, %v3055, -inf
    %v8090 = vsel %vm3894, %v3067, -inf
    %v8091 = vmax.f32 %v8089, %v8090
    %v8092 = vrot.slane %v8091, 4
    %v8093 = vmax.f32 %v8091, %v8092
    %v8094 = vrot.slane %v8093, 2
    %v8095 = vmax.f32 %v8093, %v8094
    %v8096 = vrot.slane %v8095, 1
    %v8097 = vmax.f32 %v8095, %v8096
    %v8098 = vsel %vm3894, %v3056, -inf
    %v8099 = vsel %vm3894, %v3068, -inf
    %v8100 = vmax.f32 %v8098, %v8099
    %v8101 = vrot.slane %v8100, 4
    %v8102 = vmax.f32 %v8100, %v8101
    %v8103 = vrot.slane %v8102, 2
    %v8104 = vmax.f32 %v8102, %v8103
    %v8105 = vrot.slane %v8104, 1
    %v8106 = vmax.f32 %v8104, %v8105
    %v8107 = vsel %vm3894, %v2079, -inf
    %v8108 = vsel %vm3894, %v2083, -inf
    %v8109 = vmax.f32 %v8107, %v8108
    %v8110 = vrot.slane %v8109, 4
    %v8111 = vmax.f32 %v8109, %v8110
    %v8112 = vrot.slane %v8111, 2
    %v8113 = vmax.f32 %v8111, %v8112
    %v8114 = vrot.slane %v8113, 1
    %v8115 = vmax.f32 %v8113, %v8114
    %v8116 = vsel %vm3894, %v3057, -inf
    %v8117 = vsel %vm3894, %v3069, -inf
    %v8118 = vmax.f32 %v8116, %v8117
    %v8119 = vrot.slane %v8118, 4
    %v8120 = vmax.f32 %v8118, %v8119
    %v8121 = vrot.slane %v8120, 2
    %v8122 = vmax.f32 %v8120, %v8121
    %v8123 = vrot.slane %v8122, 1
    %v8124 = vmax.f32 %v8122, %v8123
    %v8125 = vsel %vm3894, %v3058, -inf
    %v8126 = vsel %vm3894, %v3070, -inf
    %v8127 = vmax.f32 %v8125, %v8126
    %v8128 = vrot.slane %v8127, 4
    %v8129 = vmax.f32 %v8127, %v8128
    %v8130 = vrot.slane %v8129, 2
    %v8131 = vmax.f32 %v8129, %v8130
    %v8132 = vrot.slane %v8131, 1
    %v8133 = vmax.f32 %v8131, %v8132
    %v8134 = vsel %vm3894, %v3059, -inf
    %v8135 = vsel %vm3894, %v3071, -inf
    %v8136 = vmax.f32 %v8134, %v8135
    %v8137 = vrot.slane %v8136, 4
    %v8138 = vmax.f32 %v8136, %v8137
    %v8139 = vrot.slane %v8138, 2
    %v8140 = vmax.f32 %v8138, %v8139
    %v8141 = vrot.slane %v8140, 1
    %v8142 = vmax.f32 %v8140, %v8141
    %v8143 = vsel %vm3894, %v2080, -inf
    %v8144 = vsel %vm3894, %v2084, -inf
    %v8145 = vmax.f32 %v8143, %v8144
    %v8146 = vrot.slane %v8145, 4
    %v8147 = vmax.f32 %v8145, %v8146
    %v8148 = vrot.slane %v8147, 2
    %v8149 = vmax.f32 %v8147, %v8148
    %v8150 = vrot.slane %v8149, 1
    %v8151 = vmax.f32 %v8149, %v8150
    %v8152 = vsel %vm3894, %v3060, -inf
    %v8153 = vsel %vm3894, %v3072, -inf
    %v8154 = vmax.f32 %v8152, %v8153
    %v8155 = vrot.slane %v8154, 4
    %v8156 = vmax.f32 %v8154, %v8155
    %v8157 = vrot.slane %v8156, 2
    %v8158 = vmax.f32 %v8156, %v8157
    %v8159 = vrot.slane %v8158, 1
    %v8160 = vmax.f32 %v8158, %v8159
    %v8161 = vsel %vm3894, %v3061, -inf
    %v8162 = vsel %vm3894, %v3073, -inf
    %v8163 = vmax.f32 %v8161, %v8162
    %v8164 = vrot.slane %v8163, 4
    %v8165 = vmax.f32 %v8163, %v8164
    %v8166 = vrot.slane %v8165, 2
    %v8167 = vmax.f32 %v8165, %v8166
    %v8168 = vrot.slane %v8167, 1
    %v8169 = vmax.f32 %v8167, %v8168
    %v8170 = vsel %vm3894, %v3062, -inf
    %v8171 = vsel %vm3894, %v3074, -inf
    %v8172 = vmax.f32 %v8170, %v8171
    %v8173 = vrot.slane %v8172, 4
    %v8174 = vmax.f32 %v8172, %v8173
    %v8175 = vrot.slane %v8174, 2
    %v8176 = vmax.f32 %v8174, %v8175
    %v8177 = vrot.slane %v8176, 1
    %v8178 = vmax.f32 %v8176, %v8177
    %v8179 = vsel %vm3894, %v2081, -inf
    %v8180 = vsel %vm3894, %v2085, -inf
    %v8181 = vmax.f32 %v8179, %v8180
    %v8182 = vrot.slane %v8181, 4
    %v8183 = vmax.f32 %v8181, %v8182
    %v8184 = vrot.slane %v8183, 2
    %v8185 = vmax.f32 %v8183, %v8184
    %v8186 = vrot.slane %v8185, 1
    %v8187 = vmax.f32 %v8185, %v8186
    %v8188 = vsel %vm3894, %v3063, -inf
    %v8189 = vsel %vm3894, %v3075, -inf
    %v8190 = vmax.f32 %v8188, %v8189
    %v8191 = vrot.slane %v8190, 4
    %v8192 = vmax.f32 %v8190, %v8191
    %v8193 = vrot.slane %v8192, 2
    %v8194 = vmax.f32 %v8192, %v8193
    %v8195 = vrot.slane %v8194, 1
    %v8196 = vmax.f32 %v8194, %v8195
    %v8197 = vsel %vm3894, %v3064, -inf
    %v8198 = vsel %vm3894, %v3076, -inf
    %v8199 = vmax.f32 %v8197, %v8198
    %v8200 = vrot.slane %v8199, 4
    %v8201 = vmax.f32 %v8199, %v8200
    %v8202 = vrot.slane %v8201, 2
    %v8203 = vmax.f32 %v8201, %v8202
    %v8204 = vrot.slane %v8203, 1
    %v8205 = vmax.f32 %v8203, %v8204
    %v8206 = vsel %vm3894, %v3065, -inf
    %v8207 = vsel %vm3894, %v3077, -inf
    %v8208 = vmax.f32 %v8206, %v8207
    %v8209 = vrot.slane %v8208, 4
    %v8210 = vmax.f32 %v8208, %v8209
    %v8211 = vrot.slane %v8210, 2
    %v8212 = vmax.f32 %v8210, %v8211
    %v8213 = vrot.slane %v8212, 1
    %v8214 = vmax.f32 %v8212, %v8213
    %v8215 = vsel %vm3894, %v2086, -inf
    %v8216 = vsel %vm3894, %v2090, -inf
    %v8217 = vmax.f32 %v8215, %v8216
    %v8218 = vrot.slane %v8217, 4
    %v8219 = vmax.f32 %v8217, %v8218
    %v8220 = vrot.slane %v8219, 2
    %v8221 = vmax.f32 %v8219, %v8220
    %v8222 = vrot.slane %v8221, 1
    %v8223 = vmax.f32 %v8221, %v8222
    %v8224 = vsel %vm3894, %v3078, -inf
    %v8225 = vsel %vm3894, %v3090, -inf
    %v8226 = vmax.f32 %v8224, %v8225
    %v8227 = vrot.slane %v8226, 4
    %v8228 = vmax.f32 %v8226, %v8227
    %v8229 = vrot.slane %v8228, 2
    %v8230 = vmax.f32 %v8228, %v8229
    %v8231 = vrot.slane %v8230, 1
    %v8232 = vmax.f32 %v8230, %v8231
    %v8233 = vsel %vm3894, %v3079, -inf
    %v8234 = vsel %vm3894, %v3091, -inf
    %v8235 = vmax.f32 %v8233, %v8234
    %v8236 = vrot.slane %v8235, 4
    %v8237 = vmax.f32 %v8235, %v8236
    %v8238 = vrot.slane %v8237, 2
    %v8239 = vmax.f32 %v8237, %v8238
    %v8240 = vrot.slane %v8239, 1
    %v8241 = vmax.f32 %v8239, %v8240
    %v8242 = vsel %vm3894, %v3080, -inf
    %v8243 = vsel %vm3894, %v3092, -inf
    %v8244 = vmax.f32 %v8242, %v8243
    %v8245 = vrot.slane %v8244, 4
    %v8246 = vmax.f32 %v8244, %v8245
    %v8247 = vrot.slane %v8246, 2
    %v8248 = vmax.f32 %v8246, %v8247
    %v8249 = vrot.slane %v8248, 1
    %v8250 = vmax.f32 %v8248, %v8249
    %v8251 = vsel %vm3894, %v2087, -inf
    %v8252 = vsel %vm3894, %v2091, -inf
    %v8253 = vmax.f32 %v8251, %v8252
    %v8254 = vrot.slane %v8253, 4
    %v8255 = vmax.f32 %v8253, %v8254
    %v8256 = vrot.slane %v8255, 2
    %v8257 = vmax.f32 %v8255, %v8256
    %v8258 = vrot.slane %v8257, 1
    %v8259 = vmax.f32 %v8257, %v8258
    %v8260 = vsel %vm3894, %v3081, -inf
    %v8261 = vsel %vm3894, %v3093, -inf
    %v8262 = vmax.f32 %v8260, %v8261
    %v8263 = vrot.slane %v8262, 4
    %v8264 = vmax.f32 %v8262, %v8263
    %v8265 = vrot.slane %v8264, 2
    %v8266 = vmax.f32 %v8264, %v8265
    %v8267 = vrot.slane %v8266, 1
    %v8268 = vmax.f32 %v8266, %v8267
    %v8269 = vsel %vm3894, %v3082, -inf
    %v8270 = vsel %vm3894, %v3094, -inf
    %v8271 = vmax.f32 %v8269, %v8270
    %v8272 = vrot.slane %v8271, 4
    %v8273 = vmax.f32 %v8271, %v8272
    %v8274 = vrot.slane %v8273, 2
    %v8275 = vmax.f32 %v8273, %v8274
    %v8276 = vrot.slane %v8275, 1
    %v8277 = vmax.f32 %v8275, %v8276
    %v8278 = vsel %vm3894, %v3083, -inf
    %v8279 = vsel %vm3894, %v3095, -inf
    %v8280 = vmax.f32 %v8278, %v8279
    %v8281 = vrot.slane %v8280, 4
    %v8282 = vmax.f32 %v8280, %v8281
    %v8283 = vrot.slane %v8282, 2
    %v8284 = vmax.f32 %v8282, %v8283
    %v8285 = vrot.slane %v8284, 1
    %v8286 = vmax.f32 %v8284, %v8285
    %v8287 = vsel %vm3894, %v2088, -inf
    %v8288 = vsel %vm3894, %v2092, -inf
    %v8289 = vmax.f32 %v8287, %v8288
    %v8290 = vrot.slane %v8289, 4
    %v8291 = vmax.f32 %v8289, %v8290
    %v8292 = vrot.slane %v8291, 2
    %v8293 = vmax.f32 %v8291, %v8292
    %v8294 = vrot.slane %v8293, 1
    %v8295 = vmax.f32 %v8293, %v8294
    %v8296 = vsel %vm3894, %v3084, -inf
    %v8297 = vsel %vm3894, %v3096, -inf
    %v8298 = vmax.f32 %v8296, %v8297
    %v8299 = vrot.slane %v8298, 4
    %v8300 = vmax.f32 %v8298, %v8299
    %v8301 = vrot.slane %v8300, 2
    %v8302 = vmax.f32 %v8300, %v8301
    %v8303 = vrot.slane %v8302, 1
    %v8304 = vmax.f32 %v8302, %v8303
    %v8305 = vsel %vm3894, %v3085, -inf
    %v8306 = vsel %vm3894, %v3097, -inf
    %v8307 = vmax.f32 %v8305, %v8306
    %v8308 = vrot.slane %v8307, 4
    %v8309 = vmax.f32 %v8307, %v8308
    %v8310 = vrot.slane %v8309, 2
    %v8311 = vmax.f32 %v8309, %v8310
    %v8312 = vrot.slane %v8311, 1
    %v8313 = vmax.f32 %v8311, %v8312
    %v8314 = vsel %vm3894, %v3086, -inf
    %v8315 = vsel %vm3894, %v3098, -inf
    %v8316 = vmax.f32 %v8314, %v8315
    %v8317 = vrot.slane %v8316, 4
    %v8318 = vmax.f32 %v8316, %v8317
    %v8319 = vrot.slane %v8318, 2
    %v8320 = vmax.f32 %v8318, %v8319
    %v8321 = vrot.slane %v8320, 1
    %v8322 = vmax.f32 %v8320, %v8321
    %v8323 = vsel %vm3894, %v2089, -inf
    %v8324 = vsel %vm3894, %v2093, -inf
    %v8325 = vmax.f32 %v8323, %v8324
    %v8326 = vrot.slane %v8325, 4
    %v8327 = vmax.f32 %v8325, %v8326
    %v8328 = vrot.slane %v8327, 2
    %v8329 = vmax.f32 %v8327, %v8328
    %v8330 = vrot.slane %v8329, 1
    %v8331 = vmax.f32 %v8329, %v8330
    %v8332 = vsel %vm3894, %v3087, -inf
    %v8333 = vsel %vm3894, %v3099, -inf
    %v8334 = vmax.f32 %v8332, %v8333
    %v8335 = vrot.slane %v8334, 4
    %v8336 = vmax.f32 %v8334, %v8335
    %v8337 = vrot.slane %v8336, 2
    %v8338 = vmax.f32 %v8336, %v8337
    %v8339 = vrot.slane %v8338, 1
    %v8340 = vmax.f32 %v8338, %v8339
    %v8341 = vsel %vm3894, %v3088, -inf
    %v8342 = vsel %vm3894, %v3100, -inf
    %v8343 = vmax.f32 %v8341, %v8342
    %v8344 = vrot.slane %v8343, 4
    %v8345 = vmax.f32 %v8343, %v8344
    %v8346 = vrot.slane %v8345, 2
    %v8347 = vmax.f32 %v8345, %v8346
    %v8348 = vrot.slane %v8347, 1
    %v8349 = vmax.f32 %v8347, %v8348
    %v8350 = vsel %vm3894, %v3089, -inf
    %v8351 = vsel %vm3894, %v3101, -inf
    %v8352 = vmax.f32 %v8350, %v8351
    %v8353 = vrot.slane %v8352, 4
    %v8354 = vmax.f32 %v8352, %v8353
    %v8355 = vrot.slane %v8354, 2
    %v8356 = vmax.f32 %v8354, %v8355
    %v8357 = vrot.slane %v8356, 1
    %v8358 = vmax.f32 %v8356, %v8357
    %v8359 = vsel %vm3894, %v2094, -inf
    %v8360 = vsel %vm3894, %v2098, -inf
    %v8361 = vmax.f32 %v8359, %v8360
    %v8362 = vrot.slane %v8361, 4
    %v8363 = vmax.f32 %v8361, %v8362
    %v8364 = vrot.slane %v8363, 2
    %v8365 = vmax.f32 %v8363, %v8364
    %v8366 = vrot.slane %v8365, 1
    %v8367 = vmax.f32 %v8365, %v8366
    %v8368 = vsel %vm3894, %v3102, -inf
    %v8369 = vsel %vm3894, %v3114, -inf
    %v8370 = vmax.f32 %v8368, %v8369
    %v8371 = vrot.slane %v8370, 4
    %v8372 = vmax.f32 %v8370, %v8371
    %v8373 = vrot.slane %v8372, 2
    %v8374 = vmax.f32 %v8372, %v8373
    %v8375 = vrot.slane %v8374, 1
    %v8376 = vmax.f32 %v8374, %v8375
    %v8377 = vsel %vm3894, %v3103, -inf
    %v8378 = vsel %vm3894, %v3115, -inf
    %v8379 = vmax.f32 %v8377, %v8378
    %v8380 = vrot.slane %v8379, 4
    %v8381 = vmax.f32 %v8379, %v8380
    %v8382 = vrot.slane %v8381, 2
    %v8383 = vmax.f32 %v8381, %v8382
    %v8384 = vrot.slane %v8383, 1
    %v8385 = vmax.f32 %v8383, %v8384
    %v8386 = vsel %vm3894, %v3104, -inf
    %v8387 = vsel %vm3894, %v3116, -inf
    %v8388 = vmax.f32 %v8386, %v8387
    %v8389 = vrot.slane %v8388, 4
    %v8390 = vmax.f32 %v8388, %v8389
    %v8391 = vrot.slane %v8390, 2
    %v8392 = vmax.f32 %v8390, %v8391
    %v8393 = vrot.slane %v8392, 1
    %v8394 = vmax.f32 %v8392, %v8393
    %v8395 = vsel %vm3894, %v2095, -inf
    %v8396 = vsel %vm3894, %v2099, -inf
    %v8397 = vmax.f32 %v8395, %v8396
    %v8398 = vrot.slane %v8397, 4
    %v8399 = vmax.f32 %v8397, %v8398
    %v8400 = vrot.slane %v8399, 2
    %v8401 = vmax.f32 %v8399, %v8400
    %v8402 = vrot.slane %v8401, 1
    %v8403 = vmax.f32 %v8401, %v8402
    %v8404 = vsel %vm3894, %v3105, -inf
    %v8405 = vsel %vm3894, %v3117, -inf
    %v8406 = vmax.f32 %v8404, %v8405
    %v8407 = vrot.slane %v8406, 4
    %v8408 = vmax.f32 %v8406, %v8407
    %v8409 = vrot.slane %v8408, 2
    %v8410 = vmax.f32 %v8408, %v8409
    %v8411 = vrot.slane %v8410, 1
    %v8412 = vmax.f32 %v8410, %v8411
    %v8413 = vsel %vm3894, %v3106, -inf
    %v8414 = vsel %vm3894, %v3118, -inf
    %v8415 = vmax.f32 %v8413, %v8414
    %v8416 = vrot.slane %v8415, 4
    %v8417 = vmax.f32 %v8415, %v8416
    %v8418 = vrot.slane %v8417, 2
    %v8419 = vmax.f32 %v8417, %v8418
    %v8420 = vrot.slane %v8419, 1
    %v8421 = vmax.f32 %v8419, %v8420
    %v8422 = vsel %vm3894, %v3107, -inf
    %v8423 = vsel %vm3894, %v3119, -inf
    %v8424 = vmax.f32 %v8422, %v8423
    %v8425 = vrot.slane %v8424, 4
    %v8426 = vmax.f32 %v8424, %v8425
    %v8427 = vrot.slane %v8426, 2
    %v8428 = vmax.f32 %v8426, %v8427
    %v8429 = vrot.slane %v8428, 1
    %v8430 = vmax.f32 %v8428, %v8429
    %v8431 = vsel %vm3894, %v2096, -inf
    %v8432 = vsel %vm3894, %v2100, -inf
    %v8433 = vmax.f32 %v8431, %v8432
    %v8434 = vrot.slane %v8433, 4
    %v8435 = vmax.f32 %v8433, %v8434
    %v8436 = vrot.slane %v8435, 2
    %v8437 = vmax.f32 %v8435, %v8436
    %v8438 = vrot.slane %v8437, 1
    %v8439 = vmax.f32 %v8437, %v8438
    %v8440 = vsel %vm3894, %v3108, -inf
    %v8441 = vsel %vm3894, %v3120, -inf
    %v8442 = vmax.f32 %v8440, %v8441
    %v8443 = vrot.slane %v8442, 4
    %v8444 = vmax.f32 %v8442, %v8443
    %v8445 = vrot.slane %v8444, 2
    %v8446 = vmax.f32 %v8444, %v8445
    %v8447 = vrot.slane %v8446, 1
    %v8448 = vmax.f32 %v8446, %v8447
    %v8449 = vsel %vm3894, %v3109, -inf
    %v8450 = vsel %vm3894, %v3121, -inf
    %v8451 = vmax.f32 %v8449, %v8450
    %v8452 = vrot.slane %v8451, 4
    %v8453 = vmax.f32 %v8451, %v8452
    %v8454 = vrot.slane %v8453, 2
    %v8455 = vmax.f32 %v8453, %v8454
    %v8456 = vrot.slane %v8455, 1
    %v8457 = vmax.f32 %v8455, %v8456
    %v8458 = vsel %vm3894, %v3110, -inf
    %v8459 = vsel %vm3894, %v3122, -inf
    %v8460 = vmax.f32 %v8458, %v8459
    %v8461 = vrot.slane %v8460, 4
    %v8462 = vmax.f32 %v8460, %v8461
    %v8463 = vrot.slane %v8462, 2
    %v8464 = vmax.f32 %v8462, %v8463
    %v8465 = vrot.slane %v8464, 1
    %v8466 = vmax.f32 %v8464, %v8465
    %v8467 = vsel %vm3894, %v2097, -inf
    %v8468 = vsel %vm3894, %v2101, -inf
    %v8469 = vmax.f32 %v8467, %v8468
    %v8470 = vrot.slane %v8469, 4
    %v8471 = vmax.f32 %v8469, %v8470
    %v8472 = vrot.slane %v8471, 2
    %v8473 = vmax.f32 %v8471, %v8472
    %v8474 = vrot.slane %v8473, 1
    %v8475 = vmax.f32 %v8473, %v8474
    %v8476 = vsel %vm3894, %v3111, -inf
    %v8477 = vsel %vm3894, %v3123, -inf
    %v8478 = vmax.f32 %v8476, %v8477
    %v8479 = vrot.slane %v8478, 4
    %v8480 = vmax.f32 %v8478, %v8479
    %v8481 = vrot.slane %v8480, 2
    %v8482 = vmax.f32 %v8480, %v8481
    %v8483 = vrot.slane %v8482, 1
    %v8484 = vmax.f32 %v8482, %v8483
    %v8485 = vsel %vm3894, %v3112, -inf
    %v8486 = vsel %vm3894, %v3124, -inf
    %v8487 = vmax.f32 %v8485, %v8486
    %v8488 = vrot.slane %v8487, 4
    %v8489 = vmax.f32 %v8487, %v8488
    %v8490 = vrot.slane %v8489, 2
    %v8491 = vmax.f32 %v8489, %v8490
    %v8492 = vrot.slane %v8491, 1
    %v8493 = vmax.f32 %v8491, %v8492
    %v8494 = vsel %vm3894, %v3113, -inf
    %v8495 = vsel %vm3894, %v3125, -inf
    %v8496 = vmax.f32 %v8494, %v8495
    %v8497 = vrot.slane %v8496, 4
    %v8498 = vmax.f32 %v8496, %v8497
    %v8499 = vrot.slane %v8498, 2
    %v8500 = vmax.f32 %v8498, %v8499
    %v8501 = vrot.slane %v8500, 1
    %v8502 = vmax.f32 %v8500, %v8501
    %vm8895 = vcmask 1041409
    %v8896 = vsel %vm8895, %v3912, %v3903
    %vm8897 = vcmask 1042434
    %v8898 = vsel %vm8897, %v3921, %v8896
    %vm8899 = vcmask 1043459
    %v8900 = vsel %vm8899, %v3930, %v8898
    %vm8901 = vcmask 1044484
    %v8902 = vsel %vm8901, %v3939, %v8900
    %vm8903 = vcmask 1045509
    %v8904 = vsel %vm8903, %v3948, %v8902
    %vm8905 = vcmask 1046534
    %v8906 = vsel %vm8905, %v3957, %v8904
    %vm8907 = vcmask 1047559
    %v8908 = vsel %vm8907, %v3966, %v8906
    %v8909 = vsel %vm8895, %v3984, %v3975
    %v8910 = vsel %vm8897, %v3993, %v8909
    %v8911 = vsel %vm8899, %v4002, %v8910
    %v8912 = vsel %vm8901, %v4011, %v8911
    %v8913 = vsel %vm8903, %v4020, %v8912
    %v8914 = vsel %vm8895, %v4056, %v4047
    %v8915 = vsel %vm8897, %v4065, %v8914
    %v8916 = vsel %vm8899, %v4074, %v8915
    %v8917 = vsel %vm8901, %v4083, %v8916
    %v8918 = vsel %vm8903, %v4092, %v8917
    %v8919 = vsel %vm8905, %v4101, %v8918
    %v8920 = vsel %vm8907, %v4110, %v8919
    %v8921 = vsel %vm8895, %v4128, %v4119
    %v8922 = vsel %vm8897, %v4137, %v8921
    %v8923 = vsel %vm8899, %v4146, %v8922
    %v8924 = vsel %vm8901, %v4155, %v8923
    %v8925 = vsel %vm8903, %v4164, %v8924
    %v8926 = vsel %vm8895, %v4200, %v4191
    %v8927 = vsel %vm8897, %v4209, %v8926
    %v8928 = vsel %vm8899, %v4218, %v8927
    %v8929 = vsel %vm8901, %v4227, %v8928
    %v8930 = vsel %vm8903, %v4236, %v8929
    %v8931 = vsel %vm8905, %v4245, %v8930
    %v8932 = vsel %vm8907, %v4254, %v8931
    %v8933 = vsel %vm8895, %v4272, %v4263
    %v8934 = vsel %vm8897, %v4281, %v8933
    %v8935 = vsel %vm8899, %v4290, %v8934
    %v8936 = vsel %vm8901, %v4299, %v8935
    %v8937 = vsel %vm8903, %v4308, %v8936
    %v8938 = vsel %vm8895, %v4344, %v4335
    %v8939 = vsel %vm8897, %v4353, %v8938
    %v8940 = vsel %vm8899, %v4362, %v8939
    %v8941 = vsel %vm8901, %v4371, %v8940
    %v8942 = vsel %vm8903, %v4380, %v8941
    %v8943 = vsel %vm8905, %v4389, %v8942
    %v8944 = vsel %vm8907, %v4398, %v8943
    %v8945 = vsel %vm8895, %v4416, %v4407
    %v8946 = vsel %vm8897, %v4425, %v8945
    %v8947 = vsel %vm8899, %v4434, %v8946
    %v8948 = vsel %vm8901, %v4443, %v8947
    %v8949 = vsel %vm8903, %v4452, %v8948
    %v8950 = vsel %vm8895, %v4488, %v4479
    %v8951 = vsel %vm8897, %v4497, %v8950
    %v8952 = vsel %vm8899, %v4506, %v8951
    %v8953 = vsel %vm8901, %v4515, %v8952
    %v8954 = vsel %vm8903, %v4524, %v8953
    %v8955 = vsel %vm8905, %v4533, %v8954
    %v8956 = vsel %vm8907, %v4542, %v8955
    %v8957 = vsel %vm8895, %v4560, %v4551
    %v8958 = vsel %vm8897, %v4569, %v8957
    %v8959 = vsel %vm8899, %v4578, %v8958
    %v8960 = vsel %vm8901, %v4587, %v8959
    %v8961 = vsel %vm8903, %v4596, %v8960
    %v8962 = vsel %vm8895, %v4632, %v4623
    %v8963 = vsel %vm8897, %v4641, %v8962
    %v8964 = vsel %vm8899, %v4650, %v8963
    %v8965 = vsel %vm8901, %v4659, %v8964
    %v8966 = vsel %vm8903, %v4668, %v8965
    %v8967 = vsel %vm8905, %v4677, %v8966
    %v8968 = vsel %vm8907, %v4686, %v8967
    %v8969 = vsel %vm8895, %v4704, %v4695
    %v8970 = vsel %vm8897, %v4713, %v8969
    %v8971 = vsel %vm8899, %v4722, %v8970
    %v8972 = vsel %vm8901, %v4731, %v8971
    %v8973 = vsel %vm8903, %v4740, %v8972
    %v8974 = vsel %vm8895, %v4776, %v4767
    %v8975 = vsel %vm8897, %v4785, %v8974
    %v8976 = vsel %vm8899, %v4794, %v8975
    %v8977 = vsel %vm8901, %v4803, %v8976
    %v8978 = vsel %vm8903, %v4812, %v8977
    %v8979 = vsel %vm8905, %v4821, %v8978
    %v8980 = vsel %vm8907, %v4830, %v8979
    %v8981 = vsel %vm8895, %v4848, %v4839
    %v8982 = vsel %vm8897, %v4857, %v8981
    %v8983 = vsel %vm8899, %v4866, %v8982
    %v8984 = vsel %vm8901, %v4875, %v8983
    %v8985 = vsel %vm8903, %v4884, %v8984
    %v8986 = vsel %vm8895, %v4920, %v4911
    %v8987 = vsel %vm8897, %v4929, %v8986
    %v8988 = vsel %vm8899, %v4938, %v8987
    %v8989 = vsel %vm8901, %v4947, %v8988
    %v8990 = vsel %vm8903, %v4956, %v8989
    %v8991 = vsel %vm8905, %v4965, %v8990
    %v8992 = vsel %vm8907, %v4974, %v8991
    %v8993 = vsel %vm8895, %v4992, %v4983
    %v8994 = vsel %vm8897, %v5001, %v8993
    %v8995 = vsel %vm8899, %v5010, %v8994
    %v8996 = vsel %vm8901, %v5019, %v8995
    %v8997 = vsel %vm8903, %v5028, %v8996
    %v8998 = vsel %vm8895, %v5064, %v5055
    %v8999 = vsel %vm8897, %v5073, %v8998
    %v9000 = vsel %vm8899, %v5082, %v8999
    %v9001 = vsel %vm8901, %v5091, %v9000
    %v9002 = vsel %vm8903, %v5100, %v9001
    %v9003 = vsel %vm8905, %v5109, %v9002
    %v9004 = vsel %vm8907, %v5118, %v9003
    %v9005 = vsel %vm8895, %v5136, %v5127
    %v9006 = vsel %vm8897, %v5145, %v9005
    %v9007 = vsel %vm8899, %v5154, %v9006
    %v9008 = vsel %vm8901, %v5163, %v9007
    %v9009 = vsel %vm8903, %v5172, %v9008
    %v9010 = vsel %vm8895, %v5208, %v5199
    %v9011 = vsel %vm8897, %v5217, %v9010
    %v9012 = vsel %vm8899, %v5226, %v9011
    %v9013 = vsel %vm8901, %v5235, %v9012
    %v9014 = vsel %vm8903, %v5244, %v9013
    %v9015 = vsel %vm8905, %v5253, %v9014
    %v9016 = vsel %vm8907, %v5262, %v9015
    %v9017 = vsel %vm8895, %v5280, %v5271
    %v9018 = vsel %vm8897, %v5289, %v9017
    %v9019 = vsel %vm8899, %v5298, %v9018
    %v9020 = vsel %vm8901, %v5307, %v9019
    %v9021 = vsel %vm8903, %v5316, %v9020
    %v9022 = vsel %vm8895, %v5352, %v5343
    %v9023 = vsel %vm8897, %v5361, %v9022
    %v9024 = vsel %vm8899, %v5370, %v9023
    %v9025 = vsel %vm8901, %v5379, %v9024
    %v9026 = vsel %vm8903, %v5388, %v9025
    %v9027 = vsel %vm8905, %v5397, %v9026
    %v9028 = vsel %vm8907, %v5406, %v9027
    %v9029 = vsel %vm8895, %v5424, %v5415
    %v9030 = vsel %vm8897, %v5433, %v9029
    %v9031 = vsel %vm8899, %v5442, %v9030
    %v9032 = vsel %vm8901, %v5451, %v9031
    %v9033 = vsel %vm8903, %v5460, %v9032
    %v9034 = vsel %vm8895, %v5496, %v5487
    %v9035 = vsel %vm8897, %v5505, %v9034
    %v9036 = vsel %vm8899, %v5514, %v9035
    %v9037 = vsel %vm8901, %v5523, %v9036
    %v9038 = vsel %vm8903, %v5532, %v9037
    %v9039 = vsel %vm8905, %v5541, %v9038
    %v9040 = vsel %vm8907, %v5550, %v9039
    %v9041 = vsel %vm8895, %v5568, %v5559
    %v9042 = vsel %vm8897, %v5577, %v9041
    %v9043 = vsel %vm8899, %v5586, %v9042
    %v9044 = vsel %vm8901, %v5595, %v9043
    %v9045 = vsel %vm8903, %v5604, %v9044
    %v9046 = vsel %vm8895, %v5640, %v5631
    %v9047 = vsel %vm8897, %v5649, %v9046
    %v9048 = vsel %vm8899, %v5658, %v9047
    %v9049 = vsel %vm8901, %v5667, %v9048
    %v9050 = vsel %vm8903, %v5676, %v9049
    %v9051 = vsel %vm8905, %v5685, %v9050
    %v9052 = vsel %vm8907, %v5694, %v9051
    %v9053 = vsel %vm8895, %v5712, %v5703
    %v9054 = vsel %vm8897, %v5721, %v9053
    %v9055 = vsel %vm8899, %v5730, %v9054
    %v9056 = vsel %vm8901, %v5739, %v9055
    %v9057 = vsel %vm8903, %v5748, %v9056
    %v9058 = vsel %vm8895, %v5784, %v5775
    %v9059 = vsel %vm8897, %v5793, %v9058
    %v9060 = vsel %vm8899, %v5802, %v9059
    %v9061 = vsel %vm8901, %v5811, %v9060
    %v9062 = vsel %vm8903, %v5820, %v9061
    %v9063 = vsel %vm8905, %v5829, %v9062
    %v9064 = vsel %vm8907, %v5838, %v9063
    %v9065 = vsel %vm8895, %v5856, %v5847
    %v9066 = vsel %vm8897, %v5865, %v9065
    %v9067 = vsel %vm8899, %v5874, %v9066
    %v9068 = vsel %vm8901, %v5883, %v9067
    %v9069 = vsel %vm8903, %v5892, %v9068
    %v9070 = vsel %vm8895, %v6216, %v6207
    %v9071 = vsel %vm8897, %v6225, %v9070
    %v9072 = vsel %vm8899, %v6234, %v9071
    %v9073 = vsel %vm8901, %v6243, %v9072
    %v9074 = vsel %vm8903, %v6252, %v9073
    %v9075 = vsel %vm8905, %v6261, %v9074
    %v9076 = vsel %vm8907, %v6270, %v9075
    %v9077 = vsel %vm8895, %v6288, %v6279
    %v9078 = vsel %vm8897, %v6297, %v9077
    %v9079 = vsel %vm8899, %v6306, %v9078
    %v9080 = vsel %vm8901, %v6315, %v9079
    %v9081 = vsel %vm8903, %v6324, %v9080
    %v9082 = vsel %vm8895, %v6360, %v6351
    %v9083 = vsel %vm8897, %v6369, %v9082
    %v9084 = vsel %vm8899, %v6378, %v9083
    %v9085 = vsel %vm8901, %v6387, %v9084
    %v9086 = vsel %vm8903, %v6396, %v9085
    %v9087 = vsel %vm8905, %v6405, %v9086
    %v9088 = vsel %vm8907, %v6414, %v9087
    %v9089 = vsel %vm8895, %v6432, %v6423
    %v9090 = vsel %vm8897, %v6441, %v9089
    %v9091 = vsel %vm8899, %v6450, %v9090
    %v9092 = vsel %vm8901, %v6459, %v9091
    %v9093 = vsel %vm8903, %v6468, %v9092
    %v9094 = vsel %vm8895, %v6504, %v6495
    %v9095 = vsel %vm8897, %v6513, %v9094
    %v9096 = vsel %vm8899, %v6522, %v9095
    %v9097 = vsel %vm8901, %v6531, %v9096
    %v9098 = vsel %vm8903, %v6540, %v9097
    %v9099 = vsel %vm8905, %v6549, %v9098
    %v9100 = vsel %vm8907, %v6558, %v9099
    %v9101 = vsel %vm8895, %v6576, %v6567
    %v9102 = vsel %vm8897, %v6585, %v9101
    %v9103 = vsel %vm8899, %v6594, %v9102
    %v9104 = vsel %vm8901, %v6603, %v9103
    %v9105 = vsel %vm8903, %v6612, %v9104
    %v9106 = vsel %vm8895, %v6648, %v6639
    %v9107 = vsel %vm8897, %v6657, %v9106
    %v9108 = vsel %vm8899, %v6666, %v9107
    %v9109 = vsel %vm8901, %v6675, %v9108
    %v9110 = vsel %vm8903, %v6684, %v9109
    %v9111 = vsel %vm8905, %v6693, %v9110
    %v9112 = vsel %vm8907, %v6702, %v9111
    %v9113 = vsel %vm8895, %v6720, %v6711
    %v9114 = vsel %vm8897, %v6729, %v9113
    %v9115 = vsel %vm8899, %v6738, %v9114
    %v9116 = vsel %vm8901, %v6747, %v9115
    %v9117 = vsel %vm8903, %v6756, %v9116
    %v9118 = vsel %vm8895, %v6792, %v6783
    %v9119 = vsel %vm8897, %v6801, %v9118
    %v9120 = vsel %vm8899, %v6810, %v9119
    %v9121 = vsel %vm8901, %v6819, %v9120
    %v9122 = vsel %vm8903, %v6828, %v9121
    %v9123 = vsel %vm8905, %v6837, %v9122
    %v9124 = vsel %vm8907, %v6846, %v9123
    %v9125 = vsel %vm8895, %v6864, %v6855
    %v9126 = vsel %vm8897, %v6873, %v9125
    %v9127 = vsel %vm8899, %v6882, %v9126
    %v9128 = vsel %vm8901, %v6891, %v9127
    %v9129 = vsel %vm8903, %v6900, %v9128
    %v9130 = vsel %vm8895, %v6936, %v6927
    %v9131 = vsel %vm8897, %v6945, %v9130
    %v9132 = vsel %vm8899, %v6954, %v9131
    %v9133 = vsel %vm8901, %v6963, %v9132
    %v9134 = vsel %vm8903, %v6972, %v9133
    %v9135 = vsel %vm8905, %v6981, %v9134
    %v9136 = vsel %vm8907, %v6990, %v9135
    %v9137 = vsel %vm8895, %v7008, %v6999
    %v9138 = vsel %vm8897, %v7017, %v9137
    %v9139 = vsel %vm8899, %v7026, %v9138
    %v9140 = vsel %vm8901, %v7035, %v9139
    %v9141 = vsel %vm8903, %v7044, %v9140
    %v9142 = vsel %vm8895, %v7080, %v7071
    %v9143 = vsel %vm8897, %v7089, %v9142
    %v9144 = vsel %vm8899, %v7098, %v9143
    %v9145 = vsel %vm8901, %v7107, %v9144
    %v9146 = vsel %vm8903, %v7116, %v9145
    %v9147 = vsel %vm8905, %v7125, %v9146
    %v9148 = vsel %vm8907, %v7134, %v9147
    %v9149 = vsel %vm8895, %v7152, %v7143
    %v9150 = vsel %vm8897, %v7161, %v9149
    %v9151 = vsel %vm8899, %v7170, %v9150
    %v9152 = vsel %vm8901, %v7179, %v9151
    %v9153 = vsel %vm8903, %v7188, %v9152
    %v9154 = vsel %vm8895, %v7224, %v7215
    %v9155 = vsel %vm8897, %v7233, %v9154
    %v9156 = vsel %vm8899, %v7242, %v9155
    %v9157 = vsel %vm8901, %v7251, %v9156
    %v9158 = vsel %vm8903, %v7260, %v9157
    %v9159 = vsel %vm8905, %v7269, %v9158
    %v9160 = vsel %vm8907, %v7278, %v9159
    %v9161 = vsel %vm8895, %v7296, %v7287
    %v9162 = vsel %vm8897, %v7305, %v9161
    %v9163 = vsel %vm8899, %v7314, %v9162
    %v9164 = vsel %vm8901, %v7323, %v9163
    %v9165 = vsel %vm8903, %v7332, %v9164
    %v9166 = vsel %vm8895, %v7368, %v7359
    %v9167 = vsel %vm8897, %v7377, %v9166
    %v9168 = vsel %vm8899, %v7386, %v9167
    %v9169 = vsel %vm8901, %v7395, %v9168
    %v9170 = vsel %vm8903, %v7404, %v9169
    %v9171 = vsel %vm8905, %v7413, %v9170
    %v9172 = vsel %vm8907, %v7422, %v9171
    %v9173 = vsel %vm8895, %v7440, %v7431
    %v9174 = vsel %vm8897, %v7449, %v9173
    %v9175 = vsel %vm8899, %v7458, %v9174
    %v9176 = vsel %vm8901, %v7467, %v9175
    %v9177 = vsel %vm8903, %v7476, %v9176
    %v9178 = vsel %vm8895, %v7512, %v7503
    %v9179 = vsel %vm8897, %v7521, %v9178
    %v9180 = vsel %vm8899, %v7530, %v9179
    %v9181 = vsel %vm8901, %v7539, %v9180
    %v9182 = vsel %vm8903, %v7548, %v9181
    %v9183 = vsel %vm8905, %v7557, %v9182
    %v9184 = vsel %vm8907, %v7566, %v9183
    %v9185 = vsel %vm8895, %v7584, %v7575
    %v9186 = vsel %vm8897, %v7593, %v9185
    %v9187 = vsel %vm8899, %v7602, %v9186
    %v9188 = vsel %vm8901, %v7611, %v9187
    %v9189 = vsel %vm8903, %v7620, %v9188
    %v9190 = vsel %vm8895, %v7656, %v7647
    %v9191 = vsel %vm8897, %v7665, %v9190
    %v9192 = vsel %vm8899, %v7674, %v9191
    %v9193 = vsel %vm8901, %v7683, %v9192
    %v9194 = vsel %vm8903, %v7692, %v9193
    %v9195 = vsel %vm8905, %v7701, %v9194
    %v9196 = vsel %vm8907, %v7710, %v9195
    %v9197 = vsel %vm8895, %v7728, %v7719
    %v9198 = vsel %vm8897, %v7737, %v9197
    %v9199 = vsel %vm8899, %v7746, %v9198
    %v9200 = vsel %vm8901, %v7755, %v9199
    %v9201 = vsel %vm8903, %v7764, %v9200
    %v9202 = vsel %vm8895, %v7800, %v7791
    %v9203 = vsel %vm8897, %v7809, %v9202
    %v9204 = vsel %vm8899, %v7818, %v9203
    %v9205 = vsel %vm8901, %v7827, %v9204
    %v9206 = vsel %vm8903, %v7836, %v9205
    %v9207 = vsel %vm8905, %v7845, %v9206
    %v9208 = vsel %vm8907, %v7854, %v9207
    %v9209 = vsel %vm8895, %v7872, %v7863
    %v9210 = vsel %vm8897, %v7881, %v9209
    %v9211 = vsel %vm8899, %v7890, %v9210
    %v9212 = vsel %vm8901, %v7899, %v9211
    %v9213 = vsel %vm8903, %v7908, %v9212
    %v9214 = vsel %vm8895, %v7944, %v7935
    %v9215 = vsel %vm8897, %v7953, %v9214
    %v9216 = vsel %vm8899, %v7962, %v9215
    %v9217 = vsel %vm8901, %v7971, %v9216
    %v9218 = vsel %vm8903, %v7980, %v9217
    %v9219 = vsel %vm8905, %v7989, %v9218
    %v9220 = vsel %vm8907, %v7998, %v9219
    %v9221 = vsel %vm8895, %v8016, %v8007
    %v9222 = vsel %vm8897, %v8025, %v9221
    %v9223 = vsel %vm8899, %v8034, %v9222
    %v9224 = vsel %vm8901, %v8043, %v9223
    %v9225 = vsel %vm8903, %v8052, %v9224
    %v9226 = vsel %vm8895, %v8088, %v8079
    %v9227 = vsel %vm8897, %v8097, %v9226
    %v9228 = vsel %vm8899, %v8106, %v9227
    %v9229 = vsel %vm8901, %v8115, %v9228
    %v9230 = vsel %vm8903, %v8124, %v9229
    %v9231 = vsel %vm8905, %v8133, %v9230
    %v9232 = vsel %vm8907, %v8142, %v9231
    %v9233 = vsel %vm8895, %v8160, %v8151
    %v9234 = vsel %vm8897, %v8169, %v9233
    %v9235 = vsel %vm8899, %v8178, %v9234
    %v9236 = vsel %vm8901, %v8187, %v9235
    %v9237 = vsel %vm8903, %v8196, %v9236
    %v9322 = vsel %vm8895, %v3921, %v3912
    %v9323 = vsel %vm8897, %v3930, %v9322
    %v9324 = vsel %vm8899, %v3939, %v9323
    %v9325 = vsel %vm8901, %v3948, %v9324
    %v9326 = vsel %vm8903, %v3957, %v9325
    %v9327 = vsel %vm8905, %v3966, %v9326
    %v9328 = vsel %vm8907, %v3975, %v9327
    %v9329 = vsel %vm8895, %v3993, %v3984
    %v9330 = vsel %vm8897, %v4002, %v9329
    %v9331 = vsel %vm8899, %v4011, %v9330
    %v9332 = vsel %vm8901, %v4020, %v9331
    %v9333 = vsel %vm8903, %v4029, %v9332
    %v9334 = vsel %vm8895, %v4065, %v4056
    %v9335 = vsel %vm8897, %v4074, %v9334
    %v9336 = vsel %vm8899, %v4083, %v9335
    %v9337 = vsel %vm8901, %v4092, %v9336
    %v9338 = vsel %vm8903, %v4101, %v9337
    %v9339 = vsel %vm8905, %v4110, %v9338
    %v9340 = vsel %vm8907, %v4119, %v9339
    %v9341 = vsel %vm8895, %v4137, %v4128
    %v9342 = vsel %vm8897, %v4146, %v9341
    %v9343 = vsel %vm8899, %v4155, %v9342
    %v9344 = vsel %vm8901, %v4164, %v9343
    %v9345 = vsel %vm8903, %v4173, %v9344
    %v9346 = vsel %vm8895, %v4209, %v4200
    %v9347 = vsel %vm8897, %v4218, %v9346
    %v9348 = vsel %vm8899, %v4227, %v9347
    %v9349 = vsel %vm8901, %v4236, %v9348
    %v9350 = vsel %vm8903, %v4245, %v9349
    %v9351 = vsel %vm8905, %v4254, %v9350
    %v9352 = vsel %vm8907, %v4263, %v9351
    %v9353 = vsel %vm8895, %v4281, %v4272
    %v9354 = vsel %vm8897, %v4290, %v9353
    %v9355 = vsel %vm8899, %v4299, %v9354
    %v9356 = vsel %vm8901, %v4308, %v9355
    %v9357 = vsel %vm8903, %v4317, %v9356
    %v9358 = vsel %vm8895, %v4353, %v4344
    %v9359 = vsel %vm8897, %v4362, %v9358
    %v9360 = vsel %vm8899, %v4371, %v9359
    %v9361 = vsel %vm8901, %v4380, %v9360
    %v9362 = vsel %vm8903, %v4389, %v9361
    %v9363 = vsel %vm8905, %v4398, %v9362
    %v9364 = vsel %vm8907, %v4407, %v9363
    %v9365 = vsel %vm8895, %v4425, %v4416
    %v9366 = vsel %vm8897, %v4434, %v9365
    %v9367 = vsel %vm8899, %v4443, %v9366
    %v9368 = vsel %vm8901, %v4452, %v9367
    %v9369 = vsel %vm8903, %v4461, %v9368
    %v9370 = vsel %vm8895, %v4497, %v4488
    %v9371 = vsel %vm8897, %v4506, %v9370
    %v9372 = vsel %vm8899, %v4515, %v9371
    %v9373 = vsel %vm8901, %v4524, %v9372
    %v9374 = vsel %vm8903, %v4533, %v9373
    %v9375 = vsel %vm8905, %v4542, %v9374
    %v9376 = vsel %vm8907, %v4551, %v9375
    %v9377 = vsel %vm8895, %v4569, %v4560
    %v9378 = vsel %vm8897, %v4578, %v9377
    %v9379 = vsel %vm8899, %v4587, %v9378
    %v9380 = vsel %vm8901, %v4596, %v9379
    %v9381 = vsel %vm8903, %v4605, %v9380
    %v9382 = vsel %vm8895, %v4641, %v4632
    %v9383 = vsel %vm8897, %v4650, %v9382
    %v9384 = vsel %vm8899, %v4659, %v9383
    %v9385 = vsel %vm8901, %v4668, %v9384
    %v9386 = vsel %vm8903, %v4677, %v9385
    %v9387 = vsel %vm8905, %v4686, %v9386
    %v9388 = vsel %vm8907, %v4695, %v9387
    %v9389 = vsel %vm8895, %v4713, %v4704
    %v9390 = vsel %vm8897, %v4722, %v9389
    %v9391 = vsel %vm8899, %v4731, %v9390
    %v9392 = vsel %vm8901, %v4740, %v9391
    %v9393 = vsel %vm8903, %v4749, %v9392
    %v9394 = vsel %vm8895, %v4785, %v4776
    %v9395 = vsel %vm8897, %v4794, %v9394
    %v9396 = vsel %vm8899, %v4803, %v9395
    %v9397 = vsel %vm8901, %v4812, %v9396
    %v9398 = vsel %vm8903, %v4821, %v9397
    %v9399 = vsel %vm8905, %v4830, %v9398
    %v9400 = vsel %vm8907, %v4839, %v9399
    %v9401 = vsel %vm8895, %v4857, %v4848
    %v9402 = vsel %vm8897, %v4866, %v9401
    %v9403 = vsel %vm8899, %v4875, %v9402
    %v9404 = vsel %vm8901, %v4884, %v9403
    %v9405 = vsel %vm8903, %v4893, %v9404
    %v9406 = vsel %vm8895, %v4929, %v4920
    %v9407 = vsel %vm8897, %v4938, %v9406
    %v9408 = vsel %vm8899, %v4947, %v9407
    %v9409 = vsel %vm8901, %v4956, %v9408
    %v9410 = vsel %vm8903, %v4965, %v9409
    %v9411 = vsel %vm8905, %v4974, %v9410
    %v9412 = vsel %vm8907, %v4983, %v9411
    %v9413 = vsel %vm8895, %v5001, %v4992
    %v9414 = vsel %vm8897, %v5010, %v9413
    %v9415 = vsel %vm8899, %v5019, %v9414
    %v9416 = vsel %vm8901, %v5028, %v9415
    %v9417 = vsel %vm8903, %v5037, %v9416
    %v9418 = vsel %vm8895, %v5073, %v5064
    %v9419 = vsel %vm8897, %v5082, %v9418
    %v9420 = vsel %vm8899, %v5091, %v9419
    %v9421 = vsel %vm8901, %v5100, %v9420
    %v9422 = vsel %vm8903, %v5109, %v9421
    %v9423 = vsel %vm8905, %v5118, %v9422
    %v9424 = vsel %vm8907, %v5127, %v9423
    %v9425 = vsel %vm8895, %v5145, %v5136
    %v9426 = vsel %vm8897, %v5154, %v9425
    %v9427 = vsel %vm8899, %v5163, %v9426
    %v9428 = vsel %vm8901, %v5172, %v9427
    %v9429 = vsel %vm8903, %v5181, %v9428
    %v9430 = vsel %vm8895, %v5217, %v5208
    %v9431 = vsel %vm8897, %v5226, %v9430
    %v9432 = vsel %vm8899, %v5235, %v9431
    %v9433 = vsel %vm8901, %v5244, %v9432
    %v9434 = vsel %vm8903, %v5253, %v9433
    %v9435 = vsel %vm8905, %v5262, %v9434
    %v9436 = vsel %vm8907, %v5271, %v9435
    %v9437 = vsel %vm8895, %v5289, %v5280
    %v9438 = vsel %vm8897, %v5298, %v9437
    %v9439 = vsel %vm8899, %v5307, %v9438
    %v9440 = vsel %vm8901, %v5316, %v9439
    %v9441 = vsel %vm8903, %v5325, %v9440
    %v9442 = vsel %vm8895, %v5361, %v5352
    %v9443 = vsel %vm8897, %v5370, %v9442
    %v9444 = vsel %vm8899, %v5379, %v9443
    %v9445 = vsel %vm8901, %v5388, %v9444
    %v9446 = vsel %vm8903, %v5397, %v9445
    %v9447 = vsel %vm8905, %v5406, %v9446
    %v9448 = vsel %vm8907, %v5415, %v9447
    %v9449 = vsel %vm8895, %v5433, %v5424
    %v9450 = vsel %vm8897, %v5442, %v9449
    %v9451 = vsel %vm8899, %v5451, %v9450
    %v9452 = vsel %vm8901, %v5460, %v9451
    %v9453 = vsel %vm8903, %v5469, %v9452
    %v9454 = vsel %vm8895, %v5505, %v5496
    %v9455 = vsel %vm8897, %v5514, %v9454
    %v9456 = vsel %vm8899, %v5523, %v9455
    %v9457 = vsel %vm8901, %v5532, %v9456
    %v9458 = vsel %vm8903, %v5541, %v9457
    %v9459 = vsel %vm8905, %v5550, %v9458
    %v9460 = vsel %vm8907, %v5559, %v9459
    %v9461 = vsel %vm8895, %v5577, %v5568
    %v9462 = vsel %vm8897, %v5586, %v9461
    %v9463 = vsel %vm8899, %v5595, %v9462
    %v9464 = vsel %vm8901, %v5604, %v9463
    %v9465 = vsel %vm8903, %v5613, %v9464
    %v9466 = vsel %vm8895, %v5649, %v5640
    %v9467 = vsel %vm8897, %v5658, %v9466
    %v9468 = vsel %vm8899, %v5667, %v9467
    %v9469 = vsel %vm8901, %v5676, %v9468
    %v9470 = vsel %vm8903, %v5685, %v9469
    %v9471 = vsel %vm8905, %v5694, %v9470
    %v9472 = vsel %vm8907, %v5703, %v9471
    %v9473 = vsel %vm8895, %v5721, %v5712
    %v9474 = vsel %vm8897, %v5730, %v9473
    %v9475 = vsel %vm8899, %v5739, %v9474
    %v9476 = vsel %vm8901, %v5748, %v9475
    %v9477 = vsel %vm8903, %v5757, %v9476
    %v9478 = vsel %vm8895, %v5793, %v5784
    %v9479 = vsel %vm8897, %v5802, %v9478
    %v9480 = vsel %vm8899, %v5811, %v9479
    %v9481 = vsel %vm8901, %v5820, %v9480
    %v9482 = vsel %vm8903, %v5829, %v9481
    %v9483 = vsel %vm8905, %v5838, %v9482
    %v9484 = vsel %vm8907, %v5847, %v9483
    %v9485 = vsel %vm8895, %v5865, %v5856
    %v9486 = vsel %vm8897, %v5874, %v9485
    %v9487 = vsel %vm8899, %v5883, %v9486
    %v9488 = vsel %vm8901, %v5892, %v9487
    %v9489 = vsel %vm8903, %v5901, %v9488
    %v9490 = vsel %vm8895, %v6225, %v6216
    %v9491 = vsel %vm8897, %v6234, %v9490
    %v9492 = vsel %vm8899, %v6243, %v9491
    %v9493 = vsel %vm8901, %v6252, %v9492
    %v9494 = vsel %vm8903, %v6261, %v9493
    %v9495 = vsel %vm8905, %v6270, %v9494
    %v9496 = vsel %vm8907, %v6279, %v9495
    %v9497 = vsel %vm8895, %v6297, %v6288
    %v9498 = vsel %vm8897, %v6306, %v9497
    %v9499 = vsel %vm8899, %v6315, %v9498
    %v9500 = vsel %vm8901, %v6324, %v9499
    %v9501 = vsel %vm8903, %v6333, %v9500
    %v9502 = vsel %vm8895, %v6369, %v6360
    %v9503 = vsel %vm8897, %v6378, %v9502
    %v9504 = vsel %vm8899, %v6387, %v9503
    %v9505 = vsel %vm8901, %v6396, %v9504
    %v9506 = vsel %vm8903, %v6405, %v9505
    %v9507 = vsel %vm8905, %v6414, %v9506
    %v9508 = vsel %vm8907, %v6423, %v9507
    %v9509 = vsel %vm8895, %v6441, %v6432
    %v9510 = vsel %vm8897, %v6450, %v9509
    %v9511 = vsel %vm8899, %v6459, %v9510
    %v9512 = vsel %vm8901, %v6468, %v9511
    %v9513 = vsel %vm8903, %v6477, %v9512
    %v9514 = vsel %vm8895, %v6513, %v6504
    %v9515 = vsel %vm8897, %v6522, %v9514
    %v9516 = vsel %vm8899, %v6531, %v9515
    %v9517 = vsel %vm8901, %v6540, %v9516
    %v9518 = vsel %vm8903, %v6549, %v9517
    %v9519 = vsel %vm8905, %v6558, %v9518
    %v9520 = vsel %vm8907, %v6567, %v9519
    %v9521 = vsel %vm8895, %v6585, %v6576
    %v9522 = vsel %vm8897, %v6594, %v9521
    %v9523 = vsel %vm8899, %v6603, %v9522
    %v9524 = vsel %vm8901, %v6612, %v9523
    %v9525 = vsel %vm8903, %v6621, %v9524
    %v9526 = vsel %vm8895, %v6657, %v6648
    %v9527 = vsel %vm8897, %v6666, %v9526
    %v9528 = vsel %vm8899, %v6675, %v9527
    %v9529 = vsel %vm8901, %v6684, %v9528
    %v9530 = vsel %vm8903, %v6693, %v9529
    %v9531 = vsel %vm8905, %v6702, %v9530
    %v9532 = vsel %vm8907, %v6711, %v9531
    %v9533 = vsel %vm8895, %v6729, %v6720
    %v9534 = vsel %vm8897, %v6738, %v9533
    %v9535 = vsel %vm8899, %v6747, %v9534
    %v9536 = vsel %vm8901, %v6756, %v9535
    %v9537 = vsel %vm8903, %v6765, %v9536
    %v9538 = vsel %vm8895, %v6801, %v6792
    %v9539 = vsel %vm8897, %v6810, %v9538
    %v9540 = vsel %vm8899, %v6819, %v9539
    %v9541 = vsel %vm8901, %v6828, %v9540
    %v9542 = vsel %vm8903, %v6837, %v9541
    %v9543 = vsel %vm8905, %v6846, %v9542
    %v9544 = vsel %vm8907, %v6855, %v9543
    %v9545 = vsel %vm8895, %v6873, %v6864
    %v9546 = vsel %vm8897, %v6882, %v9545
    %v9547 = vsel %vm8899, %v6891, %v9546
    %v9548 = vsel %vm8901, %v6900, %v9547
    %v9549 = vsel %vm8903, %v6909, %v9548
    %v9550 = vsel %vm8895, %v6945, %v6936
    %v9551 = vsel %vm8897, %v6954, %v9550
    %v9552 = vsel %vm8899, %v6963, %v9551
    %v9553 = vsel %vm8901, %v6972, %v9552
    %v9554 = vsel %vm8903, %v6981, %v9553
    %v9555 = vsel %vm8905, %v6990, %v9554
    %v9556 = vsel %vm8907, %v6999, %v9555
    %v9557 = vsel %vm8895, %v7017, %v7008
    %v9558 = vsel %vm8897, %v7026, %v9557
    %v9559 = vsel %vm8899, %v7035, %v9558
    %v9560 = vsel %vm8901, %v7044, %v9559
    %v9561 = vsel %vm8903, %v7053, %v9560
    %v9562 = vsel %vm8895, %v7089, %v7080
    %v9563 = vsel %vm8897, %v7098, %v9562
    %v9564 = vsel %vm8899, %v7107, %v9563
    %v9565 = vsel %vm8901, %v7116, %v9564
    %v9566 = vsel %vm8903, %v7125, %v9565
    %v9567 = vsel %vm8905, %v7134, %v9566
    %v9568 = vsel %vm8907, %v7143, %v9567
    %v9569 = vsel %vm8895, %v7161, %v7152
    %v9570 = vsel %vm8897, %v7170, %v9569
    %v9571 = vsel %vm8899, %v7179, %v9570
    %v9572 = vsel %vm8901, %v7188, %v9571
    %v9573 = vsel %vm8903, %v7197, %v9572
    %v9574 = vsel %vm8895, %v7233, %v7224
    %v9575 = vsel %vm8897, %v7242, %v9574
    %v9576 = vsel %vm8899, %v7251, %v9575
    %v9577 = vsel %vm8901, %v7260, %v9576
    %v9578 = vsel %vm8903, %v7269, %v9577
    %v9579 = vsel %vm8905, %v7278, %v9578
    %v9580 = vsel %vm8907, %v7287, %v9579
    %v9581 = vsel %vm8895, %v7305, %v7296
    %v9582 = vsel %vm8897, %v7314, %v9581
    %v9583 = vsel %vm8899, %v7323, %v9582
    %v9584 = vsel %vm8901, %v7332, %v9583
    %v9585 = vsel %vm8903, %v7341, %v9584
    %v9586 = vsel %vm8895, %v7377, %v7368
    %v9587 = vsel %vm8897, %v7386, %v9586
    %v9588 = vsel %vm8899, %v7395, %v9587
    %v9589 = vsel %vm8901, %v7404, %v9588
    %v9590 = vsel %vm8903, %v7413, %v9589
    %v9591 = vsel %vm8905, %v7422, %v9590
    %v9592 = vsel %vm8907, %v7431, %v9591
    %v9593 = vsel %vm8895, %v7449, %v7440
    %v9594 = vsel %vm8897, %v7458, %v9593
    %v9595 = vsel %vm8899, %v7467, %v9594
    %v9596 = vsel %vm8901, %v7476, %v9595
    %v9597 = vsel %vm8903, %v7485, %v9596
    %v9598 = vsel %vm8895, %v7521, %v7512
    %v9599 = vsel %vm8897, %v7530, %v9598
    %v9600 = vsel %vm8899, %v7539, %v9599
    %v9601 = vsel %vm8901, %v7548, %v9600
    %v9602 = vsel %vm8903, %v7557, %v9601
    %v9603 = vsel %vm8905, %v7566, %v9602
    %v9604 = vsel %vm8907, %v7575, %v9603
    %v9605 = vsel %vm8895, %v7593, %v7584
    %v9606 = vsel %vm8897, %v7602, %v9605
    %v9607 = vsel %vm8899, %v7611, %v9606
    %v9608 = vsel %vm8901, %v7620, %v9607
    %v9609 = vsel %vm8903, %v7629, %v9608
    %v9610 = vsel %vm8895, %v7665, %v7656
    %v9611 = vsel %vm8897, %v7674, %v9610
    %v9612 = vsel %vm8899, %v7683, %v9611
    %v9613 = vsel %vm8901, %v7692, %v9612
    %v9614 = vsel %vm8903, %v7701, %v9613
    %v9615 = vsel %vm8905, %v7710, %v9614
    %v9616 = vsel %vm8907, %v7719, %v9615
    %v9617 = vsel %vm8895, %v7737, %v7728
    %v9618 = vsel %vm8897, %v7746, %v9617
    %v9619 = vsel %vm8899, %v7755, %v9618
    %v9620 = vsel %vm8901, %v7764, %v9619
    %v9621 = vsel %vm8903, %v7773, %v9620
    %v9622 = vsel %vm8895, %v7809, %v7800
    %v9623 = vsel %vm8897, %v7818, %v9622
    %v9624 = vsel %vm8899, %v7827, %v9623
    %v9625 = vsel %vm8901, %v7836, %v9624
    %v9626 = vsel %vm8903, %v7845, %v9625
    %v9627 = vsel %vm8905, %v7854, %v9626
    %v9628 = vsel %vm8907, %v7863, %v9627
    %v9629 = vsel %vm8895, %v7881, %v7872
    %v9630 = vsel %vm8897, %v7890, %v9629
    %v9631 = vsel %vm8899, %v7899, %v9630
    %v9632 = vsel %vm8901, %v7908, %v9631
    %v9633 = vsel %vm8903, %v7917, %v9632
    %v9634 = vsel %vm8895, %v7953, %v7944
    %v9635 = vsel %vm8897, %v7962, %v9634
    %v9636 = vsel %vm8899, %v7971, %v9635
    %v9637 = vsel %vm8901, %v7980, %v9636
    %v9638 = vsel %vm8903, %v7989, %v9637
    %v9639 = vsel %vm8905, %v7998, %v9638
    %v9640 = vsel %vm8907, %v8007, %v9639
    %v9641 = vsel %vm8895, %v8025, %v8016
    %v9642 = vsel %vm8897, %v8034, %v9641
    %v9643 = vsel %vm8899, %v8043, %v9642
    %v9644 = vsel %vm8901, %v8052, %v9643
    %v9645 = vsel %vm8903, %v8061, %v9644
    %v9646 = vsel %vm8895, %v8097, %v8088
    %v9647 = vsel %vm8897, %v8106, %v9646
    %v9648 = vsel %vm8899, %v8115, %v9647
    %v9649 = vsel %vm8901, %v8124, %v9648
    %v9650 = vsel %vm8903, %v8133, %v9649
    %v9651 = vsel %vm8905, %v8142, %v9650
    %v9652 = vsel %vm8907, %v8151, %v9651
    %v9653 = vsel %vm8895, %v8169, %v8160
    %v9654 = vsel %vm8897, %v8178, %v9653
    %v9655 = vsel %vm8899, %v8187, %v9654
    %v9656 = vsel %vm8901, %v8196, %v9655
    %v9657 = vsel %vm8903, %v8205, %v9656
    %9658 = vrot.lane.b32.xlu0 %v9328, 8
    %v9659 = vpop.permute.xlu0 %9658
    %9660 = vrot.lane.b32.xlu0 %v9333, 8
    %v9661 = vpop.permute.xlu0 %9660
    %9662 = vrot.lane.b32.xlu0 %v9340, 8
    %v9663 = vpop.permute.xlu0 %9662
    %9664 = vrot.lane.b32.xlu0 %v9345, 8
    %v9665 = vpop.permute.xlu0 %9664
    %9666 = vrot.lane.b32.xlu0 %v9352, 8
    %v9667 = vpop.permute.xlu0 %9666
    %9668 = vrot.lane.b32.xlu0 %v9357, 8
    %v9669 = vpop.permute.xlu0 %9668
    %9670 = vrot.lane.b32.xlu0 %v9364, 8
    %v9671 = vpop.permute.xlu0 %9670
    %9672 = vrot.lane.b32.xlu0 %v9369, 8
    %v9673 = vpop.permute.xlu0 %9672
    %9674 = vrot.lane.b32.xlu0 %v9376, 8
    %v9675 = vpop.permute.xlu0 %9674
    %9676 = vrot.lane.b32.xlu0 %v9381, 8
    %v9677 = vpop.permute.xlu0 %9676
    %9678 = vrot.lane.b32.xlu0 %v9388, 8
    %v9679 = vpop.permute.xlu0 %9678
    %9680 = vrot.lane.b32.xlu0 %v9393, 8
    %v9681 = vpop.permute.xlu0 %9680
    %9682 = vrot.lane.b32.xlu0 %v9400, 8
    %v9683 = vpop.permute.xlu0 %9682
    %9684 = vrot.lane.b32.xlu0 %v9405, 8
    %v9685 = vpop.permute.xlu0 %9684
    %9686 = vrot.lane.b32.xlu0 %v9412, 8
    %v9687 = vpop.permute.xlu0 %9686
    %9688 = vrot.lane.b32.xlu0 %v9417, 8
    %v9689 = vpop.permute.xlu0 %9688
    %9690 = vrot.lane.b32.xlu0 %v9424, 8
    %v9691 = vpop.permute.xlu0 %9690
    %9692 = vrot.lane.b32.xlu0 %v9429, 8
    %v9693 = vpop.permute.xlu0 %9692
    %9694 = vrot.lane.b32.xlu0 %v9436, 8
    %v9695 = vpop.permute.xlu0 %9694
    %9696 = vrot.lane.b32.xlu0 %v9441, 8
    %v9697 = vpop.permute.xlu0 %9696
    %9698 = vrot.lane.b32.xlu0 %v9448, 8
    %v9699 = vpop.permute.xlu0 %9698
    %9700 = vrot.lane.b32.xlu0 %v9453, 8
    %v9701 = vpop.permute.xlu0 %9700
    %9702 = vrot.lane.b32.xlu0 %v9460, 8
    %v9703 = vpop.permute.xlu0 %9702
    %9704 = vrot.lane.b32.xlu0 %v9465, 8
    %v9705 = vpop.permute.xlu0 %9704
    %9706 = vrot.lane.b32.xlu0 %v9472, 8
    %v9707 = vpop.permute.xlu0 %9706
    %9708 = vrot.lane.b32.xlu0 %v9477, 8
    %v9709 = vpop.permute.xlu0 %9708
    %9710 = vrot.lane.b32.xlu0 %v9484, 8
    %v9711 = vpop.permute.xlu0 %9710
    %9712 = vrot.lane.b32.xlu0 %v9489, 8
    %v9713 = vpop.permute.xlu0 %9712
    %9714 = vrot.lane.b32.xlu0 %v9496, 8
    %v9715 = vpop.permute.xlu0 %9714
    %9716 = vrot.lane.b32.xlu0 %v9501, 8
    %v9717 = vpop.permute.xlu0 %9716
    %9718 = vrot.lane.b32.xlu0 %v9508, 8
    %v9719 = vpop.permute.xlu0 %9718
    %9720 = vrot.lane.b32.xlu0 %v9513, 8
    %v9721 = vpop.permute.xlu0 %9720
    %9722 = vrot.lane.b32.xlu0 %v9520, 8
    %v9723 = vpop.permute.xlu0 %9722
    %9724 = vrot.lane.b32.xlu0 %v9525, 8
    %v9725 = vpop.permute.xlu0 %9724
    %9726 = vrot.lane.b32.xlu0 %v9532, 8
    %v9727 = vpop.permute.xlu0 %9726
    %9728 = vrot.lane.b32.xlu0 %v9537, 8
    %v9729 = vpop.permute.xlu0 %9728
    %9730 = vrot.lane.b32.xlu0 %v9544, 8
    %v9731 = vpop.permute.xlu0 %9730
    %9732 = vrot.lane.b32.xlu0 %v9549, 8
    %v9733 = vpop.permute.xlu0 %9732
    %9734 = vrot.lane.b32.xlu0 %v9556, 8
    %v9735 = vpop.permute.xlu0 %9734
    %9736 = vrot.lane.b32.xlu0 %v9561, 8
    %v9737 = vpop.permute.xlu0 %9736
    %9738 = vrot.lane.b32.xlu0 %v9568, 8
    %v9739 = vpop.permute.xlu0 %9738
    %9740 = vrot.lane.b32.xlu0 %v9573, 8
    %v9741 = vpop.permute.xlu0 %9740
    %9742 = vrot.lane.b32.xlu0 %v9580, 8
    %v9743 = vpop.permute.xlu0 %9742
    %9744 = vrot.lane.b32.xlu0 %v9585, 8
    %v9745 = vpop.permute.xlu0 %9744
    %9746 = vrot.lane.b32.xlu0 %v9592, 8
    %v9747 = vpop.permute.xlu0 %9746
    %9748 = vrot.lane.b32.xlu0 %v9597, 8
    %v9749 = vpop.permute.xlu0 %9748
    %9750 = vrot.lane.b32.xlu0 %v9604, 8
    %v9751 = vpop.permute.xlu0 %9750
    %9752 = vrot.lane.b32.xlu0 %v9609, 8
    %v9753 = vpop.permute.xlu0 %9752
    %9754 = vrot.lane.b32.xlu0 %v9616, 8
    %v9755 = vpop.permute.xlu0 %9754
    %9756 = vrot.lane.b32.xlu0 %v9621, 8
    %v9757 = vpop.permute.xlu0 %9756
    %9758 = vrot.lane.b32.xlu0 %v9628, 8
    %v9759 = vpop.permute.xlu0 %9758
    %9760 = vrot.lane.b32.xlu0 %v9633, 8
    %v9761 = vpop.permute.xlu0 %9760
    %9762 = vrot.lane.b32.xlu0 %v9640, 8
    %v9763 = vpop.permute.xlu0 %9762
    %9764 = vrot.lane.b32.xlu0 %v9645, 8
    %v9765 = vpop.permute.xlu0 %9764
    %9766 = vrot.lane.b32.xlu0 %v9652, 8
    %v9767 = vpop.permute.xlu0 %9766
    %9768 = vrot.lane.b32.xlu0 %v9657, 8
    %v9769 = vpop.permute.xlu0 %9768
    %v9854 = vsel %vm8895, %v3930, %v3921
    %v9855 = vsel %vm8897, %v3939, %v9854
    %v9856 = vsel %vm8899, %v3948, %v9855
    %v9857 = vsel %vm8901, %v3957, %v9856
    %v9858 = vsel %vm8903, %v3966, %v9857
    %v9859 = vsel %vm8905, %v3975, %v9858
    %v9860 = vsel %vm8907, %v3984, %v9859
    %v9861 = vsel %vm8895, %v4002, %v3993
    %v9862 = vsel %vm8897, %v4011, %v9861
    %v9863 = vsel %vm8899, %v4020, %v9862
    %v9864 = vsel %vm8901, %v4029, %v9863
    %v9865 = vsel %vm8903, %v4038, %v9864
    %v9866 = vsel %vm8895, %v4074, %v4065
    %v9867 = vsel %vm8897, %v4083, %v9866
    %v9868 = vsel %vm8899, %v4092, %v9867
    %v9869 = vsel %vm8901, %v4101, %v9868
    %v9870 = vsel %vm8903, %v4110, %v9869
    %v9871 = vsel %vm8905, %v4119, %v9870
    %v9872 = vsel %vm8907, %v4128, %v9871
    %v9873 = vsel %vm8895, %v4146, %v4137
    %v9874 = vsel %vm8897, %v4155, %v9873
    %v9875 = vsel %vm8899, %v4164, %v9874
    %v9876 = vsel %vm8901, %v4173, %v9875
    %v9877 = vsel %vm8903, %v4182, %v9876
    %v9878 = vsel %vm8895, %v4218, %v4209
    %v9879 = vsel %vm8897, %v4227, %v9878
    %v9880 = vsel %vm8899, %v4236, %v9879
    %v9881 = vsel %vm8901, %v4245, %v9880
    %v9882 = vsel %vm8903, %v4254, %v9881
    %v9883 = vsel %vm8905, %v4263, %v9882
    %v9884 = vsel %vm8907, %v4272, %v9883
    %v9885 = vsel %vm8895, %v4290, %v4281
    %v9886 = vsel %vm8897, %v4299, %v9885
    %v9887 = vsel %vm8899, %v4308, %v9886
    %v9888 = vsel %vm8901, %v4317, %v9887
    %v9889 = vsel %vm8903, %v4326, %v9888
    %v9890 = vsel %vm8895, %v4362, %v4353
    %v9891 = vsel %vm8897, %v4371, %v9890
    %v9892 = vsel %vm8899, %v4380, %v9891
    %v9893 = vsel %vm8901, %v4389, %v9892
    %v9894 = vsel %vm8903, %v4398, %v9893
    %v9895 = vsel %vm8905, %v4407, %v9894
    %v9896 = vsel %vm8907, %v4416, %v9895
    %v9897 = vsel %vm8895, %v4434, %v4425
    %v9898 = vsel %vm8897, %v4443, %v9897
    %v9899 = vsel %vm8899, %v4452, %v9898
    %v9900 = vsel %vm8901, %v4461, %v9899
    %v9901 = vsel %vm8903, %v4470, %v9900
    %v9902 = vsel %vm8895, %v4506, %v4497
    %v9903 = vsel %vm8897, %v4515, %v9902
    %v9904 = vsel %vm8899, %v4524, %v9903
    %v9905 = vsel %vm8901, %v4533, %v9904
    %v9906 = vsel %vm8903, %v4542, %v9905
    %v9907 = vsel %vm8905, %v4551, %v9906
    %v9908 = vsel %vm8907, %v4560, %v9907
    %v9909 = vsel %vm8895, %v4578, %v4569
    %v9910 = vsel %vm8897, %v4587, %v9909
    %v9911 = vsel %vm8899, %v4596, %v9910
    %v9912 = vsel %vm8901, %v4605, %v9911
    %v9913 = vsel %vm8903, %v4614, %v9912
    %v9914 = vsel %vm8895, %v4650, %v4641
    %v9915 = vsel %vm8897, %v4659, %v9914
    %v9916 = vsel %vm8899, %v4668, %v9915
    %v9917 = vsel %vm8901, %v4677, %v9916
    %v9918 = vsel %vm8903, %v4686, %v9917
    %v9919 = vsel %vm8905, %v4695, %v9918
    %v9920 = vsel %vm8907, %v4704, %v9919
    %v9921 = vsel %vm8895, %v4722, %v4713
    %v9922 = vsel %vm8897, %v4731, %v9921
    %v9923 = vsel %vm8899, %v4740, %v9922
    %v9924 = vsel %vm8901, %v4749, %v9923
    %v9925 = vsel %vm8903, %v4758, %v9924
    %v9926 = vsel %vm8895, %v4794, %v4785
    %v9927 = vsel %vm8897, %v4803, %v9926
    %v9928 = vsel %vm8899, %v4812, %v9927
    %v9929 = vsel %vm8901, %v4821, %v9928
    %v9930 = vsel %vm8903, %v4830, %v9929
    %v9931 = vsel %vm8905, %v4839, %v9930
    %v9932 = vsel %vm8907, %v4848, %v9931
    %v9933 = vsel %vm8895, %v4866, %v4857
    %v9934 = vsel %vm8897, %v4875, %v9933
    %v9935 = vsel %vm8899, %v4884, %v9934
    %v9936 = vsel %vm8901, %v4893, %v9935
    %v9937 = vsel %vm8903, %v4902, %v9936
    %v9938 = vsel %vm8895, %v4938, %v4929
    %v9939 = vsel %vm8897, %v4947, %v9938
    %v9940 = vsel %vm8899, %v4956, %v9939
    %v9941 = vsel %vm8901, %v4965, %v9940
    %v9942 = vsel %vm8903, %v4974, %v9941
    %v9943 = vsel %vm8905, %v4983, %v9942
    %v9944 = vsel %vm8907, %v4992, %v9943
    %v9945 = vsel %vm8895, %v5010, %v5001
    %v9946 = vsel %vm8897, %v5019, %v9945
    %v9947 = vsel %vm8899, %v5028, %v9946
    %v9948 = vsel %vm8901, %v5037, %v9947
    %v9949 = vsel %vm8903, %v5046, %v9948
    %v9950 = vsel %vm8895, %v5082, %v5073
    %v9951 = vsel %vm8897, %v5091, %v9950
    %v9952 = vsel %vm8899, %v5100, %v9951
    %v9953 = vsel %vm8901, %v5109, %v9952
    %v9954 = vsel %vm8903, %v5118, %v9953
    %v9955 = vsel %vm8905, %v5127, %v9954
    %v9956 = vsel %vm8907, %v5136, %v9955
    %v9957 = vsel %vm8895, %v5154, %v5145
    %v9958 = vsel %vm8897, %v5163, %v9957
    %v9959 = vsel %vm8899, %v5172, %v9958
    %v9960 = vsel %vm8901, %v5181, %v9959
    %v9961 = vsel %vm8903, %v5190, %v9960
    %v9962 = vsel %vm8895, %v5226, %v5217
    %v9963 = vsel %vm8897, %v5235, %v9962
    %v9964 = vsel %vm8899, %v5244, %v9963
    %v9965 = vsel %vm8901, %v5253, %v9964
    %v9966 = vsel %vm8903, %v5262, %v9965
    %v9967 = vsel %vm8905, %v5271, %v9966
    %v9968 = vsel %vm8907, %v5280, %v9967
    %v9969 = vsel %vm8895, %v5298, %v5289
    %v9970 = vsel %vm8897, %v5307, %v9969
    %v9971 = vsel %vm8899, %v5316, %v9970
    %v9972 = vsel %vm8901, %v5325, %v9971
    %v9973 = vsel %vm8903, %v5334, %v9972
    %v9974 = vsel %vm8895, %v5370, %v5361
    %v9975 = vsel %vm8897, %v5379, %v9974
    %v9976 = vsel %vm8899, %v5388, %v9975
    %v9977 = vsel %vm8901, %v5397, %v9976
    %v9978 = vsel %vm8903, %v5406, %v9977
    %v9979 = vsel %vm8905, %v5415, %v9978
    %v9980 = vsel %vm8907, %v5424, %v9979
    %v9981 = vsel %vm8895, %v5442, %v5433
    %v9982 = vsel %vm8897, %v5451, %v9981
    %v9983 = vsel %vm8899, %v5460, %v9982
    %v9984 = vsel %vm8901, %v5469, %v9983
    %v9985 = vsel %vm8903, %v5478, %v9984
    %v9986 = vsel %vm8895, %v5514, %v5505
    %v9987 = vsel %vm8897, %v5523, %v9986
    %v9988 = vsel %vm8899, %v5532, %v9987
    %v9989 = vsel %vm8901, %v5541, %v9988
    %v9990 = vsel %vm8903, %v5550, %v9989
    %v9991 = vsel %vm8905, %v5559, %v9990
    %v9992 = vsel %vm8907, %v5568, %v9991
    %v9993 = vsel %vm8895, %v5586, %v5577
    %v9994 = vsel %vm8897, %v5595, %v9993
    %v9995 = vsel %vm8899, %v5604, %v9994
    %v9996 = vsel %vm8901, %v5613, %v9995
    %v9997 = vsel %vm8903, %v5622, %v9996
    %v9998 = vsel %vm8895, %v5658, %v5649
    %v9999 = vsel %vm8897, %v5667, %v9998
    %v10000 = vsel %vm8899, %v5676, %v9999
    %v10001 = vsel %vm8901, %v5685, %v10000
    %v10002 = vsel %vm8903, %v5694, %v10001
    %v10003 = vsel %vm8905, %v5703, %v10002
    %v10004 = vsel %vm8907, %v5712, %v10003
    %v10005 = vsel %vm8895, %v5730, %v5721
    %v10006 = vsel %vm8897, %v5739, %v10005
    %v10007 = vsel %vm8899, %v5748, %v10006
    %v10008 = vsel %vm8901, %v5757, %v10007
    %v10009 = vsel %vm8903, %v5766, %v10008
    %v10010 = vsel %vm8895, %v5802, %v5793
    %v10011 = vsel %vm8897, %v5811, %v10010
    %v10012 = vsel %vm8899, %v5820, %v10011
    %v10013 = vsel %vm8901, %v5829, %v10012
    %v10014 = vsel %vm8903, %v5838, %v10013
    %v10015 = vsel %vm8905, %v5847, %v10014
    %v10016 = vsel %vm8907, %v5856, %v10015
    %v10017 = vsel %vm8895, %v5874, %v5865
    %v10018 = vsel %vm8897, %v5883, %v10017
    %v10019 = vsel %vm8899, %v5892, %v10018
    %v10020 = vsel %vm8901, %v5901, %v10019
    %v10021 = vsel %vm8903, %v5910, %v10020
    %v10022 = vsel %vm8895, %v6234, %v6225
    %v10023 = vsel %vm8897, %v6243, %v10022
    %v10024 = vsel %vm8899, %v6252, %v10023
    %v10025 = vsel %vm8901, %v6261, %v10024
    %v10026 = vsel %vm8903, %v6270, %v10025
    %v10027 = vsel %vm8905, %v6279, %v10026
    %v10028 = vsel %vm8907, %v6288, %v10027
    %v10029 = vsel %vm8895, %v6306, %v6297
    %v10030 = vsel %vm8897, %v6315, %v10029
    %v10031 = vsel %vm8899, %v6324, %v10030
    %v10032 = vsel %vm8901, %v6333, %v10031
    %v10033 = vsel %vm8903, %v6342, %v10032
    %v10034 = vsel %vm8895, %v6378, %v6369
    %v10035 = vsel %vm8897, %v6387, %v10034
    %v10036 = vsel %vm8899, %v6396, %v10035
    %v10037 = vsel %vm8901, %v6405, %v10036
    %v10038 = vsel %vm8903, %v6414, %v10037
    %v10039 = vsel %vm8905, %v6423, %v10038
    %v10040 = vsel %vm8907, %v6432, %v10039
    %v10041 = vsel %vm8895, %v6450, %v6441
    %v10042 = vsel %vm8897, %v6459, %v10041
    %v10043 = vsel %vm8899, %v6468, %v10042
    %v10044 = vsel %vm8901, %v6477, %v10043
    %v10045 = vsel %vm8903, %v6486, %v10044
    %v10046 = vsel %vm8895, %v6522, %v6513
    %v10047 = vsel %vm8897, %v6531, %v10046
    %v10048 = vsel %vm8899, %v6540, %v10047
    %v10049 = vsel %vm8901, %v6549, %v10048
    %v10050 = vsel %vm8903, %v6558, %v10049
    %v10051 = vsel %vm8905, %v6567, %v10050
    %v10052 = vsel %vm8907, %v6576, %v10051
    %v10053 = vsel %vm8895, %v6594, %v6585
    %v10054 = vsel %vm8897, %v6603, %v10053
    %v10055 = vsel %vm8899, %v6612, %v10054
    %v10056 = vsel %vm8901, %v6621, %v10055
    %v10057 = vsel %vm8903, %v6630, %v10056
    %v10058 = vsel %vm8895, %v6666, %v6657
    %v10059 = vsel %vm8897, %v6675, %v10058
    %v10060 = vsel %vm8899, %v6684, %v10059
    %v10061 = vsel %vm8901, %v6693, %v10060
    %v10062 = vsel %vm8903, %v6702, %v10061
    %v10063 = vsel %vm8905, %v6711, %v10062
    %v10064 = vsel %vm8907, %v6720, %v10063
    %v10065 = vsel %vm8895, %v6738, %v6729
    %v10066 = vsel %vm8897, %v6747, %v10065
    %v10067 = vsel %vm8899, %v6756, %v10066
    %v10068 = vsel %vm8901, %v6765, %v10067
    %v10069 = vsel %vm8903, %v6774, %v10068
    %v10070 = vsel %vm8895, %v6810, %v6801
    %v10071 = vsel %vm8897, %v6819, %v10070
    %v10072 = vsel %vm8899, %v6828, %v10071
    %v10073 = vsel %vm8901, %v6837, %v10072
    %v10074 = vsel %vm8903, %v6846, %v10073
    %v10075 = vsel %vm8905, %v6855, %v10074
    %v10076 = vsel %vm8907, %v6864, %v10075
    %v10077 = vsel %vm8895, %v6882, %v6873
    %v10078 = vsel %vm8897, %v6891, %v10077
    %v10079 = vsel %vm8899, %v6900, %v10078
    %v10080 = vsel %vm8901, %v6909, %v10079
    %v10081 = vsel %vm8903, %v6918, %v10080
    %v10082 = vsel %vm8895, %v6954, %v6945
    %v10083 = vsel %vm8897, %v6963, %v10082
    %v10084 = vsel %vm8899, %v6972, %v10083
    %v10085 = vsel %vm8901, %v6981, %v10084
    %v10086 = vsel %vm8903, %v6990, %v10085
    %v10087 = vsel %vm8905, %v6999, %v10086
    %v10088 = vsel %vm8907, %v7008, %v10087
    %v10089 = vsel %vm8895, %v7026, %v7017
    %v10090 = vsel %vm8897, %v7035, %v10089
    %v10091 = vsel %vm8899, %v7044, %v10090
    %v10092 = vsel %vm8901, %v7053, %v10091
    %v10093 = vsel %vm8903, %v7062, %v10092
    %v10094 = vsel %vm8895, %v7098, %v7089
    %v10095 = vsel %vm8897, %v7107, %v10094
    %v10096 = vsel %vm8899, %v7116, %v10095
    %v10097 = vsel %vm8901, %v7125, %v10096
    %v10098 = vsel %vm8903, %v7134, %v10097
    %v10099 = vsel %vm8905, %v7143, %v10098
    %v10100 = vsel %vm8907, %v7152, %v10099
    %v10101 = vsel %vm8895, %v7170, %v7161
    %v10102 = vsel %vm8897, %v7179, %v10101
    %v10103 = vsel %vm8899, %v7188, %v10102
    %v10104 = vsel %vm8901, %v7197, %v10103
    %v10105 = vsel %vm8903, %v7206, %v10104
    %v10106 = vsel %vm8895, %v7242, %v7233
    %v10107 = vsel %vm8897, %v7251, %v10106
    %v10108 = vsel %vm8899, %v7260, %v10107
    %v10109 = vsel %vm8901, %v7269, %v10108
    %v10110 = vsel %vm8903, %v7278, %v10109
    %v10111 = vsel %vm8905, %v7287, %v10110
    %v10112 = vsel %vm8907, %v7296, %v10111
    %v10113 = vsel %vm8895, %v7314, %v7305
    %v10114 = vsel %vm8897, %v7323, %v10113
    %v10115 = vsel %vm8899, %v7332, %v10114
    %v10116 = vsel %vm8901, %v7341, %v10115
    %v10117 = vsel %vm8903, %v7350, %v10116
    %v10118 = vsel %vm8895, %v7386, %v7377
    %v10119 = vsel %vm8897, %v7395, %v10118
    %v10120 = vsel %vm8899, %v7404, %v10119
    %v10121 = vsel %vm8901, %v7413, %v10120
    %v10122 = vsel %vm8903, %v7422, %v10121
    %v10123 = vsel %vm8905, %v7431, %v10122
    %v10124 = vsel %vm8907, %v7440, %v10123
    %v10125 = vsel %vm8895, %v7458, %v7449
    %v10126 = vsel %vm8897, %v7467, %v10125
    %v10127 = vsel %vm8899, %v7476, %v10126
    %v10128 = vsel %vm8901, %v7485, %v10127
    %v10129 = vsel %vm8903, %v7494, %v10128
    %v10130 = vsel %vm8895, %v7530, %v7521
    %v10131 = vsel %vm8897, %v7539, %v10130
    %v10132 = vsel %vm8899, %v7548, %v10131
    %v10133 = vsel %vm8901, %v7557, %v10132
    %v10134 = vsel %vm8903, %v7566, %v10133
    %v10135 = vsel %vm8905, %v7575, %v10134
    %v10136 = vsel %vm8907, %v7584, %v10135
    %v10137 = vsel %vm8895, %v7602, %v7593
    %v10138 = vsel %vm8897, %v7611, %v10137
    %v10139 = vsel %vm8899, %v7620, %v10138
    %v10140 = vsel %vm8901, %v7629, %v10139
    %v10141 = vsel %vm8903, %v7638, %v10140
    %v10142 = vsel %vm8895, %v7674, %v7665
    %v10143 = vsel %vm8897, %v7683, %v10142
    %v10144 = vsel %vm8899, %v7692, %v10143
    %v10145 = vsel %vm8901, %v7701, %v10144
    %v10146 = vsel %vm8903, %v7710, %v10145
    %v10147 = vsel %vm8905, %v7719, %v10146
    %v10148 = vsel %vm8907, %v7728, %v10147
    %v10149 = vsel %vm8895, %v7746, %v7737
    %v10150 = vsel %vm8897, %v7755, %v10149
    %v10151 = vsel %vm8899, %v7764, %v10150
    %v10152 = vsel %vm8901, %v7773, %v10151
    %v10153 = vsel %vm8903, %v7782, %v10152
    %v10154 = vsel %vm8895, %v7818, %v7809
    %v10155 = vsel %vm8897, %v7827, %v10154
    %v10156 = vsel %vm8899, %v7836, %v10155
    %v10157 = vsel %vm8901, %v7845, %v10156
    %v10158 = vsel %vm8903, %v7854, %v10157
    %v10159 = vsel %vm8905, %v7863, %v10158
    %v10160 = vsel %vm8907, %v7872, %v10159
    %v10161 = vsel %vm8895, %v7890, %v7881
    %v10162 = vsel %vm8897, %v7899, %v10161
    %v10163 = vsel %vm8899, %v7908, %v10162
    %v10164 = vsel %vm8901, %v7917, %v10163
    %v10165 = vsel %vm8903, %v7926, %v10164
    %v10166 = vsel %vm8895, %v7962, %v7953
    %v10167 = vsel %vm8897, %v7971, %v10166
    %v10168 = vsel %vm8899, %v7980, %v10167
    %v10169 = vsel %vm8901, %v7989, %v10168
    %v10170 = vsel %vm8903, %v7998, %v10169
    %v10171 = vsel %vm8905, %v8007, %v10170
    %v10172 = vsel %vm8907, %v8016, %v10171
    %v10173 = vsel %vm8895, %v8034, %v8025
    %v10174 = vsel %vm8897, %v8043, %v10173
    %v10175 = vsel %vm8899, %v8052, %v10174
    %v10176 = vsel %vm8901, %v8061, %v10175
    %v10177 = vsel %vm8903, %v8070, %v10176
    %v10178 = vsel %vm8895, %v8106, %v8097
    %v10179 = vsel %vm8897, %v8115, %v10178
    %v10180 = vsel %vm8899, %v8124, %v10179
    %v10181 = vsel %vm8901, %v8133, %v10180
    %v10182 = vsel %vm8903, %v8142, %v10181
    %v10183 = vsel %vm8905, %v8151, %v10182
    %v10184 = vsel %vm8907, %v8160, %v10183
    %v10185 = vsel %vm8895, %v8178, %v8169
    %v10186 = vsel %vm8897, %v8187, %v10185
    %v10187 = vsel %vm8899, %v8196, %v10186
    %v10188 = vsel %vm8901, %v8205, %v10187
    %v10189 = vsel %vm8903, %v8214, %v10188
    %10190 = vrot.lane.b32.xlu0 %v9860, 16
    %v10191 = vpop.permute.xlu0 %10190
    %10192 = vrot.lane.b32.xlu0 %v9865, 16
    %v10193 = vpop.permute.xlu0 %10192
    %10194 = vrot.lane.b32.xlu0 %v9872, 16
    %v10195 = vpop.permute.xlu0 %10194
    %10196 = vrot.lane.b32.xlu0 %v9877, 16
    %v10197 = vpop.permute.xlu0 %10196
    %10198 = vrot.lane.b32.xlu0 %v9884, 16
    %v10199 = vpop.permute.xlu0 %10198
    %10200 = vrot.lane.b32.xlu0 %v9889, 16
    %v10201 = vpop.permute.xlu0 %10200
    %10202 = vrot.lane.b32.xlu0 %v9896, 16
    %v10203 = vpop.permute.xlu0 %10202
    %10204 = vrot.lane.b32.xlu0 %v9901, 16
    %v10205 = vpop.permute.xlu0 %10204
    %10206 = vrot.lane.b32.xlu0 %v9908, 16
    %v10207 = vpop.permute.xlu0 %10206
    %10208 = vrot.lane.b32.xlu0 %v9913, 16
    %v10209 = vpop.permute.xlu0 %10208
    %10210 = vrot.lane.b32.xlu0 %v9920, 16
    %v10211 = vpop.permute.xlu0 %10210
    %10212 = vrot.lane.b32.xlu0 %v9925, 16
    %v10213 = vpop.permute.xlu0 %10212
    %10214 = vrot.lane.b32.xlu0 %v9932, 16
    %v10215 = vpop.permute.xlu0 %10214
    %10216 = vrot.lane.b32.xlu0 %v9937, 16
    %v10217 = vpop.permute.xlu0 %10216
    %10218 = vrot.lane.b32.xlu0 %v9944, 16
    %v10219 = vpop.permute.xlu0 %10218
    %10220 = vrot.lane.b32.xlu0 %v9949, 16
    %v10221 = vpop.permute.xlu0 %10220
    %10222 = vrot.lane.b32.xlu0 %v9956, 16
    %v10223 = vpop.permute.xlu0 %10222
    %10224 = vrot.lane.b32.xlu0 %v9961, 16
    %v10225 = vpop.permute.xlu0 %10224
    %10226 = vrot.lane.b32.xlu0 %v9968, 16
    %v10227 = vpop.permute.xlu0 %10226
    %10228 = vrot.lane.b32.xlu0 %v9973, 16
    %v10229 = vpop.permute.xlu0 %10228
    %10230 = vrot.lane.b32.xlu0 %v9980, 16
    %v10231 = vpop.permute.xlu0 %10230
    %10232 = vrot.lane.b32.xlu0 %v9985, 16
    %v10233 = vpop.permute.xlu0 %10232
    %10234 = vrot.lane.b32.xlu0 %v9992, 16
    %v10235 = vpop.permute.xlu0 %10234
    %10236 = vrot.lane.b32.xlu0 %v9997, 16
    %v10237 = vpop.permute.xlu0 %10236
    %10238 = vrot.lane.b32.xlu0 %v10004, 16
    %v10239 = vpop.permute.xlu0 %10238
    %10240 = vrot.lane.b32.xlu0 %v10009, 16
    %v10241 = vpop.permute.xlu0 %10240
    %10242 = vrot.lane.b32.xlu0 %v10016, 16
    %v10243 = vpop.permute.xlu0 %10242
    %10244 = vrot.lane.b32.xlu0 %v10021, 16
    %v10245 = vpop.permute.xlu0 %10244
    %10246 = vrot.lane.b32.xlu0 %v10028, 16
    %v10247 = vpop.permute.xlu0 %10246
    %10248 = vrot.lane.b32.xlu0 %v10033, 16
    %v10249 = vpop.permute.xlu0 %10248
    %10250 = vrot.lane.b32.xlu0 %v10040, 16
    %v10251 = vpop.permute.xlu0 %10250
    %10252 = vrot.lane.b32.xlu0 %v10045, 16
    %v10253 = vpop.permute.xlu0 %10252
    %10254 = vrot.lane.b32.xlu0 %v10052, 16
    %v10255 = vpop.permute.xlu0 %10254
    %10256 = vrot.lane.b32.xlu0 %v10057, 16
    %v10257 = vpop.permute.xlu0 %10256
    %10258 = vrot.lane.b32.xlu0 %v10064, 16
    %v10259 = vpop.permute.xlu0 %10258
    %10260 = vrot.lane.b32.xlu0 %v10069, 16
    %v10261 = vpop.permute.xlu0 %10260
    %10262 = vrot.lane.b32.xlu0 %v10076, 16
    %v10263 = vpop.permute.xlu0 %10262
    %10264 = vrot.lane.b32.xlu0 %v10081, 16
    %v10265 = vpop.permute.xlu0 %10264
    %10266 = vrot.lane.b32.xlu0 %v10088, 16
    %v10267 = vpop.permute.xlu0 %10266
    %10268 = vrot.lane.b32.xlu0 %v10093, 16
    %v10269 = vpop.permute.xlu0 %10268
    %10270 = vrot.lane.b32.xlu0 %v10100, 16
    %v10271 = vpop.permute.xlu0 %10270
    %10272 = vrot.lane.b32.xlu0 %v10105, 16
    %v10273 = vpop.permute.xlu0 %10272
    %10274 = vrot.lane.b32.xlu0 %v10112, 16
    %v10275 = vpop.permute.xlu0 %10274
    %10276 = vrot.lane.b32.xlu0 %v10117, 16
    %v10277 = vpop.permute.xlu0 %10276
    %10278 = vrot.lane.b32.xlu0 %v10124, 16
    %v10279 = vpop.permute.xlu0 %10278
    %10280 = vrot.lane.b32.xlu0 %v10129, 16
    %v10281 = vpop.permute.xlu0 %10280
    %10282 = vrot.lane.b32.xlu0 %v10136, 16
    %v10283 = vpop.permute.xlu0 %10282
    %10284 = vrot.lane.b32.xlu0 %v10141, 16
    %v10285 = vpop.permute.xlu0 %10284
    %10286 = vrot.lane.b32.xlu0 %v10148, 16
    %v10287 = vpop.permute.xlu0 %10286
    %10288 = vrot.lane.b32.xlu0 %v10153, 16
    %v10289 = vpop.permute.xlu0 %10288
    %10290 = vrot.lane.b32.xlu0 %v10160, 16
    %v10291 = vpop.permute.xlu0 %10290
    %10292 = vrot.lane.b32.xlu0 %v10165, 16
    %v10293 = vpop.permute.xlu0 %10292
    %10294 = vrot.lane.b32.xlu0 %v10172, 16
    %v10295 = vpop.permute.xlu0 %10294
    %10296 = vrot.lane.b32.xlu0 %v10177, 16
    %v10297 = vpop.permute.xlu0 %10296
    %10298 = vrot.lane.b32.xlu0 %v10184, 16
    %v10299 = vpop.permute.xlu0 %10298
    %10300 = vrot.lane.b32.xlu0 %v10189, 16
    %v10301 = vpop.permute.xlu0 %10300
    %v10386 = vsel %vm8895, %v5928, %v5919
    %v10387 = vsel %vm8897, %v5937, %v10386
    %v10388 = vsel %vm8899, %v5946, %v10387
    %v10389 = vsel %vm8901, %v5955, %v10388
    %v10390 = vsel %vm8903, %v5964, %v10389
    %v10391 = vsel %vm8905, %v5973, %v10390
    %v10392 = vsel %vm8907, %v5982, %v10391
    %v10393 = vsel %vm8895, %v6000, %v5991
    %v10394 = vsel %vm8897, %v6009, %v10393
    %v10395 = vsel %vm8899, %v6018, %v10394
    %v10396 = vsel %vm8901, %v6027, %v10395
    %v10397 = vsel %vm8903, %v6036, %v10396
    %v10398 = vsel %vm8895, %v8232, %v8223
    %v10399 = vsel %vm8897, %v8241, %v10398
    %v10400 = vsel %vm8899, %v8250, %v10399
    %v10401 = vsel %vm8901, %v8259, %v10400
    %v10402 = vsel %vm8903, %v8268, %v10401
    %v10403 = vsel %vm8905, %v8277, %v10402
    %v10404 = vsel %vm8907, %v8286, %v10403
    %v10405 = vsel %vm8895, %v8304, %v8295
    %v10406 = vsel %vm8897, %v8313, %v10405
    %v10407 = vsel %vm8899, %v8322, %v10406
    %v10408 = vsel %vm8901, %v8331, %v10407
    %v10409 = vsel %vm8903, %v8340, %v10408
    %10410 = vrot.lane.b32.xlu0 %v8920, 24
    %v10411 = vpop.permute.xlu0 %10410
    %10412 = vrot.lane.b32.xlu0 %v8925, 24
    %v10413 = vpop.permute.xlu0 %10412
    %10414 = vrot.lane.b32.xlu0 %v8932, 24
    %v10415 = vpop.permute.xlu0 %10414
    %10416 = vrot.lane.b32.xlu0 %v8937, 24
    %v10417 = vpop.permute.xlu0 %10416
    %10418 = vrot.lane.b32.xlu0 %v8944, 24
    %v10419 = vpop.permute.xlu0 %10418
    %10420 = vrot.lane.b32.xlu0 %v8949, 24
    %v10421 = vpop.permute.xlu0 %10420
    %10422 = vrot.lane.b32.xlu0 %v8956, 24
    %v10423 = vpop.permute.xlu0 %10422
    %10424 = vrot.lane.b32.xlu0 %v8961, 24
    %v10425 = vpop.permute.xlu0 %10424
    %10426 = vrot.lane.b32.xlu0 %v8968, 24
    %v10427 = vpop.permute.xlu0 %10426
    %10428 = vrot.lane.b32.xlu0 %v8973, 24
    %v10429 = vpop.permute.xlu0 %10428
    %10430 = vrot.lane.b32.xlu0 %v8980, 24
    %v10431 = vpop.permute.xlu0 %10430
    %10432 = vrot.lane.b32.xlu0 %v8985, 24
    %v10433 = vpop.permute.xlu0 %10432
    %10434 = vrot.lane.b32.xlu0 %v8992, 24
    %v10435 = vpop.permute.xlu0 %10434
    %10436 = vrot.lane.b32.xlu0 %v8997, 24
    %v10437 = vpop.permute.xlu0 %10436
    %10438 = vrot.lane.b32.xlu0 %v9004, 24
    %v10439 = vpop.permute.xlu0 %10438
    %10440 = vrot.lane.b32.xlu0 %v9009, 24
    %v10441 = vpop.permute.xlu0 %10440
    %10442 = vrot.lane.b32.xlu0 %v9016, 24
    %v10443 = vpop.permute.xlu0 %10442
    %10444 = vrot.lane.b32.xlu0 %v9021, 24
    %v10445 = vpop.permute.xlu0 %10444
    %10446 = vrot.lane.b32.xlu0 %v9028, 24
    %v10447 = vpop.permute.xlu0 %10446
    %10448 = vrot.lane.b32.xlu0 %v9033, 24
    %v10449 = vpop.permute.xlu0 %10448
    %10450 = vrot.lane.b32.xlu0 %v9040, 24
    %v10451 = vpop.permute.xlu0 %10450
    %10452 = vrot.lane.b32.xlu0 %v9045, 24
    %v10453 = vpop.permute.xlu0 %10452
    %10454 = vrot.lane.b32.xlu0 %v9052, 24
    %v10455 = vpop.permute.xlu0 %10454
    %10456 = vrot.lane.b32.xlu0 %v9057, 24
    %v10457 = vpop.permute.xlu0 %10456
    %10458 = vrot.lane.b32.xlu0 %v9064, 24
    %v10459 = vpop.permute.xlu0 %10458
    %10460 = vrot.lane.b32.xlu0 %v9069, 24
    %v10461 = vpop.permute.xlu0 %10460
    %10462 = vrot.lane.b32.xlu0 %v10392, 24
    %v10463 = vpop.permute.xlu0 %10462
    %10464 = vrot.lane.b32.xlu0 %v10397, 24
    %v10465 = vpop.permute.xlu0 %10464
    %10466 = vrot.lane.b32.xlu0 %v9088, 24
    %v10467 = vpop.permute.xlu0 %10466
    %10468 = vrot.lane.b32.xlu0 %v9093, 24
    %v10469 = vpop.permute.xlu0 %10468
    %10470 = vrot.lane.b32.xlu0 %v9100, 24
    %v10471 = vpop.permute.xlu0 %10470
    %10472 = vrot.lane.b32.xlu0 %v9105, 24
    %v10473 = vpop.permute.xlu0 %10472
    %10474 = vrot.lane.b32.xlu0 %v9112, 24
    %v10475 = vpop.permute.xlu0 %10474
    %10476 = vrot.lane.b32.xlu0 %v9117, 24
    %v10477 = vpop.permute.xlu0 %10476
    %10478 = vrot.lane.b32.xlu0 %v9124, 24
    %v10479 = vpop.permute.xlu0 %10478
    %10480 = vrot.lane.b32.xlu0 %v9129, 24
    %v10481 = vpop.permute.xlu0 %10480
    %10482 = vrot.lane.b32.xlu0 %v9136, 24
    %v10483 = vpop.permute.xlu0 %10482
    %10484 = vrot.lane.b32.xlu0 %v9141, 24
    %v10485 = vpop.permute.xlu0 %10484
    %10486 = vrot.lane.b32.xlu0 %v9148, 24
    %v10487 = vpop.permute.xlu0 %10486
    %10488 = vrot.lane.b32.xlu0 %v9153, 24
    %v10489 = vpop.permute.xlu0 %10488
    %10490 = vrot.lane.b32.xlu0 %v9160, 24
    %v10491 = vpop.permute.xlu0 %10490
    %10492 = vrot.lane.b32.xlu0 %v9165, 24
    %v10493 = vpop.permute.xlu0 %10492
    %10494 = vrot.lane.b32.xlu0 %v9172, 24
    %v10495 = vpop.permute.xlu0 %10494
    %10496 = vrot.lane.b32.xlu0 %v9177, 24
    %v10497 = vpop.permute.xlu0 %10496
    %10498 = vrot.lane.b32.xlu0 %v9184, 24
    %v10499 = vpop.permute.xlu0 %10498
    %10500 = vrot.lane.b32.xlu0 %v9189, 24
    %v10501 = vpop.permute.xlu0 %10500
    %10502 = vrot.lane.b32.xlu0 %v9196, 24
    %v10503 = vpop.permute.xlu0 %10502
    %10504 = vrot.lane.b32.xlu0 %v9201, 24
    %v10505 = vpop.permute.xlu0 %10504
    %10506 = vrot.lane.b32.xlu0 %v9208, 24
    %v10507 = vpop.permute.xlu0 %10506
    %10508 = vrot.lane.b32.xlu0 %v9213, 24
    %v10509 = vpop.permute.xlu0 %10508
    %10510 = vrot.lane.b32.xlu0 %v9220, 24
    %v10511 = vpop.permute.xlu0 %10510
    %10512 = vrot.lane.b32.xlu0 %v9225, 24
    %v10513 = vpop.permute.xlu0 %10512
    %10514 = vrot.lane.b32.xlu0 %v9232, 24
    %v10515 = vpop.permute.xlu0 %10514
    %10516 = vrot.lane.b32.xlu0 %v9237, 24
    %v10517 = vpop.permute.xlu0 %10516
    %10518 = vrot.lane.b32.xlu0 %v10404, 24
    %v10519 = vpop.permute.xlu0 %10518
    %10520 = vrot.lane.b32.xlu0 %v10409, 24
    %v10521 = vpop.permute.xlu0 %10520
    %v10580 = vsel %vm8895, %v5937, %v5928
    %v10581 = vsel %vm8897, %v5946, %v10580
    %v10582 = vsel %vm8899, %v5955, %v10581
    %v10583 = vsel %vm8901, %v5964, %v10582
    %v10584 = vsel %vm8903, %v5973, %v10583
    %v10585 = vsel %vm8905, %v5982, %v10584
    %v10586 = vsel %vm8907, %v5991, %v10585
    %v10587 = vsel %vm8895, %v6009, %v6000
    %v10588 = vsel %vm8897, %v6018, %v10587
    %v10589 = vsel %vm8899, %v6027, %v10588
    %v10590 = vsel %vm8901, %v6036, %v10589
    %v10591 = vsel %vm8903, %v6045, %v10590
    %v10592 = vsel %vm8895, %v8241, %v8232
    %v10593 = vsel %vm8897, %v8250, %v10592
    %v10594 = vsel %vm8899, %v8259, %v10593
    %v10595 = vsel %vm8901, %v8268, %v10594
    %v10596 = vsel %vm8903, %v8277, %v10595
    %v10597 = vsel %vm8905, %v8286, %v10596
    %v10598 = vsel %vm8907, %v8295, %v10597
    %v10599 = vsel %vm8895, %v8313, %v8304
    %v10600 = vsel %vm8897, %v8322, %v10599
    %v10601 = vsel %vm8899, %v8331, %v10600
    %v10602 = vsel %vm8901, %v8340, %v10601
    %v10603 = vsel %vm8903, %v8349, %v10602
    %10604 = vrot.lane.b32.xlu0 %v9340, 32
    %v10605 = vpop.permute.xlu0 %10604
    %10606 = vrot.lane.b32.xlu0 %v9345, 32
    %v10607 = vpop.permute.xlu0 %10606
    %10608 = vrot.lane.b32.xlu0 %v9352, 32
    %v10609 = vpop.permute.xlu0 %10608
    %10610 = vrot.lane.b32.xlu0 %v9357, 32
    %v10611 = vpop.permute.xlu0 %10610
    %10612 = vrot.lane.b32.xlu0 %v9364, 32
    %v10613 = vpop.permute.xlu0 %10612
    %10614 = vrot.lane.b32.xlu0 %v9369, 32
    %v10615 = vpop.permute.xlu0 %10614
    %10616 = vrot.lane.b32.xlu0 %v9376, 32
    %v10617 = vpop.permute.xlu0 %10616
    %10618 = vrot.lane.b32.xlu0 %v9381, 32
    %v10619 = vpop.permute.xlu0 %10618
    %10620 = vrot.lane.b32.xlu0 %v9388, 32
    %v10621 = vpop.permute.xlu0 %10620
    %10622 = vrot.lane.b32.xlu0 %v9393, 32
    %v10623 = vpop.permute.xlu0 %10622
    %10624 = vrot.lane.b32.xlu0 %v9400, 32
    %v10625 = vpop.permute.xlu0 %10624
    %10626 = vrot.lane.b32.xlu0 %v9405, 32
    %v10627 = vpop.permute.xlu0 %10626
    %10628 = vrot.lane.b32.xlu0 %v9412, 32
    %v10629 = vpop.permute.xlu0 %10628
    %10630 = vrot.lane.b32.xlu0 %v9417, 32
    %v10631 = vpop.permute.xlu0 %10630
    %10632 = vrot.lane.b32.xlu0 %v9424, 32
    %v10633 = vpop.permute.xlu0 %10632
    %10634 = vrot.lane.b32.xlu0 %v9429, 32
    %v10635 = vpop.permute.xlu0 %10634
    %10636 = vrot.lane.b32.xlu0 %v9436, 32
    %v10637 = vpop.permute.xlu0 %10636
    %10638 = vrot.lane.b32.xlu0 %v9441, 32
    %v10639 = vpop.permute.xlu0 %10638
    %10640 = vrot.lane.b32.xlu0 %v9448, 32
    %v10641 = vpop.permute.xlu0 %10640
    %10642 = vrot.lane.b32.xlu0 %v9453, 32
    %v10643 = vpop.permute.xlu0 %10642
    %10644 = vrot.lane.b32.xlu0 %v9460, 32
    %v10645 = vpop.permute.xlu0 %10644
    %10646 = vrot.lane.b32.xlu0 %v9465, 32
    %v10647 = vpop.permute.xlu0 %10646
    %10648 = vrot.lane.b32.xlu0 %v9472, 32
    %v10649 = vpop.permute.xlu0 %10648
    %10650 = vrot.lane.b32.xlu0 %v9477, 32
    %v10651 = vpop.permute.xlu0 %10650
    %10652 = vrot.lane.b32.xlu0 %v9484, 32
    %v10653 = vpop.permute.xlu0 %10652
    %10654 = vrot.lane.b32.xlu0 %v9489, 32
    %v10655 = vpop.permute.xlu0 %10654
    %10656 = vrot.lane.b32.xlu0 %v10586, 32
    %v10657 = vpop.permute.xlu0 %10656
    %10658 = vrot.lane.b32.xlu0 %v10591, 32
    %v10659 = vpop.permute.xlu0 %10658
    %10660 = vrot.lane.b32.xlu0 %v9508, 32
    %v10661 = vpop.permute.xlu0 %10660
    %10662 = vrot.lane.b32.xlu0 %v9513, 32
    %v10663 = vpop.permute.xlu0 %10662
    %10664 = vrot.lane.b32.xlu0 %v9520, 32
    %v10665 = vpop.permute.xlu0 %10664
    %10666 = vrot.lane.b32.xlu0 %v9525, 32
    %v10667 = vpop.permute.xlu0 %10666
    %10668 = vrot.lane.b32.xlu0 %v9532, 32
    %v10669 = vpop.permute.xlu0 %10668
    %10670 = vrot.lane.b32.xlu0 %v9537, 32
    %v10671 = vpop.permute.xlu0 %10670
    %10672 = vrot.lane.b32.xlu0 %v9544, 32
    %v10673 = vpop.permute.xlu0 %10672
    %10674 = vrot.lane.b32.xlu0 %v9549, 32
    %v10675 = vpop.permute.xlu0 %10674
    %10676 = vrot.lane.b32.xlu0 %v9556, 32
    %v10677 = vpop.permute.xlu0 %10676
    %10678 = vrot.lane.b32.xlu0 %v9561, 32
    %v10679 = vpop.permute.xlu0 %10678
    %10680 = vrot.lane.b32.xlu0 %v9568, 32
    %v10681 = vpop.permute.xlu0 %10680
    %10682 = vrot.lane.b32.xlu0 %v9573, 32
    %v10683 = vpop.permute.xlu0 %10682
    %10684 = vrot.lane.b32.xlu0 %v9580, 32
    %v10685 = vpop.permute.xlu0 %10684
    %10686 = vrot.lane.b32.xlu0 %v9585, 32
    %v10687 = vpop.permute.xlu0 %10686
    %10688 = vrot.lane.b32.xlu0 %v9592, 32
    %v10689 = vpop.permute.xlu0 %10688
    %10690 = vrot.lane.b32.xlu0 %v9597, 32
    %v10691 = vpop.permute.xlu0 %10690
    %10692 = vrot.lane.b32.xlu0 %v9604, 32
    %v10693 = vpop.permute.xlu0 %10692
    %10694 = vrot.lane.b32.xlu0 %v9609, 32
    %v10695 = vpop.permute.xlu0 %10694
    %10696 = vrot.lane.b32.xlu0 %v9616, 32
    %v10697 = vpop.permute.xlu0 %10696
    %10698 = vrot.lane.b32.xlu0 %v9621, 32
    %v10699 = vpop.permute.xlu0 %10698
    %10700 = vrot.lane.b32.xlu0 %v9628, 32
    %v10701 = vpop.permute.xlu0 %10700
    %10702 = vrot.lane.b32.xlu0 %v9633, 32
    %v10703 = vpop.permute.xlu0 %10702
    %10704 = vrot.lane.b32.xlu0 %v9640, 32
    %v10705 = vpop.permute.xlu0 %10704
    %10706 = vrot.lane.b32.xlu0 %v9645, 32
    %v10707 = vpop.permute.xlu0 %10706
    %10708 = vrot.lane.b32.xlu0 %v9652, 32
    %v10709 = vpop.permute.xlu0 %10708
    %10710 = vrot.lane.b32.xlu0 %v9657, 32
    %v10711 = vpop.permute.xlu0 %10710
    %10712 = vrot.lane.b32.xlu0 %v10598, 32
    %v10713 = vpop.permute.xlu0 %10712
    %10714 = vrot.lane.b32.xlu0 %v10603, 32
    %v10715 = vpop.permute.xlu0 %10714
    %v10774 = vsel %vm8895, %v5946, %v5937
    %v10775 = vsel %vm8897, %v5955, %v10774
    %v10776 = vsel %vm8899, %v5964, %v10775
    %v10777 = vsel %vm8901, %v5973, %v10776
    %v10778 = vsel %vm8903, %v5982, %v10777
    %v10779 = vsel %vm8905, %v5991, %v10778
    %v10780 = vsel %vm8907, %v6000, %v10779
    %v10781 = vsel %vm8895, %v6018, %v6009
    %v10782 = vsel %vm8897, %v6027, %v10781
    %v10783 = vsel %vm8899, %v6036, %v10782
    %v10784 = vsel %vm8901, %v6045, %v10783
    %v10785 = vsel %vm8903, %v6054, %v10784
    %v10786 = vsel %vm8895, %v8250, %v8241
    %v10787 = vsel %vm8897, %v8259, %v10786
    %v10788 = vsel %vm8899, %v8268, %v10787
    %v10789 = vsel %vm8901, %v8277, %v10788
    %v10790 = vsel %vm8903, %v8286, %v10789
    %v10791 = vsel %vm8905, %v8295, %v10790
    %v10792 = vsel %vm8907, %v8304, %v10791
    %v10793 = vsel %vm8895, %v8322, %v8313
    %v10794 = vsel %vm8897, %v8331, %v10793
    %v10795 = vsel %vm8899, %v8340, %v10794
    %v10796 = vsel %vm8901, %v8349, %v10795
    %v10797 = vsel %vm8903, %v8358, %v10796
    %10798 = vrot.lane.b32.xlu0 %v9872, 40
    %v10799 = vpop.permute.xlu0 %10798
    %10800 = vrot.lane.b32.xlu0 %v9877, 40
    %v10801 = vpop.permute.xlu0 %10800
    %10802 = vrot.lane.b32.xlu0 %v9884, 40
    %v10803 = vpop.permute.xlu0 %10802
    %10804 = vrot.lane.b32.xlu0 %v9889, 40
    %v10805 = vpop.permute.xlu0 %10804
    %10806 = vrot.lane.b32.xlu0 %v9896, 40
    %v10807 = vpop.permute.xlu0 %10806
    %10808 = vrot.lane.b32.xlu0 %v9901, 40
    %v10809 = vpop.permute.xlu0 %10808
    %10810 = vrot.lane.b32.xlu0 %v9908, 40
    %v10811 = vpop.permute.xlu0 %10810
    %10812 = vrot.lane.b32.xlu0 %v9913, 40
    %v10813 = vpop.permute.xlu0 %10812
    %10814 = vrot.lane.b32.xlu0 %v9920, 40
    %v10815 = vpop.permute.xlu0 %10814
    %10816 = vrot.lane.b32.xlu0 %v9925, 40
    %v10817 = vpop.permute.xlu0 %10816
    %10818 = vrot.lane.b32.xlu0 %v9932, 40
    %v10819 = vpop.permute.xlu0 %10818
    %10820 = vrot.lane.b32.xlu0 %v9937, 40
    %v10821 = vpop.permute.xlu0 %10820
    %10822 = vrot.lane.b32.xlu0 %v9944, 40
    %v10823 = vpop.permute.xlu0 %10822
    %10824 = vrot.lane.b32.xlu0 %v9949, 40
    %v10825 = vpop.permute.xlu0 %10824
    %10826 = vrot.lane.b32.xlu0 %v9956, 40
    %v10827 = vpop.permute.xlu0 %10826
    %10828 = vrot.lane.b32.xlu0 %v9961, 40
    %v10829 = vpop.permute.xlu0 %10828
    %10830 = vrot.lane.b32.xlu0 %v9968, 40
    %v10831 = vpop.permute.xlu0 %10830
    %10832 = vrot.lane.b32.xlu0 %v9973, 40
    %v10833 = vpop.permute.xlu0 %10832
    %10834 = vrot.lane.b32.xlu0 %v9980, 40
    %v10835 = vpop.permute.xlu0 %10834
    %10836 = vrot.lane.b32.xlu0 %v9985, 40
    %v10837 = vpop.permute.xlu0 %10836
    %10838 = vrot.lane.b32.xlu0 %v9992, 40
    %v10839 = vpop.permute.xlu0 %10838
    %10840 = vrot.lane.b32.xlu0 %v9997, 40
    %v10841 = vpop.permute.xlu0 %10840
    %10842 = vrot.lane.b32.xlu0 %v10004, 40
    %v10843 = vpop.permute.xlu0 %10842
    %10844 = vrot.lane.b32.xlu0 %v10009, 40
    %v10845 = vpop.permute.xlu0 %10844
    %10846 = vrot.lane.b32.xlu0 %v10016, 40
    %v10847 = vpop.permute.xlu0 %10846
    %10848 = vrot.lane.b32.xlu0 %v10021, 40
    %v10849 = vpop.permute.xlu0 %10848
    %10850 = vrot.lane.b32.xlu0 %v10780, 40
    %v10851 = vpop.permute.xlu0 %10850
    %10852 = vrot.lane.b32.xlu0 %v10785, 40
    %v10853 = vpop.permute.xlu0 %10852
    %10854 = vrot.lane.b32.xlu0 %v10040, 40
    %v10855 = vpop.permute.xlu0 %10854
    %10856 = vrot.lane.b32.xlu0 %v10045, 40
    %v10857 = vpop.permute.xlu0 %10856
    %10858 = vrot.lane.b32.xlu0 %v10052, 40
    %v10859 = vpop.permute.xlu0 %10858
    %10860 = vrot.lane.b32.xlu0 %v10057, 40
    %v10861 = vpop.permute.xlu0 %10860
    %10862 = vrot.lane.b32.xlu0 %v10064, 40
    %v10863 = vpop.permute.xlu0 %10862
    %10864 = vrot.lane.b32.xlu0 %v10069, 40
    %v10865 = vpop.permute.xlu0 %10864
    %10866 = vrot.lane.b32.xlu0 %v10076, 40
    %v10867 = vpop.permute.xlu0 %10866
    %10868 = vrot.lane.b32.xlu0 %v10081, 40
    %v10869 = vpop.permute.xlu0 %10868
    %10870 = vrot.lane.b32.xlu0 %v10088, 40
    %v10871 = vpop.permute.xlu0 %10870
    %10872 = vrot.lane.b32.xlu0 %v10093, 40
    %v10873 = vpop.permute.xlu0 %10872
    %10874 = vrot.lane.b32.xlu0 %v10100, 40
    %v10875 = vpop.permute.xlu0 %10874
    %10876 = vrot.lane.b32.xlu0 %v10105, 40
    %v10877 = vpop.permute.xlu0 %10876
    %10878 = vrot.lane.b32.xlu0 %v10112, 40
    %v10879 = vpop.permute.xlu0 %10878
    %10880 = vrot.lane.b32.xlu0 %v10117, 40
    %v10881 = vpop.permute.xlu0 %10880
    %10882 = vrot.lane.b32.xlu0 %v10124, 40
    %v10883 = vpop.permute.xlu0 %10882
    %10884 = vrot.lane.b32.xlu0 %v10129, 40
    %v10885 = vpop.permute.xlu0 %10884
    %10886 = vrot.lane.b32.xlu0 %v10136, 40
    %v10887 = vpop.permute.xlu0 %10886
    %10888 = vrot.lane.b32.xlu0 %v10141, 40
    %v10889 = vpop.permute.xlu0 %10888
    %10890 = vrot.lane.b32.xlu0 %v10148, 40
    %v10891 = vpop.permute.xlu0 %10890
    %10892 = vrot.lane.b32.xlu0 %v10153, 40
    %v10893 = vpop.permute.xlu0 %10892
    %10894 = vrot.lane.b32.xlu0 %v10160, 40
    %v10895 = vpop.permute.xlu0 %10894
    %10896 = vrot.lane.b32.xlu0 %v10165, 40
    %v10897 = vpop.permute.xlu0 %10896
    %10898 = vrot.lane.b32.xlu0 %v10172, 40
    %v10899 = vpop.permute.xlu0 %10898
    %10900 = vrot.lane.b32.xlu0 %v10177, 40
    %v10901 = vpop.permute.xlu0 %10900
    %10902 = vrot.lane.b32.xlu0 %v10184, 40
    %v10903 = vpop.permute.xlu0 %10902
    %10904 = vrot.lane.b32.xlu0 %v10189, 40
    %v10905 = vpop.permute.xlu0 %10904
    %10906 = vrot.lane.b32.xlu0 %v10792, 40
    %v10907 = vpop.permute.xlu0 %10906
    %10908 = vrot.lane.b32.xlu0 %v10797, 40
    %v10909 = vpop.permute.xlu0 %10908
    %v10994 = vsel %vm8895, %v6072, %v6063
    %v10995 = vsel %vm8897, %v6081, %v10994
    %v10996 = vsel %vm8899, %v6090, %v10995
    %v10997 = vsel %vm8901, %v6099, %v10996
    %v10998 = vsel %vm8903, %v6108, %v10997
    %v10999 = vsel %vm8905, %v6117, %v10998
    %v11000 = vsel %vm8907, %v6126, %v10999
    %v11001 = vsel %vm8895, %v6144, %v6135
    %v11002 = vsel %vm8897, %v6153, %v11001
    %v11003 = vsel %vm8899, %v6162, %v11002
    %v11004 = vsel %vm8901, %v6171, %v11003
    %v11005 = vsel %vm8903, %v6180, %v11004
    %v11006 = vsel %vm8895, %v8376, %v8367
    %v11007 = vsel %vm8897, %v8385, %v11006
    %v11008 = vsel %vm8899, %v8394, %v11007
    %v11009 = vsel %vm8901, %v8403, %v11008
    %v11010 = vsel %vm8903, %v8412, %v11009
    %v11011 = vsel %vm8905, %v8421, %v11010
    %v11012 = vsel %vm8907, %v8430, %v11011
    %v11013 = vsel %vm8895, %v8448, %v8439
    %v11014 = vsel %vm8897, %v8457, %v11013
    %v11015 = vsel %vm8899, %v8466, %v11014
    %v11016 = vsel %vm8901, %v8475, %v11015
    %v11017 = vsel %vm8903, %v8484, %v11016
    %11018 = vrot.lane.b32.xlu0 %v8932, 48
    %v11019 = vpop.permute.xlu0 %11018
    %11020 = vrot.lane.b32.xlu0 %v8937, 48
    %v11021 = vpop.permute.xlu0 %11020
    %11022 = vrot.lane.b32.xlu0 %v8944, 48
    %v11023 = vpop.permute.xlu0 %11022
    %11024 = vrot.lane.b32.xlu0 %v8949, 48
    %v11025 = vpop.permute.xlu0 %11024
    %11026 = vrot.lane.b32.xlu0 %v8956, 48
    %v11027 = vpop.permute.xlu0 %11026
    %11028 = vrot.lane.b32.xlu0 %v8961, 48
    %v11029 = vpop.permute.xlu0 %11028
    %11030 = vrot.lane.b32.xlu0 %v8968, 48
    %v11031 = vpop.permute.xlu0 %11030
    %11032 = vrot.lane.b32.xlu0 %v8973, 48
    %v11033 = vpop.permute.xlu0 %11032
    %11034 = vrot.lane.b32.xlu0 %v8980, 48
    %v11035 = vpop.permute.xlu0 %11034
    %11036 = vrot.lane.b32.xlu0 %v8985, 48
    %v11037 = vpop.permute.xlu0 %11036
    %11038 = vrot.lane.b32.xlu0 %v8992, 48
    %v11039 = vpop.permute.xlu0 %11038
    %11040 = vrot.lane.b32.xlu0 %v8997, 48
    %v11041 = vpop.permute.xlu0 %11040
    %11042 = vrot.lane.b32.xlu0 %v9004, 48
    %v11043 = vpop.permute.xlu0 %11042
    %11044 = vrot.lane.b32.xlu0 %v9009, 48
    %v11045 = vpop.permute.xlu0 %11044
    %11046 = vrot.lane.b32.xlu0 %v9016, 48
    %v11047 = vpop.permute.xlu0 %11046
    %11048 = vrot.lane.b32.xlu0 %v9021, 48
    %v11049 = vpop.permute.xlu0 %11048
    %11050 = vrot.lane.b32.xlu0 %v9028, 48
    %v11051 = vpop.permute.xlu0 %11050
    %11052 = vrot.lane.b32.xlu0 %v9033, 48
    %v11053 = vpop.permute.xlu0 %11052
    %11054 = vrot.lane.b32.xlu0 %v9040, 48
    %v11055 = vpop.permute.xlu0 %11054
    %11056 = vrot.lane.b32.xlu0 %v9045, 48
    %v11057 = vpop.permute.xlu0 %11056
    %11058 = vrot.lane.b32.xlu0 %v9052, 48
    %v11059 = vpop.permute.xlu0 %11058
    %11060 = vrot.lane.b32.xlu0 %v9057, 48
    %v11061 = vpop.permute.xlu0 %11060
    %11062 = vrot.lane.b32.xlu0 %v9064, 48
    %v11063 = vpop.permute.xlu0 %11062
    %11064 = vrot.lane.b32.xlu0 %v9069, 48
    %v11065 = vpop.permute.xlu0 %11064
    %11066 = vrot.lane.b32.xlu0 %v10392, 48
    %v11067 = vpop.permute.xlu0 %11066
    %11068 = vrot.lane.b32.xlu0 %v10397, 48
    %v11069 = vpop.permute.xlu0 %11068
    %11070 = vrot.lane.b32.xlu0 %v11000, 48
    %v11071 = vpop.permute.xlu0 %11070
    %11072 = vrot.lane.b32.xlu0 %v11005, 48
    %v11073 = vpop.permute.xlu0 %11072
    %11074 = vrot.lane.b32.xlu0 %v9100, 48
    %v11075 = vpop.permute.xlu0 %11074
    %11076 = vrot.lane.b32.xlu0 %v9105, 48
    %v11077 = vpop.permute.xlu0 %11076
    %11078 = vrot.lane.b32.xlu0 %v9112, 48
    %v11079 = vpop.permute.xlu0 %11078
    %11080 = vrot.lane.b32.xlu0 %v9117, 48
    %v11081 = vpop.permute.xlu0 %11080
    %11082 = vrot.lane.b32.xlu0 %v9124, 48
    %v11083 = vpop.permute.xlu0 %11082
    %11084 = vrot.lane.b32.xlu0 %v9129, 48
    %v11085 = vpop.permute.xlu0 %11084
    %11086 = vrot.lane.b32.xlu0 %v9136, 48
    %v11087 = vpop.permute.xlu0 %11086
    %11088 = vrot.lane.b32.xlu0 %v9141, 48
    %v11089 = vpop.permute.xlu0 %11088
    %11090 = vrot.lane.b32.xlu0 %v9148, 48
    %v11091 = vpop.permute.xlu0 %11090
    %11092 = vrot.lane.b32.xlu0 %v9153, 48
    %v11093 = vpop.permute.xlu0 %11092
    %11094 = vrot.lane.b32.xlu0 %v9160, 48
    %v11095 = vpop.permute.xlu0 %11094
    %11096 = vrot.lane.b32.xlu0 %v9165, 48
    %v11097 = vpop.permute.xlu0 %11096
    %11098 = vrot.lane.b32.xlu0 %v9172, 48
    %v11099 = vpop.permute.xlu0 %11098
    %11100 = vrot.lane.b32.xlu0 %v9177, 48
    %v11101 = vpop.permute.xlu0 %11100
    %11102 = vrot.lane.b32.xlu0 %v9184, 48
    %v11103 = vpop.permute.xlu0 %11102
    %11104 = vrot.lane.b32.xlu0 %v9189, 48
    %v11105 = vpop.permute.xlu0 %11104
    %11106 = vrot.lane.b32.xlu0 %v9196, 48
    %v11107 = vpop.permute.xlu0 %11106
    %11108 = vrot.lane.b32.xlu0 %v9201, 48
    %v11109 = vpop.permute.xlu0 %11108
    %11110 = vrot.lane.b32.xlu0 %v9208, 48
    %v11111 = vpop.permute.xlu0 %11110
    %11112 = vrot.lane.b32.xlu0 %v9213, 48
    %v11113 = vpop.permute.xlu0 %11112
    %11114 = vrot.lane.b32.xlu0 %v9220, 48
    %v11115 = vpop.permute.xlu0 %11114
    %11116 = vrot.lane.b32.xlu0 %v9225, 48
    %v11117 = vpop.permute.xlu0 %11116
    %11118 = vrot.lane.b32.xlu0 %v9232, 48
    %v11119 = vpop.permute.xlu0 %11118
    %11120 = vrot.lane.b32.xlu0 %v9237, 48
    %v11121 = vpop.permute.xlu0 %11120
    %11122 = vrot.lane.b32.xlu0 %v10404, 48
    %v11123 = vpop.permute.xlu0 %11122
    %11124 = vrot.lane.b32.xlu0 %v10409, 48
    %v11125 = vpop.permute.xlu0 %11124
    %11126 = vrot.lane.b32.xlu0 %v11012, 48
    %v11127 = vpop.permute.xlu0 %11126
    %11128 = vrot.lane.b32.xlu0 %v11017, 48
    %v11129 = vpop.permute.xlu0 %11128
    %v11188 = vsel %vm8895, %v6081, %v6072
    %v11189 = vsel %vm8897, %v6090, %v11188
    %v11190 = vsel %vm8899, %v6099, %v11189
    %v11191 = vsel %vm8901, %v6108, %v11190
    %v11192 = vsel %vm8903, %v6117, %v11191
    %v11193 = vsel %vm8905, %v6126, %v11192
    %v11194 = vsel %vm8907, %v6135, %v11193
    %v11195 = vsel %vm8895, %v6153, %v6144
    %v11196 = vsel %vm8897, %v6162, %v11195
    %v11197 = vsel %vm8899, %v6171, %v11196
    %v11198 = vsel %vm8901, %v6180, %v11197
    %v11199 = vsel %vm8903, %v6189, %v11198
    %v11200 = vsel %vm8895, %v8385, %v8376
    %v11201 = vsel %vm8897, %v8394, %v11200
    %v11202 = vsel %vm8899, %v8403, %v11201
    %v11203 = vsel %vm8901, %v8412, %v11202
    %v11204 = vsel %vm8903, %v8421, %v11203
    %v11205 = vsel %vm8905, %v8430, %v11204
    %v11206 = vsel %vm8907, %v8439, %v11205
    %v11207 = vsel %vm8895, %v8457, %v8448
    %v11208 = vsel %vm8897, %v8466, %v11207
    %v11209 = vsel %vm8899, %v8475, %v11208
    %v11210 = vsel %vm8901, %v8484, %v11209
    %v11211 = vsel %vm8903, %v8493, %v11210
    %11212 = vrot.lane.b32.xlu0 %v9352, 56
    %v11213 = vpop.permute.xlu0 %11212
    %11214 = vrot.lane.b32.xlu0 %v9357, 56
    %v11215 = vpop.permute.xlu0 %11214
    %11216 = vrot.lane.b32.xlu0 %v9364, 56
    %v11217 = vpop.permute.xlu0 %11216
    %11218 = vrot.lane.b32.xlu0 %v9369, 56
    %v11219 = vpop.permute.xlu0 %11218
    %11220 = vrot.lane.b32.xlu0 %v9376, 56
    %v11221 = vpop.permute.xlu0 %11220
    %11222 = vrot.lane.b32.xlu0 %v9381, 56
    %v11223 = vpop.permute.xlu0 %11222
    %11224 = vrot.lane.b32.xlu0 %v9388, 56
    %v11225 = vpop.permute.xlu0 %11224
    %11226 = vrot.lane.b32.xlu0 %v9393, 56
    %v11227 = vpop.permute.xlu0 %11226
    %11228 = vrot.lane.b32.xlu0 %v9400, 56
    %v11229 = vpop.permute.xlu0 %11228
    %11230 = vrot.lane.b32.xlu0 %v9405, 56
    %v11231 = vpop.permute.xlu0 %11230
    %11232 = vrot.lane.b32.xlu0 %v9412, 56
    %v11233 = vpop.permute.xlu0 %11232
    %11234 = vrot.lane.b32.xlu0 %v9417, 56
    %v11235 = vpop.permute.xlu0 %11234
    %11236 = vrot.lane.b32.xlu0 %v9424, 56
    %v11237 = vpop.permute.xlu0 %11236
    %11238 = vrot.lane.b32.xlu0 %v9429, 56
    %v11239 = vpop.permute.xlu0 %11238
    %11240 = vrot.lane.b32.xlu0 %v9436, 56
    %v11241 = vpop.permute.xlu0 %11240
    %11242 = vrot.lane.b32.xlu0 %v9441, 56
    %v11243 = vpop.permute.xlu0 %11242
    %11244 = vrot.lane.b32.xlu0 %v9448, 56
    %v11245 = vpop.permute.xlu0 %11244
    %11246 = vrot.lane.b32.xlu0 %v9453, 56
    %v11247 = vpop.permute.xlu0 %11246
    %11248 = vrot.lane.b32.xlu0 %v9460, 56
    %v11249 = vpop.permute.xlu0 %11248
    %11250 = vrot.lane.b32.xlu0 %v9465, 56
    %v11251 = vpop.permute.xlu0 %11250
    %11252 = vrot.lane.b32.xlu0 %v9472, 56
    %v11253 = vpop.permute.xlu0 %11252
    %11254 = vrot.lane.b32.xlu0 %v9477, 56
    %v11255 = vpop.permute.xlu0 %11254
    %11256 = vrot.lane.b32.xlu0 %v9484, 56
    %v11257 = vpop.permute.xlu0 %11256
    %11258 = vrot.lane.b32.xlu0 %v9489, 56
    %v11259 = vpop.permute.xlu0 %11258
    %11260 = vrot.lane.b32.xlu0 %v10586, 56
    %v11261 = vpop.permute.xlu0 %11260
    %11262 = vrot.lane.b32.xlu0 %v10591, 56
    %v11263 = vpop.permute.xlu0 %11262
    %11264 = vrot.lane.b32.xlu0 %v11194, 56
    %v11265 = vpop.permute.xlu0 %11264
    %11266 = vrot.lane.b32.xlu0 %v11199, 56
    %v11267 = vpop.permute.xlu0 %11266
    %11268 = vrot.lane.b32.xlu0 %v9520, 56
    %v11269 = vpop.permute.xlu0 %11268
    %11270 = vrot.lane.b32.xlu0 %v9525, 56
    %v11271 = vpop.permute.xlu0 %11270
    %11272 = vrot.lane.b32.xlu0 %v9532, 56
    %v11273 = vpop.permute.xlu0 %11272
    %11274 = vrot.lane.b32.xlu0 %v9537, 56
    %v11275 = vpop.permute.xlu0 %11274
    %11276 = vrot.lane.b32.xlu0 %v9544, 56
    %v11277 = vpop.permute.xlu0 %11276
    %11278 = vrot.lane.b32.xlu0 %v9549, 56
    %v11279 = vpop.permute.xlu0 %11278
    %11280 = vrot.lane.b32.xlu0 %v9556, 56
    %v11281 = vpop.permute.xlu0 %11280
    %11282 = vrot.lane.b32.xlu0 %v9561, 56
    %v11283 = vpop.permute.xlu0 %11282
    %11284 = vrot.lane.b32.xlu0 %v9568, 56
    %v11285 = vpop.permute.xlu0 %11284
    %11286 = vrot.lane.b32.xlu0 %v9573, 56
    %v11287 = vpop.permute.xlu0 %11286
    %11288 = vrot.lane.b32.xlu0 %v9580, 56
    %v11289 = vpop.permute.xlu0 %11288
    %11290 = vrot.lane.b32.xlu0 %v9585, 56
    %v11291 = vpop.permute.xlu0 %11290
    %11292 = vrot.lane.b32.xlu0 %v9592, 56
    %v11293 = vpop.permute.xlu0 %11292
    %11294 = vrot.lane.b32.xlu0 %v9597, 56
    %v11295 = vpop.permute.xlu0 %11294
    %11296 = vrot.lane.b32.xlu0 %v9604, 56
    %v11297 = vpop.permute.xlu0 %11296
    %11298 = vrot.lane.b32.xlu0 %v9609, 56
    %v11299 = vpop.permute.xlu0 %11298
    %11300 = vrot.lane.b32.xlu0 %v9616, 56
    %v11301 = vpop.permute.xlu0 %11300
    %11302 = vrot.lane.b32.xlu0 %v9621, 56
    %v11303 = vpop.permute.xlu0 %11302
    %11304 = vrot.lane.b32.xlu0 %v9628, 56
    %v11305 = vpop.permute.xlu0 %11304
    %11306 = vrot.lane.b32.xlu0 %v9633, 56
    %v11307 = vpop.permute.xlu0 %11306
    %11308 = vrot.lane.b32.xlu0 %v9640, 56
    %v11309 = vpop.permute.xlu0 %11308
    %11310 = vrot.lane.b32.xlu0 %v9645, 56
    %v11311 = vpop.permute.xlu0 %11310
    %11312 = vrot.lane.b32.xlu0 %v9652, 56
    %v11313 = vpop.permute.xlu0 %11312
    %11314 = vrot.lane.b32.xlu0 %v9657, 56
    %v11315 = vpop.permute.xlu0 %11314
    %11316 = vrot.lane.b32.xlu0 %v10598, 56
    %v11317 = vpop.permute.xlu0 %11316
    %11318 = vrot.lane.b32.xlu0 %v10603, 56
    %v11319 = vpop.permute.xlu0 %11318
    %11320 = vrot.lane.b32.xlu0 %v11206, 56
    %v11321 = vpop.permute.xlu0 %11320
    %11322 = vrot.lane.b32.xlu0 %v11211, 56
    %v11323 = vpop.permute.xlu0 %11322
    %v11382 = vsel %vm8895, %v6090, %v6081
    %v11383 = vsel %vm8897, %v6099, %v11382
    %v11384 = vsel %vm8899, %v6108, %v11383
    %v11385 = vsel %vm8901, %v6117, %v11384
    %v11386 = vsel %vm8903, %v6126, %v11385
    %v11387 = vsel %vm8905, %v6135, %v11386
    %v11388 = vsel %vm8907, %v6144, %v11387
    %v11389 = vsel %vm8895, %v6162, %v6153
    %v11390 = vsel %vm8897, %v6171, %v11389
    %v11391 = vsel %vm8899, %v6180, %v11390
    %v11392 = vsel %vm8901, %v6189, %v11391
    %v11393 = vsel %vm8903, %v6198, %v11392
    %v11394 = vsel %vm8895, %v8394, %v8385
    %v11395 = vsel %vm8897, %v8403, %v11394
    %v11396 = vsel %vm8899, %v8412, %v11395
    %v11397 = vsel %vm8901, %v8421, %v11396
    %v11398 = vsel %vm8903, %v8430, %v11397
    %v11399 = vsel %vm8905, %v8439, %v11398
    %v11400 = vsel %vm8907, %v8448, %v11399
    %v11401 = vsel %vm8895, %v8466, %v8457
    %v11402 = vsel %vm8897, %v8475, %v11401
    %v11403 = vsel %vm8899, %v8484, %v11402
    %v11404 = vsel %vm8901, %v8493, %v11403
    %v11405 = vsel %vm8903, %v8502, %v11404
    %11406 = vrot.lane.b32.xlu0 %v9884, 64
    %v11407 = vpop.permute.xlu0 %11406
    %11408 = vrot.lane.b32.xlu0 %v9889, 64
    %v11409 = vpop.permute.xlu0 %11408
    %11410 = vrot.lane.b32.xlu0 %v9896, 64
    %v11411 = vpop.permute.xlu0 %11410
    %11412 = vrot.lane.b32.xlu0 %v9901, 64
    %v11413 = vpop.permute.xlu0 %11412
    %11414 = vrot.lane.b32.xlu0 %v9908, 64
    %v11415 = vpop.permute.xlu0 %11414
    %11416 = vrot.lane.b32.xlu0 %v9913, 64
    %v11417 = vpop.permute.xlu0 %11416
    %11418 = vrot.lane.b32.xlu0 %v9920, 64
    %v11419 = vpop.permute.xlu0 %11418
    %11420 = vrot.lane.b32.xlu0 %v9925, 64
    %v11421 = vpop.permute.xlu0 %11420
    %11422 = vrot.lane.b32.xlu0 %v9932, 64
    %v11423 = vpop.permute.xlu0 %11422
    %11424 = vrot.lane.b32.xlu0 %v9937, 64
    %v11425 = vpop.permute.xlu0 %11424
    %11426 = vrot.lane.b32.xlu0 %v9944, 64
    %v11427 = vpop.permute.xlu0 %11426
    %11428 = vrot.lane.b32.xlu0 %v9949, 64
    %v11429 = vpop.permute.xlu0 %11428
    %11430 = vrot.lane.b32.xlu0 %v9956, 64
    %v11431 = vpop.permute.xlu0 %11430
    %11432 = vrot.lane.b32.xlu0 %v9961, 64
    %v11433 = vpop.permute.xlu0 %11432
    %11434 = vrot.lane.b32.xlu0 %v9968, 64
    %v11435 = vpop.permute.xlu0 %11434
    %11436 = vrot.lane.b32.xlu0 %v9973, 64
    %v11437 = vpop.permute.xlu0 %11436
    %11438 = vrot.lane.b32.xlu0 %v9980, 64
    %v11439 = vpop.permute.xlu0 %11438
    %11440 = vrot.lane.b32.xlu0 %v9985, 64
    %v11441 = vpop.permute.xlu0 %11440
    %11442 = vrot.lane.b32.xlu0 %v9992, 64
    %v11443 = vpop.permute.xlu0 %11442
    %11444 = vrot.lane.b32.xlu0 %v9997, 64
    %v11445 = vpop.permute.xlu0 %11444
    %11446 = vrot.lane.b32.xlu0 %v10004, 64
    %v11447 = vpop.permute.xlu0 %11446
    %11448 = vrot.lane.b32.xlu0 %v10009, 64
    %v11449 = vpop.permute.xlu0 %11448
    %11450 = vrot.lane.b32.xlu0 %v10016, 64
    %v11451 = vpop.permute.xlu0 %11450
    %11452 = vrot.lane.b32.xlu0 %v10021, 64
    %v11453 = vpop.permute.xlu0 %11452
    %11454 = vrot.lane.b32.xlu0 %v10780, 64
    %v11455 = vpop.permute.xlu0 %11454
    %11456 = vrot.lane.b32.xlu0 %v10785, 64
    %v11457 = vpop.permute.xlu0 %11456
    %11458 = vrot.lane.b32.xlu0 %v11388, 64
    %v11459 = vpop.permute.xlu0 %11458
    %11460 = vrot.lane.b32.xlu0 %v11393, 64
    %v11461 = vpop.permute.xlu0 %11460
    %11462 = vrot.lane.b32.xlu0 %v10052, 64
    %v11463 = vpop.permute.xlu0 %11462
    %11464 = vrot.lane.b32.xlu0 %v10057, 64
    %v11465 = vpop.permute.xlu0 %11464
    %11466 = vrot.lane.b32.xlu0 %v10064, 64
    %v11467 = vpop.permute.xlu0 %11466
    %11468 = vrot.lane.b32.xlu0 %v10069, 64
    %v11469 = vpop.permute.xlu0 %11468
    %11470 = vrot.lane.b32.xlu0 %v10076, 64
    %v11471 = vpop.permute.xlu0 %11470
    %11472 = vrot.lane.b32.xlu0 %v10081, 64
    %v11473 = vpop.permute.xlu0 %11472
    %11474 = vrot.lane.b32.xlu0 %v10088, 64
    %v11475 = vpop.permute.xlu0 %11474
    %11476 = vrot.lane.b32.xlu0 %v10093, 64
    %v11477 = vpop.permute.xlu0 %11476
    %11478 = vrot.lane.b32.xlu0 %v10100, 64
    %v11479 = vpop.permute.xlu0 %11478
    %11480 = vrot.lane.b32.xlu0 %v10105, 64
    %v11481 = vpop.permute.xlu0 %11480
    %11482 = vrot.lane.b32.xlu0 %v10112, 64
    %v11483 = vpop.permute.xlu0 %11482
    %11484 = vrot.lane.b32.xlu0 %v10117, 64
    %v11485 = vpop.permute.xlu0 %11484
    %11486 = vrot.lane.b32.xlu0 %v10124, 64
    %v11487 = vpop.permute.xlu0 %11486
    %11488 = vrot.lane.b32.xlu0 %v10129, 64
    %v11489 = vpop.permute.xlu0 %11488
    %11490 = vrot.lane.b32.xlu0 %v10136, 64
    %v11491 = vpop.permute.xlu0 %11490
    %11492 = vrot.lane.b32.xlu0 %v10141, 64
    %v11493 = vpop.permute.xlu0 %11492
    %11494 = vrot.lane.b32.xlu0 %v10148, 64
    %v11495 = vpop.permute.xlu0 %11494
    %11496 = vrot.lane.b32.xlu0 %v10153, 64
    %v11497 = vpop.permute.xlu0 %11496
    %11498 = vrot.lane.b32.xlu0 %v10160, 64
    %v11499 = vpop.permute.xlu0 %11498
    %11500 = vrot.lane.b32.xlu0 %v10165, 64
    %v11501 = vpop.permute.xlu0 %11500
    %11502 = vrot.lane.b32.xlu0 %v10172, 64
    %v11503 = vpop.permute.xlu0 %11502
    %11504 = vrot.lane.b32.xlu0 %v10177, 64
    %v11505 = vpop.permute.xlu0 %11504
    %11506 = vrot.lane.b32.xlu0 %v10184, 64
    %v11507 = vpop.permute.xlu0 %11506
    %11508 = vrot.lane.b32.xlu0 %v10189, 64
    %v11509 = vpop.permute.xlu0 %11508
    %11510 = vrot.lane.b32.xlu0 %v10792, 64
    %v11511 = vpop.permute.xlu0 %11510
    %11512 = vrot.lane.b32.xlu0 %v10797, 64
    %v11513 = vpop.permute.xlu0 %11512
    %11514 = vrot.lane.b32.xlu0 %v11400, 64
    %v11515 = vpop.permute.xlu0 %11514
    %11516 = vrot.lane.b32.xlu0 %v11405, 64
    %v11517 = vpop.permute.xlu0 %11516
    %vm11574 = vcmask 64512
    %v11575 = vsel %vm11574, %v8908, %v9659
    %v11576 = vsel %vm11574, %v8913, %v9661
    %v11577 = vsel %vm11574, %v8920, %v9663
    %v11578 = vsel %vm11574, %v8925, %v9665
    %v11579 = vsel %vm11574, %v8932, %v9667
    %v11580 = vsel %vm11574, %v8937, %v9669
    %v11581 = vsel %vm11574, %v8944, %v9671
    %v11582 = vsel %vm11574, %v8949, %v9673
    %v11583 = vsel %vm11574, %v8956, %v9675
    %v11584 = vsel %vm11574, %v8961, %v9677
    %v11585 = vsel %vm11574, %v8968, %v9679
    %v11586 = vsel %vm11574, %v8973, %v9681
    %v11587 = vsel %vm11574, %v8980, %v9683
    %v11588 = vsel %vm11574, %v8985, %v9685
    %v11589 = vsel %vm11574, %v8992, %v9687
    %v11590 = vsel %vm11574, %v8997, %v9689
    %v11591 = vsel %vm11574, %v9004, %v9691
    %v11592 = vsel %vm11574, %v9009, %v9693
    %v11593 = vsel %vm11574, %v9016, %v9695
    %v11594 = vsel %vm11574, %v9021, %v9697
    %v11595 = vsel %vm11574, %v9028, %v9699
    %v11596 = vsel %vm11574, %v9033, %v9701
    %v11597 = vsel %vm11574, %v9040, %v9703
    %v11598 = vsel %vm11574, %v9045, %v9705
    %v11599 = vsel %vm11574, %v9052, %v9707
    %v11600 = vsel %vm11574, %v9057, %v9709
    %v11601 = vsel %vm11574, %v9064, %v9711
    %v11602 = vsel %vm11574, %v9069, %v9713
    %v11603 = vsel %vm11574, %v9076, %v9715
    %v11604 = vsel %vm11574, %v9081, %v9717
    %v11605 = vsel %vm11574, %v9088, %v9719
    %v11606 = vsel %vm11574, %v9093, %v9721
    %v11607 = vsel %vm11574, %v9100, %v9723
    %v11608 = vsel %vm11574, %v9105, %v9725
    %v11609 = vsel %vm11574, %v9112, %v9727
    %v11610 = vsel %vm11574, %v9117, %v9729
    %v11611 = vsel %vm11574, %v9124, %v9731
    %v11612 = vsel %vm11574, %v9129, %v9733
    %v11613 = vsel %vm11574, %v9136, %v9735
    %v11614 = vsel %vm11574, %v9141, %v9737
    %v11615 = vsel %vm11574, %v9148, %v9739
    %v11616 = vsel %vm11574, %v9153, %v9741
    %v11617 = vsel %vm11574, %v9160, %v9743
    %v11618 = vsel %vm11574, %v9165, %v9745
    %v11619 = vsel %vm11574, %v9172, %v9747
    %v11620 = vsel %vm11574, %v9177, %v9749
    %v11621 = vsel %vm11574, %v9184, %v9751
    %v11622 = vsel %vm11574, %v9189, %v9753
    %v11623 = vsel %vm11574, %v9196, %v9755
    %v11624 = vsel %vm11574, %v9201, %v9757
    %v11625 = vsel %vm11574, %v9208, %v9759
    %v11626 = vsel %vm11574, %v9213, %v9761
    %v11627 = vsel %vm11574, %v9220, %v9763
    %v11628 = vsel %vm11574, %v9225, %v9765
    %v11629 = vsel %vm11574, %v9232, %v9767
    %v11630 = vsel %vm11574, %v9237, %v9769
    %vm11631 = vcmask 130048
    %v11632 = vsel %vm11631, %v11575, %v10191
    %v11633 = vsel %vm11631, %v11576, %v10193
    %v11634 = vsel %vm11631, %v11577, %v10195
    %v11635 = vsel %vm11631, %v11578, %v10197
    %v11636 = vsel %vm11631, %v11579, %v10199
    %v11637 = vsel %vm11631, %v11580, %v10201
    %v11638 = vsel %vm11631, %v11581, %v10203
    %v11639 = vsel %vm11631, %v11582, %v10205
    %v11640 = vsel %vm11631, %v11583, %v10207
    %v11641 = vsel %vm11631, %v11584, %v10209
    %v11642 = vsel %vm11631, %v11585, %v10211
    %v11643 = vsel %vm11631, %v11586, %v10213
    %v11644 = vsel %vm11631, %v11587, %v10215
    %v11645 = vsel %vm11631, %v11588, %v10217
    %v11646 = vsel %vm11631, %v11589, %v10219
    %v11647 = vsel %vm11631, %v11590, %v10221
    %v11648 = vsel %vm11631, %v11591, %v10223
    %v11649 = vsel %vm11631, %v11592, %v10225
    %v11650 = vsel %vm11631, %v11593, %v10227
    %v11651 = vsel %vm11631, %v11594, %v10229
    %v11652 = vsel %vm11631, %v11595, %v10231
    %v11653 = vsel %vm11631, %v11596, %v10233
    %v11654 = vsel %vm11631, %v11597, %v10235
    %v11655 = vsel %vm11631, %v11598, %v10237
    %v11656 = vsel %vm11631, %v11599, %v10239
    %v11657 = vsel %vm11631, %v11600, %v10241
    %v11658 = vsel %vm11631, %v11601, %v10243
    %v11659 = vsel %vm11631, %v11602, %v10245
    %v11660 = vsel %vm11631, %v11603, %v10247
    %v11661 = vsel %vm11631, %v11604, %v10249
    %v11662 = vsel %vm11631, %v11605, %v10251
    %v11663 = vsel %vm11631, %v11606, %v10253
    %v11664 = vsel %vm11631, %v11607, %v10255
    %v11665 = vsel %vm11631, %v11608, %v10257
    %v11666 = vsel %vm11631, %v11609, %v10259
    %v11667 = vsel %vm11631, %v11610, %v10261
    %v11668 = vsel %vm11631, %v11611, %v10263
    %v11669 = vsel %vm11631, %v11612, %v10265
    %v11670 = vsel %vm11631, %v11613, %v10267
    %v11671 = vsel %vm11631, %v11614, %v10269
    %v11672 = vsel %vm11631, %v11615, %v10271
    %v11673 = vsel %vm11631, %v11616, %v10273
    %v11674 = vsel %vm11631, %v11617, %v10275
    %v11675 = vsel %vm11631, %v11618, %v10277
    %v11676 = vsel %vm11631, %v11619, %v10279
    %v11677 = vsel %vm11631, %v11620, %v10281
    %v11678 = vsel %vm11631, %v11621, %v10283
    %v11679 = vsel %vm11631, %v11622, %v10285
    %v11680 = vsel %vm11631, %v11623, %v10287
    %v11681 = vsel %vm11631, %v11624, %v10289
    %v11682 = vsel %vm11631, %v11625, %v10291
    %v11683 = vsel %vm11631, %v11626, %v10293
    %v11684 = vsel %vm11631, %v11627, %v10295
    %v11685 = vsel %vm11631, %v11628, %v10297
    %v11686 = vsel %vm11631, %v11629, %v10299
    %v11687 = vsel %vm11631, %v11630, %v10301
    %vm11688 = vcmask 195584
    %v11689 = vsel %vm11688, %v11632, %v10411
    %v11690 = vsel %vm11688, %v11633, %v10413
    %v11691 = vsel %vm11688, %v11634, %v10415
    %v11692 = vsel %vm11688, %v11635, %v10417
    %v11693 = vsel %vm11688, %v11636, %v10419
    %v11694 = vsel %vm11688, %v11637, %v10421
    %v11695 = vsel %vm11688, %v11638, %v10423
    %v11696 = vsel %vm11688, %v11639, %v10425
    %v11697 = vsel %vm11688, %v11640, %v10427
    %v11698 = vsel %vm11688, %v11641, %v10429
    %v11699 = vsel %vm11688, %v11642, %v10431
    %v11700 = vsel %vm11688, %v11643, %v10433
    %v11701 = vsel %vm11688, %v11644, %v10435
    %v11702 = vsel %vm11688, %v11645, %v10437
    %v11703 = vsel %vm11688, %v11646, %v10439
    %v11704 = vsel %vm11688, %v11647, %v10441
    %v11705 = vsel %vm11688, %v11648, %v10443
    %v11706 = vsel %vm11688, %v11649, %v10445
    %v11707 = vsel %vm11688, %v11650, %v10447
    %v11708 = vsel %vm11688, %v11651, %v10449
    %v11709 = vsel %vm11688, %v11652, %v10451
    %v11710 = vsel %vm11688, %v11653, %v10453
    %v11711 = vsel %vm11688, %v11654, %v10455
    %v11712 = vsel %vm11688, %v11655, %v10457
    %v11713 = vsel %vm11688, %v11656, %v10459
    %v11714 = vsel %vm11688, %v11657, %v10461
    %v11715 = vsel %vm11688, %v11658, %v10463
    %v11716 = vsel %vm11688, %v11659, %v10465
    %v11717 = vsel %vm11688, %v11660, %v10467
    %v11718 = vsel %vm11688, %v11661, %v10469
    %v11719 = vsel %vm11688, %v11662, %v10471
    %v11720 = vsel %vm11688, %v11663, %v10473
    %v11721 = vsel %vm11688, %v11664, %v10475
    %v11722 = vsel %vm11688, %v11665, %v10477
    %v11723 = vsel %vm11688, %v11666, %v10479
    %v11724 = vsel %vm11688, %v11667, %v10481
    %v11725 = vsel %vm11688, %v11668, %v10483
    %v11726 = vsel %vm11688, %v11669, %v10485
    %v11727 = vsel %vm11688, %v11670, %v10487
    %v11728 = vsel %vm11688, %v11671, %v10489
    %v11729 = vsel %vm11688, %v11672, %v10491
    %v11730 = vsel %vm11688, %v11673, %v10493
    %v11731 = vsel %vm11688, %v11674, %v10495
    %v11732 = vsel %vm11688, %v11675, %v10497
    %v11733 = vsel %vm11688, %v11676, %v10499
    %v11734 = vsel %vm11688, %v11677, %v10501
    %v11735 = vsel %vm11688, %v11678, %v10503
    %v11736 = vsel %vm11688, %v11679, %v10505
    %v11737 = vsel %vm11688, %v11680, %v10507
    %v11738 = vsel %vm11688, %v11681, %v10509
    %v11739 = vsel %vm11688, %v11682, %v10511
    %v11740 = vsel %vm11688, %v11683, %v10513
    %v11741 = vsel %vm11688, %v11684, %v10515
    %v11742 = vsel %vm11688, %v11685, %v10517
    %v11743 = vsel %vm11688, %v11686, %v10519
    %v11744 = vsel %vm11688, %v11687, %v10521
    %vm11745 = vcmask 261120
    %v11746 = vsel %vm11745, %v11689, %v10605
    %v11747 = vsel %vm11745, %v11690, %v10607
    %v11748 = vsel %vm11745, %v11691, %v10609
    %v11749 = vsel %vm11745, %v11692, %v10611
    %v11750 = vsel %vm11745, %v11693, %v10613
    %v11751 = vsel %vm11745, %v11694, %v10615
    %v11752 = vsel %vm11745, %v11695, %v10617
    %v11753 = vsel %vm11745, %v11696, %v10619
    %v11754 = vsel %vm11745, %v11697, %v10621
    %v11755 = vsel %vm11745, %v11698, %v10623
    %v11756 = vsel %vm11745, %v11699, %v10625
    %v11757 = vsel %vm11745, %v11700, %v10627
    %v11758 = vsel %vm11745, %v11701, %v10629
    %v11759 = vsel %vm11745, %v11702, %v10631
    %v11760 = vsel %vm11745, %v11703, %v10633
    %v11761 = vsel %vm11745, %v11704, %v10635
    %v11762 = vsel %vm11745, %v11705, %v10637
    %v11763 = vsel %vm11745, %v11706, %v10639
    %v11764 = vsel %vm11745, %v11707, %v10641
    %v11765 = vsel %vm11745, %v11708, %v10643
    %v11766 = vsel %vm11745, %v11709, %v10645
    %v11767 = vsel %vm11745, %v11710, %v10647
    %v11768 = vsel %vm11745, %v11711, %v10649
    %v11769 = vsel %vm11745, %v11712, %v10651
    %v11770 = vsel %vm11745, %v11713, %v10653
    %v11771 = vsel %vm11745, %v11714, %v10655
    %v11772 = vsel %vm11745, %v11715, %v10657
    %v11773 = vsel %vm11745, %v11716, %v10659
    %v11774 = vsel %vm11745, %v11717, %v10661
    %v11775 = vsel %vm11745, %v11718, %v10663
    %v11776 = vsel %vm11745, %v11719, %v10665
    %v11777 = vsel %vm11745, %v11720, %v10667
    %v11778 = vsel %vm11745, %v11721, %v10669
    %v11779 = vsel %vm11745, %v11722, %v10671
    %v11780 = vsel %vm11745, %v11723, %v10673
    %v11781 = vsel %vm11745, %v11724, %v10675
    %v11782 = vsel %vm11745, %v11725, %v10677
    %v11783 = vsel %vm11745, %v11726, %v10679
    %v11784 = vsel %vm11745, %v11727, %v10681
    %v11785 = vsel %vm11745, %v11728, %v10683
    %v11786 = vsel %vm11745, %v11729, %v10685
    %v11787 = vsel %vm11745, %v11730, %v10687
    %v11788 = vsel %vm11745, %v11731, %v10689
    %v11789 = vsel %vm11745, %v11732, %v10691
    %v11790 = vsel %vm11745, %v11733, %v10693
    %v11791 = vsel %vm11745, %v11734, %v10695
    %v11792 = vsel %vm11745, %v11735, %v10697
    %v11793 = vsel %vm11745, %v11736, %v10699
    %v11794 = vsel %vm11745, %v11737, %v10701
    %v11795 = vsel %vm11745, %v11738, %v10703
    %v11796 = vsel %vm11745, %v11739, %v10705
    %v11797 = vsel %vm11745, %v11740, %v10707
    %v11798 = vsel %vm11745, %v11741, %v10709
    %v11799 = vsel %vm11745, %v11742, %v10711
    %v11800 = vsel %vm11745, %v11743, %v10713
    %v11801 = vsel %vm11745, %v11744, %v10715
    %vm11802 = vcmask 326656
    %v11803 = vsel %vm11802, %v11746, %v10799
    %v11804 = vsel %vm11802, %v11747, %v10801
    %v11805 = vsel %vm11802, %v11748, %v10803
    %v11806 = vsel %vm11802, %v11749, %v10805
    %v11807 = vsel %vm11802, %v11750, %v10807
    %v11808 = vsel %vm11802, %v11751, %v10809
    %v11809 = vsel %vm11802, %v11752, %v10811
    %v11810 = vsel %vm11802, %v11753, %v10813
    %v11811 = vsel %vm11802, %v11754, %v10815
    %v11812 = vsel %vm11802, %v11755, %v10817
    %v11813 = vsel %vm11802, %v11756, %v10819
    %v11814 = vsel %vm11802, %v11757, %v10821
    %v11815 = vsel %vm11802, %v11758, %v10823
    %v11816 = vsel %vm11802, %v11759, %v10825
    %v11817 = vsel %vm11802, %v11760, %v10827
    %v11818 = vsel %vm11802, %v11761, %v10829
    %v11819 = vsel %vm11802, %v11762, %v10831
    %v11820 = vsel %vm11802, %v11763, %v10833
    %v11821 = vsel %vm11802, %v11764, %v10835
    %v11822 = vsel %vm11802, %v11765, %v10837
    %v11823 = vsel %vm11802, %v11766, %v10839
    %v11824 = vsel %vm11802, %v11767, %v10841
    %v11825 = vsel %vm11802, %v11768, %v10843
    %v11826 = vsel %vm11802, %v11769, %v10845
    %v11827 = vsel %vm11802, %v11770, %v10847
    %v11828 = vsel %vm11802, %v11771, %v10849
    %v11829 = vsel %vm11802, %v11772, %v10851
    %v11830 = vsel %vm11802, %v11773, %v10853
    %v11831 = vsel %vm11802, %v11774, %v10855
    %v11832 = vsel %vm11802, %v11775, %v10857
    %v11833 = vsel %vm11802, %v11776, %v10859
    %v11834 = vsel %vm11802, %v11777, %v10861
    %v11835 = vsel %vm11802, %v11778, %v10863
    %v11836 = vsel %vm11802, %v11779, %v10865
    %v11837 = vsel %vm11802, %v11780, %v10867
    %v11838 = vsel %vm11802, %v11781, %v10869
    %v11839 = vsel %vm11802, %v11782, %v10871
    %v11840 = vsel %vm11802, %v11783, %v10873
    %v11841 = vsel %vm11802, %v11784, %v10875
    %v11842 = vsel %vm11802, %v11785, %v10877
    %v11843 = vsel %vm11802, %v11786, %v10879
    %v11844 = vsel %vm11802, %v11787, %v10881
    %v11845 = vsel %vm11802, %v11788, %v10883
    %v11846 = vsel %vm11802, %v11789, %v10885
    %v11847 = vsel %vm11802, %v11790, %v10887
    %v11848 = vsel %vm11802, %v11791, %v10889
    %v11849 = vsel %vm11802, %v11792, %v10891
    %v11850 = vsel %vm11802, %v11793, %v10893
    %v11851 = vsel %vm11802, %v11794, %v10895
    %v11852 = vsel %vm11802, %v11795, %v10897
    %v11853 = vsel %vm11802, %v11796, %v10899
    %v11854 = vsel %vm11802, %v11797, %v10901
    %v11855 = vsel %vm11802, %v11798, %v10903
    %v11856 = vsel %vm11802, %v11799, %v10905
    %v11857 = vsel %vm11802, %v11800, %v10907
    %v11858 = vsel %vm11802, %v11801, %v10909
    %vm11859 = vcmask 392192
    %v11860 = vsel %vm11859, %v11803, %v11019
    %v11861 = vsel %vm11859, %v11804, %v11021
    %v11862 = vsel %vm11859, %v11805, %v11023
    %v11863 = vsel %vm11859, %v11806, %v11025
    %v11864 = vsel %vm11859, %v11807, %v11027
    %v11865 = vsel %vm11859, %v11808, %v11029
    %v11866 = vsel %vm11859, %v11809, %v11031
    %v11867 = vsel %vm11859, %v11810, %v11033
    %v11868 = vsel %vm11859, %v11811, %v11035
    %v11869 = vsel %vm11859, %v11812, %v11037
    %v11870 = vsel %vm11859, %v11813, %v11039
    %v11871 = vsel %vm11859, %v11814, %v11041
    %v11872 = vsel %vm11859, %v11815, %v11043
    %v11873 = vsel %vm11859, %v11816, %v11045
    %v11874 = vsel %vm11859, %v11817, %v11047
    %v11875 = vsel %vm11859, %v11818, %v11049
    %v11876 = vsel %vm11859, %v11819, %v11051
    %v11877 = vsel %vm11859, %v11820, %v11053
    %v11878 = vsel %vm11859, %v11821, %v11055
    %v11879 = vsel %vm11859, %v11822, %v11057
    %v11880 = vsel %vm11859, %v11823, %v11059
    %v11881 = vsel %vm11859, %v11824, %v11061
    %v11882 = vsel %vm11859, %v11825, %v11063
    %v11883 = vsel %vm11859, %v11826, %v11065
    %v11884 = vsel %vm11859, %v11827, %v11067
    %v11885 = vsel %vm11859, %v11828, %v11069
    %v11886 = vsel %vm11859, %v11829, %v11071
    %v11887 = vsel %vm11859, %v11830, %v11073
    %v11888 = vsel %vm11859, %v11831, %v11075
    %v11889 = vsel %vm11859, %v11832, %v11077
    %v11890 = vsel %vm11859, %v11833, %v11079
    %v11891 = vsel %vm11859, %v11834, %v11081
    %v11892 = vsel %vm11859, %v11835, %v11083
    %v11893 = vsel %vm11859, %v11836, %v11085
    %v11894 = vsel %vm11859, %v11837, %v11087
    %v11895 = vsel %vm11859, %v11838, %v11089
    %v11896 = vsel %vm11859, %v11839, %v11091
    %v11897 = vsel %vm11859, %v11840, %v11093
    %v11898 = vsel %vm11859, %v11841, %v11095
    %v11899 = vsel %vm11859, %v11842, %v11097
    %v11900 = vsel %vm11859, %v11843, %v11099
    %v11901 = vsel %vm11859, %v11844, %v11101
    %v11902 = vsel %vm11859, %v11845, %v11103
    %v11903 = vsel %vm11859, %v11846, %v11105
    %v11904 = vsel %vm11859, %v11847, %v11107
    %v11905 = vsel %vm11859, %v11848, %v11109
    %v11906 = vsel %vm11859, %v11849, %v11111
    %v11907 = vsel %vm11859, %v11850, %v11113
    %v11908 = vsel %vm11859, %v11851, %v11115
    %v11909 = vsel %vm11859, %v11852, %v11117
    %v11910 = vsel %vm11859, %v11853, %v11119
    %v11911 = vsel %vm11859, %v11854, %v11121
    %v11912 = vsel %vm11859, %v11855, %v11123
    %v11913 = vsel %vm11859, %v11856, %v11125
    %v11914 = vsel %vm11859, %v11857, %v11127
    %v11915 = vsel %vm11859, %v11858, %v11129
    %vm11916 = vcmask 457728
    %v11917 = vsel %vm11916, %v11860, %v11213
    %v11918 = vsel %vm11916, %v11861, %v11215
    %v11919 = vsel %vm11916, %v11862, %v11217
    %v11920 = vsel %vm11916, %v11863, %v11219
    %v11921 = vsel %vm11916, %v11864, %v11221
    %v11922 = vsel %vm11916, %v11865, %v11223
    %v11923 = vsel %vm11916, %v11866, %v11225
    %v11924 = vsel %vm11916, %v11867, %v11227
    %v11925 = vsel %vm11916, %v11868, %v11229
    %v11926 = vsel %vm11916, %v11869, %v11231
    %v11927 = vsel %vm11916, %v11870, %v11233
    %v11928 = vsel %vm11916, %v11871, %v11235
    %v11929 = vsel %vm11916, %v11872, %v11237
    %v11930 = vsel %vm11916, %v11873, %v11239
    %v11931 = vsel %vm11916, %v11874, %v11241
    %v11932 = vsel %vm11916, %v11875, %v11243
    %v11933 = vsel %vm11916, %v11876, %v11245
    %v11934 = vsel %vm11916, %v11877, %v11247
    %v11935 = vsel %vm11916, %v11878, %v11249
    %v11936 = vsel %vm11916, %v11879, %v11251
    %v11937 = vsel %vm11916, %v11880, %v11253
    %v11938 = vsel %vm11916, %v11881, %v11255
    %v11939 = vsel %vm11916, %v11882, %v11257
    %v11940 = vsel %vm11916, %v11883, %v11259
    %v11941 = vsel %vm11916, %v11884, %v11261
    %v11942 = vsel %vm11916, %v11885, %v11263
    %v11943 = vsel %vm11916, %v11886, %v11265
    %v11944 = vsel %vm11916, %v11887, %v11267
    %v11945 = vsel %vm11916, %v11888, %v11269
    %v11946 = vsel %vm11916, %v11889, %v11271
    %v11947 = vsel %vm11916, %v11890, %v11273
    %v11948 = vsel %vm11916, %v11891, %v11275
    %v11949 = vsel %vm11916, %v11892, %v11277
    %v11950 = vsel %vm11916, %v11893, %v11279
    %v11951 = vsel %vm11916, %v11894, %v11281
    %v11952 = vsel %vm11916, %v11895, %v11283
    %v11953 = vsel %vm11916, %v11896, %v11285
    %v11954 = vsel %vm11916, %v11897, %v11287
    %v11955 = vsel %vm11916, %v11898, %v11289
    %v11956 = vsel %vm11916, %v11899, %v11291
    %v11957 = vsel %vm11916, %v11900, %v11293
    %v11958 = vsel %vm11916, %v11901, %v11295
    %v11959 = vsel %vm11916, %v11902, %v11297
    %v11960 = vsel %vm11916, %v11903, %v11299
    %v11961 = vsel %vm11916, %v11904, %v11301
    %v11962 = vsel %vm11916, %v11905, %v11303
    %v11963 = vsel %vm11916, %v11906, %v11305
    %v11964 = vsel %vm11916, %v11907, %v11307
    %v11965 = vsel %vm11916, %v11908, %v11309
    %v11966 = vsel %vm11916, %v11909, %v11311
    %v11967 = vsel %vm11916, %v11910, %v11313
    %v11968 = vsel %vm11916, %v11911, %v11315
    %v11969 = vsel %vm11916, %v11912, %v11317
    %v11970 = vsel %vm11916, %v11913, %v11319
    %v11971 = vsel %vm11916, %v11914, %v11321
    %v11972 = vsel %vm11916, %v11915, %v11323
    %vm11973 = vcmask 523264
    %v11974 = vsel %vm11973, %v11917, %v11407
    %v11975 = vsel %vm11973, %v11918, %v11409
    %v11976 = vsel %vm11973, %v11919, %v11411
    %v11977 = vsel %vm11973, %v11920, %v11413
    %v11978 = vsel %vm11973, %v11921, %v11415
    %v11979 = vsel %vm11973, %v11922, %v11417
    %v11980 = vsel %vm11973, %v11923, %v11419
    %v11981 = vsel %vm11973, %v11924, %v11421
    %v11982 = vsel %vm11973, %v11925, %v11423
    %v11983 = vsel %vm11973, %v11926, %v11425
    %v11984 = vsel %vm11973, %v11927, %v11427
    %v11985 = vsel %vm11973, %v11928, %v11429
    %v11986 = vsel %vm11973, %v11929, %v11431
    %v11987 = vsel %vm11973, %v11930, %v11433
    %v11988 = vsel %vm11973, %v11931, %v11435
    %v11989 = vsel %vm11973, %v11932, %v11437
    %v11990 = vsel %vm11973, %v11933, %v11439
    %v11991 = vsel %vm11973, %v11934, %v11441
    %v11992 = vsel %vm11973, %v11935, %v11443
    %v11993 = vsel %vm11973, %v11936, %v11445
    %v11994 = vsel %vm11973, %v11937, %v11447
    %v11995 = vsel %vm11973, %v11938, %v11449
    %v11996 = vsel %vm11973, %v11939, %v11451
    %v11997 = vsel %vm11973, %v11940, %v11453
    %v11998 = vsel %vm11973, %v11941, %v11455
    %v11999 = vsel %vm11973, %v11942, %v11457
    %v12000 = vsel %vm11973, %v11943, %v11459
    %v12001 = vsel %vm11973, %v11944, %v11461
    %v12002 = vsel %vm11973, %v11945, %v11463
    %v12003 = vsel %vm11973, %v11946, %v11465
    %v12004 = vsel %vm11973, %v11947, %v11467
    %v12005 = vsel %vm11973, %v11948, %v11469
    %v12006 = vsel %vm11973, %v11949, %v11471
    %v12007 = vsel %vm11973, %v11950, %v11473
    %v12008 = vsel %vm11973, %v11951, %v11475
    %v12009 = vsel %vm11973, %v11952, %v11477
    %v12010 = vsel %vm11973, %v11953, %v11479
    %v12011 = vsel %vm11973, %v11954, %v11481
    %v12012 = vsel %vm11973, %v11955, %v11483
    %v12013 = vsel %vm11973, %v11956, %v11485
    %v12014 = vsel %vm11973, %v11957, %v11487
    %v12015 = vsel %vm11973, %v11958, %v11489
    %v12016 = vsel %vm11973, %v11959, %v11491
    %v12017 = vsel %vm11973, %v11960, %v11493
    %v12018 = vsel %vm11973, %v11961, %v11495
    %v12019 = vsel %vm11973, %v11962, %v11497
    %v12020 = vsel %vm11973, %v11963, %v11499
    %v12021 = vsel %vm11973, %v11964, %v11501
    %v12022 = vsel %vm11973, %v11965, %v11503
    %v12023 = vsel %vm11973, %v11966, %v11505
    %v12024 = vsel %vm11973, %v11967, %v11507
    %v12025 = vsel %vm11973, %v11968, %v11509
    %v12026 = vsel %vm11973, %v11969, %v11511
    %v12027 = vsel %vm11973, %v11970, %v11513
    %v12028 = vsel %vm11973, %v11971, %v11515
    %v12029 = vsel %vm11973, %v11972, %v11517
    %v12086 = vrot.slane %v11974, 2
    %v12087 = vrot.slane %v11974, 4
    %v12088 = vrot.slane %v11974, 6
    %v12089 = vrot.slane %v11975, 2
    %v12090 = vrot.slane %v11975, 4
    %v12091 = vrot.slane %v11976, 2
    %v12092 = vrot.slane %v11976, 4
    %v12093 = vrot.slane %v11976, 6
    %v12094 = vrot.slane %v11977, 2
    %v12095 = vrot.slane %v11977, 4
    %v12096 = vrot.slane %v11978, 2
    %v12097 = vrot.slane %v11978, 4
    %v12098 = vrot.slane %v11978, 6
    %v12099 = vrot.slane %v11979, 2
    %v12100 = vrot.slane %v11979, 4
    %v12101 = vrot.slane %v11980, 2
    %v12102 = vrot.slane %v11980, 4
    %v12103 = vrot.slane %v11980, 6
    %v12104 = vrot.slane %v11981, 2
    %v12105 = vrot.slane %v11981, 4
    %v12106 = vrot.slane %v11982, 2
    %v12107 = vrot.slane %v11982, 4
    %v12108 = vrot.slane %v11982, 6
    %v12109 = vrot.slane %v11983, 2
    %v12110 = vrot.slane %v11983, 4
    %v12111 = vrot.slane %v11984, 2
    %v12112 = vrot.slane %v11984, 4
    %v12113 = vrot.slane %v11984, 6
    %v12114 = vrot.slane %v11985, 2
    %v12115 = vrot.slane %v11985, 4
    %v12116 = vrot.slane %v11986, 2
    %v12117 = vrot.slane %v11986, 4
    %v12118 = vrot.slane %v11986, 6
    %v12119 = vrot.slane %v11987, 2
    %v12120 = vrot.slane %v11987, 4
    %v12121 = vrot.slane %v11988, 2
    %v12122 = vrot.slane %v11988, 4
    %v12123 = vrot.slane %v11988, 6
    %v12124 = vrot.slane %v11989, 2
    %v12125 = vrot.slane %v11989, 4
    %v12126 = vrot.slane %v11990, 2
    %v12127 = vrot.slane %v11990, 4
    %v12128 = vrot.slane %v11990, 6
    %v12129 = vrot.slane %v11991, 2
    %v12130 = vrot.slane %v11991, 4
    %v12131 = vrot.slane %v11992, 2
    %v12132 = vrot.slane %v11992, 4
    %v12133 = vrot.slane %v11992, 6
    %v12134 = vrot.slane %v11993, 2
    %v12135 = vrot.slane %v11993, 4
    %v12136 = vrot.slane %v11994, 2
    %v12137 = vrot.slane %v11994, 4
    %v12138 = vrot.slane %v11994, 6
    %v12139 = vrot.slane %v11995, 2
    %v12140 = vrot.slane %v11995, 4
    %v12141 = vrot.slane %v11996, 2
    %v12142 = vrot.slane %v11996, 4
    %v12143 = vrot.slane %v11996, 6
    %v12144 = vrot.slane %v11997, 2
    %v12145 = vrot.slane %v11997, 4
    %v12146 = vrot.slane %v11998, 2
    %v12147 = vrot.slane %v11998, 4
    %v12148 = vrot.slane %v11998, 6
    %v12149 = vrot.slane %v11999, 2
    %v12150 = vrot.slane %v11999, 4
    %v12151 = vrot.slane %v12000, 2
    %v12152 = vrot.slane %v12000, 4
    %v12153 = vrot.slane %v12000, 6
    %v12154 = vrot.slane %v12001, 2
    %v12155 = vrot.slane %v12001, 4
    %v12156 = vrot.slane %v12002, 2
    %v12157 = vrot.slane %v12002, 4
    %v12158 = vrot.slane %v12002, 6
    %v12159 = vrot.slane %v12003, 2
    %v12160 = vrot.slane %v12003, 4
    %v12161 = vrot.slane %v12004, 2
    %v12162 = vrot.slane %v12004, 4
    %v12163 = vrot.slane %v12004, 6
    %v12164 = vrot.slane %v12005, 2
    %v12165 = vrot.slane %v12005, 4
    %v12166 = vrot.slane %v12006, 2
    %v12167 = vrot.slane %v12006, 4
    %v12168 = vrot.slane %v12006, 6
    %v12169 = vrot.slane %v12007, 2
    %v12170 = vrot.slane %v12007, 4
    %v12171 = vrot.slane %v12008, 2
    %v12172 = vrot.slane %v12008, 4
    %v12173 = vrot.slane %v12008, 6
    %v12174 = vrot.slane %v12009, 2
    %v12175 = vrot.slane %v12009, 4
    %v12176 = vrot.slane %v12010, 2
    %v12177 = vrot.slane %v12010, 4
    %v12178 = vrot.slane %v12010, 6
    %v12179 = vrot.slane %v12011, 2
    %v12180 = vrot.slane %v12011, 4
    %v12181 = vrot.slane %v12012, 2
    %v12182 = vrot.slane %v12012, 4
    %v12183 = vrot.slane %v12012, 6
    %v12184 = vrot.slane %v12013, 2
    %v12185 = vrot.slane %v12013, 4
    %v12186 = vrot.slane %v12014, 2
    %v12187 = vrot.slane %v12014, 4
    %v12188 = vrot.slane %v12014, 6
    %v12189 = vrot.slane %v12015, 2
    %v12190 = vrot.slane %v12015, 4
    %v12191 = vrot.slane %v12016, 2
    %v12192 = vrot.slane %v12016, 4
    %v12193 = vrot.slane %v12016, 6
    %v12194 = vrot.slane %v12017, 2
    %v12195 = vrot.slane %v12017, 4
    %v12196 = vrot.slane %v12018, 2
    %v12197 = vrot.slane %v12018, 4
    %v12198 = vrot.slane %v12018, 6
    %v12199 = vrot.slane %v12019, 2
    %v12200 = vrot.slane %v12019, 4
    %v12201 = vrot.slane %v12020, 2
    %v12202 = vrot.slane %v12020, 4
    %v12203 = vrot.slane %v12020, 6
    %v12204 = vrot.slane %v12021, 2
    %v12205 = vrot.slane %v12021, 4
    %v12206 = vrot.slane %v12022, 2
    %v12207 = vrot.slane %v12022, 4
    %v12208 = vrot.slane %v12022, 6
    %v12209 = vrot.slane %v12023, 2
    %v12210 = vrot.slane %v12023, 4
    %v12211 = vrot.slane %v12024, 2
    %v12212 = vrot.slane %v12024, 4
    %v12213 = vrot.slane %v12024, 6
    %v12214 = vrot.slane %v12025, 2
    %v12215 = vrot.slane %v12025, 4
    %v12216 = vrot.slane %v12026, 2
    %v12217 = vrot.slane %v12026, 4
    %v12218 = vrot.slane %v12026, 6
    %v12219 = vrot.slane %v12027, 2
    %v12220 = vrot.slane %v12027, 4
    %v12221 = vrot.slane %v12028, 2
    %v12222 = vrot.slane %v12028, 4
    %v12223 = vrot.slane %v12028, 6
    %v12224 = vrot.slane %v12029, 2
    %v12225 = vrot.slane %v12029, 4
    %v12226 = vld [vmem:[%s2] sm:$0xff]
    %v12227 = vld [vmem:[%s2 + $0x8] sm:$0xff]
    %v12228 = vld [vmem:[%s2 + $0x10] sm:$0xff]
    %v12229 = vld [vmem:[%s2 + $0x18] sm:$0xff]
    %v12230 = vld [vmem:[%s2 + $0x20] sm:$0xff]
    %v12231 = vld [vmem:[%s2 + $0x28] sm:$0xff]
    %v12232 = vld [vmem:[%s2 + $0x30] sm:$0xff]
    %v12233 = vld [vmem:[%s2 + $0x38] sm:$0xff]
    %v12234 = vld [vmem:[%s2 + $0x40] sm:$0xff]
    %v12235 = vld [vmem:[%s3] sm:$0x1]
    %v12237 = vperm.slane %v12235, 0
    %12239 = vst [vmem:[#allocation1] ss:$4 sm:$0xff] %v11974
    %s12240 = scalar_lea.vmem [#allocation1], 1
    %12241 = vst [vmem:[%s12240] ss:$4 sm:$0xff] %v12086
    %s12242 = scalar_lea.vmem [#allocation1], 2
    %12243 = vst [vmem:[%s12242] ss:$4 sm:$0xff] %v12087
    %s12244 = scalar_lea.vmem [#allocation1], 3
    %12245 = vst [vmem:[%s12244] ss:$4 sm:$0xff] %v12088
    %s12246 = scalar_lea.vmem [#allocation1], 32
    %12247 = vst [vmem:[%s12246] ss:$4 sm:$0xff] %v11975
    %s12248 = scalar_lea.vmem [#allocation1], 33
    %12249 = vst [vmem:[%s12248] ss:$4 sm:$0xff] %v12089
    %s12250 = scalar_lea.vmem [#allocation1], 34
    %12251 = vst [vmem:[%s12250] ss:$4 sm:$0xff] %v12090
    %s12252 = scalar_lea.vmem [#allocation1], 35
    %12253 = vst [vmem:[%s12252] ss:$4 sm:$0xff] %v11976
    %v12254 = vld.sshfl [vmem:[#allocation1] sm:$0xff pattern:$0x73625140]
    %v12255 = vld.sshfl [vmem:[#allocation1 + $0x20] sm:$0xff pattern:$0x73625140]
    %12256 = vst [vmem:[#allocation1] ss:$4 sm:$0xff] %v12091
    %12257 = vst [vmem:[%s12240] ss:$4 sm:$0xff] %v12092
    %12258 = vst [vmem:[%s12242] ss:$4 sm:$0xff] %v12093
    %12259 = vst [vmem:[%s12244] ss:$4 sm:$0xff] %v11977
    %12260 = vst [vmem:[%s12246] ss:$4 sm:$0xff] %v12094
    %12261 = vst [vmem:[%s12248] ss:$4 sm:$0xff] %v12095
    %12262 = vst [vmem:[%s12250] ss:$4 sm:$0xff] %v11978
    %12263 = vst [vmem:[%s12252] ss:$4 sm:$0xff] %v12096
    %v12264 = vld.sshfl [vmem:[#allocation1] sm:$0xff pattern:$0x73625140]
    %v12265 = vld.sshfl [vmem:[#allocation1 + $0x20] sm:$0xff pattern:$0x73625140]
    %12266 = vst [vmem:[#allocation1] ss:$4 sm:$0xff] %v12097
    %12267 = vst [vmem:[%s12240] ss:$4 sm:$0xff] %v12098
    %12268 = vst [vmem:[%s12242] ss:$4 sm:$0xff] %v11979
    %12269 = vst [vmem:[%s12244] ss:$4 sm:$0xff] %v12099
    %12270 = vst [vmem:[%s12246] ss:$4 sm:$0xff] %v12100
    %12271 = vst [vmem:[%s12248] ss:$4 sm:$0xff] %v11980
    %12272 = vst [vmem:[%s12250] ss:$4 sm:$0xff] %v12101
    %12273 = vst [vmem:[%s12252] ss:$4 sm:$0xff] %v12102
    %v12274 = vld.sshfl [vmem:[#allocation1] sm:$0xff pattern:$0x73625140]
    %v12275 = vld.sshfl [vmem:[#allocation1 + $0x20] sm:$0xff pattern:$0x73625140]
    %12276 = vst [vmem:[#allocation1] ss:$4 sm:$0xff] %v12103
    %12277 = vst [vmem:[%s12240] ss:$4 sm:$0xff] %v11981
    %12278 = vst [vmem:[%s12242] ss:$4 sm:$0xff] %v12104
    %12279 = vst [vmem:[%s12244] ss:$4 sm:$0xff] %v12105
    %12280 = vst [vmem:[%s12246] ss:$4 sm:$0xff] %v11982
    %12281 = vst [vmem:[%s12248] ss:$4 sm:$0xff] %v12106
    %12282 = vst [vmem:[%s12250] ss:$4 sm:$0xff] %v12107
    %12283 = vst [vmem:[%s12252] ss:$4 sm:$0xff] %v12108
    %v12284 = vld.sshfl [vmem:[#allocation1] sm:$0xff pattern:$0x73625140]
    %v12285 = vld.sshfl [vmem:[#allocation1 + $0x20] sm:$0xff pattern:$0x73625140]
    %12286 = vst [vmem:[#allocation1] ss:$4 sm:$0xff] %v11983
    %12287 = vst [vmem:[%s12240] ss:$4 sm:$0xff] %v12109
    %12288 = vst [vmem:[%s12242] ss:$4 sm:$0xff] %v12110
    %12289 = vst [vmem:[%s12244] ss:$4 sm:$0xff] %v11984
    %12290 = vst [vmem:[%s12246] ss:$4 sm:$0xff] %v12111
    %12291 = vst [vmem:[%s12248] ss:$4 sm:$0xff] %v12112
    %12292 = vst [vmem:[%s12250] ss:$4 sm:$0xff] %v12113
    %12293 = vst [vmem:[%s12252] ss:$4 sm:$0xff] %v11985
    %v12294 = vld.sshfl [vmem:[#allocation1] sm:$0xff pattern:$0x73625140]
    %v12295 = vld.sshfl [vmem:[#allocation1 + $0x20] sm:$0xff pattern:$0x73625140]
    %12296 = vst [vmem:[#allocation1] ss:$4 sm:$0xff] %v12114
    %12297 = vst [vmem:[%s12240] ss:$4 sm:$0xff] %v12115
    %12298 = vst [vmem:[%s12242] ss:$4 sm:$0xff] %v11986
    %12299 = vst [vmem:[%s12244] ss:$4 sm:$0xff] %v12116
    %12300 = vst [vmem:[%s12246] ss:$4 sm:$0xff] %v12117
    %12301 = vst [vmem:[%s12248] ss:$4 sm:$0xff] %v12118
    %12302 = vst [vmem:[%s12250] ss:$4 sm:$0xff] %v11987
    %12303 = vst [vmem:[%s12252] ss:$4 sm:$0xff] %v12119
    %v12304 = vld.sshfl [vmem:[#allocation1] sm:$0xff pattern:$0x73625140]
    %v12305 = vld.sshfl [vmem:[#allocation1 + $0x20] sm:$0xff pattern:$0x73625140]
    %12306 = vst [vmem:[#allocation1] ss:$4 sm:$0xff] %v12120
    %12307 = vst [vmem:[%s12240] ss:$4 sm:$0xff] %v11988
    %12308 = vst [vmem:[%s12242] ss:$4 sm:$0xff] %v12121
    %12309 = vst [vmem:[%s12244] ss:$4 sm:$0xff] %v12122
    %12310 = vst [vmem:[%s12246] ss:$4 sm:$0xff] %v12123
    %12311 = vst [vmem:[%s12248] ss:$4 sm:$0xff] %v11989
    %12312 = vst [vmem:[%s12250] ss:$4 sm:$0xff] %v12124
    %12313 = vst [vmem:[%s12252] ss:$4 sm:$0xff] %v12125
    %v12314 = vld.sshfl [vmem:[#allocation1] sm:$0xff pattern:$0x73625140]
    %v12315 = vld.sshfl [vmem:[#allocation1 + $0x20] sm:$0xff pattern:$0x73625140]
    %12316 = vst [vmem:[#allocation1] ss:$4 sm:$0xff] %v11990
    %12317 = vst [vmem:[%s12240] ss:$4 sm:$0xff] %v12126
    %12318 = vst [vmem:[%s12242] ss:$4 sm:$0xff] %v12127
    %12319 = vst [vmem:[%s12244] ss:$4 sm:$0xff] %v12128
    %12320 = vst [vmem:[%s12246] ss:$4 sm:$0xff] %v11991
    %12321 = vst [vmem:[%s12248] ss:$4 sm:$0xff] %v12129
    %12322 = vst [vmem:[%s12250] ss:$4 sm:$0xff] %v12130
    %12323 = vst [vmem:[%s12252] ss:$4 sm:$0xff] %v11992
    %v12324 = vld.sshfl [vmem:[#allocation1] sm:$0xff pattern:$0x73625140]
    %v12325 = vld.sshfl [vmem:[#allocation1 + $0x20] sm:$0xff pattern:$0x73625140]
    %12326 = vst [vmem:[#allocation1] ss:$4 sm:$0xff] %v12131
    %12327 = vst [vmem:[%s12240] ss:$4 sm:$0xff] %v12132
    %12328 = vst [vmem:[%s12242] ss:$4 sm:$0xff] %v12133
    %12329 = vst [vmem:[%s12244] ss:$4 sm:$0xff] %v11993
    %12330 = vst [vmem:[%s12246] ss:$4 sm:$0xff] %v12134
    %12331 = vst [vmem:[%s12248] ss:$4 sm:$0xff] %v12135
    %12332 = vst [vmem:[%s12250] ss:$4 sm:$0xff] %v11994
    %12333 = vst [vmem:[%s12252] ss:$4 sm:$0xff] %v12136
    %v12334 = vld.sshfl [vmem:[#allocation1] sm:$0xff pattern:$0x73625140]
    %v12335 = vld.sshfl [vmem:[#allocation1 + $0x20] sm:$0xff pattern:$0x73625140]
    %12336 = vst [vmem:[#allocation1] ss:$4 sm:$0xff] %v12137
    %12337 = vst [vmem:[%s12240] ss:$4 sm:$0xff] %v12138
    %12338 = vst [vmem:[%s12242] ss:$4 sm:$0xff] %v11995
    %12339 = vst [vmem:[%s12244] ss:$4 sm:$0xff] %v12139
    %12340 = vst [vmem:[%s12246] ss:$4 sm:$0xff] %v12140
    %12341 = vst [vmem:[%s12248] ss:$4 sm:$0xff] %v11996
    %12342 = vst [vmem:[%s12250] ss:$4 sm:$0xff] %v12141
    %12343 = vst [vmem:[%s12252] ss:$4 sm:$0xff] %v12142
    %v12344 = vld.sshfl [vmem:[#allocation1] sm:$0xff pattern:$0x73625140]
    %v12345 = vld.sshfl [vmem:[#allocation1 + $0x20] sm:$0xff pattern:$0x73625140]
    %12346 = vst [vmem:[#allocation1] ss:$4 sm:$0xff] %v12143
    %12347 = vst [vmem:[%s12240] ss:$4 sm:$0xff] %v11997
    %12348 = vst [vmem:[%s12242] ss:$4 sm:$0xff] %v12144
    %12349 = vst [vmem:[%s12244] ss:$4 sm:$0xff] %v12145
    %12350 = vst [vmem:[%s12246] ss:$4 sm:$0xff] %v11998
    %12351 = vst [vmem:[%s12248] ss:$4 sm:$0xff] %v12146
    %12352 = vst [vmem:[%s12250] ss:$4 sm:$0xff] %v12147
    %12353 = vst [vmem:[%s12252] ss:$4 sm:$0xff] %v12148
    %v12354 = vld.sshfl [vmem:[#allocation1] sm:$0xff pattern:$0x73625140]
    %v12355 = vld.sshfl [vmem:[#allocation1 + $0x20] sm:$0xff pattern:$0x73625140]
    %12356 = vst [vmem:[#allocation1] ss:$4 sm:$0xff] %v11999
    %12357 = vst [vmem:[%s12240] ss:$4 sm:$0xff] %v12149
    %12358 = vst [vmem:[%s12242] ss:$4 sm:$0xff] %v12150
    %12359 = vst [vmem:[%s12244] ss:$4 sm:$0xff] %v12000
    %12360 = vst [vmem:[%s12246] ss:$4 sm:$0xff] %v12151
    %12361 = vst [vmem:[%s12248] ss:$4 sm:$0xff] %v12152
    %12362 = vst [vmem:[%s12250] ss:$4 sm:$0xff] %v12153
    %12363 = vst [vmem:[%s12252] ss:$4 sm:$0xff] %v12001
    %v12364 = vld.sshfl [vmem:[#allocation1] sm:$0xff pattern:$0x73625140]
    %v12365 = vld.sshfl [vmem:[#allocation1 + $0x20] sm:$0xff pattern:$0x73625140]
    %12366 = vst [vmem:[#allocation1] ss:$4 sm:$0xff] %v12154
    %12367 = vst [vmem:[%s12240] ss:$4 sm:$0xff] %v12155
    %12368 = vst [vmem:[%s12242] ss:$4 sm:$0xff] %v12002
    %12369 = vst [vmem:[%s12244] ss:$4 sm:$0xff] %v12156
    %12370 = vst [vmem:[%s12246] ss:$4 sm:$0xff] %v12157
    %12371 = vst [vmem:[%s12248] ss:$4 sm:$0xff] %v12158
    %12372 = vst [vmem:[%s12250] ss:$4 sm:$0xff] %v12003
    %12373 = vst [vmem:[%s12252] ss:$4 sm:$0xff] %v12159
    %v12374 = vld.sshfl [vmem:[#allocation1] sm:$0xff pattern:$0x73625140]
    %v12375 = vld.sshfl [vmem:[#allocation1 + $0x20] sm:$0xff pattern:$0x73625140]
    %12376 = vst [vmem:[#allocation1] ss:$4 sm:$0xff] %v12160
    %12377 = vst [vmem:[%s12240] ss:$4 sm:$0xff] %v12004
    %12378 = vst [vmem:[%s12242] ss:$4 sm:$0xff] %v12161
    %12379 = vst [vmem:[%s12244] ss:$4 sm:$0xff] %v12162
    %12380 = vst [vmem:[%s12246] ss:$4 sm:$0xff] %v12163
    %12381 = vst [vmem:[%s12248] ss:$4 sm:$0xff] %v12005
    %12382 = vst [vmem:[%s12250] ss:$4 sm:$0xff] %v12164
    %12383 = vst [vmem:[%s12252] ss:$4 sm:$0xff] %v12165
    %v12384 = vld.sshfl [vmem:[#allocation1] sm:$0xff pattern:$0x73625140]
    %v12385 = vld.sshfl [vmem:[#allocation1 + $0x20] sm:$0xff pattern:$0x73625140]
    %12386 = vst [vmem:[#allocation1] ss:$4 sm:$0xff] %v12006
    %12387 = vst [vmem:[%s12240] ss:$4 sm:$0xff] %v12166
    %12388 = vst [vmem:[%s12242] ss:$4 sm:$0xff] %v12167
    %12389 = vst [vmem:[%s12244] ss:$4 sm:$0xff] %v12168
    %12390 = vst [vmem:[%s12246] ss:$4 sm:$0xff] %v12007
    %12391 = vst [vmem:[%s12248] ss:$4 sm:$0xff] %v12169
    %12392 = vst [vmem:[%s12250] ss:$4 sm:$0xff] %v12170
    %12393 = vst [vmem:[%s12252] ss:$4 sm:$0xff] %v12008
    %v12394 = vld.sshfl [vmem:[#allocation1] sm:$0xff pattern:$0x73625140]
    %v12395 = vld.sshfl [vmem:[#allocation1 + $0x20] sm:$0xff pattern:$0x73625140]
    %12396 = vst [vmem:[#allocation1] ss:$4 sm:$0xff] %v12171
    %12397 = vst [vmem:[%s12240] ss:$4 sm:$0xff] %v12172
    %12398 = vst [vmem:[%s12242] ss:$4 sm:$0xff] %v12173
    %12399 = vst [vmem:[%s12244] ss:$4 sm:$0xff] %v12009
    %12400 = vst [vmem:[%s12246] ss:$4 sm:$0xff] %v12174
    %12401 = vst [vmem:[%s12248] ss:$4 sm:$0xff] %v12175
    %12402 = vst [vmem:[%s12250] ss:$4 sm:$0xff] %v12010
    %12403 = vst [vmem:[%s12252] ss:$4 sm:$0xff] %v12176
    %v12404 = vld.sshfl [vmem:[#allocation1] sm:$0xff pattern:$0x73625140]
    %v12405 = vld.sshfl [vmem:[#allocation1 + $0x20] sm:$0xff pattern:$0x73625140]
    %12406 = vst [vmem:[#allocation1] ss:$4 sm:$0xff] %v12177
    %12407 = vst [vmem:[%s12240] ss:$4 sm:$0xff] %v12178
    %12408 = vst [vmem:[%s12242] ss:$4 sm:$0xff] %v12011
    %12409 = vst [vmem:[%s12244] ss:$4 sm:$0xff] %v12179
    %12410 = vst [vmem:[%s12246] ss:$4 sm:$0xff] %v12180
    %12411 = vst [vmem:[%s12248] ss:$4 sm:$0xff] %v12012
    %12412 = vst [vmem:[%s12250] ss:$4 sm:$0xff] %v12181
    %12413 = vst [vmem:[%s12252] ss:$4 sm:$0xff] %v12182
    %v12414 = vld.sshfl [vmem:[#allocation1] sm:$0xff pattern:$0x73625140]
    %v12415 = vld.sshfl [vmem:[#allocation1 + $0x20] sm:$0xff pattern:$0x73625140]
    %12416 = vst [vmem:[#allocation1] ss:$4 sm:$0xff] %v12183
    %12417 = vst [vmem:[%s12240] ss:$4 sm:$0xff] %v12013
    %12418 = vst [vmem:[%s12242] ss:$4 sm:$0xff] %v12184
    %12419 = vst [vmem:[%s12244] ss:$4 sm:$0xff] %v12185
    %12420 = vst [vmem:[%s12246] ss:$4 sm:$0xff] %v12014
    %12421 = vst [vmem:[%s12248] ss:$4 sm:$0xff] %v12186
    %12422 = vst [vmem:[%s12250] ss:$4 sm:$0xff] %v12187
    %12423 = vst [vmem:[%s12252] ss:$4 sm:$0xff] %v12188
    %v12424 = vld.sshfl [vmem:[#allocation1] sm:$0xff pattern:$0x73625140]
    %v12425 = vld.sshfl [vmem:[#allocation1 + $0x20] sm:$0xff pattern:$0x73625140]
    %12426 = vst [vmem:[#allocation1] ss:$4 sm:$0xff] %v12015
    %12427 = vst [vmem:[%s12240] ss:$4 sm:$0xff] %v12189
    %12428 = vst [vmem:[%s12242] ss:$4 sm:$0xff] %v12190
    %12429 = vst [vmem:[%s12244] ss:$4 sm:$0xff] %v12016
    %12430 = vst [vmem:[%s12246] ss:$4 sm:$0xff] %v12191
    %12431 = vst [vmem:[%s12248] ss:$4 sm:$0xff] %v12192
    %12432 = vst [vmem:[%s12250] ss:$4 sm:$0xff] %v12193
    %12433 = vst [vmem:[%s12252] ss:$4 sm:$0xff] %v12017
    %v12434 = vld.sshfl [vmem:[#allocation1] sm:$0xff pattern:$0x73625140]
    %v12435 = vld.sshfl [vmem:[#allocation1 + $0x20] sm:$0xff pattern:$0x73625140]
    %12436 = vst [vmem:[#allocation1] ss:$4 sm:$0xff] %v12194
    %12437 = vst [vmem:[%s12240] ss:$4 sm:$0xff] %v12195
    %12438 = vst [vmem:[%s12242] ss:$4 sm:$0xff] %v12018
    %12439 = vst [vmem:[%s12244] ss:$4 sm:$0xff] %v12196
    %12440 = vst [vmem:[%s12246] ss:$4 sm:$0xff] %v12197
    %12441 = vst [vmem:[%s12248] ss:$4 sm:$0xff] %v12198
    %12442 = vst [vmem:[%s12250] ss:$4 sm:$0xff] %v12019
    %12443 = vst [vmem:[%s12252] ss:$4 sm:$0xff] %v12199
    %v12444 = vld.sshfl [vmem:[#allocation1] sm:$0xff pattern:$0x73625140]
    %v12445 = vld.sshfl [vmem:[#allocation1 + $0x20] sm:$0xff pattern:$0x73625140]
    %12446 = vst [vmem:[#allocation1] ss:$4 sm:$0xff] %v12200
    %12447 = vst [vmem:[%s12240] ss:$4 sm:$0xff] %v12020
    %12448 = vst [vmem:[%s12242] ss:$4 sm:$0xff] %v12201
    %12449 = vst [vmem:[%s12244] ss:$4 sm:$0xff] %v12202
    %12450 = vst [vmem:[%s12246] ss:$4 sm:$0xff] %v12203
    %12451 = vst [vmem:[%s12248] ss:$4 sm:$0xff] %v12021
    %12452 = vst [vmem:[%s12250] ss:$4 sm:$0xff] %v12204
    %12453 = vst [vmem:[%s12252] ss:$4 sm:$0xff] %v12205
    %v12454 = vld.sshfl [vmem:[#allocation1] sm:$0xff pattern:$0x73625140]
    %v12455 = vld.sshfl [vmem:[#allocation1 + $0x20] sm:$0xff pattern:$0x73625140]
    %12456 = vst [vmem:[#allocation1] ss:$4 sm:$0xff] %v12022
    %12457 = vst [vmem:[%s12240] ss:$4 sm:$0xff] %v12206
    %12458 = vst [vmem:[%s12242] ss:$4 sm:$0xff] %v12207
    %12459 = vst [vmem:[%s12244] ss:$4 sm:$0xff] %v12208
    %12460 = vst [vmem:[%s12246] ss:$4 sm:$0xff] %v12023
    %12461 = vst [vmem:[%s12248] ss:$4 sm:$0xff] %v12209
    %12462 = vst [vmem:[%s12250] ss:$4 sm:$0xff] %v12210
    %12463 = vst [vmem:[%s12252] ss:$4 sm:$0xff] %v12024
    %v12464 = vld.sshfl [vmem:[#allocation1] sm:$0xff pattern:$0x73625140]
    %v12465 = vld.sshfl [vmem:[#allocation1 + $0x20] sm:$0xff pattern:$0x73625140]
    %12466 = vst [vmem:[#allocation1] ss:$4 sm:$0xff] %v12211
    %12467 = vst [vmem:[%s12240] ss:$4 sm:$0xff] %v12212
    %12468 = vst [vmem:[%s12242] ss:$4 sm:$0xff] %v12213
    %12469 = vst [vmem:[%s12244] ss:$4 sm:$0xff] %v12025
    %12470 = vst [vmem:[%s12246] ss:$4 sm:$0xff] %v12214
    %12471 = vst [vmem:[%s12248] ss:$4 sm:$0xff] %v12215
    %12472 = vst [vmem:[%s12250] ss:$4 sm:$0xff] %v12026
    %12473 = vst [vmem:[%s12252] ss:$4 sm:$0xff] %v12216
    %v12474 = vld.sshfl [vmem:[#allocation1] sm:$0xff pattern:$0x73625140]
    %v12475 = vld.sshfl [vmem:[#allocation1 + $0x20] sm:$0xff pattern:$0x73625140]
    %12476 = vst [vmem:[#allocation1] ss:$4 sm:$0xff] %v12217
    %12477 = vst [vmem:[%s12240] ss:$4 sm:$0xff] %v12218
    %12478 = vst [vmem:[%s12242] ss:$4 sm:$0xff] %v12027
    %12479 = vst [vmem:[%s12244] ss:$4 sm:$0xff] %v12219
    %12480 = vst [vmem:[%s12246] ss:$4 sm:$0xff] %v12220
    %12481 = vst [vmem:[%s12248] ss:$4 sm:$0xff] %v12028
    %12482 = vst [vmem:[%s12250] ss:$4 sm:$0xff] %v12221
    %12483 = vst [vmem:[%s12252] ss:$4 sm:$0xff] %v12222
    %v12484 = vld.sshfl [vmem:[#allocation1] sm:$0xff pattern:$0x73625140]
    %v12485 = vld.sshfl [vmem:[#allocation1 + $0x20] sm:$0xff pattern:$0x73625140]
    %12486 = vst [vmem:[#allocation1] ss:$4 sm:$0xff] %v12223
    %12487 = vst [vmem:[%s12240] ss:$4 sm:$0xff] %v12029
    %12488 = vst [vmem:[%s12242] ss:$4 sm:$0xff] %v12224
    %12489 = vst [vmem:[%s12244] ss:$4 sm:$0xff] %v12225
    %v12490 = vld.sshfl [vmem:[#allocation1] sm:$0xff pattern:$0x73625140]
    %vm12491 = vcmask 588800
    %v12492 = vsel %vm12491, %v12254, 0
    %v12494 = vsel %vm12491, %v12255, 0
    %v12496 = vsel %vm12491, %v12264, 0
    %v12498 = vsel %vm12491, %v12265, 0
    %v12500 = vsel %vm12491, %v12274, 0
    %v12502 = vsel %vm12491, %v12275, 0
    %v12504 = vsel %vm12491, %v12284, 0
    %v12506 = vsel %vm12491, %v12285, 0
    %v12508 = vsel %vm12491, %v12294, 0
    %v12510 = vsel %vm12491, %v12295, 0
    %v12512 = vsel %vm12491, %v12304, 0
    %v12514 = vsel %vm12491, %v12305, 0
    %v12516 = vsel %vm12491, %v12314, 0
    %v12518 = vsel %vm12491, %v12315, 0
    %v12520 = vsel %vm12491, %v12324, 0
    %v12522 = vsel %vm12491, %v12325, 0
    %v12524 = vsel %vm12491, %v12334, 0
    %v12526 = vsel %vm12491, %v12335, 0
    %v12528 = vsel %vm12491, %v12344, 0
    %v12530 = vsel %vm12491, %v12345, 0
    %v12532 = vsel %vm12491, %v12354, 0
    %v12534 = vsel %vm12491, %v12355, 0
    %v12536 = vsel %vm12491, %v12364, 0
    %v12538 = vsel %vm12491, %v12365, 0
    %v12540 = vsel %vm12491, %v12374, 0
    %v12542 = vsel %vm12491, %v12375, 0
    %v12544 = vsel %vm12491, %v12384, 0
    %v12546 = vsel %vm12491, %v12385, 0
    %v12548 = vsel %vm12491, %v12394, 0
    %v12550 = vsel %vm12491, %v12395, 0
    %v12552 = vsel %vm12491, %v12404, 0
    %v12554 = vsel %vm12491, %v12405, 0
    %v12556 = vsel %vm12491, %v12414, 0
    %v12558 = vsel %vm12491, %v12415, 0
    %v12560 = vsel %vm12491, %v12424, 0
    %v12562 = vsel %vm12491, %v12425, 0
    %v12564 = vsel %vm12491, %v12434, 0
    %v12566 = vsel %vm12491, %v12435, 0
    %v12568 = vsel %vm12491, %v12444, 0
    %v12570 = vsel %vm12491, %v12445, 0
    %v12572 = vsel %vm12491, %v12454, 0
    %v12574 = vsel %vm12491, %v12455, 0
    %v12576 = vsel %vm12491, %v12464, 0
    %v12578 = vsel %vm12491, %v12465, 0
    %v12580 = vsel %vm12491, %v12474, 0
    %v12582 = vsel %vm12491, %v12475, 0
    %v12584 = vsel %vm12491, %v12484, 0
    %v12586 = vsel %vm12491, %v12485, 0
    %v12588 = vsel %vm12491, %v12490, 0
    %12590 = vmatpush.msra.mxu0 0.0
    %12591 = vmatpush.msra.mxu0 0.0
    %12592 = vmatpush.msra.mxu0 0.0
    %12593 = vmatpush.msra.mxu0 0.0
    %12594 = vmatpush.msra.mxu0 0.0
    %12595 = vmatpush.msra.mxu0 0.0
    %12596 = vmatpush.msra.mxu0 0.0
    %12597 = vmatpush.msra.mxu0 %v12234
    %12598 = vmatpush.msra.mxu0 %v12233
    %12599 = vmatpush.msra.mxu0 %v12232
    %12600 = vmatpush.msra.mxu0 %v12231
    %12601 = vmatpush.msra.mxu0 %v12230
    %12602 = vmatpush.msra.mxu0 %v12229
    %12603 = vmatpush.msra.mxu0 %v12228
    %12604 = vmatpush.msra.mxu0 %v12227
    %12605 = vmatpush.msra.mxu0 %v12226
    %12606 = vmatmul.f32.gmra.mxu0 %v12492
    %v12607 = vpop.f32.mrf.mxu0
    %v12608 = vadd.f32 %v12237, %v12607
    %12609 = vmatmul.f32.gmra.mxu0 %v12494
    %v12610 = vpop.f32.mrf.mxu0
    %v12611 = vadd.f32 %v12237, %v12610
    %12612 = vmatmul.f32.gmra.mxu0 %v12496
    %v12613 = vpop.f32.mrf.mxu0
    %v12614 = vadd.f32 %v12237, %v12613
    %12615 = vmatmul.f32.gmra.mxu0 %v12498
    %v12616 = vpop.f32.mrf.mxu0
    %v12617 = vadd.f32 %v12237, %v12616
    %12618 = vmatmul.f32.gmra.mxu0 %v12500
    %v12619 = vpop.f32.mrf.mxu0
    %v12620 = vadd.f32 %v12237, %v12619
    %12621 = vmatmul.f32.gmra.mxu0 %v12502
    %v12622 = vpop.f32.mrf.mxu0
    %v12623 = vadd.f32 %v12237, %v12622
    %12624 = vmatmul.f32.gmra.mxu0 %v12504
    %v12625 = vpop.f32.mrf.mxu0
    %v12626 = vadd.f32 %v12237, %v12625
    %12627 = vmatmul.f32.gmra.mxu0 %v12506
    %v12628 = vpop.f32.mrf.mxu0
    %v12629 = vadd.f32 %v12237, %v12628
    %12630 = vmatmul.f32.gmra.mxu0 %v12508
    %v12631 = vpop.f32.mrf.mxu0
    %v12632 = vadd.f32 %v12237, %v12631
    %12633 = vmatmul.f32.gmra.mxu0 %v12510
    %v12634 = vpop.f32.mrf.mxu0
    %v12635 = vadd.f32 %v12237, %v12634
    %12636 = vmatmul.f32.gmra.mxu0 %v12512
    %v12637 = vpop.f32.mrf.mxu0
    %v12638 = vadd.f32 %v12237, %v12637
    %12639 = vmatmul.f32.gmra.mxu0 %v12514
    %v12640 = vpop.f32.mrf.mxu0
    %v12641 = vadd.f32 %v12237, %v12640
    %12642 = vmatmul.f32.gmra.mxu0 %v12516
    %v12643 = vpop.f32.mrf.mxu0
    %v12644 = vadd.f32 %v12237, %v12643
    %12645 = vmatmul.f32.gmra.mxu0 %v12518
    %v12646 = vpop.f32.mrf.mxu0
    %v12647 = vadd.f32 %v12237, %v12646
    %12648 = vmatmul.f32.gmra.mxu0 %v12520
    %v12649 = vpop.f32.mrf.mxu0
    %v12650 = vadd.f32 %v12237, %v12649
    %12651 = vmatmul.f32.gmra.mxu0 %v12522
    %v12652 = vpop.f32.mrf.mxu0
    %v12653 = vadd.f32 %v12237, %v12652
    %12654 = vmatmul.f32.gmra.mxu0 %v12524
    %v12655 = vpop.f32.mrf.mxu0
    %v12656 = vadd.f32 %v12237, %v12655
    %12657 = vmatmul.f32.gmra.mxu0 %v12526
    %v12658 = vpop.f32.mrf.mxu0
    %v12659 = vadd.f32 %v12237, %v12658
    %12660 = vmatmul.f32.gmra.mxu0 %v12528
    %v12661 = vpop.f32.mrf.mxu0
    %v12662 = vadd.f32 %v12237, %v12661
    %12663 = vmatmul.f32.gmra.mxu0 %v12530
    %v12664 = vpop.f32.mrf.mxu0
    %v12665 = vadd.f32 %v12237, %v12664
    %12666 = vmatmul.f32.gmra.mxu0 %v12532
    %v12667 = vpop.f32.mrf.mxu0
    %v12668 = vadd.f32 %v12237, %v12667
    %12669 = vmatmul.f32.gmra.mxu0 %v12534
    %v12670 = vpop.f32.mrf.mxu0
    %v12671 = vadd.f32 %v12237, %v12670
    %12672 = vmatmul.f32.gmra.mxu0 %v12536
    %v12673 = vpop.f32.mrf.mxu0
    %v12674 = vadd.f32 %v12237, %v12673
    %12675 = vmatmul.f32.gmra.mxu0 %v12538
    %v12676 = vpop.f32.mrf.mxu0
    %v12677 = vadd.f32 %v12237, %v12676
    %12678 = vmatmul.f32.gmra.mxu0 %v12540
    %v12679 = vpop.f32.mrf.mxu0
    %v12680 = vadd.f32 %v12237, %v12679
    %12681 = vmatmul.f32.gmra.mxu0 %v12542
    %v12682 = vpop.f32.mrf.mxu0
    %v12683 = vadd.f32 %v12237, %v12682
    %12684 = vmatmul.f32.gmra.mxu0 %v12544
    %v12685 = vpop.f32.mrf.mxu0
    %v12686 = vadd.f32 %v12237, %v12685
    %12687 = vmatmul.f32.gmra.mxu0 %v12546
    %v12688 = vpop.f32.mrf.mxu0
    %v12689 = vadd.f32 %v12237, %v12688
    %12690 = vmatmul.f32.gmra.mxu0 %v12548
    %v12691 = vpop.f32.mrf.mxu0
    %v12692 = vadd.f32 %v12237, %v12691
    %12693 = vmatmul.f32.gmra.mxu0 %v12550
    %v12694 = vpop.f32.mrf.mxu0
    %v12695 = vadd.f32 %v12237, %v12694
    %12696 = vmatmul.f32.gmra.mxu0 %v12552
    %v12697 = vpop.f32.mrf.mxu0
    %v12698 = vadd.f32 %v12237, %v12697
    %12699 = vmatmul.f32.gmra.mxu0 %v12554
    %v12700 = vpop.f32.mrf.mxu0
    %v12701 = vadd.f32 %v12237, %v12700
    %12702 = vmatmul.f32.gmra.mxu0 %v12556
    %v12703 = vpop.f32.mrf.mxu0
    %v12704 = vadd.f32 %v12237, %v12703
    %12705 = vmatmul.f32.gmra.mxu0 %v12558
    %v12706 = vpop.f32.mrf.mxu0
    %v12707 = vadd.f32 %v12237, %v12706
    %12708 = vmatmul.f32.gmra.mxu0 %v12560
    %v12709 = vpop.f32.mrf.mxu0
    %v12710 = vadd.f32 %v12237, %v12709
    %12711 = vmatmul.f32.gmra.mxu0 %v12562
    %v12712 = vpop.f32.mrf.mxu0
    %v12713 = vadd.f32 %v12237, %v12712
    %12714 = vmatmul.f32.gmra.mxu0 %v12564
    %v12715 = vpop.f32.mrf.mxu0
    %v12716 = vadd.f32 %v12237, %v12715
    %12717 = vmatmul.f32.gmra.mxu0 %v12566
    %v12718 = vpop.f32.mrf.mxu0
    %v12719 = vadd.f32 %v12237, %v12718
    %12720 = vmatmul.f32.gmra.mxu0 %v12568
    %v12721 = vpop.f32.mrf.mxu0
    %v12722 = vadd.f32 %v12237, %v12721
    %12723 = vmatmul.f32.gmra.mxu0 %v12570
    %v12724 = vpop.f32.mrf.mxu0
    %v12725 = vadd.f32 %v12237, %v12724
    %12726 = vmatmul.f32.gmra.mxu0 %v12572
    %v12727 = vpop.f32.mrf.mxu0
    %v12728 = vadd.f32 %v12237, %v12727
    %12729 = vmatmul.f32.gmra.mxu0 %v12574
    %v12730 = vpop.f32.mrf.mxu0
    %v12731 = vadd.f32 %v12237, %v12730
    %12732 = vmatmul.f32.gmra.mxu0 %v12576
    %v12733 = vpop.f32.mrf.mxu0
    %v12734 = vadd.f32 %v12237, %v12733
    %12735 = vmatmul.f32.gmra.mxu0 %v12578
    %v12736 = vpop.f32.mrf.mxu0
    %v12737 = vadd.f32 %v12237, %v12736
    %12738 = vmatmul.f32.gmra.mxu0 %v12580
    %v12739 = vpop.f32.mrf.mxu0
    %v12740 = vadd.f32 %v12237, %v12739
    %12741 = vmatmul.f32.gmra.mxu0 %v12582
    %v12742 = vpop.f32.mrf.mxu0
    %v12743 = vadd.f32 %v12237, %v12742
    %12744 = vmatmul.f32.gmra.mxu0 %v12584
    %v12745 = vpop.f32.mrf.mxu0
    %v12746 = vadd.f32 %v12237, %v12745
    %12747 = vmatmul.f32.gmra.mxu0 %v12586
    %v12748 = vpop.f32.mrf.mxu0
    %v12749 = vadd.f32 %v12237, %v12748
    %12750 = vmatmul.f32.gmra.mxu0 %v12588
    %v12751 = vpop.f32.mrf.mxu0
    %v12752 = vadd.f32 %v12237, %v12751
    %12753 = vdwg.mxu0
    %v12754 = vmax.f32 %v12608, 0.0
    %v12755 = vmax.f32 %v12611, 0.0
    %v12756 = vmax.f32 %v12614, 0.0
    %v12757 = vmax.f32 %v12617, 0.0
    %v12758 = vmax.f32 %v12620, 0.0
    %v12759 = vmax.f32 %v12623, 0.0
    %v12760 = vmax.f32 %v12626, 0.0
    %v12761 = vmax.f32 %v12629, 0.0
    %v12762 = vmax.f32 %v12632, 0.0
    %v12763 = vmax.f32 %v12635, 0.0
    %v12764 = vmax.f32 %v12638, 0.0
    %v12765 = vmax.f32 %v12641, 0.0
    %v12766 = vmax.f32 %v12644, 0.0
    %v12767 = vmax.f32 %v12647, 0.0
    %v12768 = vmax.f32 %v12650, 0.0
    %v12769 = vmax.f32 %v12653, 0.0
    %v12770 = vmax.f32 %v12656, 0.0
    %v12771 = vmax.f32 %v12659, 0.0
    %v12772 = vmax.f32 %v12662, 0.0
    %v12773 = vmax.f32 %v12665, 0.0
    %v12774 = vmax.f32 %v12668, 0.0
    %v12775 = vmax.f32 %v12671, 0.0
    %v12776 = vmax.f32 %v12674, 0.0
    %v12777 = vmax.f32 %v12677, 0.0
    %v12778 = vmax.f32 %v12680, 0.0
    %v12779 = vmax.f32 %v12683, 0.0
    %v12780 = vmax.f32 %v12686, 0.0
    %v12781 = vmax.f32 %v12689, 0.0
    %v12782 = vmax.f32 %v12692, 0.0
    %v12783 = vmax.f32 %v12695, 0.0
    %v12784 = vmax.f32 %v12698, 0.0
    %v12785 = vmax.f32 %v12701, 0.0
    %v12786 = vmax.f32 %v12704, 0.0
    %v12787 = vmax.f32 %v12707, 0.0
    %v12788 = vmax.f32 %v12710, 0.0
    %v12789 = vmax.f32 %v12713, 0.0
    %v12790 = vmax.f32 %v12716, 0.0
    %v12791 = vmax.f32 %v12719, 0.0
    %v12792 = vmax.f32 %v12722, 0.0
    %v12793 = vmax.f32 %v12725, 0.0
    %v12794 = vmax.f32 %v12728, 0.0
    %v12795 = vmax.f32 %v12731, 0.0
    %v12796 = vmax.f32 %v12734, 0.0
    %v12797 = vmax.f32 %v12737, 0.0
    %v12798 = vmax.f32 %v12740, 0.0
    %v12799 = vmax.f32 %v12743, 0.0
    %v12800 = vmax.f32 %v12746, 0.0
    %v12801 = vmax.f32 %v12749, 0.0
    %v12802 = vmax.f32 %v12752, 0.0
    %v12852 = vrot.slane %v12754, 2
    %v12853 = vrot.slane %v12754, 4
    %v12854 = vrot.slane %v12754, 6
    %v12855 = vrot.slane %v12755, 2
    %v12856 = vrot.slane %v12755, 4
    %v12857 = vrot.slane %v12755, 6
    %v12858 = vrot.slane %v12756, 2
    %v12859 = vrot.slane %v12756, 4
    %v12860 = vrot.slane %v12756, 6
    %v12861 = vrot.slane %v12757, 2
    %v12862 = vrot.slane %v12757, 4
    %v12863 = vrot.slane %v12757, 6
    %v12864 = vrot.slane %v12758, 2
    %v12865 = vrot.slane %v12758, 4
    %v12866 = vrot.slane %v12758, 6
    %v12867 = vrot.slane %v12759, 2
    %v12868 = vrot.slane %v12759, 4
    %v12869 = vrot.slane %v12759, 6
    %v12870 = vrot.slane %v12760, 2
    %v12871 = vrot.slane %v12760, 4
    %v12872 = vrot.slane %v12760, 6
    %v12873 = vrot.slane %v12761, 2
    %v12874 = vrot.slane %v12761, 4
    %v12875 = vrot.slane %v12761, 6
    %v12876 = vrot.slane %v12762, 2
    %v12877 = vrot.slane %v12762, 4
    %v12878 = vrot.slane %v12762, 6
    %v12879 = vrot.slane %v12763, 2
    %v12880 = vrot.slane %v12763, 4
    %v12881 = vrot.slane %v12763, 6
    %v12882 = vrot.slane %v12764, 2
    %v12883 = vrot.slane %v12764, 4
    %v12884 = vrot.slane %v12764, 6
    %v12885 = vrot.slane %v12765, 2
    %v12886 = vrot.slane %v12765, 4
    %v12887 = vrot.slane %v12765, 6
    %v12888 = vrot.slane %v12766, 2
    %v12889 = vrot.slane %v12766, 4
    %v12890 = vrot.slane %v12766, 6
    %v12891 = vrot.slane %v12767, 2
    %v12892 = vrot.slane %v12767, 4
    %v12893 = vrot.slane %v12767, 6
    %v12894 = vrot.slane %v12768, 2
    %v12895 = vrot.slane %v12768, 4
    %v12896 = vrot.slane %v12768, 6
    %v12897 = vrot.slane %v12769, 2
    %v12898 = vrot.slane %v12769, 4
    %v12899 = vrot.slane %v12769, 6
    %v12900 = vrot.slane %v12770, 2
    %v12901 = vrot.slane %v12770, 4
    %v12902 = vrot.slane %v12770, 6
    %v12903 = vrot.slane %v12771, 2
    %v12904 = vrot.slane %v12771, 4
    %v12905 = vrot.slane %v12771, 6
    %v12906 = vrot.slane %v12772, 2
    %v12907 = vrot.slane %v12772, 4
    %v12908 = vrot.slane %v12772, 6
    %v12909 = vrot.slane %v12773, 2
    %v12910 = vrot.slane %v12773, 4
    %v12911 = vrot.slane %v12773, 6
    %v12912 = vrot.slane %v12774, 2
    %v12913 = vrot.slane %v12774, 4
    %v12914 = vrot.slane %v12774, 6
    %v12915 = vrot.slane %v12775, 2
    %v12916 = vrot.slane %v12775, 4
    %v12917 = vrot.slane %v12775, 6
    %v12918 = vrot.slane %v12776, 2
    %v12919 = vrot.slane %v12776, 4
    %v12920 = vrot.slane %v12776, 6
    %v12921 = vrot.slane %v12777, 2
    %v12922 = vrot.slane %v12777, 4
    %v12923 = vrot.slane %v12777, 6
    %v12924 = vrot.slane %v12778, 2
    %v12925 = vrot.slane %v12778, 4
    %v12926 = vrot.slane %v12778, 6
    %v12927 = vrot.slane %v12779, 2
    %v12928 = vrot.slane %v12779, 4
    %v12929 = vrot.slane %v12779, 6
    %v12930 = vrot.slane %v12780, 2
    %v12931 = vrot.slane %v12780, 4
    %v12932 = vrot.slane %v12780, 6
    %v12933 = vrot.slane %v12781, 2
    %v12934 = vrot.slane %v12781, 4
    %v12935 = vrot.slane %v12781, 6
    %v12936 = vrot.slane %v12782, 2
    %v12937 = vrot.slane %v12782, 4
    %v12938 = vrot.slane %v12782, 6
    %v12939 = vrot.slane %v12783, 2
    %v12940 = vrot.slane %v12783, 4
    %v12941 = vrot.slane %v12783, 6
    %v12942 = vrot.slane %v12784, 2
    %v12943 = vrot.slane %v12784, 4
    %v12944 = vrot.slane %v12784, 6
    %v12945 = vrot.slane %v12785, 2
    %v12946 = vrot.slane %v12785, 4
    %v12947 = vrot.slane %v12785, 6
    %v12948 = vrot.slane %v12786, 2
    %v12949 = vrot.slane %v12786, 4
    %v12950 = vrot.slane %v12786, 6
    %v12951 = vrot.slane %v12787, 2
    %v12952 = vrot.slane %v12787, 4
    %v12953 = vrot.slane %v12787, 6
    %v12954 = vrot.slane %v12788, 2
    %v12955 = vrot.slane %v12788, 4
    %v12956 = vrot.slane %v12788, 6
    %v12957 = vrot.slane %v12789, 2
    %v12958 = vrot.slane %v12789, 4
    %v12959 = vrot.slane %v12789, 6
    %v12960 = vrot.slane %v12790, 2
    %v12961 = vrot.slane %v12790, 4
    %v12962 = vrot.slane %v12790, 6
    %v12963 = vrot.slane %v12791, 2
    %v12964 = vrot.slane %v12791, 4
    %v12965 = vrot.slane %v12791, 6
    %v12966 = vrot.slane %v12792, 2
    %v12967 = vrot.slane %v12792, 4
    %v12968 = vrot.slane %v12792, 6
    %v12969 = vrot.slane %v12793, 2
    %v12970 = vrot.slane %v12793, 4
    %v12971 = vrot.slane %v12793, 6
    %v12972 = vrot.slane %v12794, 2
    %v12973 = vrot.slane %v12794, 4
    %v12974 = vrot.slane %v12794, 6
    %v12975 = vrot.slane %v12795, 2
    %v12976 = vrot.slane %v12795, 4
    %v12977 = vrot.slane %v12795, 6
    %v12978 = vrot.slane %v12796, 2
    %v12979 = vrot.slane %v12796, 4
    %v12980 = vrot.slane %v12796, 6
    %v12981 = vrot.slane %v12797, 2
    %v12982 = vrot.slane %v12797, 4
    %v12983 = vrot.slane %v12797, 6
    %v12984 = vrot.slane %v12798, 2
    %v12985 = vrot.slane %v12798, 4
    %v12986 = vrot.slane %v12798, 6
    %v12987 = vrot.slane %v12799, 2
    %v12988 = vrot.slane %v12799, 4
    %v12989 = vrot.slane %v12799, 6
    %v12990 = vrot.slane %v12800, 2
    %v12991 = vrot.slane %v12800, 4
    %v12992 = vrot.slane %v12800, 6
    %v12993 = vrot.slane %v12801, 2
    %v12994 = vrot.slane %v12801, 4
    %v12995 = vrot.slane %v12801, 6
    %v12996 = vrot.slane %v12802, 2
    %v12997 = vrot.slane %v12802, 4
    %v12998 = vrot.slane %v12802, 6
    %vm13146 = vcmask 123904
    %v13147 = vsel %vm13146, %v12754, -inf
    %v13148 = vsel %vm13146, %v12857, -inf
    %v13149 = vmax.f32 %v13147, %v13148
    %v13150 = vrot.slane %v13149, 4
    %v13151 = vmax.f32 %v13149, %v13150
    %v13152 = vrot.slane %v13151, 2
    %v13153 = vmax.f32 %v13151, %v13152
    %v13154 = vrot.slane %v13153, 1
    %v13155 = vmax.f32 %v13153, %v13154
    %v13156 = vsel %vm13146, %v12852, -inf
    %v13157 = vsel %vm13146, %v12756, -inf
    %v13158 = vmax.f32 %v13156, %v13157
    %v13159 = vrot.slane %v13158, 4
    %v13160 = vmax.f32 %v13158, %v13159
    %v13161 = vrot.slane %v13160, 2
    %v13162 = vmax.f32 %v13160, %v13161
    %v13163 = vrot.slane %v13162, 1
    %v13164 = vmax.f32 %v13162, %v13163
    %v13165 = vsel %vm13146, %v12853, -inf
    %v13166 = vsel %vm13146, %v12858, -inf
    %v13167 = vmax.f32 %v13165, %v13166
    %v13168 = vrot.slane %v13167, 4
    %v13169 = vmax.f32 %v13167, %v13168
    %v13170 = vrot.slane %v13169, 2
    %v13171 = vmax.f32 %v13169, %v13170
    %v13172 = vrot.slane %v13171, 1
    %v13173 = vmax.f32 %v13171, %v13172
    %v13174 = vsel %vm13146, %v12854, -inf
    %v13175 = vsel %vm13146, %v12859, -inf
    %v13176 = vmax.f32 %v13174, %v13175
    %v13177 = vrot.slane %v13176, 4
    %v13178 = vmax.f32 %v13176, %v13177
    %v13179 = vrot.slane %v13178, 2
    %v13180 = vmax.f32 %v13178, %v13179
    %v13181 = vrot.slane %v13180, 1
    %v13182 = vmax.f32 %v13180, %v13181
    %v13183 = vsel %vm13146, %v12755, -inf
    %v13184 = vsel %vm13146, %v12860, -inf
    %v13185 = vmax.f32 %v13183, %v13184
    %v13186 = vrot.slane %v13185, 4
    %v13187 = vmax.f32 %v13185, %v13186
    %v13188 = vrot.slane %v13187, 2
    %v13189 = vmax.f32 %v13187, %v13188
    %v13190 = vrot.slane %v13189, 1
    %v13191 = vmax.f32 %v13189, %v13190
    %v13192 = vsel %vm13146, %v12855, -inf
    %v13193 = vsel %vm13146, %v12757, -inf
    %v13194 = vmax.f32 %v13192, %v13193
    %v13195 = vrot.slane %v13194, 4
    %v13196 = vmax.f32 %v13194, %v13195
    %v13197 = vrot.slane %v13196, 2
    %v13198 = vmax.f32 %v13196, %v13197
    %v13199 = vrot.slane %v13198, 1
    %v13200 = vmax.f32 %v13198, %v13199
    %v13201 = vsel %vm13146, %v12856, -inf
    %v13202 = vsel %vm13146, %v12861, -inf
    %v13203 = vmax.f32 %v13201, %v13202
    %v13204 = vrot.slane %v13203, 4
    %v13205 = vmax.f32 %v13203, %v13204
    %v13206 = vrot.slane %v13205, 2
    %v13207 = vmax.f32 %v13205, %v13206
    %v13208 = vrot.slane %v13207, 1
    %v13209 = vmax.f32 %v13207, %v13208
    %v13210 = vsel %vm13146, %v12862, -inf
    %v13211 = vsel %vm13146, %v12867, -inf
    %v13212 = vmax.f32 %v13210, %v13211
    %v13213 = vrot.slane %v13212, 4
    %v13214 = vmax.f32 %v13212, %v13213
    %v13215 = vrot.slane %v13214, 2
    %v13216 = vmax.f32 %v13214, %v13215
    %v13217 = vrot.slane %v13216, 1
    %v13218 = vmax.f32 %v13216, %v13217
    %v13219 = vsel %vm13146, %v12863, -inf
    %v13220 = vsel %vm13146, %v12868, -inf
    %v13221 = vmax.f32 %v13219, %v13220
    %v13222 = vrot.slane %v13221, 4
    %v13223 = vmax.f32 %v13221, %v13222
    %v13224 = vrot.slane %v13223, 2
    %v13225 = vmax.f32 %v13223, %v13224
    %v13226 = vrot.slane %v13225, 1
    %v13227 = vmax.f32 %v13225, %v13226
    %v13228 = vsel %vm13146, %v12758, -inf
    %v13229 = vsel %vm13146, %v12869, -inf
    %v13230 = vmax.f32 %v13228, %v13229
    %v13231 = vrot.slane %v13230, 4
    %v13232 = vmax.f32 %v13230, %v13231
    %v13233 = vrot.slane %v13232, 2
    %v13234 = vmax.f32 %v13232, %v13233
    %v13235 = vrot.slane %v13234, 1
    %v13236 = vmax.f32 %v13234, %v13235
    %v13237 = vsel %vm13146, %v12864, -inf
    %v13238 = vsel %vm13146, %v12760, -inf
    %v13239 = vmax.f32 %v13237, %v13238
    %v13240 = vrot.slane %v13239, 4
    %v13241 = vmax.f32 %v13239, %v13240
    %v13242 = vrot.slane %v13241, 2
    %v13243 = vmax.f32 %v13241, %v13242
    %v13244 = vrot.slane %v13243, 1
    %v13245 = vmax.f32 %v13243, %v13244
    %v13246 = vsel %vm13146, %v12865, -inf
    %v13247 = vsel %vm13146, %v12870, -inf
    %v13248 = vmax.f32 %v13246, %v13247
    %v13249 = vrot.slane %v13248, 4
    %v13250 = vmax.f32 %v13248, %v13249
    %v13251 = vrot.slane %v13250, 2
    %v13252 = vmax.f32 %v13250, %v13251
    %v13253 = vrot.slane %v13252, 1
    %v13254 = vmax.f32 %v13252, %v13253
    %v13255 = vsel %vm13146, %v12866, -inf
    %v13256 = vsel %vm13146, %v12871, -inf
    %v13257 = vmax.f32 %v13255, %v13256
    %v13258 = vrot.slane %v13257, 4
    %v13259 = vmax.f32 %v13257, %v13258
    %v13260 = vrot.slane %v13259, 2
    %v13261 = vmax.f32 %v13259, %v13260
    %v13262 = vrot.slane %v13261, 1
    %v13263 = vmax.f32 %v13261, %v13262
    %v13264 = vsel %vm13146, %v12759, -inf
    %v13265 = vsel %vm13146, %v12872, -inf
    %v13266 = vmax.f32 %v13264, %v13265
    %v13267 = vrot.slane %v13266, 4
    %v13268 = vmax.f32 %v13266, %v13267
    %v13269 = vrot.slane %v13268, 2
    %v13270 = vmax.f32 %v13268, %v13269
    %v13271 = vrot.slane %v13270, 1
    %v13272 = vmax.f32 %v13270, %v13271
    %v13273 = vsel %vm13146, %v12761, -inf
    %v13274 = vsel %vm13146, %v12878, -inf
    %v13275 = vmax.f32 %v13273, %v13274
    %v13276 = vrot.slane %v13275, 4
    %v13277 = vmax.f32 %v13275, %v13276
    %v13278 = vrot.slane %v13277, 2
    %v13279 = vmax.f32 %v13277, %v13278
    %v13280 = vrot.slane %v13279, 1
    %v13281 = vmax.f32 %v13279, %v13280
    %v13282 = vsel %vm13146, %v12873, -inf
    %v13283 = vsel %vm13146, %v12763, -inf
    %v13284 = vmax.f32 %v13282, %v13283
    %v13285 = vrot.slane %v13284, 4
    %v13286 = vmax.f32 %v13284, %v13285
    %v13287 = vrot.slane %v13286, 2
    %v13288 = vmax.f32 %v13286, %v13287
    %v13289 = vrot.slane %v13288, 1
    %v13290 = vmax.f32 %v13288, %v13289
    %v13291 = vsel %vm13146, %v12874, -inf
    %v13292 = vsel %vm13146, %v12879, -inf
    %v13293 = vmax.f32 %v13291, %v13292
    %v13294 = vrot.slane %v13293, 4
    %v13295 = vmax.f32 %v13293, %v13294
    %v13296 = vrot.slane %v13295, 2
    %v13297 = vmax.f32 %v13295, %v13296
    %v13298 = vrot.slane %v13297, 1
    %v13299 = vmax.f32 %v13297, %v13298
    %v13300 = vsel %vm13146, %v12875, -inf
    %v13301 = vsel %vm13146, %v12880, -inf
    %v13302 = vmax.f32 %v13300, %v13301
    %v13303 = vrot.slane %v13302, 4
    %v13304 = vmax.f32 %v13302, %v13303
    %v13305 = vrot.slane %v13304, 2
    %v13306 = vmax.f32 %v13304, %v13305
    %v13307 = vrot.slane %v13306, 1
    %v13308 = vmax.f32 %v13306, %v13307
    %v13309 = vsel %vm13146, %v12762, -inf
    %v13310 = vsel %vm13146, %v12881, -inf
    %v13311 = vmax.f32 %v13309, %v13310
    %v13312 = vrot.slane %v13311, 4
    %v13313 = vmax.f32 %v13311, %v13312
    %v13314 = vrot.slane %v13313, 2
    %v13315 = vmax.f32 %v13313, %v13314
    %v13316 = vrot.slane %v13315, 1
    %v13317 = vmax.f32 %v13315, %v13316
    %v13318 = vsel %vm13146, %v12876, -inf
    %v13319 = vsel %vm13146, %v12764, -inf
    %v13320 = vmax.f32 %v13318, %v13319
    %v13321 = vrot.slane %v13320, 4
    %v13322 = vmax.f32 %v13320, %v13321
    %v13323 = vrot.slane %v13322, 2
    %v13324 = vmax.f32 %v13322, %v13323
    %v13325 = vrot.slane %v13324, 1
    %v13326 = vmax.f32 %v13324, %v13325
    %v13327 = vsel %vm13146, %v12877, -inf
    %v13328 = vsel %vm13146, %v12882, -inf
    %v13329 = vmax.f32 %v13327, %v13328
    %v13330 = vrot.slane %v13329, 4
    %v13331 = vmax.f32 %v13329, %v13330
    %v13332 = vrot.slane %v13331, 2
    %v13333 = vmax.f32 %v13331, %v13332
    %v13334 = vrot.slane %v13333, 1
    %v13335 = vmax.f32 %v13333, %v13334
    %v13336 = vsel %vm13146, %v12883, -inf
    %v13337 = vsel %vm13146, %v12888, -inf
    %v13338 = vmax.f32 %v13336, %v13337
    %v13339 = vrot.slane %v13338, 4
    %v13340 = vmax.f32 %v13338, %v13339
    %v13341 = vrot.slane %v13340, 2
    %v13342 = vmax.f32 %v13340, %v13341
    %v13343 = vrot.slane %v13342, 1
    %v13344 = vmax.f32 %v13342, %v13343
    %v13345 = vsel %vm13146, %v12884, -inf
    %v13346 = vsel %vm13146, %v12889, -inf
    %v13347 = vmax.f32 %v13345, %v13346
    %v13348 = vrot.slane %v13347, 4
    %v13349 = vmax.f32 %v13347, %v13348
    %v13350 = vrot.slane %v13349, 2
    %v13351 = vmax.f32 %v13349, %v13350
    %v13352 = vrot.slane %v13351, 1
    %v13353 = vmax.f32 %v13351, %v13352
    %v13354 = vsel %vm13146, %v12765, -inf
    %v13355 = vsel %vm13146, %v12890, -inf
    %v13356 = vmax.f32 %v13354, %v13355
    %v13357 = vrot.slane %v13356, 4
    %v13358 = vmax.f32 %v13356, %v13357
    %v13359 = vrot.slane %v13358, 2
    %v13360 = vmax.f32 %v13358, %v13359
    %v13361 = vrot.slane %v13360, 1
    %v13362 = vmax.f32 %v13360, %v13361
    %v13363 = vsel %vm13146, %v12885, -inf
    %v13364 = vsel %vm13146, %v12767, -inf
    %v13365 = vmax.f32 %v13363, %v13364
    %v13366 = vrot.slane %v13365, 4
    %v13367 = vmax.f32 %v13365, %v13366
    %v13368 = vrot.slane %v13367, 2
    %v13369 = vmax.f32 %v13367, %v13368
    %v13370 = vrot.slane %v13369, 1
    %v13371 = vmax.f32 %v13369, %v13370
    %v13372 = vsel %vm13146, %v12886, -inf
    %v13373 = vsel %vm13146, %v12891, -inf
    %v13374 = vmax.f32 %v13372, %v13373
    %v13375 = vrot.slane %v13374, 4
    %v13376 = vmax.f32 %v13374, %v13375
    %v13377 = vrot.slane %v13376, 2
    %v13378 = vmax.f32 %v13376, %v13377
    %v13379 = vrot.slane %v13378, 1
    %v13380 = vmax.f32 %v13378, %v13379
    %v13381 = vsel %vm13146, %v12887, -inf
    %v13382 = vsel %vm13146, %v12892, -inf
    %v13383 = vmax.f32 %v13381, %v13382
    %v13384 = vrot.slane %v13383, 4
    %v13385 = vmax.f32 %v13383, %v13384
    %v13386 = vrot.slane %v13385, 2
    %v13387 = vmax.f32 %v13385, %v13386
    %v13388 = vrot.slane %v13387, 1
    %v13389 = vmax.f32 %v13387, %v13388
    %v13390 = vsel %vm13146, %v12766, -inf
    %v13391 = vsel %vm13146, %v12893, -inf
    %v13392 = vmax.f32 %v13390, %v13391
    %v13393 = vrot.slane %v13392, 4
    %v13394 = vmax.f32 %v13392, %v13393
    %v13395 = vrot.slane %v13394, 2
    %v13396 = vmax.f32 %v13394, %v13395
    %v13397 = vrot.slane %v13396, 1
    %v13398 = vmax.f32 %v13396, %v13397
    %v13399 = vsel %vm13146, %v12768, -inf
    %v13400 = vsel %vm13146, %v12899, -inf
    %v13401 = vmax.f32 %v13399, %v13400
    %v13402 = vrot.slane %v13401, 4
    %v13403 = vmax.f32 %v13401, %v13402
    %v13404 = vrot.slane %v13403, 2
    %v13405 = vmax.f32 %v13403, %v13404
    %v13406 = vrot.slane %v13405, 1
    %v13407 = vmax.f32 %v13405, %v13406
    %v13408 = vsel %vm13146, %v12894, -inf
    %v13409 = vsel %vm13146, %v12770, -inf
    %v13410 = vmax.f32 %v13408, %v13409
    %v13411 = vrot.slane %v13410, 4
    %v13412 = vmax.f32 %v13410, %v13411
    %v13413 = vrot.slane %v13412, 2
    %v13414 = vmax.f32 %v13412, %v13413
    %v13415 = vrot.slane %v13414, 1
    %v13416 = vmax.f32 %v13414, %v13415
    %v13417 = vsel %vm13146, %v12895, -inf
    %v13418 = vsel %vm13146, %v12900, -inf
    %v13419 = vmax.f32 %v13417, %v13418
    %v13420 = vrot.slane %v13419, 4
    %v13421 = vmax.f32 %v13419, %v13420
    %v13422 = vrot.slane %v13421, 2
    %v13423 = vmax.f32 %v13421, %v13422
    %v13424 = vrot.slane %v13423, 1
    %v13425 = vmax.f32 %v13423, %v13424
    %v13426 = vsel %vm13146, %v12896, -inf
    %v13427 = vsel %vm13146, %v12901, -inf
    %v13428 = vmax.f32 %v13426, %v13427
    %v13429 = vrot.slane %v13428, 4
    %v13430 = vmax.f32 %v13428, %v13429
    %v13431 = vrot.slane %v13430, 2
    %v13432 = vmax.f32 %v13430, %v13431
    %v13433 = vrot.slane %v13432, 1
    %v13434 = vmax.f32 %v13432, %v13433
    %v13435 = vsel %vm13146, %v12769, -inf
    %v13436 = vsel %vm13146, %v12902, -inf
    %v13437 = vmax.f32 %v13435, %v13436
    %v13438 = vrot.slane %v13437, 4
    %v13439 = vmax.f32 %v13437, %v13438
    %v13440 = vrot.slane %v13439, 2
    %v13441 = vmax.f32 %v13439, %v13440
    %v13442 = vrot.slane %v13441, 1
    %v13443 = vmax.f32 %v13441, %v13442
    %v13444 = vsel %vm13146, %v12897, -inf
    %v13445 = vsel %vm13146, %v12771, -inf
    %v13446 = vmax.f32 %v13444, %v13445
    %v13447 = vrot.slane %v13446, 4
    %v13448 = vmax.f32 %v13446, %v13447
    %v13449 = vrot.slane %v13448, 2
    %v13450 = vmax.f32 %v13448, %v13449
    %v13451 = vrot.slane %v13450, 1
    %v13452 = vmax.f32 %v13450, %v13451
    %v13453 = vsel %vm13146, %v12898, -inf
    %v13454 = vsel %vm13146, %v12903, -inf
    %v13455 = vmax.f32 %v13453, %v13454
    %v13456 = vrot.slane %v13455, 4
    %v13457 = vmax.f32 %v13455, %v13456
    %v13458 = vrot.slane %v13457, 2
    %v13459 = vmax.f32 %v13457, %v13458
    %v13460 = vrot.slane %v13459, 1
    %v13461 = vmax.f32 %v13459, %v13460
    %v13462 = vsel %vm13146, %v12904, -inf
    %v13463 = vsel %vm13146, %v12909, -inf
    %v13464 = vmax.f32 %v13462, %v13463
    %v13465 = vrot.slane %v13464, 4
    %v13466 = vmax.f32 %v13464, %v13465
    %v13467 = vrot.slane %v13466, 2
    %v13468 = vmax.f32 %v13466, %v13467
    %v13469 = vrot.slane %v13468, 1
    %v13470 = vmax.f32 %v13468, %v13469
    %v13471 = vsel %vm13146, %v12905, -inf
    %v13472 = vsel %vm13146, %v12910, -inf
    %v13473 = vmax.f32 %v13471, %v13472
    %v13474 = vrot.slane %v13473, 4
    %v13475 = vmax.f32 %v13473, %v13474
    %v13476 = vrot.slane %v13475, 2
    %v13477 = vmax.f32 %v13475, %v13476
    %v13478 = vrot.slane %v13477, 1
    %v13479 = vmax.f32 %v13477, %v13478
    %v13480 = vsel %vm13146, %v12772, -inf
    %v13481 = vsel %vm13146, %v12911, -inf
    %v13482 = vmax.f32 %v13480, %v13481
    %v13483 = vrot.slane %v13482, 4
    %v13484 = vmax.f32 %v13482, %v13483
    %v13485 = vrot.slane %v13484, 2
    %v13486 = vmax.f32 %v13484, %v13485
    %v13487 = vrot.slane %v13486, 1
    %v13488 = vmax.f32 %v13486, %v13487
    %v13489 = vsel %vm13146, %v12906, -inf
    %v13490 = vsel %vm13146, %v12774, -inf
    %v13491 = vmax.f32 %v13489, %v13490
    %v13492 = vrot.slane %v13491, 4
    %v13493 = vmax.f32 %v13491, %v13492
    %v13494 = vrot.slane %v13493, 2
    %v13495 = vmax.f32 %v13493, %v13494
    %v13496 = vrot.slane %v13495, 1
    %v13497 = vmax.f32 %v13495, %v13496
    %v13498 = vsel %vm13146, %v12907, -inf
    %v13499 = vsel %vm13146, %v12912, -inf
    %v13500 = vmax.f32 %v13498, %v13499
    %v13501 = vrot.slane %v13500, 4
    %v13502 = vmax.f32 %v13500, %v13501
    %v13503 = vrot.slane %v13502, 2
    %v13504 = vmax.f32 %v13502, %v13503
    %v13505 = vrot.slane %v13504, 1
    %v13506 = vmax.f32 %v13504, %v13505
    %v13507 = vsel %vm13146, %v12908, -inf
    %v13508 = vsel %vm13146, %v12913, -inf
    %v13509 = vmax.f32 %v13507, %v13508
    %v13510 = vrot.slane %v13509, 4
    %v13511 = vmax.f32 %v13509, %v13510
    %v13512 = vrot.slane %v13511, 2
    %v13513 = vmax.f32 %v13511, %v13512
    %v13514 = vrot.slane %v13513, 1
    %v13515 = vmax.f32 %v13513, %v13514
    %v13516 = vsel %vm13146, %v12773, -inf
    %v13517 = vsel %vm13146, %v12914, -inf
    %v13518 = vmax.f32 %v13516, %v13517
    %v13519 = vrot.slane %v13518, 4
    %v13520 = vmax.f32 %v13518, %v13519
    %v13521 = vrot.slane %v13520, 2
    %v13522 = vmax.f32 %v13520, %v13521
    %v13523 = vrot.slane %v13522, 1
    %v13524 = vmax.f32 %v13522, %v13523
    %v13525 = vsel %vm13146, %v12775, -inf
    %v13526 = vsel %vm13146, %v12920, -inf
    %v13527 = vmax.f32 %v13525, %v13526
    %v13528 = vrot.slane %v13527, 4
    %v13529 = vmax.f32 %v13527, %v13528
    %v13530 = vrot.slane %v13529, 2
    %v13531 = vmax.f32 %v13529, %v13530
    %v13532 = vrot.slane %v13531, 1
    %v13533 = vmax.f32 %v13531, %v13532
    %v13534 = vsel %vm13146, %v12915, -inf
    %v13535 = vsel %vm13146, %v12777, -inf
    %v13536 = vmax.f32 %v13534, %v13535
    %v13537 = vrot.slane %v13536, 4
    %v13538 = vmax.f32 %v13536, %v13537
    %v13539 = vrot.slane %v13538, 2
    %v13540 = vmax.f32 %v13538, %v13539
    %v13541 = vrot.slane %v13540, 1
    %v13542 = vmax.f32 %v13540, %v13541
    %v13543 = vsel %vm13146, %v12916, -inf
    %v13544 = vsel %vm13146, %v12921, -inf
    %v13545 = vmax.f32 %v13543, %v13544
    %v13546 = vrot.slane %v13545, 4
    %v13547 = vmax.f32 %v13545, %v13546
    %v13548 = vrot.slane %v13547, 2
    %v13549 = vmax.f32 %v13547, %v13548
    %v13550 = vrot.slane %v13549, 1
    %v13551 = vmax.f32 %v13549, %v13550
    %v13552 = vsel %vm13146, %v12917, -inf
    %v13553 = vsel %vm13146, %v12922, -inf
    %v13554 = vmax.f32 %v13552, %v13553
    %v13555 = vrot.slane %v13554, 4
    %v13556 = vmax.f32 %v13554, %v13555
    %v13557 = vrot.slane %v13556, 2
    %v13558 = vmax.f32 %v13556, %v13557
    %v13559 = vrot.slane %v13558, 1
    %v13560 = vmax.f32 %v13558, %v13559
    %v13561 = vsel %vm13146, %v12776, -inf
    %v13562 = vsel %vm13146, %v12923, -inf
    %v13563 = vmax.f32 %v13561, %v13562
    %v13564 = vrot.slane %v13563, 4
    %v13565 = vmax.f32 %v13563, %v13564
    %v13566 = vrot.slane %v13565, 2
    %v13567 = vmax.f32 %v13565, %v13566
    %v13568 = vrot.slane %v13567, 1
    %v13569 = vmax.f32 %v13567, %v13568
    %v13570 = vsel %vm13146, %v12918, -inf
    %v13571 = vsel %vm13146, %v12778, -inf
    %v13572 = vmax.f32 %v13570, %v13571
    %v13573 = vrot.slane %v13572, 4
    %v13574 = vmax.f32 %v13572, %v13573
    %v13575 = vrot.slane %v13574, 2
    %v13576 = vmax.f32 %v13574, %v13575
    %v13577 = vrot.slane %v13576, 1
    %v13578 = vmax.f32 %v13576, %v13577
    %v13579 = vsel %vm13146, %v12919, -inf
    %v13580 = vsel %vm13146, %v12924, -inf
    %v13581 = vmax.f32 %v13579, %v13580
    %v13582 = vrot.slane %v13581, 4
    %v13583 = vmax.f32 %v13581, %v13582
    %v13584 = vrot.slane %v13583, 2
    %v13585 = vmax.f32 %v13583, %v13584
    %v13586 = vrot.slane %v13585, 1
    %v13587 = vmax.f32 %v13585, %v13586
    %v13588 = vsel %vm13146, %v12925, -inf
    %v13589 = vsel %vm13146, %v12930, -inf
    %v13590 = vmax.f32 %v13588, %v13589
    %v13591 = vrot.slane %v13590, 4
    %v13592 = vmax.f32 %v13590, %v13591
    %v13593 = vrot.slane %v13592, 2
    %v13594 = vmax.f32 %v13592, %v13593
    %v13595 = vrot.slane %v13594, 1
    %v13596 = vmax.f32 %v13594, %v13595
    %v13597 = vsel %vm13146, %v12926, -inf
    %v13598 = vsel %vm13146, %v12931, -inf
    %v13599 = vmax.f32 %v13597, %v13598
    %v13600 = vrot.slane %v13599, 4
    %v13601 = vmax.f32 %v13599, %v13600
    %v13602 = vrot.slane %v13601, 2
    %v13603 = vmax.f32 %v13601, %v13602
    %v13604 = vrot.slane %v13603, 1
    %v13605 = vmax.f32 %v13603, %v13604
    %v13606 = vsel %vm13146, %v12779, -inf
    %v13607 = vsel %vm13146, %v12932, -inf
    %v13608 = vmax.f32 %v13606, %v13607
    %v13609 = vrot.slane %v13608, 4
    %v13610 = vmax.f32 %v13608, %v13609
    %v13611 = vrot.slane %v13610, 2
    %v13612 = vmax.f32 %v13610, %v13611
    %v13613 = vrot.slane %v13612, 1
    %v13614 = vmax.f32 %v13612, %v13613
    %v13615 = vsel %vm13146, %v12927, -inf
    %v13616 = vsel %vm13146, %v12781, -inf
    %v13617 = vmax.f32 %v13615, %v13616
    %v13618 = vrot.slane %v13617, 4
    %v13619 = vmax.f32 %v13617, %v13618
    %v13620 = vrot.slane %v13619, 2
    %v13621 = vmax.f32 %v13619, %v13620
    %v13622 = vrot.slane %v13621, 1
    %v13623 = vmax.f32 %v13621, %v13622
    %v13624 = vsel %vm13146, %v12928, -inf
    %v13625 = vsel %vm13146, %v12933, -inf
    %v13626 = vmax.f32 %v13624, %v13625
    %v13627 = vrot.slane %v13626, 4
    %v13628 = vmax.f32 %v13626, %v13627
    %v13629 = vrot.slane %v13628, 2
    %v13630 = vmax.f32 %v13628, %v13629
    %v13631 = vrot.slane %v13630, 1
    %v13632 = vmax.f32 %v13630, %v13631
    %v13633 = vsel %vm13146, %v12929, -inf
    %v13634 = vsel %vm13146, %v12934, -inf
    %v13635 = vmax.f32 %v13633, %v13634
    %v13636 = vrot.slane %v13635, 4
    %v13637 = vmax.f32 %v13635, %v13636
    %v13638 = vrot.slane %v13637, 2
    %v13639 = vmax.f32 %v13637, %v13638
    %v13640 = vrot.slane %v13639, 1
    %v13641 = vmax.f32 %v13639, %v13640
    %v13642 = vsel %vm13146, %v12780, -inf
    %v13643 = vsel %vm13146, %v12935, -inf
    %v13644 = vmax.f32 %v13642, %v13643
    %v13645 = vrot.slane %v13644, 4
    %v13646 = vmax.f32 %v13644, %v13645
    %v13647 = vrot.slane %v13646, 2
    %v13648 = vmax.f32 %v13646, %v13647
    %v13649 = vrot.slane %v13648, 1
    %v13650 = vmax.f32 %v13648, %v13649
    %v13651 = vsel %vm13146, %v12782, -inf
    %v13652 = vsel %vm13146, %v12941, -inf
    %v13653 = vmax.f32 %v13651, %v13652
    %v13654 = vrot.slane %v13653, 4
    %v13655 = vmax.f32 %v13653, %v13654
    %v13656 = vrot.slane %v13655, 2
    %v13657 = vmax.f32 %v13655, %v13656
    %v13658 = vrot.slane %v13657, 1
    %v13659 = vmax.f32 %v13657, %v13658
    %v13660 = vsel %vm13146, %v12936, -inf
    %v13661 = vsel %vm13146, %v12784, -inf
    %v13662 = vmax.f32 %v13660, %v13661
    %v13663 = vrot.slane %v13662, 4
    %v13664 = vmax.f32 %v13662, %v13663
    %v13665 = vrot.slane %v13664, 2
    %v13666 = vmax.f32 %v13664, %v13665
    %v13667 = vrot.slane %v13666, 1
    %v13668 = vmax.f32 %v13666, %v13667
    %v13669 = vsel %vm13146, %v12937, -inf
    %v13670 = vsel %vm13146, %v12942, -inf
    %v13671 = vmax.f32 %v13669, %v13670
    %v13672 = vrot.slane %v13671, 4
    %v13673 = vmax.f32 %v13671, %v13672
    %v13674 = vrot.slane %v13673, 2
    %v13675 = vmax.f32 %v13673, %v13674
    %v13676 = vrot.slane %v13675, 1
    %v13677 = vmax.f32 %v13675, %v13676
    %v13678 = vsel %vm13146, %v12938, -inf
    %v13679 = vsel %vm13146, %v12943, -inf
    %v13680 = vmax.f32 %v13678, %v13679
    %v13681 = vrot.slane %v13680, 4
    %v13682 = vmax.f32 %v13680, %v13681
    %v13683 = vrot.slane %v13682, 2
    %v13684 = vmax.f32 %v13682, %v13683
    %v13685 = vrot.slane %v13684, 1
    %v13686 = vmax.f32 %v13684, %v13685
    %v13687 = vsel %vm13146, %v12783, -inf
    %v13688 = vsel %vm13146, %v12944, -inf
    %v13689 = vmax.f32 %v13687, %v13688
    %v13690 = vrot.slane %v13689, 4
    %v13691 = vmax.f32 %v13689, %v13690
    %v13692 = vrot.slane %v13691, 2
    %v13693 = vmax.f32 %v13691, %v13692
    %v13694 = vrot.slane %v13693, 1
    %v13695 = vmax.f32 %v13693, %v13694
    %v13696 = vsel %vm13146, %v12939, -inf
    %v13697 = vsel %vm13146, %v12785, -inf
    %v13698 = vmax.f32 %v13696, %v13697
    %v13699 = vrot.slane %v13698, 4
    %v13700 = vmax.f32 %v13698, %v13699
    %v13701 = vrot.slane %v13700, 2
    %v13702 = vmax.f32 %v13700, %v13701
    %v13703 = vrot.slane %v13702, 1
    %v13704 = vmax.f32 %v13702, %v13703
    %v13705 = vsel %vm13146, %v12940, -inf
    %v13706 = vsel %vm13146, %v12945, -inf
    %v13707 = vmax.f32 %v13705, %v13706
    %v13708 = vrot.slane %v13707, 4
    %v13709 = vmax.f32 %v13707, %v13708
    %v13710 = vrot.slane %v13709, 2
    %v13711 = vmax.f32 %v13709, %v13710
    %v13712 = vrot.slane %v13711, 1
    %v13713 = vmax.f32 %v13711, %v13712
    %v13714 = vsel %vm13146, %v12946, -inf
    %v13715 = vsel %vm13146, %v12951, -inf
    %v13716 = vmax.f32 %v13714, %v13715
    %v13717 = vrot.slane %v13716, 4
    %v13718 = vmax.f32 %v13716, %v13717
    %v13719 = vrot.slane %v13718, 2
    %v13720 = vmax.f32 %v13718, %v13719
    %v13721 = vrot.slane %v13720, 1
    %v13722 = vmax.f32 %v13720, %v13721
    %v13723 = vsel %vm13146, %v12947, -inf
    %v13724 = vsel %vm13146, %v12952, -inf
    %v13725 = vmax.f32 %v13723, %v13724
    %v13726 = vrot.slane %v13725, 4
    %v13727 = vmax.f32 %v13725, %v13726
    %v13728 = vrot.slane %v13727, 2
    %v13729 = vmax.f32 %v13727, %v13728
    %v13730 = vrot.slane %v13729, 1
    %v13731 = vmax.f32 %v13729, %v13730
    %v13732 = vsel %vm13146, %v12786, -inf
    %v13733 = vsel %vm13146, %v12953, -inf
    %v13734 = vmax.f32 %v13732, %v13733
    %v13735 = vrot.slane %v13734, 4
    %v13736 = vmax.f32 %v13734, %v13735
    %v13737 = vrot.slane %v13736, 2
    %v13738 = vmax.f32 %v13736, %v13737
    %v13739 = vrot.slane %v13738, 1
    %v13740 = vmax.f32 %v13738, %v13739
    %v13741 = vsel %vm13146, %v12948, -inf
    %v13742 = vsel %vm13146, %v12788, -inf
    %v13743 = vmax.f32 %v13741, %v13742
    %v13744 = vrot.slane %v13743, 4
    %v13745 = vmax.f32 %v13743, %v13744
    %v13746 = vrot.slane %v13745, 2
    %v13747 = vmax.f32 %v13745, %v13746
    %v13748 = vrot.slane %v13747, 1
    %v13749 = vmax.f32 %v13747, %v13748
    %v13750 = vsel %vm13146, %v12949, -inf
    %v13751 = vsel %vm13146, %v12954, -inf
    %v13752 = vmax.f32 %v13750, %v13751
    %v13753 = vrot.slane %v13752, 4
    %v13754 = vmax.f32 %v13752, %v13753
    %v13755 = vrot.slane %v13754, 2
    %v13756 = vmax.f32 %v13754, %v13755
    %v13757 = vrot.slane %v13756, 1
    %v13758 = vmax.f32 %v13756, %v13757
    %v13759 = vsel %vm13146, %v12950, -inf
    %v13760 = vsel %vm13146, %v12955, -inf
    %v13761 = vmax.f32 %v13759, %v13760
    %v13762 = vrot.slane %v13761, 4
    %v13763 = vmax.f32 %v13761, %v13762
    %v13764 = vrot.slane %v13763, 2
    %v13765 = vmax.f32 %v13763, %v13764
    %v13766 = vrot.slane %v13765, 1
    %v13767 = vmax.f32 %v13765, %v13766
    %v13768 = vsel %vm13146, %v12787, -inf
    %v13769 = vsel %vm13146, %v12956, -inf
    %v13770 = vmax.f32 %v13768, %v13769
    %v13771 = vrot.slane %v13770, 4
    %v13772 = vmax.f32 %v13770, %v13771
    %v13773 = vrot.slane %v13772, 2
    %v13774 = vmax.f32 %v13772, %v13773
    %v13775 = vrot.slane %v13774, 1
    %v13776 = vmax.f32 %v13774, %v13775
    %v13777 = vsel %vm13146, %v12789, -inf
    %v13778 = vsel %vm13146, %v12962, -inf
    %v13779 = vmax.f32 %v13777, %v13778
    %v13780 = vrot.slane %v13779, 4
    %v13781 = vmax.f32 %v13779, %v13780
    %v13782 = vrot.slane %v13781, 2
    %v13783 = vmax.f32 %v13781, %v13782
    %v13784 = vrot.slane %v13783, 1
    %v13785 = vmax.f32 %v13783, %v13784
    %v13786 = vsel %vm13146, %v12957, -inf
    %v13787 = vsel %vm13146, %v12791, -inf
    %v13788 = vmax.f32 %v13786, %v13787
    %v13789 = vrot.slane %v13788, 4
    %v13790 = vmax.f32 %v13788, %v13789
    %v13791 = vrot.slane %v13790, 2
    %v13792 = vmax.f32 %v13790, %v13791
    %v13793 = vrot.slane %v13792, 1
    %v13794 = vmax.f32 %v13792, %v13793
    %v13795 = vsel %vm13146, %v12958, -inf
    %v13796 = vsel %vm13146, %v12963, -inf
    %v13797 = vmax.f32 %v13795, %v13796
    %v13798 = vrot.slane %v13797, 4
    %v13799 = vmax.f32 %v13797, %v13798
    %v13800 = vrot.slane %v13799, 2
    %v13801 = vmax.f32 %v13799, %v13800
    %v13802 = vrot.slane %v13801, 1
    %v13803 = vmax.f32 %v13801, %v13802
    %v13804 = vsel %vm13146, %v12959, -inf
    %v13805 = vsel %vm13146, %v12964, -inf
    %v13806 = vmax.f32 %v13804, %v13805
    %v13807 = vrot.slane %v13806, 4
    %v13808 = vmax.f32 %v13806, %v13807
    %v13809 = vrot.slane %v13808, 2
    %v13810 = vmax.f32 %v13808, %v13809
    %v13811 = vrot.slane %v13810, 1
    %v13812 = vmax.f32 %v13810, %v13811
    %v13813 = vsel %vm13146, %v12790, -inf
    %v13814 = vsel %vm13146, %v12965, -inf
    %v13815 = vmax.f32 %v13813, %v13814
    %v13816 = vrot.slane %v13815, 4
    %v13817 = vmax.f32 %v13815, %v13816
    %v13818 = vrot.slane %v13817, 2
    %v13819 = vmax.f32 %v13817, %v13818
    %v13820 = vrot.slane %v13819, 1
    %v13821 = vmax.f32 %v13819, %v13820
    %v13822 = vsel %vm13146, %v12960, -inf
    %v13823 = vsel %vm13146, %v12792, -inf
    %v13824 = vmax.f32 %v13822, %v13823
    %v13825 = vrot.slane %v13824, 4
    %v13826 = vmax.f32 %v13824, %v13825
    %v13827 = vrot.slane %v13826, 2
    %v13828 = vmax.f32 %v13826, %v13827
    %v13829 = vrot.slane %v13828, 1
    %v13830 = vmax.f32 %v13828, %v13829
    %v13831 = vsel %vm13146, %v12961, -inf
    %v13832 = vsel %vm13146, %v12966, -inf
    %v13833 = vmax.f32 %v13831, %v13832
    %v13834 = vrot.slane %v13833, 4
    %v13835 = vmax.f32 %v13833, %v13834
    %v13836 = vrot.slane %v13835, 2
    %v13837 = vmax.f32 %v13835, %v13836
    %v13838 = vrot.slane %v13837, 1
    %v13839 = vmax.f32 %v13837, %v13838
    %v13840 = vsel %vm13146, %v12967, -inf
    %v13841 = vsel %vm13146, %v12972, -inf
    %v13842 = vmax.f32 %v13840, %v13841
    %v13843 = vrot.slane %v13842, 4
    %v13844 = vmax.f32 %v13842, %v13843
    %v13845 = vrot.slane %v13844, 2
    %v13846 = vmax.f32 %v13844, %v13845
    %v13847 = vrot.slane %v13846, 1
    %v13848 = vmax.f32 %v13846, %v13847
    %v13849 = vsel %vm13146, %v12968, -inf
    %v13850 = vsel %vm13146, %v12973, -inf
    %v13851 = vmax.f32 %v13849, %v13850
    %v13852 = vrot.slane %v13851, 4
    %v13853 = vmax.f32 %v13851, %v13852
    %v13854 = vrot.slane %v13853, 2
    %v13855 = vmax.f32 %v13853, %v13854
    %v13856 = vrot.slane %v13855, 1
    %v13857 = vmax.f32 %v13855, %v13856
    %v13858 = vsel %vm13146, %v12793, -inf
    %v13859 = vsel %vm13146, %v12974, -inf
    %v13860 = vmax.f32 %v13858, %v13859
    %v13861 = vrot.slane %v13860, 4
    %v13862 = vmax.f32 %v13860, %v13861
    %v13863 = vrot.slane %v13862, 2
    %v13864 = vmax.f32 %v13862, %v13863
    %v13865 = vrot.slane %v13864, 1
    %v13866 = vmax.f32 %v13864, %v13865
    %v13867 = vsel %vm13146, %v12969, -inf
    %v13868 = vsel %vm13146, %v12795, -inf
    %v13869 = vmax.f32 %v13867, %v13868
    %v13870 = vrot.slane %v13869, 4
    %v13871 = vmax.f32 %v13869, %v13870
    %v13872 = vrot.slane %v13871, 2
    %v13873 = vmax.f32 %v13871, %v13872
    %v13874 = vrot.slane %v13873, 1
    %v13875 = vmax.f32 %v13873, %v13874
    %v13876 = vsel %vm13146, %v12970, -inf
    %v13877 = vsel %vm13146, %v12975, -inf
    %v13878 = vmax.f32 %v13876, %v13877
    %v13879 = vrot.slane %v13878, 4
    %v13880 = vmax.f32 %v13878, %v13879
    %v13881 = vrot.slane %v13880, 2
    %v13882 = vmax.f32 %v13880, %v13881
    %v13883 = vrot.slane %v13882, 1
    %v13884 = vmax.f32 %v13882, %v13883
    %v13885 = vsel %vm13146, %v12971, -inf
    %v13886 = vsel %vm13146, %v12976, -inf
    %v13887 = vmax.f32 %v13885, %v13886
    %v13888 = vrot.slane %v13887, 4
    %v13889 = vmax.f32 %v13887, %v13888
    %v13890 = vrot.slane %v13889, 2
    %v13891 = vmax.f32 %v13889, %v13890
    %v13892 = vrot.slane %v13891, 1
    %v13893 = vmax.f32 %v13891, %v13892
    %v13894 = vsel %vm13146, %v12794, -inf
    %v13895 = vsel %vm13146, %v12977, -inf
    %v13896 = vmax.f32 %v13894, %v13895
    %v13897 = vrot.slane %v13896, 4
    %v13898 = vmax.f32 %v13896, %v13897
    %v13899 = vrot.slane %v13898, 2
    %v13900 = vmax.f32 %v13898, %v13899
    %v13901 = vrot.slane %v13900, 1
    %v13902 = vmax.f32 %v13900, %v13901
    %v13903 = vsel %vm13146, %v12796, -inf
    %v13904 = vsel %vm13146, %v12983, -inf
    %v13905 = vmax.f32 %v13903, %v13904
    %v13906 = vrot.slane %v13905, 4
    %v13907 = vmax.f32 %v13905, %v13906
    %v13908 = vrot.slane %v13907, 2
    %v13909 = vmax.f32 %v13907, %v13908
    %v13910 = vrot.slane %v13909, 1
    %v13911 = vmax.f32 %v13909, %v13910
    %v13912 = vsel %vm13146, %v12978, -inf
    %v13913 = vsel %vm13146, %v12798, -inf
    %v13914 = vmax.f32 %v13912, %v13913
    %v13915 = vrot.slane %v13914, 4
    %v13916 = vmax.f32 %v13914, %v13915
    %v13917 = vrot.slane %v13916, 2
    %v13918 = vmax.f32 %v13916, %v13917
    %v13919 = vrot.slane %v13918, 1
    %v13920 = vmax.f32 %v13918, %v13919
    %v13921 = vsel %vm13146, %v12979, -inf
    %v13922 = vsel %vm13146, %v12984, -inf
    %v13923 = vmax.f32 %v13921, %v13922
    %v13924 = vrot.slane %v13923, 4
    %v13925 = vmax.f32 %v13923, %v13924
    %v13926 = vrot.slane %v13925, 2
    %v13927 = vmax.f32 %v13925, %v13926
    %v13928 = vrot.slane %v13927, 1
    %v13929 = vmax.f32 %v13927, %v13928
    %v13930 = vsel %vm13146, %v12980, -inf
    %v13931 = vsel %vm13146, %v12985, -inf
    %v13932 = vmax.f32 %v13930, %v13931
    %v13933 = vrot.slane %v13932, 4
    %v13934 = vmax.f32 %v13932, %v13933
    %v13935 = vrot.slane %v13934, 2
    %v13936 = vmax.f32 %v13934, %v13935
    %v13937 = vrot.slane %v13936, 1
    %v13938 = vmax.f32 %v13936, %v13937
    %v13939 = vsel %vm13146, %v12797, -inf
    %v13940 = vsel %vm13146, %v12986, -inf
    %v13941 = vmax.f32 %v13939, %v13940
    %v13942 = vrot.slane %v13941, 4
    %v13943 = vmax.f32 %v13941, %v13942
    %v13944 = vrot.slane %v13943, 2
    %v13945 = vmax.f32 %v13943, %v13944
    %v13946 = vrot.slane %v13945, 1
    %v13947 = vmax.f32 %v13945, %v13946
    %v13948 = vsel %vm13146, %v12981, -inf
    %v13949 = vsel %vm13146, %v12799, -inf
    %v13950 = vmax.f32 %v13948, %v13949
    %v13951 = vrot.slane %v13950, 4
    %v13952 = vmax.f32 %v13950, %v13951
    %v13953 = vrot.slane %v13952, 2
    %v13954 = vmax.f32 %v13952, %v13953
    %v13955 = vrot.slane %v13954, 1
    %v13956 = vmax.f32 %v13954, %v13955
    %v13957 = vsel %vm13146, %v12982, -inf
    %v13958 = vsel %vm13146, %v12987, -inf
    %v13959 = vmax.f32 %v13957, %v13958
    %v13960 = vrot.slane %v13959, 4
    %v13961 = vmax.f32 %v13959, %v13960
    %v13962 = vrot.slane %v13961, 2
    %v13963 = vmax.f32 %v13961, %v13962
    %v13964 = vrot.slane %v13963, 1
    %v13965 = vmax.f32 %v13963, %v13964
    %v13966 = vsel %vm13146, %v12988, -inf
    %v13967 = vsel %vm13146, %v12993, -inf
    %v13968 = vmax.f32 %v13966, %v13967
    %v13969 = vrot.slane %v13968, 4
    %v13970 = vmax.f32 %v13968, %v13969
    %v13971 = vrot.slane %v13970, 2
    %v13972 = vmax.f32 %v13970, %v13971
    %v13973 = vrot.slane %v13972, 1
    %v13974 = vmax.f32 %v13972, %v13973
    %v13975 = vsel %vm13146, %v12989, -inf
    %v13976 = vsel %vm13146, %v12994, -inf
    %v13977 = vmax.f32 %v13975, %v13976
    %v13978 = vrot.slane %v13977, 4
    %v13979 = vmax.f32 %v13977, %v13978
    %v13980 = vrot.slane %v13979, 2
    %v13981 = vmax.f32 %v13979, %v13980
    %v13982 = vrot.slane %v13981, 1
    %v13983 = vmax.f32 %v13981, %v13982
    %v13984 = vsel %vm13146, %v12800, -inf
    %v13985 = vsel %vm13146, %v12995, -inf
    %v13986 = vmax.f32 %v13984, %v13985
    %v13987 = vrot.slane %v13986, 4
    %v13988 = vmax.f32 %v13986, %v13987
    %v13989 = vrot.slane %v13988, 2
    %v13990 = vmax.f32 %v13988, %v13989
    %v13991 = vrot.slane %v13990, 1
    %v13992 = vmax.f32 %v13990, %v13991
    %v13993 = vsel %vm13146, %v12990, -inf
    %v13994 = vsel %vm13146, %v12802, -inf
    %v13995 = vmax.f32 %v13993, %v13994
    %v13996 = vrot.slane %v13995, 4
    %v13997 = vmax.f32 %v13995, %v13996
    %v13998 = vrot.slane %v13997, 2
    %v13999 = vmax.f32 %v13997, %v13998
    %v14000 = vrot.slane %v13999, 1
    %v14001 = vmax.f32 %v13999, %v14000
    %v14002 = vsel %vm13146, %v12991, -inf
    %v14003 = vsel %vm13146, %v12996, -inf
    %v14004 = vmax.f32 %v14002, %v14003
    %v14005 = vrot.slane %v14004, 4
    %v14006 = vmax.f32 %v14004, %v14005
    %v14007 = vrot.slane %v14006, 2
    %v14008 = vmax.f32 %v14006, %v14007
    %v14009 = vrot.slane %v14008, 1
    %v14010 = vmax.f32 %v14008, %v14009
    %v14011 = vsel %vm13146, %v12992, -inf
    %v14012 = vsel %vm13146, %v12997, -inf
    %v14013 = vmax.f32 %v14011, %v14012
    %v14014 = vrot.slane %v14013, 4
    %v14015 = vmax.f32 %v14013, %v14014
    %v14016 = vrot.slane %v14015, 2
    %v14017 = vmax.f32 %v14015, %v14016
    %v14018 = vrot.slane %v14017, 1
    %v14019 = vmax.f32 %v14017, %v14018
    %v14020 = vsel %vm13146, %v12801, -inf
    %v14021 = vsel %vm13146, %v12998, -inf
    %v14022 = vmax.f32 %v14020, %v14021
    %v14023 = vrot.slane %v14022, 4
    %v14024 = vmax.f32 %v14022, %v14023
    %v14025 = vrot.slane %v14024, 2
    %v14026 = vmax.f32 %v14024, %v14025
    %v14027 = vrot.slane %v14026, 1
    %v14028 = vmax.f32 %v14026, %v14027
    %v14031 = vsel %vm8895, %v13596, %v13155
    %v14035 = vsel %vm8895, %v13605, %v13164
    %14036 = vrot.lane.b32.xlu0 %v14035, 16
    %v14037 = vpop.permute.xlu0 %14036
    %v14041 = vsel %vm8895, %v13614, %v13173
    %14042 = vrot.lane.b32.xlu0 %v14041, 32
    %v14043 = vpop.permute.xlu0 %14042
    %v14047 = vsel %vm8895, %v13623, %v13182
    %14048 = vrot.lane.b32.xlu0 %v14047, 48
    %v14049 = vpop.permute.xlu0 %14048
    %v14053 = vsel %vm8895, %v13632, %v13191
    %14054 = vrot.lane.b32.xlu0 %v14053, 64
    %v14055 = vpop.permute.xlu0 %14054
    %v14059 = vsel %vm8895, %v13641, %v13200
    %14060 = vrot.lane.b32.xlu0 %v14059, 80
    %v14061 = vpop.permute.xlu0 %14060
    %v14065 = vsel %vm8895, %v13650, %v13209
    %14066 = vrot.lane.b32.xlu0 %v14065, 96
    %v14067 = vpop.permute.xlu0 %14066
    %v14071 = vsel %vm8895, %v13659, %v13218
    %14072 = vrot.lane.b32.xlu0 %v14071, 112
    %v14073 = vpop.permute.xlu0 %14072
    %v14077 = vsel %vm8895, %v13668, %v13227
    %v14081 = vsel %vm8895, %v13677, %v13236
    %14082 = vrot.lane.b32.xlu0 %v14081, 16
    %v14083 = vpop.permute.xlu0 %14082
    %v14087 = vsel %vm8895, %v13686, %v13245
    %14088 = vrot.lane.b32.xlu0 %v14087, 32
    %v14089 = vpop.permute.xlu0 %14088
    %v14093 = vsel %vm8895, %v13695, %v13254
    %14094 = vrot.lane.b32.xlu0 %v14093, 48
    %v14095 = vpop.permute.xlu0 %14094
    %v14099 = vsel %vm8895, %v13704, %v13263
    %14100 = vrot.lane.b32.xlu0 %v14099, 64
    %v14101 = vpop.permute.xlu0 %14100
    %v14105 = vsel %vm8895, %v13713, %v13272
    %14106 = vrot.lane.b32.xlu0 %v14105, 80
    %v14107 = vpop.permute.xlu0 %14106
    %v14111 = vsel %vm8895, %v13722, %v13281
    %14112 = vrot.lane.b32.xlu0 %v14111, 96
    %v14113 = vpop.permute.xlu0 %14112
    %v14117 = vsel %vm8895, %v13731, %v13290
    %14118 = vrot.lane.b32.xlu0 %v14117, 112
    %v14119 = vpop.permute.xlu0 %14118
    %v14121 = vsel %vm11631, %v14031, %v14037
    %v14122 = vsel %vm11745, %v14121, %v14043
    %v14123 = vsel %vm11859, %v14122, %v14049
    %v14124 = vsel %vm11973, %v14123, %v14055
    %vm14125 = vcmask 654336
    %v14126 = vsel %vm14125, %v14124, %v14061
    %vm14127 = vcmask 785408
    %v14128 = vsel %vm14127, %v14126, %v14067
    %vm14129 = vcmask 916480
    %v14130 = vsel %vm14129, %v14128, %v14073
    %v14131 = vsel %vm11631, %v14077, %v14083
    %v14132 = vsel %vm11745, %v14131, %v14089
    %v14133 = vsel %vm11859, %v14132, %v14095
    %v14134 = vsel %vm11973, %v14133, %v14101
    %v14135 = vsel %vm14125, %v14134, %v14107
    %v14136 = vsel %vm14127, %v14135, %v14113
    %v14137 = vsel %vm14129, %v14136, %v14119
    %v14140 = vsel %vm8895, %v13740, %v13299
    %v14144 = vsel %vm8895, %v13749, %v13308
    %14145 = vrot.lane.b32.xlu0 %v14144, 16
    %v14146 = vpop.permute.xlu0 %14145
    %v14150 = vsel %vm8895, %v13758, %v13317
    %14151 = vrot.lane.b32.xlu0 %v14150, 32
    %v14152 = vpop.permute.xlu0 %14151
    %v14156 = vsel %vm8895, %v13767, %v13326
    %14157 = vrot.lane.b32.xlu0 %v14156, 48
    %v14158 = vpop.permute.xlu0 %14157
    %v14162 = vsel %vm8895, %v13776, %v13335
    %14163 = vrot.lane.b32.xlu0 %v14162, 64
    %v14164 = vpop.permute.xlu0 %14163
    %v14168 = vsel %vm8895, %v13785, %v13344
    %14169 = vrot.lane.b32.xlu0 %v14168, 80
    %v14170 = vpop.permute.xlu0 %14169
    %v14174 = vsel %vm8895, %v13794, %v13353
    %14175 = vrot.lane.b32.xlu0 %v14174, 96
    %v14176 = vpop.permute.xlu0 %14175
    %v14180 = vsel %vm8895, %v13803, %v13362
    %14181 = vrot.lane.b32.xlu0 %v14180, 112
    %v14182 = vpop.permute.xlu0 %14181
    %v14186 = vsel %vm8895, %v13812, %v13371
    %v14190 = vsel %vm8895, %v13821, %v13380
    %14191 = vrot.lane.b32.xlu0 %v14190, 16
    %v14192 = vpop.permute.xlu0 %14191
    %v14196 = vsel %vm8895, %v13830, %v13389
    %14197 = vrot.lane.b32.xlu0 %v14196, 32
    %v14198 = vpop.permute.xlu0 %14197
    %v14202 = vsel %vm8895, %v13839, %v13398
    %14203 = vrot.lane.b32.xlu0 %v14202, 48
    %v14204 = vpop.permute.xlu0 %14203
    %v14208 = vsel %vm8895, %v13848, %v13407
    %14209 = vrot.lane.b32.xlu0 %v14208, 64
    %v14210 = vpop.permute.xlu0 %14209
    %v14214 = vsel %vm8895, %v13857, %v13416
    %14215 = vrot.lane.b32.xlu0 %v14214, 80
    %v14216 = vpop.permute.xlu0 %14215
    %v14220 = vsel %vm8895, %v13866, %v13425
    %14221 = vrot.lane.b32.xlu0 %v14220, 96
    %v14222 = vpop.permute.xlu0 %14221
    %v14226 = vsel %vm8895, %v13875, %v13434
    %14227 = vrot.lane.b32.xlu0 %v14226, 112
    %v14228 = vpop.permute.xlu0 %14227
    %v14230 = vsel %vm11631, %v14140, %v14146
    %v14231 = vsel %vm11745, %v14230, %v14152
    %v14232 = vsel %vm11859, %v14231, %v14158
    %v14233 = vsel %vm11973, %v14232, %v14164
    %v14234 = vsel %vm14125, %v14233, %v14170
    %v14235 = vsel %vm14127, %v14234, %v14176
    %v14236 = vsel %vm14129, %v14235, %v14182
    %v14237 = vsel %vm11631, %v14186, %v14192
    %v14238 = vsel %vm11745, %v14237, %v14198
    %v14239 = vsel %vm11859, %v14238, %v14204
    %v14240 = vsel %vm11973, %v14239, %v14210
    %v14241 = vsel %vm14125, %v14240, %v14216
    %v14242 = vsel %vm14127, %v14241, %v14222
    %v14243 = vsel %vm14129, %v14242, %v14228
    %v14246 = vsel %vm8895, %v13884, %v13443
    %v14250 = vsel %vm8895, %v13893, %v13452
    %14251 = vrot.lane.b32.xlu0 %v14250, 16
    %v14252 = vpop.permute.xlu0 %14251
    %v14256 = vsel %vm8895, %v13902, %v13461
    %14257 = vrot.lane.b32.xlu0 %v14256, 32
    %v14258 = vpop.permute.xlu0 %14257
    %v14262 = vsel %vm8895, %v13911, %v13470
    %14263 = vrot.lane.b32.xlu0 %v14262, 48
    %v14264 = vpop.permute.xlu0 %14263
    %v14268 = vsel %vm8895, %v13920, %v13479
    %14269 = vrot.lane.b32.xlu0 %v14268, 64
    %v14270 = vpop.permute.xlu0 %14269
    %v14274 = vsel %vm8895, %v13929, %v13488
    %14275 = vrot.lane.b32.xlu0 %v14274, 80
    %v14276 = vpop.permute.xlu0 %14275
    %v14280 = vsel %vm8895, %v13938, %v13497
    %14281 = vrot.lane.b32.xlu0 %v14280, 96
    %v14282 = vpop.permute.xlu0 %14281
    %v14286 = vsel %vm8895, %v13947, %v13506
    %14287 = vrot.lane.b32.xlu0 %v14286, 112
    %v14288 = vpop.permute.xlu0 %14287
    %v14292 = vsel %vm8895, %v13956, %v13515
    %v14296 = vsel %vm8895, %v13965, %v13524
    %14297 = vrot.lane.b32.xlu0 %v14296, 16
    %v14298 = vpop.permute.xlu0 %14297
    %v14302 = vsel %vm8895, %v13974, %v13533
    %14303 = vrot.lane.b32.xlu0 %v14302, 32
    %v14304 = vpop.permute.xlu0 %14303
    %v14308 = vsel %vm8895, %v13983, %v13542
    %14309 = vrot.lane.b32.xlu0 %v14308, 48
    %v14310 = vpop.permute.xlu0 %14309
    %v14314 = vsel %vm8895, %v13992, %v13551
    %14315 = vrot.lane.b32.xlu0 %v14314, 64
    %v14316 = vpop.permute.xlu0 %14315
    %v14320 = vsel %vm8895, %v14001, %v13560
    %14321 = vrot.lane.b32.xlu0 %v14320, 80
    %v14322 = vpop.permute.xlu0 %14321
    %v14326 = vsel %vm8895, %v14010, %v13569
    %14327 = vrot.lane.b32.xlu0 %v14326, 96
    %v14328 = vpop.permute.xlu0 %14327
    %v14332 = vsel %vm8895, %v14019, %v13578
    %14333 = vrot.lane.b32.xlu0 %v14332, 112
    %v14334 = vpop.permute.xlu0 %14333
    %v14336 = vsel %vm11631, %v14246, %v14252
    %v14337 = vsel %vm11745, %v14336, %v14258
    %v14338 = vsel %vm11859, %v14337, %v14264
    %v14339 = vsel %vm11973, %v14338, %v14270
    %v14340 = vsel %vm14125, %v14339, %v14276
    %v14341 = vsel %vm14127, %v14340, %v14282
    %v14342 = vsel %vm14129, %v14341, %v14288
    %v14343 = vsel %vm11631, %v14292, %v14298
    %v14344 = vsel %vm11745, %v14343, %v14304
    %v14345 = vsel %vm11859, %v14344, %v14310
    %v14346 = vsel %vm11973, %v14345, %v14316
    %v14347 = vsel %vm14125, %v14346, %v14322
    %v14348 = vsel %vm14127, %v14347, %v14328
    %v14349 = vsel %vm14129, %v14348, %v14334
    %v14352 = vsel %vm8895, %v14028, %v13587
    %v14353 = vld [vmem:[%s4] sm:$0xff]
    %v14354 = vld [vmem:[%s4 + $0x8] sm:$0xff]
    %v14355 = vld [vmem:[%s4 + $0x10] sm:$0xff]
    %v14356 = vld [vmem:[%s4 + $0x18] sm:$0xff]
    %v14357 = vld [vmem:[%s4 + $0x20] sm:$0xff]
    %v14358 = vld [vmem:[%s4 + $0x28] sm:$0xff]
    %v14359 = vld [vmem:[%s4 + $0x30] sm:$0xff]
    %v14360 = vld [vmem:[%s4 + $0x38] sm:$0xff]
    %v14361 = vld [vmem:[%s4 + $0x40] sm:$0xff]
    %v14362 = vld [vmem:[%s4 + $0x48] sm:$0xff]
    %v14363 = vld [vmem:[%s4 + $0x50] sm:$0xff]
    %v14364 = vld [vmem:[%s4 + $0x58] sm:$0xff]
    %v14365 = vld [vmem:[%s4 + $0x60] sm:$0xff]
    %v14366 = vld [vmem:[%s4 + $0x68] sm:$0xff]
    %v14367 = vld [vmem:[%s4 + $0x70] sm:$0xff]
    %v14368 = vld [vmem:[%s4 + $0x78] sm:$0xff]
    %v14369 = vld [vmem:[%s4 + $0x80] sm:$0xff]
    %v14370 = vld [vmem:[%s4 + $0x88] sm:$0xff]
    %v14371 = vld [vmem:[%s4 + $0x90] sm:$0xff]
    %v14372 = vld [vmem:[%s4 + $0x98] sm:$0xff]
    %v14373 = vld [vmem:[%s4 + $0xa0] sm:$0xff]
    %v14374 = vld [vmem:[%s4 + $0xa8] sm:$0xff]
    %v14375 = vld [vmem:[%s4 + $0xb0] sm:$0xff]
    %v14376 = vld [vmem:[%s4 + $0xb8] sm:$0xff]
    %v14377 = vld [vmem:[%s4 + $0xc0] sm:$0xff]
    %v14378 = vld [vmem:[%s4 + $0xc8] sm:$0xff]
    %v14379 = vld [vmem:[%s4 + $0xd0] sm:$0xff]
    %v14380 = vld [vmem:[%s4 + $0xd8] sm:$0xff]
    %v14381 = vld [vmem:[%s4 + $0xe0] sm:$0xff]
    %v14382 = vld [vmem:[%s4 + $0xe8] sm:$0xff]
    %v14383 = vld [vmem:[%s4 + $0xf0] sm:$0xff]
    %v14384 = vld [vmem:[%s4 + $0xf8] sm:$0xff]
    %v14385 = vld [vmem:[%s4 + $0x100] sm:$0xff]
    %v14386 = vld [vmem:[%s4 + $0x108] sm:$0xff]
    %v14387 = vld [vmem:[%s4 + $0x110] sm:$0xff]
    %v14388 = vld [vmem:[%s4 + $0x118] sm:$0xff]
    %v14389 = vld [vmem:[%s4 + $0x120] sm:$0xff]
    %v14390 = vld [vmem:[%s4 + $0x128] sm:$0xff]
    %v14391 = vld [vmem:[%s4 + $0x130] sm:$0xff]
    %v14392 = vld [vmem:[%s4 + $0x138] sm:$0xff]
    %v14393 = vld [vmem:[%s4 + $0x140] sm:$0xff]
    %v14394 = vld [vmem:[%s4 + $0x148] sm:$0xff]
    %v14395 = vld [vmem:[%s4 + $0x150] sm:$0xff]
    %v14396 = vld [vmem:[%s4 + $0x158] sm:$0xff]
    %v14397 = vld [vmem:[%s4 + $0x160] sm:$0xff]
    %v14398 = vld [vmem:[%s4 + $0x168] sm:$0xff]
    %v14399 = vld [vmem:[%s4 + $0x170] sm:$0xff]
    %v14400 = vld [vmem:[%s4 + $0x178] sm:$0xff]
    %v14401 = vld [vmem:[%s4 + $0x180] sm:$0xff]
    %v14402 = vld [vmem:[%s4 + $0x188] sm:$0xff]
    %v14403 = vld [vmem:[%s4 + $0x190] sm:$0xff]
    %v14404 = vld [vmem:[%s4 + $0x198] sm:$0xff]
    %v14405 = vld [vmem:[%s4 + $0x1a0] sm:$0xff]
    %v14406 = vld [vmem:[%s4 + $0x1a8] sm:$0xff]
    %v14407 = vld [vmem:[%s4 + $0x1b0] sm:$0xff]
    %v14408 = vld [vmem:[%s4 + $0x1b8] sm:$0xff]
    %v14409 = vld [vmem:[%s4 + $0x1c0] sm:$0xff]
    %v14410 = vld [vmem:[%s4 + $0x1c8] sm:$0xff]
    %v14411 = vld [vmem:[%s4 + $0x1d0] sm:$0xff]
    %v14412 = vld [vmem:[%s4 + $0x1d8] sm:$0xff]
    %v14413 = vld [vmem:[%s4 + $0x1e0] sm:$0xff]
    %v14414 = vld [vmem:[%s4 + $0x1e8] sm:$0xff]
    %v14415 = vld [vmem:[%s4 + $0x1f0] sm:$0xff]
    %v14416 = vld [vmem:[%s4 + $0x1f8] sm:$0xff]
    %v14417 = vld [vmem:[%s4 + $0x200] sm:$0xff]
    %v14418 = vld [vmem:[%s4 + $0x208] sm:$0xff]
    %v14419 = vld [vmem:[%s4 + $0x210] sm:$0xff]
    %v14420 = vld [vmem:[%s4 + $0x218] sm:$0xff]
    %v14421 = vld [vmem:[%s4 + $0x220] sm:$0xff]
    %v14422 = vld [vmem:[%s4 + $0x228] sm:$0xff]
    %v14423 = vld [vmem:[%s4 + $0x230] sm:$0xff]
    %v14424 = vld [vmem:[%s4 + $0x238] sm:$0xff]
    %v14425 = vld [vmem:[%s4 + $0x240] sm:$0xff]
    %v14426 = vld [vmem:[%s4 + $0x248] sm:$0xff]
    %v14427 = vld [vmem:[%s4 + $0x250] sm:$0xff]
    %v14428 = vld [vmem:[%s4 + $0x258] sm:$0xff]
    %v14429 = vld [vmem:[%s4 + $0x260] sm:$0xff]
    %v14430 = vld [vmem:[%s4 + $0x268] sm:$0xff]
    %v14431 = vld [vmem:[%s4 + $0x270] sm:$0xff]
    %v14432 = vld [vmem:[%s4 + $0x278] sm:$0xff]
    %v14433 = vld [vmem:[%s4 + $0x280] sm:$0xff]
    %v14434 = vld [vmem:[%s4 + $0x288] sm:$0xff]
    %v14435 = vld [vmem:[%s4 + $0x290] sm:$0xff]
    %v14436 = vld [vmem:[%s4 + $0x298] sm:$0xff]
    %v14437 = vld [vmem:[%s4 + $0x2a0] sm:$0xff]
    %v14438 = vld [vmem:[%s4 + $0x2a8] sm:$0xff]
    %v14439 = vld [vmem:[%s4 + $0x2b0] sm:$0xff]
    %v14440 = vld [vmem:[%s4 + $0x2b8] sm:$0xff]
    %v14441 = vld [vmem:[%s4 + $0x2c0] sm:$0xff]
    %v14442 = vld [vmem:[%s4 + $0x2c8] sm:$0xff]
    %v14443 = vld [vmem:[%s4 + $0x2d0] sm:$0xff]
    %v14444 = vld [vmem:[%s4 + $0x2d8] sm:$0xff]
    %v14445 = vld [vmem:[%s4 + $0x2e0] sm:$0xff]
    %v14446 = vld [vmem:[%s4 + $0x2e8] sm:$0xff]
    %v14447 = vld [vmem:[%s4 + $0x2f0] sm:$0xff]
    %v14448 = vld [vmem:[%s4 + $0x2f8] sm:$0xff]
    %v14449 = vld [vmem:[%s4 + $0x300] sm:$0xff]
    %v14450 = vld [vmem:[%s4 + $0x308] sm:$0xff]
    %v14451 = vld [vmem:[%s5] sm:$0x1]
    %v14453 = vperm.slane %v14451, 0
    %v14455 = vsel %vm11631, %v14352, 0
    %14457 = vmatpush.msra.mxu0 %v14368
    %14458 = vmatpush.msra.mxu0 %v14367
    %14459 = vmatpush.msra.mxu0 %v14366
    %14460 = vmatpush.msra.mxu0 %v14365
    %14461 = vmatpush.msra.mxu0 %v14364
    %14462 = vmatpush.msra.mxu0 %v14363
    %14463 = vmatpush.msra.mxu0 %v14362
    %14464 = vmatpush.msra.mxu0 %v14361
    %14465 = vmatpush.msra.mxu0 %v14360
    %14466 = vmatpush.msra.mxu0 %v14359
    %14467 = vmatpush.msra.mxu0 %v14358
    %14468 = vmatpush.msra.mxu0 %v14357
    %14469 = vmatpush.msra.mxu0 %v14356
    %14470 = vmatpush.msra.mxu0 %v14355
    %14471 = vmatpush.msra.mxu0 %v14354
    %14472 = vmatpush.msra.mxu0 %v14353
    %14473 = vmatmul.f32.gmra.mxu0 %v14130
    %v14474 = vpop.f32.mrf.mxu0
    %v14475 = vadd.f32 %v14453, %v14474
    %14476 = vdwg.mxu0
    %14477 = vmatpush.msra.mxu0 %v14384
    %14478 = vmatpush.msra.mxu0 %v14383
    %14479 = vmatpush.msra.mxu0 %v14382
    %14480 = vmatpush.msra.mxu0 %v14381
    %14481 = vmatpush.msra.mxu0 %v14380
    %14482 = vmatpush.msra.mxu0 %v14379
    %14483 = vmatpush.msra.mxu0 %v14378
    %14484 = vmatpush.msra.mxu0 %v14377
    %14485 = vmatpush.msra.mxu0 %v14376
    %14486 = vmatpush.msra.mxu0 %v14375
    %14487 = vmatpush.msra.mxu0 %v14374
    %14488 = vmatpush.msra.mxu0 %v14373
    %14489 = vmatpush.msra.mxu0 %v14372
    %14490 = vmatpush.msra.mxu0 %v14371
    %14491 = vmatpush.msra.mxu0 %v14370
    %14492 = vmatpush.msra.mxu0 %v14369
    %14493 = vmatmul.f32.gmra.mxu0 %v14137
    %v14494 = vpop.f32.mrf.mxu0
    %v14495 = vadd.f32 %v14475, %v14494
    %14496 = vdwg.mxu0
    %14497 = vmatpush.msra.mxu0 %v14400
    %14498 = vmatpush.msra.mxu0 %v14399
    %14499 = vmatpush.msra.mxu0 %v14398
    %14500 = vmatpush.msra.mxu0 %v14397
    %14501 = vmatpush.msra.mxu0 %v14396
    %14502 = vmatpush.msra.mxu0 %v14395
    %14503 = vmatpush.msra.mxu0 %v14394
    %14504 = vmatpush.msra.mxu0 %v14393
    %14505 = vmatpush.msra.mxu0 %v14392
    %14506 = vmatpush.msra.mxu0 %v14391
    %14507 = vmatpush.msra.mxu0 %v14390
    %14508 = vmatpush.msra.mxu0 %v14389
    %14509 = vmatpush.msra.mxu0 %v14388
    %14510 = vmatpush.msra.mxu0 %v14387
    %14511 = vmatpush.msra.mxu0 %v14386
    %14512 = vmatpush.msra.mxu0 %v14385
    %14513 = vmatmul.f32.gmra.mxu0 %v14236
    %v14514 = vpop.f32.mrf.mxu0
    %v14515 = vadd.f32 %v14495, %v14514
    %14516 = vdwg.mxu0
    %14517 = vmatpush.msra.mxu0 %v14416
    %14518 = vmatpush.msra.mxu0 %v14415
    %14519 = vmatpush.msra.mxu0 %v14414
    %14520 = vmatpush.msra.mxu0 %v14413
    %14521 = vmatpush.msra.mxu0 %v14412
    %14522 = vmatpush.msra.mxu0 %v14411
    %14523 = vmatpush.msra.mxu0 %v14410
    %14524 = vmatpush.msra.mxu0 %v14409
    %14525 = vmatpush.msra.mxu0 %v14408
    %14526 = vmatpush.msra.mxu0 %v14407
    %14527 = vmatpush.msra.mxu0 %v14406
    %14528 = vmatpush.msra.mxu0 %v14405
    %14529 = vmatpush.msra.mxu0 %v14404
    %14530 = vmatpush.msra.mxu0 %v14403
    %14531 = vmatpush.msra.mxu0 %v14402
    %14532 = vmatpush.msra.mxu0 %v14401
    %14533 = vmatmul.f32.gmra.mxu0 %v14243
    %v14534 = vpop.f32.mrf.mxu0
    %v14535 = vadd.f32 %v14515, %v14534
    %14536 = vdwg.mxu0
    %14537 = vmatpush.msra.mxu0 %v14432
    %14538 = vmatpush.msra.mxu0 %v14431
    %14539 = vmatpush.msra.mxu0 %v14430
    %14540 = vmatpush.msra.mxu0 %v14429
    %14541 = vmatpush.msra.mxu0 %v14428
    %14542 = vmatpush.msra.mxu0 %v14427
    %14543 = vmatpush.msra.mxu0 %v14426
    %14544 = vmatpush.msra.mxu0 %v14425
    %14545 = vmatpush.msra.mxu0 %v14424
    %14546 = vmatpush.msra.mxu0 %v14423
    %14547 = vmatpush.msra.mxu0 %v14422
    %14548 = vmatpush.msra.mxu0 %v14421
    %14549 = vmatpush.msra.mxu0 %v14420
    %14550 = vmatpush.msra.mxu0 %v14419
    %14551 = vmatpush.msra.mxu0 %v14418
    %14552 = vmatpush.msra.mxu0 %v14417
    %14553 = vmatmul.f32.gmra.mxu0 %v14342
    %v14554 = vpop.f32.mrf.mxu0
    %v14555 = vadd.f32 %v14535, %v14554
    %14556 = vdwg.mxu0
    %14557 = vmatpush.msra.mxu0 %v14448
    %14558 = vmatpush.msra.mxu0 %v14447
    %14559 = vmatpush.msra.mxu0 %v14446
    %14560 = vmatpush.msra.mxu0 %v14445
    %14561 = vmatpush.msra.mxu0 %v14444
    %14562 = vmatpush.msra.mxu0 %v14443
    %14563 = vmatpush.msra.mxu0 %v14442
    %14564 = vmatpush.msra.mxu0 %v14441
    %14565 = vmatpush.msra.mxu0 %v14440
    %14566 = vmatpush.msra.mxu0 %v14439
    %14567 = vmatpush.msra.mxu0 %v14438
    %14568 = vmatpush.msra.mxu0 %v14437
    %14569 = vmatpush.msra.mxu0 %v14436
    %14570 = vmatpush.msra.mxu0 %v14435
    %14571 = vmatpush.msra.mxu0 %v14434
    %14572 = vmatpush.msra.mxu0 %v14433
    %14573 = vmatmul.f32.gmra.mxu0 %v14349
    %v14574 = vpop.f32.mrf.mxu0
    %v14575 = vadd.f32 %v14555, %v14574
    %14576 = vdwg.mxu0
    %14577 = vmatpush.msra.mxu0 0.0
    %14578 = vmatpush.msra.mxu0 0.0
    %14579 = vmatpush.msra.mxu0 0.0
    %14580 = vmatpush.msra.mxu0 0.0
    %14581 = vmatpush.msra.mxu0 0.0
    %14582 = vmatpush.msra.mxu0 0.0
    %14583 = vmatpush.msra.mxu0 0.0
    %14584 = vmatpush.msra.mxu0 0.0
    %14585 = vmatpush.msra.mxu0 0.0
    %14586 = vmatpush.msra.mxu0 0.0
    %14587 = vmatpush.msra.mxu0 0.0
    %14588 = vmatpush.msra.mxu0 0.0
    %14589 = vmatpush.msra.mxu0 0.0
    %14590 = vmatpush.msra.mxu0 0.0
    %14591 = vmatpush.msra.mxu0 %v14450
    %14592 = vmatpush.msra.mxu0 %v14449
    %14593 = vmatmul.f32.gmra.mxu0 %v14455
    %v14594 = vpop.f32.mrf.mxu0
    %v14595 = vadd.f32 %v14575, %v14594
    %14596 = vdwg.mxu0
    %v14597 = vmax.f32 %v14595, 0.0
    %v14598 = vld [vmem:[%s6] sm:$0xff]
    %v14599 = vld [vmem:[%s6 + $0x8] sm:$0xff]
    %v14600 = vld [vmem:[%s6 + $0x10] sm:$0xff]
    %v14601 = vld [vmem:[%s6 + $0x18] sm:$0xff]
    %v14602 = vld [vmem:[%s6 + $0x20] sm:$0xff]
    %v14603 = vld [vmem:[%s6 + $0x28] sm:$0xff]
    %v14604 = vld [vmem:[%s6 + $0x30] sm:$0xff]
    %v14605 = vld [vmem:[%s6 + $0x38] sm:$0xff]
    %v14606 = vld [vmem:[%s7] sm:$0x1]
    %v14608 = vperm.slane %v14606, 0
    %v14611 = vsel %vm11973, %v14597, 0
    %14613 = vmatpush.msra.mxu0 0.0
    %14614 = vmatpush.msra.mxu0 0.0
    %14615 = vmatpush.msra.mxu0 0.0
    %14616 = vmatpush.msra.mxu0 0.0
    %14617 = vmatpush.msra.mxu0 0.0
    %14618 = vmatpush.msra.mxu0 0.0
    %14619 = vmatpush.msra.mxu0 0.0
    %14620 = vmatpush.msra.mxu0 0.0
    %14621 = vmatpush.msra.mxu0 %v14605
    %14622 = vmatpush.msra.mxu0 %v14604
    %14623 = vmatpush.msra.mxu0 %v14603
    %14624 = vmatpush.msra.mxu0 %v14602
    %14625 = vmatpush.msra.mxu0 %v14601
    %14626 = vmatpush.msra.mxu0 %v14600
    %14627 = vmatpush.msra.mxu0 %v14599
    %14628 = vmatpush.msra.mxu0 %v14598
    %14629 = vmatmul.f32.gmra.mxu0 %v14611
    %v14630 = vpop.f32.mrf.mxu0
    %v14631 = vadd.f32 %v14608, %v14630
    %14632 = vdwg.mxu0
    %vm14633 = vcmask 74752
    %14634 = vst.msk [vmem:[#allocation2] sm:$0x3] %vm14633, %v14631
    // Predicated region
    $region34: #{digit_classifier_forward.1} parent=1 // pred_check
      _
    $region35: #{digit_classifier_forward.1} parent=1 // pred_check_branch
      %14636 = sbr.rel (0) target = $region37
    $region36: #{digit_classifier_forward.1} parent=1 // pred_region
      %14638 = vsyncadd [#allocation3], 0
      %s14640 = sshll.u32 [#allocation2], 4
      %s14641 = int_to_ptr.vmem [resolvable:$true] %s14640
      %s14642 = sshll.u32 %s8, 4
      %s14643 = int_to_ptr.hbm [resolvable:$true] %s14642
      %14645 = dma.vmem_to_hbm [thread:$0]  %s14641, 32, %s14643, [#allocation3]
    $region37: #{digit_classifier_forward.1} parent=1 // pred_fallthru
      _
    // Predicated region
    $region38: #{digit_classifier_forward.1} parent=1 // pred_check
      _
    $region39: #{digit_classifier_forward.1} parent=1 // pred_check_branch
      %14647 = sbr.rel (0) target = $region41
    $region40: #{digit_classifier_forward.1} parent=1 // pred_region
      %14649 = dma.done [#allocation3], 32
    $region41: #{digit_classifier_forward.1} parent=1 // pred_fallthru
      _
    %14650 = vsyncpa [#allocation3], 1

</llo_original>
